<compile_context>
chip_gen: v7x
topology: tpu7x:2x2x1
jax: 0.10.0
libtpu: 0.0.40
codegen_flags: <defaults>
</compile_context>

<pallas_src>
import functools

import jax
import jax.numpy as jnp
import numpy as np
from jax import lax
from jax.experimental import pallas as pl
from jax.experimental.pallas import tpu as pltpu

EPS = 1e-5


# ------------------------------ Pallas kernel ------------------------------

def _tree_sum(vals):
    """Pairwise reduction -> shorter f32 add chain than a linear fold."""
    vals = list(vals)
    while len(vals) > 1:
        nxt = [vals[i] + vals[i + 1] for i in range(0, len(vals) - 1, 2)]
        if len(vals) % 2:
            nxt.append(vals[-1])
        vals = nxt
    return vals[0]


def _zero_border(pad_ref, H, W):
    """Zero only the 1-px border of a padded (H+2, W+2, C) VMEM scratch."""
    C = pad_ref.shape[-1]
    dt = pad_ref.dtype
    pad_ref[0:1, :, :] = jnp.zeros((1, W + 2, C), dt)
    pad_ref[H + 1:H + 2, :, :] = jnp.zeros((1, W + 2, C), dt)
    pad_ref[:, 0:1, :] = jnp.zeros((H + 2, 1, C), dt)
    pad_ref[:, W + 1:W + 2, :] = jnp.zeros((H + 2, 1, C), dt)


def _conv3x3_dots(pad_ref, w_ref, H, W, cdtype):
    """3x3 conv (stride 1) as 9 back-to-back MXU dots over shifted slabs.

    Weights are read per-tap from the ref (no whole (9,C,D) live value);
    slabs are cast to the compute dtype just before the dot (f32 accumulate).
    """
    C = pad_ref.shape[-1]
    partials = []
    for kh in range(3):
        for kw in range(3):
            a = pad_ref[kh:kh + H, kw:kw + W, :].reshape(H * W, C).astype(cdtype)
            partials.append(
                jnp.dot(a, w_ref[kh * 3 + kw], preferred_element_type=jnp.float32))
    return _tree_sum(partials)                               # (H*W, D) f32


def _fused_kernel(*refs, project, cdtype):
    """BN1 -> conv3x3 -> PReLU -> conv3x3 (BN2 folded) -> +shortcut, one image."""
    if project:
        (x_ref, w1_ref, s1_ref, b1_ref, alpha_ref, w2_ref, b2_ref,
         wsc_ref, bsc_ref, o_ref, xbn_pad_ref, y1_pad_ref) = refs
    else:
        (x_ref, w1_ref, s1_ref, b1_ref, alpha_ref, w2_ref, b2_ref,
         o_ref, xbn_pad_ref, y1_pad_ref) = refs

    _, H, W, Cin = x_ref.shape
    D = o_ref.shape[2]

    # Cheap per-step border init (interior is fully overwritten below).
    _zero_border(xbn_pad_ref, H, W)
    _zero_border(y1_pad_ref, H, W)

    x = x_ref[0]                                             # (H, W, Cin) f32

    # ---- BN1 (inference affine, f32) written into the padded scratch ----
    xbn_pad_ref[1:H + 1, 1:W + 1, :] = x * s1_ref[...] + b1_ref[...]

    # ---- conv1 3x3, stride 1 (no HBM im2col) ----
    acc1 = _conv3x3_dots(xbn_pad_ref, w1_ref, H, W, cdtype)   # (H*W, D) f32

    # ---- PReLU (f32) ----
    y1 = jnp.where(acc1 > 0, acc1, alpha_ref[...] * acc1)

    # y1 stays in VMEM (zero-padded) for stage 2.
    y1_pad_ref[1:H + 1, 1:W + 1, :] = y1.reshape(H, W, D)

    # ---- conv2 3x3 (stride handled by the wrapper) + folded-BN2 bias ----
    res = _conv3x3_dots(y1_pad_ref, w2_ref, H, W, cdtype) + b2_ref[...]

    # ---- shortcut ----
    if project:
        sc = jnp.dot(x.reshape(H * W, Cin).astype(cdtype), wsc_ref[...],
                     preferred_element_type=jnp.float32) + bsc_ref[...]
    else:
        sc = x.reshape(H * W, D)                             # identity, exact f32

    o_ref[...] = (res + sc).reshape(1, H * W, D)


def _call_fused(x_nhwc, w1p, s1, b1, alpha, w2p, b2, wsc, bsc, cdtype):
    N, H, W, Cin = x_nhwc.shape
    D = w1p.shape[-1]
    project = wsc is not None
    if not project:
        assert Cin == D, "identity shortcut requires in_channel == depth"

    in_arrays = [x_nhwc, w1p, s1, b1, alpha, w2p, b2]
    in_specs = [
        pl.BlockSpec((1, H, W, Cin), lambda n: (n, 0, 0, 0)),
        pl.BlockSpec((9, Cin, D), lambda n: (0, 0, 0)),
        pl.BlockSpec((1, 1, Cin), lambda n: (0, 0, 0)),
        pl.BlockSpec((1, 1, Cin), lambda n: (0, 0, 0)),
        pl.BlockSpec((1, D), lambda n: (0, 0)),
        pl.BlockSpec((9, D, D), lambda n: (0, 0, 0)),
        pl.BlockSpec((1, D), lambda n: (0, 0)),
    ]
    if project:
        in_arrays += [wsc, bsc]
        in_specs += [
            pl.BlockSpec((Cin, D), lambda n: (0, 0)),
            pl.BlockSpec((1, D), lambda n: (0, 0)),
        ]

    kernel = functools.partial(_fused_kernel, project=project, cdtype=cdtype)
    out = pl.pallas_call(
        kernel,
        out_shape=jax.ShapeDtypeStruct((N, H * W, D), jnp.float32),
        grid_spec=pltpu.PrefetchScalarGridSpec(
            num_scalar_prefetch=0,
            grid=(N,),
            in_specs=in_specs,
            out_specs=pl.BlockSpec((1, H * W, D), lambda n: (n, 0, 0)),
            scratch_shapes=[
                pltpu.VMEM((H + 2, W + 2, Cin), jnp.float32),   # padded BN1(x)
                pltpu.VMEM((H + 2, W + 2, D), jnp.float32),     # padded PReLU out
            ],
        ),
        compiler_params=pltpu.CompilerParams(
            dimension_semantics=("parallel",),
            vmem_limit_bytes=64 * 1024 * 1024,
        ),
    )(*in_arrays)
    return out.reshape(N, H, W, D)


# ------------------------------ JAX wrapper --------------------------------

def init_params(key, in_channel, depth):
    ks = jax.random.split(key, 16)
    p = {
        'bn1_gamma': jax.random.uniform(ks[0], (in_channel,), minval=0.5, maxval=1.5),
        'bn1_beta': 0.1 * jax.random.normal(ks[1], (in_channel,)),
        'bn1_mean': 0.1 * jax.random.normal(ks[2], (in_channel,)),
        'bn1_var': jax.random.uniform(ks[3], (in_channel,), minval=0.5, maxval=1.5),
        'w1': 0.1 * jax.random.normal(ks[4], (depth, in_channel, 3, 3)),   # OIHW
        'prelu_alpha': jnp.full((depth,), 0.25) + 0.05 * jax.random.normal(ks[5], (depth,)),
        'w2': 0.1 * jax.random.normal(ks[6], (depth, depth, 3, 3)),        # OIHW
        'bn2_gamma': jax.random.uniform(ks[7], (depth,), minval=0.5, maxval=1.5),
        'bn2_beta': 0.1 * jax.random.normal(ks[8], (depth,)),
        'bn2_mean': 0.1 * jax.random.normal(ks[9], (depth,)),
        'bn2_var': jax.random.uniform(ks[10], (depth,), minval=0.5, maxval=1.5),
    }
    if in_channel != depth:
        p.update({
            'wsc': 0.1 * jax.random.normal(ks[11], (depth, in_channel, 1, 1)),
            'bnsc_gamma': jax.random.uniform(ks[12], (depth,), minval=0.5, maxval=1.5),
            'bnsc_beta': 0.1 * jax.random.normal(ks[13], (depth,)),
            'bnsc_mean': 0.1 * jax.random.normal(ks[14], (depth,)),
            'bnsc_var': jax.random.uniform(ks[15], (depth,), minval=0.5, maxval=1.5),
        })
    return p


def bottleneck_ir_forward(x_nchw, params, in_channel, depth, stride,
                          compute_dtype=jnp.bfloat16):
    x = jnp.transpose(x_nchw, (0, 2, 3, 1)).astype(jnp.float32)     # NHWC

    # BN1 affine (applied in-kernel, f32).
    s1 = params['bn1_gamma'] / jnp.sqrt(params['bn1_var'] + EPS)
    b1 = params['bn1_beta'] - params['bn1_mean'] * s1

    # conv1 weights packed as (tap, cin, depth).
    w1p = jnp.transpose(params['w1'], (2, 3, 1, 0)).reshape(9, in_channel, depth)
    alpha = params['prelu_alpha'].reshape(1, depth)

    # conv2 weights with BN2 scale folded into the output-channel columns.
    s2 = params['bn2_gamma'] / jnp.sqrt(params['bn2_var'] + EPS)
    b2 = params['bn2_beta'] - params['bn2_mean'] * s2
    w2p = jnp.transpose(params['w2'], (2, 3, 1, 0)).reshape(9, depth, depth)
    w2p = w2p * s2.reshape(1, 1, depth)

    if in_channel == depth:
        wsc = bsc = None
    else:
        ssc = params['bnsc_gamma'] / jnp.sqrt(params['bnsc_var'] + EPS)
        bsc = (params['bnsc_beta'] - params['bnsc_mean'] * ssc).reshape(1, depth)
        wsc = params['wsc'][:, :, 0, 0].T * ssc.reshape(1, depth)    # (Cin, depth)

    out = _call_fused(
        x,
        w1p.astype(compute_dtype),                  # GEMM operands in compute dtype
        s1.reshape(1, 1, in_channel).astype(jnp.float32),
        b1.reshape(1, 1, in_channel).astype(jnp.float32),
        alpha.astype(jnp.float32),
        w2p.astype(compute_dtype),
        b2.reshape(1, depth).astype(jnp.float32),
        None if wsc is None else wsc.astype(compute_dtype),
        None if bsc is None else bsc.astype(jnp.float32),
        compute_dtype,
    )                                                                # (N, H, W, depth)

    if stride > 1:
        # TODO(synk): subsample inside the kernel (strided sublane reads) to cut
        # conv2 MXU work and output HBM writeback ~4x on stride-2 blocks.
        out = out[:, ::stride, ::stride, :]
    return jnp.transpose(out, (0, 3, 1, 2))                          # NCHW


# ---------------------- pure-JAX reference (for checking) ------------------

def _reference(x_nchw, params, in_channel, depth, stride):
    def bn(x, g, b, m, v):
        sc = (g / jnp.sqrt(v + EPS))[None, :, None, None]
        return (x - m[None, :, None, None]) * sc + b[None, :, None, None]

    def conv(x, w, s, pad):
        return lax.conv_general_dilated(x, w, (s, s), ((pad, pad), (pad, pad)),
                                        dimension_numbers=('NCHW', 'OIHW', 'NCHW'))

    if in_channel == depth:
        shortcut = x_nchw[:, :, ::stride, ::stride]
    else:
        shortcut = bn(conv(x_nchw, params['wsc'], stride, 0),
                      params['bnsc_gamma'], params['bnsc_beta'],
                      params['bnsc_mean'], params['bnsc_var'])
    r = bn(x_nchw, params['bn1_gamma'], params['bn1_beta'],
           params['bn1_mean'], params['bn1_var'])
    r = conv(r, params['w1'], 1, 1)
    a = params['prelu_alpha'][None, :, None, None]
    r = jnp.where(r > 0, r, a * r)
    r = conv(r, params['w2'], stride, 1)
    r = bn(r, params['bn2_gamma'], params['bn2_beta'],
           params['bn2_mean'], params['bn2_var'])
    return r + shortcut


# --------------------------------- main ------------------------------------

if __name__ == "__main__":
    key = jax.random.PRNGKey(0)
    kx, kp = jax.random.split(key, 2)

    fwd = jax.jit(bottleneck_ir_forward, static_argnums=(2, 3, 4, 5))

    configs = [
        (4, 8, 2),   # in_channel != depth -> Conv1x1 + BN shortcut, stride 2
        (8, 8, 1),   # in_channel == depth -> MaxPool2d(1, 1) identity shortcut
    ]
    for idx, (cin, depth, stride) in enumerate(configs):
        params = init_params(jax.random.fold_in(kp, idx), cin, depth)
        x = jax.random.normal(jax.random.fold_in(kx, idx), (2, cin, 16, 16), jnp.float32)
        ref = np.asarray(_reference(x, params, cin, depth, stride))

        # Exact path (f32 GEMM operands): tight check of indexing / conv math.
        out32 = np.asarray(jax.block_until_ready(
            fwd(x, params, cin, depth, stride, jnp.float32)))
        if not np.allclose(out32, ref, rtol=1e-4, atol=1e-4):
            raise AssertionError(
                f"f32 mismatch for config {(cin, depth, stride)}: "
                f"max abs err = {np.max(np.abs(out32 - ref))}")

        # Production path (bf16 GEMM operands, f32 accumulation): looser
        # tolerance covers bf16 rounding through two stacked 3x3 convs.
        outbf = np.asarray(jax.block_until_ready(
            fwd(x, params, cin, depth, stride, jnp.bfloat16)))
        if not np.allclose(outbf, ref, rtol=5e-2, atol=1e-1):
            raise AssertionError(
                f"bf16 mismatch for config {(cin, depth, stride)}: "
                f"max abs err = {np.max(np.abs(outbf - ref))}")
    print("KERNEL_OK")
</pallas_src>

<mosaic_0001>
module attributes {stable_mosaic.version = 11 : i64} {
  func.func @_fused_kernel(%arg0: i32, %arg1: memref<1x16x16x4xf32, #tpu.memory_space<vmem>>, %arg2: memref<9x4x8xf32, #tpu.memory_space<vmem>>, %arg3: memref<1x1x4xf32, #tpu.memory_space<vmem>>, %arg4: memref<1x1x4xf32, #tpu.memory_space<vmem>>, %arg5: memref<1x8xf32, #tpu.memory_space<vmem>>, %arg6: memref<9x8x8xf32, #tpu.memory_space<vmem>>, %arg7: memref<1x8xf32, #tpu.memory_space<vmem>>, %arg8: memref<4x8xf32, #tpu.memory_space<vmem>>, %arg9: memref<1x8xf32, #tpu.memory_space<vmem>>, %arg10: memref<1x256x8xf32, #tpu.memory_space<vmem>>, %arg11: memref<18x18x4xf32, #tpu.memory_space<vmem>>, %arg12: memref<18x18x8xf32, #tpu.memory_space<vmem>>) attributes {dimension_semantics = [#tpu.dimension_semantics<parallel>], iteration_bounds = array<i64: 2>, scalar_prefetch = 0 : i64, scratch_operands = 2 : i64, tpu.core_type = #tpu.core_type<tc>, window_params = [{transform_indices = @transform_0, window_bounds = array<i64: 1, 16, 16, 4>}, {pipeline_mode = #tpu.pipeline_mode<synchronous>, transform_indices = @transform_1, window_bounds = array<i64: 9, 4, 8>}, {pipeline_mode = #tpu.pipeline_mode<synchronous>, transform_indices = @transform_2, window_bounds = array<i64: 1, 1, 4>}, {pipeline_mode = #tpu.pipeline_mode<synchronous>, transform_indices = @transform_3, window_bounds = array<i64: 1, 1, 4>}, {pipeline_mode = #tpu.pipeline_mode<synchronous>, transform_indices = @transform_4, window_bounds = array<i64: 1, 8>}, {pipeline_mode = #tpu.pipeline_mode<synchronous>, transform_indices = @transform_5, window_bounds = array<i64: 9, 8, 8>}, {pipeline_mode = #tpu.pipeline_mode<synchronous>, transform_indices = @transform_6, window_bounds = array<i64: 1, 8>}, {pipeline_mode = #tpu.pipeline_mode<synchronous>, transform_indices = @transform_7, window_bounds = array<i64: 4, 8>}, {pipeline_mode = #tpu.pipeline_mode<synchronous>, transform_indices = @transform_8, window_bounds = array<i64: 1, 8>}, {transform_indices = @transform_9, window_bounds = array<i64: 1, 256, 8>}]} {
    %cst = arith.constant 0.000000e+00 : f32
    %0 = vector.broadcast %cst : f32 to vector<1x18x4xf32>
    %c0 = arith.constant 0 : index
    %c0_0 = arith.constant 0 : index
    %c0_1 = arith.constant 0 : index
    %1 = vector.load %arg11[%c0, %c0_0, %c0_1] : memref<18x18x4xf32, #tpu.memory_space<vmem>>, vector<1x18x4xf32>
    tpu.vector_store %arg11[%c0, %c0_0, %c0_1], %0 {strides = array<i32>} : memref<18x18x4xf32, #tpu.memory_space<vmem>>, vector<1x18x4xf32>,
    %cst_2 = arith.constant 0.000000e+00 : f32
    %2 = vector.broadcast %cst_2 : f32 to vector<1x18x4xf32>
    %c17 = arith.constant 17 : index
    %c0_3 = arith.constant 0 : index
    %c0_4 = arith.constant 0 : index
    %3 = vector.load %arg11[%c17, %c0_3, %c0_4] : memref<18x18x4xf32, #tpu.memory_space<vmem>>, vector<1x18x4xf32>
    tpu.vector_store %arg11[%c17, %c0_3, %c0_4], %2 {strides = array<i32>} : memref<18x18x4xf32, #tpu.memory_space<vmem>>, vector<1x18x4xf32>,
    %cst_5 = arith.constant 0.000000e+00 : f32
    %4 = vector.broadcast %cst_5 : f32 to vector<18x1x4xf32>
    %c0_6 = arith.constant 0 : index
    %c0_7 = arith.constant 0 : index
    %c0_8 = arith.constant 0 : index
    %5 = vector.load %arg11[%c0_6, %c0_7, %c0_8] : memref<18x18x4xf32, #tpu.memory_space<vmem>>, vector<18x1x4xf32>
    tpu.vector_store %arg11[%c0_6, %c0_7, %c0_8], %4 {strides = array<i32>} : memref<18x18x4xf32, #tpu.memory_space<vmem>>, vector<18x1x4xf32>,
    %cst_9 = arith.constant 0.000000e+00 : f32
    %6 = vector.broadcast %cst_9 : f32 to vector<18x1x4xf32>
    %c0_10 = arith.constant 0 : index
    %c17_11 = arith.constant 17 : index
    %c0_12 = arith.constant 0 : index
    %7 = vector.load %arg11[%c0_10, %c17_11, %c0_12] : memref<18x18x4xf32, #tpu.memory_space<vmem>>, vector<18x1x4xf32>
    tpu.vector_store %arg11[%c0_10, %c17_11, %c0_12], %6 {strides = array<i32>} : memref<18x18x4xf32, #tpu.memory_space<vmem>>, vector<18x1x4xf32>,
    %cst_13 = arith.constant 0.000000e+00 : f32
    %8 = vector.broadcast %cst_13 : f32 to vector<1x18x8xf32>
    %c0_14 = arith.constant 0 : index
    %c0_15 = arith.constant 0 : index
    %c0_16 = arith.constant 0 : index
    %9 = vector.load %arg12[%c0_14, %c0_15, %c0_16] : memref<18x18x8xf32, #tpu.memory_space<vmem>>, vector<1x18x8xf32>
    tpu.vector_store %arg12[%c0_14, %c0_15, %c0_16], %8 {strides = array<i32>} : memref<18x18x8xf32, #tpu.memory_space<vmem>>, vector<1x18x8xf32>,
    %cst_17 = arith.constant 0.000000e+00 : f32
    %10 = vector.broadcast %cst_17 : f32 to vector<1x18x8xf32>
    %c17_18 = arith.constant 17 : index
    %c0_19 = arith.constant 0 : index
    %c0_20 = arith.constant 0 : index
    %11 = vector.load %arg12[%c17_18, %c0_19, %c0_20] : memref<18x18x8xf32, #tpu.memory_space<vmem>>, vector<1x18x8xf32>
    tpu.vector_store %arg12[%c17_18, %c0_19, %c0_20], %10 {strides = array<i32>} : memref<18x18x8xf32, #tpu.memory_space<vmem>>, vector<1x18x8xf32>,
    %cst_21 = arith.constant 0.000000e+00 : f32
    %12 = vector.broadcast %cst_21 : f32 to vector<18x1x8xf32>
    %c0_22 = arith.constant 0 : index
    %c0_23 = arith.constant 0 : index
    %c0_24 = arith.constant 0 : index
    %13 = vector.load %arg12[%c0_22, %c0_23, %c0_24] : memref<18x18x8xf32, #tpu.memory_space<vmem>>, vector<18x1x8xf32>
    tpu.vector_store %arg12[%c0_22, %c0_23, %c0_24], %12 {strides = array<i32>} : memref<18x18x8xf32, #tpu.memory_space<vmem>>, vector<18x1x8xf32>,
    %cst_25 = arith.constant 0.000000e+00 : f32
    %14 = vector.broadcast %cst_25 : f32 to vector<18x1x8xf32>
    %c0_26 = arith.constant 0 : index
    %c17_27 = arith.constant 17 : index
    %c0_28 = arith.constant 0 : index
    %15 = vector.load %arg12[%c0_26, %c17_27, %c0_28] : memref<18x18x8xf32, #tpu.memory_space<vmem>>, vector<18x1x8xf32>
    tpu.vector_store %arg12[%c0_26, %c17_27, %c0_28], %14 {strides = array<i32>} : memref<18x18x8xf32, #tpu.memory_space<vmem>>, vector<18x1x8xf32>,
    %c0_29 = arith.constant 0 : index
    %c0_30 = arith.constant 0 : index
    %c0_31 = arith.constant 0 : index
    %c0_32 = arith.constant 0 : index
    %16 = vector.load %arg1[%c0_29, %c0_30, %c0_31, %c0_32] : memref<1x16x16x4xf32, #tpu.memory_space<vmem>>, vector<1x16x16x4xf32>
    %17 = vector.shape_cast %16 : vector<1x16x16x4xf32> to vector<16x16x4xf32>
    %c0_33 = arith.constant 0 : index
    %c0_34 = arith.constant 0 : index
    %c0_35 = arith.constant 0 : index
    %18 = vector.load %arg3[%c0_33, %c0_34, %c0_35] : memref<1x1x4xf32, #tpu.memory_space<vmem>>, vector<1x1x4xf32>
    %19 = vector.broadcast %18 : vector<1x1x4xf32> to vector<16x16x4xf32>
    %20 = arith.mulf %17, %19 : vector<16x16x4xf32>
    %c0_36 = arith.constant 0 : index
    %c0_37 = arith.constant 0 : index
    %c0_38 = arith.constant 0 : index
    %21 = vector.load %arg4[%c0_36, %c0_37, %c0_38] : memref<1x1x4xf32, #tpu.memory_space<vmem>>, vector<1x1x4xf32>
    %22 = vector.broadcast %21 : vector<1x1x4xf32> to vector<16x16x4xf32>
    %23 = arith.addf %20, %22 : vector<16x16x4xf32>
    %c1 = arith.constant 1 : index
    %c1_39 = arith.constant 1 : index
    %c0_40 = arith.constant 0 : index
    %24 = vector.load %arg11[%c1, %c1_39, %c0_40] : memref<18x18x4xf32, #tpu.memory_space<vmem>>, vector<16x16x4xf32>
    tpu.vector_store %arg11[%c1, %c1_39, %c0_40], %23 {strides = array<i32>} : memref<18x18x4xf32, #tpu.memory_space<vmem>>, vector<16x16x4xf32>,
    %c0_41 = arith.constant 0 : index
    %c0_42 = arith.constant 0 : index
    %c0_43 = arith.constant 0 : index
    %25 = vector.load %arg11[%c0_41, %c0_42, %c0_43] : memref<18x18x4xf32, #tpu.memory_space<vmem>>, vector<16x16x4xf32>
    %26 = vector.shape_cast %25 : vector<16x16x4xf32> to vector<256x4xf32>
    %c0_44 = arith.constant 0 : index
    %c0_45 = arith.constant 0 : index
    %c0_46 = arith.constant 0 : index
    %27 = vector.load %arg2[%c0_44, %c0_45, %c0_46] : memref<9x4x8xf32, #tpu.memory_space<vmem>>, vector<1x4x8xf32>
    %28 = vector.shape_cast %27 : vector<1x4x8xf32> to vector<4x8xf32>
    %cst_47 = arith.constant dense<0.000000e+00> : vector<256x8xf32>
    %29 = tpu.matmul %26, %28, %cst_47 {dimension_numbers = #tpu.dot_dimension_numbers<[1], [0], [0], [1], [0, 0, 1, 1], [], []>} : vector<256x4xf32>, vector<4x8xf32>, vector<256x8xf32> -> vector<256x8xf32>
    %c0_48 = arith.constant 0 : index
    %c1_49 = arith.constant 1 : index
    %c0_50 = arith.constant 0 : index
    %30 = vector.load %arg11[%c0_48, %c1_49, %c0_50] : memref<18x18x4xf32, #tpu.memory_space<vmem>>, vector<16x16x4xf32>
    %31 = vector.shape_cast %30 : vector<16x16x4xf32> to vector<256x4xf32>
    %c1_51 = arith.constant 1 : index
    %c0_52 = arith.constant 0 : index
    %c0_53 = arith.constant 0 : index
    %32 = vector.load %arg2[%c1_51, %c0_52, %c0_53] : memref<9x4x8xf32, #tpu.memory_space<vmem>>, vector<1x4x8xf32>
    %33 = vector.shape_cast %32 : vector<1x4x8xf32> to vector<4x8xf32>
    %cst_54 = arith.constant dense<0.000000e+00> : vector<256x8xf32>
    %34 = tpu.matmul %31, %33, %cst_54 {dimension_numbers = #tpu.dot_dimension_numbers<[1], [0], [0], [1], [0, 0, 1, 1], [], []>} : vector<256x4xf32>, vector<4x8xf32>, vector<256x8xf32> -> vector<256x8xf32>
    %c0_55 = arith.constant 0 : index
    %c2 = arith.constant 2 : index
    %c0_56 = arith.constant 0 : index
    %35 = vector.load %arg11[%c0_55, %c2, %c0_56] : memref<18x18x4xf32, #tpu.memory_space<vmem>>, vector<16x16x4xf32>
    %36 = vector.shape_cast %35 : vector<16x16x4xf32> to vector<256x4xf32>
    %c2_57 = arith.constant 2 : index
    %c0_58 = arith.constant 0 : index
    %c0_59 = arith.constant 0 : index
    %37 = vector.load %arg2[%c2_57, %c0_58, %c0_59] : memref<9x4x8xf32, #tpu.memory_space<vmem>>, vector<1x4x8xf32>
    %38 = vector.shape_cast %37 : vector<1x4x8xf32> to vector<4x8xf32>
    %cst_60 = arith.constant dense<0.000000e+00> : vector<256x8xf32>
    %39 = tpu.matmul %36, %38, %cst_60 {dimension_numbers = #tpu.dot_dimension_numbers<[1], [0], [0], [1], [0, 0, 1, 1], [], []>} : vector<256x4xf32>, vector<4x8xf32>, vector<256x8xf32> -> vector<256x8xf32>
    %c1_61 = arith.constant 1 : index
    %c0_62 = arith.constant 0 : index
    %c0_63 = arith.constant 0 : index
    %40 = vector.load %arg11[%c1_61, %c0_62, %c0_63] : memref<18x18x4xf32, #tpu.memory_space<vmem>>, vector<16x16x4xf32>
    %41 = vector.shape_cast %40 : vector<16x16x4xf32> to vector<256x4xf32>
    %c3 = arith.constant 3 : index
    %c0_64 = arith.constant 0 : index
    %c0_65 = arith.constant 0 : index
    %42 = vector.load %arg2[%c3, %c0_64, %c0_65] : memref<9x4x8xf32, #tpu.memory_space<vmem>>, vector<1x4x8xf32>
    %43 = vector.shape_cast %42 : vector<1x4x8xf32> to vector<4x8xf32>
    %cst_66 = arith.constant dense<0.000000e+00> : vector<256x8xf32>
    %44 = tpu.matmul %41, %43, %cst_66 {dimension_numbers = #tpu.dot_dimension_numbers<[1], [0], [0], [1], [0, 0, 1, 1], [], []>} : vector<256x4xf32>, vector<4x8xf32>, vector<256x8xf32> -> vector<256x8xf32>
    %c1_67 = arith.constant 1 : index
    %c1_68 = arith.constant 1 : index
    %c0_69 = arith.constant 0 : index
    %45 = vector.load %arg11[%c1_67, %c1_68, %c0_69] : memref<18x18x4xf32, #tpu.memory_space<vmem>>, vector<16x16x4xf32>
    %46 = vector.shape_cast %45 : vector<16x16x4xf32> to vector<256x4xf32>
    %c4 = arith.constant 4 : index
    %c0_70 = arith.constant 0 : index
    %c0_71 = arith.constant 0 : index
    %47 = vector.load %arg2[%c4, %c0_70, %c0_71] : memref<9x4x8xf32, #tpu.memory_space<vmem>>, vector<1x4x8xf32>
    %48 = vector.shape_cast %47 : vector<1x4x8xf32> to vector<4x8xf32>
    %cst_72 = arith.constant dense<0.000000e+00> : vector<256x8xf32>
    %49 = tpu.matmul %46, %48, %cst_72 {dimension_numbers = #tpu.dot_dimension_numbers<[1], [0], [0], [1], [0, 0, 1, 1], [], []>} : vector<256x4xf32>, vector<4x8xf32>, vector<256x8xf32> -> vector<256x8xf32>
    %c1_73 = arith.constant 1 : index
    %c2_74 = arith.constant 2 : index
    %c0_75 = arith.constant 0 : index
    %50 = vector.load %arg11[%c1_73, %c2_74, %c0_75] : memref<18x18x4xf32, #tpu.memory_space<vmem>>, vector<16x16x4xf32>
    %51 = vector.shape_cast %50 : vector<16x16x4xf32> to vector<256x4xf32>
    %c5 = arith.constant 5 : index
    %c0_76 = arith.constant 0 : index
    %c0_77 = arith.constant 0 : index
    %52 = vector.load %arg2[%c5, %c0_76, %c0_77] : memref<9x4x8xf32, #tpu.memory_space<vmem>>, vector<1x4x8xf32>
    %53 = vector.shape_cast %52 : vector<1x4x8xf32> to vector<4x8xf32>
    %cst_78 = arith.constant dense<0.000000e+00> : vector<256x8xf32>
    %54 = tpu.matmul %51, %53, %cst_78 {dimension_numbers = #tpu.dot_dimension_numbers<[1], [0], [0], [1], [0, 0, 1, 1], [], []>} : vector<256x4xf32>, vector<4x8xf32>, vector<256x8xf32> -> vector<256x8xf32>
    %c2_79 = arith.constant 2 : index
    %c0_80 = arith.constant 0 : index
    %c0_81 = arith.constant 0 : index
    %55 = vector.load %arg11[%c2_79, %c0_80, %c0_81] : memref<18x18x4xf32, #tpu.memory_space<vmem>>, vector<16x16x4xf32>
    %56 = vector.shape_cast %55 : vector<16x16x4xf32> to vector<256x4xf32>
    %c6 = arith.constant 6 : index
    %c0_82 = arith.constant 0 : index
    %c0_83 = arith.constant 0 : index
    %57 = vector.load %arg2[%c6, %c0_82, %c0_83] : memref<9x4x8xf32, #tpu.memory_space<vmem>>, vector<1x4x8xf32>
    %58 = vector.shape_cast %57 : vector<1x4x8xf32> to vector<4x8xf32>
    %cst_84 = arith.constant dense<0.000000e+00> : vector<256x8xf32>
    %59 = tpu.matmul %56, %58, %cst_84 {dimension_numbers = #tpu.dot_dimension_numbers<[1], [0], [0], [1], [0, 0, 1, 1], [], []>} : vector<256x4xf32>, vector<4x8xf32>, vector<256x8xf32> -> vector<256x8xf32>
    %c2_85 = arith.constant 2 : index
    %c1_86 = arith.constant 1 : index
    %c0_87 = arith.constant 0 : index
    %60 = vector.load %arg11[%c2_85, %c1_86, %c0_87] : memref<18x18x4xf32, #tpu.memory_space<vmem>>, vector<16x16x4xf32>
    %61 = vector.shape_cast %60 : vector<16x16x4xf32> to vector<256x4xf32>
    %c7 = arith.constant 7 : index
    %c0_88 = arith.constant 0 : index
    %c0_89 = arith.constant 0 : index
    %62 = vector.load %arg2[%c7, %c0_88, %c0_89] : memref<9x4x8xf32, #tpu.memory_space<vmem>>, vector<1x4x8xf32>
    %63 = vector.shape_cast %62 : vector<1x4x8xf32> to vector<4x8xf32>
    %cst_90 = arith.constant dense<0.000000e+00> : vector<256x8xf32>
    %64 = tpu.matmul %61, %63, %cst_90 {dimension_numbers = #tpu.dot_dimension_numbers<[1], [0], [0], [1], [0, 0, 1, 1], [], []>} : vector<256x4xf32>, vector<4x8xf32>, vector<256x8xf32> -> vector<256x8xf32>
    %c2_91 = arith.constant 2 : index
    %c2_92 = arith.constant 2 : index
    %c0_93 = arith.constant 0 : index
    %65 = vector.load %arg11[%c2_91, %c2_92, %c0_93] : memref<18x18x4xf32, #tpu.memory_space<vmem>>, vector<16x16x4xf32>
    %66 = vector.shape_cast %65 : vector<16x16x4xf32> to vector<256x4xf32>
    %c8 = arith.constant 8 : index
    %c0_94 = arith.constant 0 : index
    %c0_95 = arith.constant 0 : index
    %67 = vector.load %arg2[%c8, %c0_94, %c0_95] : memref<9x4x8xf32, #tpu.memory_space<vmem>>, vector<1x4x8xf32>
    %68 = vector.shape_cast %67 : vector<1x4x8xf32> to vector<4x8xf32>
    %cst_96 = arith.constant dense<0.000000e+00> : vector<256x8xf32>
    %69 = tpu.matmul %66, %68, %cst_96 {dimension_numbers = #tpu.dot_dimension_numbers<[1], [0], [0], [1], [0, 0, 1, 1], [], []>} : vector<256x4xf32>, vector<4x8xf32>, vector<256x8xf32> -> vector<256x8xf32>
    %70 = arith.addf %29, %34 : vector<256x8xf32>
    %71 = arith.addf %39, %44 : vector<256x8xf32>
    %72 = arith.addf %49, %54 : vector<256x8xf32>
    %73 = arith.addf %59, %64 : vector<256x8xf32>
    %74 = arith.addf %70, %71 : vector<256x8xf32>
    %75 = arith.addf %72, %73 : vector<256x8xf32>
    %76 = arith.addf %74, %75 : vector<256x8xf32>
    %77 = arith.addf %76, %69 : vector<256x8xf32>
    %cst_97 = arith.constant 0.000000e+00 : f32
    %78 = vector.broadcast %cst_97 : f32 to vector<256x8xf32>
    %79 = arith.cmpf ogt, %77, %78 : vector<256x8xf32>
    %c0_98 = arith.constant 0 : index
    %c0_99 = arith.constant 0 : index
    %80 = vector.load %arg5[%c0_98, %c0_99] : memref<1x8xf32, #tpu.memory_space<vmem>>, vector<1x8xf32>
    %81 = vector.broadcast %80 : vector<1x8xf32> to vector<256x8xf32>
    %82 = arith.mulf %81, %77 : vector<256x8xf32>
    %83 = arith.select %79, %77, %82 : vector<256x8xi1>, vector<256x8xf32>
    %84 = vector.shape_cast %83 : vector<256x8xf32> to vector<16x16x8xf32>
    %c1_100 = arith.constant 1 : index
    %c1_101 = arith.constant 1 : index
    %c0_102 = arith.constant 0 : index
    %85 = vector.load %arg12[%c1_100, %c1_101, %c0_102] : memref<18x18x8xf32, #tpu.memory_space<vmem>>, vector<16x16x8xf32>
    tpu.vector_store %arg12[%c1_100, %c1_101, %c0_102], %84 {strides = array<i32>} : memref<18x18x8xf32, #tpu.memory_space<vmem>>, vector<16x16x8xf32>,
    %c0_103 = arith.constant 0 : index
    %c0_104 = arith.constant 0 : index
    %c0_105 = arith.constant 0 : index
    %86 = vector.load %arg12[%c0_103, %c0_104, %c0_105] : memref<18x18x8xf32, #tpu.memory_space<vmem>>, vector<16x16x8xf32>
    %87 = vector.shape_cast %86 : vector<16x16x8xf32> to vector<256x8xf32>
    %c0_106 = arith.constant 0 : index
    %c0_107 = arith.constant 0 : index
    %c0_108 = arith.constant 0 : index
    %88 = vector.load %arg6[%c0_106, %c0_107, %c0_108] : memref<9x8x8xf32, #tpu.memory_space<vmem>>, vector<1x8x8xf32>
    %89 = vector.shape_cast %88 : vector<1x8x8xf32> to vector<8x8xf32>
    %cst_109 = arith.constant dense<0.000000e+00> : vector<256x8xf32>
    %90 = tpu.matmul %87, %89, %cst_109 {dimension_numbers = #tpu.dot_dimension_numbers<[1], [0], [0], [1], [0, 0, 1, 1], [], []>} : vector<256x8xf32>, vector<8x8xf32>, vector<256x8xf32> -> vector<256x8xf32>
    %c0_110 = arith.constant 0 : index
    %c1_111 = arith.constant 1 : index
    %c0_112 = arith.constant 0 : index
    %91 = vector.load %arg12[%c0_110, %c1_111, %c0_112] : memref<18x18x8xf32, #tpu.memory_space<vmem>>, vector<16x16x8xf32>
    %92 = vector.shape_cast %91 : vector<16x16x8xf32> to vector<256x8xf32>
    %c1_113 = arith.constant 1 : index
    %c0_114 = arith.constant 0 : index
    %c0_115 = arith.constant 0 : index
    %93 = vector.load %arg6[%c1_113, %c0_114, %c0_115] : memref<9x8x8xf32, #tpu.memory_space<vmem>>, vector<1x8x8xf32>
    %94 = vector.shape_cast %93 : vector<1x8x8xf32> to vector<8x8xf32>
    %cst_116 = arith.constant dense<0.000000e+00> : vector<256x8xf32>
    %95 = tpu.matmul %92, %94, %cst_116 {dimension_numbers = #tpu.dot_dimension_numbers<[1], [0], [0], [1], [0, 0, 1, 1], [], []>} : vector<256x8xf32>, vector<8x8xf32>, vector<256x8xf32> -> vector<256x8xf32>
    %c0_117 = arith.constant 0 : index
    %c2_118 = arith.constant 2 : index
    %c0_119 = arith.constant 0 : index
    %96 = vector.load %arg12[%c0_117, %c2_118, %c0_119] : memref<18x18x8xf32, #tpu.memory_space<vmem>>, vector<16x16x8xf32>
    %97 = vector.shape_cast %96 : vector<16x16x8xf32> to vector<256x8xf32>
    %c2_120 = arith.constant 2 : index
    %c0_121 = arith.constant 0 : index
    %c0_122 = arith.constant 0 : index
    %98 = vector.load %arg6[%c2_120, %c0_121, %c0_122] : memref<9x8x8xf32, #tpu.memory_space<vmem>>, vector<1x8x8xf32>
    %99 = vector.shape_cast %98 : vector<1x8x8xf32> to vector<8x8xf32>
    %cst_123 = arith.constant dense<0.000000e+00> : vector<256x8xf32>
    %100 = tpu.matmul %97, %99, %cst_123 {dimension_numbers = #tpu.dot_dimension_numbers<[1], [0], [0], [1], [0, 0, 1, 1], [], []>} : vector<256x8xf32>, vector<8x8xf32>, vector<256x8xf32> -> vector<256x8xf32>
    %c1_124 = arith.constant 1 : index
    %c0_125 = arith.constant 0 : index
    %c0_126 = arith.constant 0 : index
    %101 = vector.load %arg12[%c1_124, %c0_125, %c0_126] : memref<18x18x8xf32, #tpu.memory_space<vmem>>, vector<16x16x8xf32>
    %102 = vector.shape_cast %101 : vector<16x16x8xf32> to vector<256x8xf32>
    %c3_127 = arith.constant 3 : index
    %c0_128 = arith.constant 0 : index
    %c0_129 = arith.constant 0 : index
    %103 = vector.load %arg6[%c3_127, %c0_128, %c0_129] : memref<9x8x8xf32, #tpu.memory_space<vmem>>, vector<1x8x8xf32>
    %104 = vector.shape_cast %103 : vector<1x8x8xf32> to vector<8x8xf32>
    %cst_130 = arith.constant dense<0.000000e+00> : vector<256x8xf32>
    %105 = tpu.matmul %102, %104, %cst_130 {dimension_numbers = #tpu.dot_dimension_numbers<[1], [0], [0], [1], [0, 0, 1, 1], [], []>} : vector<256x8xf32>, vector<8x8xf32>, vector<256x8xf32> -> vector<256x8xf32>
    %c1_131 = arith.constant 1 : index
    %c1_132 = arith.constant 1 : index
    %c0_133 = arith.constant 0 : index
    %106 = vector.load %arg12[%c1_131, %c1_132, %c0_133] : memref<18x18x8xf32, #tpu.memory_space<vmem>>, vector<16x16x8xf32>
    %107 = vector.shape_cast %106 : vector<16x16x8xf32> to vector<256x8xf32>
    %c4_134 = arith.constant 4 : index
    %c0_135 = arith.constant 0 : index
    %c0_136 = arith.constant 0 : index
    %108 = vector.load %arg6[%c4_134, %c0_135, %c0_136] : memref<9x8x8xf32, #tpu.memory_space<vmem>>, vector<1x8x8xf32>
    %109 = vector.shape_cast %108 : vector<1x8x8xf32> to vector<8x8xf32>
    %cst_137 = arith.constant dense<0.000000e+00> : vector<256x8xf32>
    %110 = tpu.matmul %107, %109, %cst_137 {dimension_numbers = #tpu.dot_dimension_numbers<[1], [0], [0], [1], [0, 0, 1, 1], [], []>} : vector<256x8xf32>, vector<8x8xf32>, vector<256x8xf32> -> vector<256x8xf32>
    %c1_138 = arith.constant 1 : index
    %c2_139 = arith.constant 2 : index
    %c0_140 = arith.constant 0 : index
    %111 = vector.load %arg12[%c1_138, %c2_139, %c0_140] : memref<18x18x8xf32, #tpu.memory_space<vmem>>, vector<16x16x8xf32>
    %112 = vector.shape_cast %111 : vector<16x16x8xf32> to vector<256x8xf32>
    %c5_141 = arith.constant 5 : index
    %c0_142 = arith.constant 0 : index
    %c0_143 = arith.constant 0 : index
    %113 = vector.load %arg6[%c5_141, %c0_142, %c0_143] : memref<9x8x8xf32, #tpu.memory_space<vmem>>, vector<1x8x8xf32>
    %114 = vector.shape_cast %113 : vector<1x8x8xf32> to vector<8x8xf32>
    %cst_144 = arith.constant dense<0.000000e+00> : vector<256x8xf32>
    %115 = tpu.matmul %112, %114, %cst_144 {dimension_numbers = #tpu.dot_dimension_numbers<[1], [0], [0], [1], [0, 0, 1, 1], [], []>} : vector<256x8xf32>, vector<8x8xf32>, vector<256x8xf32> -> vector<256x8xf32>
    %c2_145 = arith.constant 2 : index
    %c0_146 = arith.constant 0 : index
    %c0_147 = arith.constant 0 : index
    %116 = vector.load %arg12[%c2_145, %c0_146, %c0_147] : memref<18x18x8xf32, #tpu.memory_space<vmem>>, vector<16x16x8xf32>
    %117 = vector.shape_cast %116 : vector<16x16x8xf32> to vector<256x8xf32>
    %c6_148 = arith.constant 6 : index
    %c0_149 = arith.constant 0 : index
    %c0_150 = arith.constant 0 : index
    %118 = vector.load %arg6[%c6_148, %c0_149, %c0_150] : memref<9x8x8xf32, #tpu.memory_space<vmem>>, vector<1x8x8xf32>
    %119 = vector.shape_cast %118 : vector<1x8x8xf32> to vector<8x8xf32>
    %cst_151 = arith.constant dense<0.000000e+00> : vector<256x8xf32>
    %120 = tpu.matmul %117, %119, %cst_151 {dimension_numbers = #tpu.dot_dimension_numbers<[1], [0], [0], [1], [0, 0, 1, 1], [], []>} : vector<256x8xf32>, vector<8x8xf32>, vector<256x8xf32> -> vector<256x8xf32>
    %c2_152 = arith.constant 2 : index
    %c1_153 = arith.constant 1 : index
    %c0_154 = arith.constant 0 : index
    %121 = vector.load %arg12[%c2_152, %c1_153, %c0_154] : memref<18x18x8xf32, #tpu.memory_space<vmem>>, vector<16x16x8xf32>
    %122 = vector.shape_cast %121 : vector<16x16x8xf32> to vector<256x8xf32>
    %c7_155 = arith.constant 7 : index
    %c0_156 = arith.constant 0 : index
    %c0_157 = arith.constant 0 : index
    %123 = vector.load %arg6[%c7_155, %c0_156, %c0_157] : memref<9x8x8xf32, #tpu.memory_space<vmem>>, vector<1x8x8xf32>
    %124 = vector.shape_cast %123 : vector<1x8x8xf32> to vector<8x8xf32>
    %cst_158 = arith.constant dense<0.000000e+00> : vector<256x8xf32>
    %125 = tpu.matmul %122, %124, %cst_158 {dimension_numbers = #tpu.dot_dimension_numbers<[1], [0], [0], [1], [0, 0, 1, 1], [], []>} : vector<256x8xf32>, vector<8x8xf32>, vector<256x8xf32> -> vector<256x8xf32>
    %c2_159 = arith.constant 2 : index
    %c2_160 = arith.constant 2 : index
    %c0_161 = arith.constant 0 : index
    %126 = vector.load %arg12[%c2_159, %c2_160, %c0_161] : memref<18x18x8xf32, #tpu.memory_space<vmem>>, vector<16x16x8xf32>
    %127 = vector.shape_cast %126 : vector<16x16x8xf32> to vector<256x8xf32>
    %c8_162 = arith.constant 8 : index
    %c0_163 = arith.constant 0 : index
    %c0_164 = arith.constant 0 : index
    %128 = vector.load %arg6[%c8_162, %c0_163, %c0_164] : memref<9x8x8xf32, #tpu.memory_space<vmem>>, vector<1x8x8xf32>
    %129 = vector.shape_cast %128 : vector<1x8x8xf32> to vector<8x8xf32>
    %cst_165 = arith.constant dense<0.000000e+00> : vector<256x8xf32>
    %130 = tpu.matmul %127, %129, %cst_165 {dimension_numbers = #tpu.dot_dimension_numbers<[1], [0], [0], [1], [0, 0, 1, 1], [], []>} : vector<256x8xf32>, vector<8x8xf32>, vector<256x8xf32> -> vector<256x8xf32>
    %131 = arith.addf %90, %95 : vector<256x8xf32>
    %132 = arith.addf %100, %105 : vector<256x8xf32>
    %133 = arith.addf %110, %115 : vector<256x8xf32>
    %134 = arith.addf %120, %125 : vector<256x8xf32>
    %135 = arith.addf %131, %132 : vector<256x8xf32>
    %136 = arith.addf %133, %134 : vector<256x8xf32>
    %137 = arith.addf %135, %136 : vector<256x8xf32>
    %138 = arith.addf %137, %130 : vector<256x8xf32>
    %c0_166 = arith.constant 0 : index
    %c0_167 = arith.constant 0 : index
    %139 = vector.load %arg7[%c0_166, %c0_167] : memref<1x8xf32, #tpu.memory_space<vmem>>, vector<1x8xf32>
    %140 = vector.broadcast %139 : vector<1x8xf32> to vector<256x8xf32>
    %141 = arith.addf %138, %140 : vector<256x8xf32>
    %142 = vector.shape_cast %17 : vector<16x16x4xf32> to vector<256x4xf32>
    %c0_168 = arith.constant 0 : index
    %c0_169 = arith.constant 0 : index
    %143 = vector.load %arg8[%c0_168, %c0_169] : memref<4x8xf32, #tpu.memory_space<vmem>>, vector<4x8xf32>
    %cst_170 = arith.constant dense<0.000000e+00> : vector<256x8xf32>
    %144 = tpu.matmul %142, %143, %cst_170 {dimension_numbers = #tpu.dot_dimension_numbers<[1], [0], [0], [1], [0, 0, 1, 1], [], []>} : vector<256x4xf32>, vector<4x8xf32>, vector<256x8xf32> -> vector<256x8xf32>
    %c0_171 = arith.constant 0 : index
    %c0_172 = arith.constant 0 : index
    %145 = vector.load %arg9[%c0_171, %c0_172] : memref<1x8xf32, #tpu.memory_space<vmem>>, vector<1x8xf32>
    %146 = vector.broadcast %145 : vector<1x8xf32> to vector<256x8xf32>
    %147 = arith.addf %144, %146 : vector<256x8xf32>
    %148 = arith.addf %141, %147 : vector<256x8xf32>
    %149 = vector.shape_cast %148 : vector<256x8xf32> to vector<1x256x8xf32>
    %c0_173 = arith.constant 0 : index
    %c0_174 = arith.constant 0 : index
    %c0_175 = arith.constant 0 : index
    %150 = vector.load %arg10[%c0_173, %c0_174, %c0_175] : memref<1x256x8xf32, #tpu.memory_space<vmem>>, vector<1x256x8xf32>
    tpu.vector_store %arg10[%c0_173, %c0_174, %c0_175], %149 {strides = array<i32>} : memref<1x256x8xf32, #tpu.memory_space<vmem>>, vector<1x256x8xf32>,
    return
  }
  func.func @transform_0(%arg0: i32) -> (i32, i32, i32, i32) {
    %c0_i32 = arith.constant 0 : i32
    %c0_i32_0 = arith.constant 0 : i32
    %c0_i32_1 = arith.constant 0 : i32
    %c0_i32_2 = arith.constant 0 : i32
    return %arg0, %c0_i32, %c0_i32_0, %c0_i32_1 : i32, i32, i32, i32
  }
  func.func @transform_1(%arg0: i32) -> (i32, i32, i32) {
    %c0_i32 = arith.constant 0 : i32
    %c0_i32_0 = arith.constant 0 : i32
    %c0_i32_1 = arith.constant 0 : i32
    %c0_i32_2 = arith.constant 0 : i32
    return %c0_i32, %c0_i32_0, %c0_i32_1 : i32, i32, i32
  }
  func.func @transform_2(%arg0: i32) -> (i32, i32, i32) {
    %c0_i32 = arith.constant 0 : i32
    %c0_i32_0 = arith.constant 0 : i32
    %c0_i32_1 = arith.constant 0 : i32
    %c0_i32_2 = arith.constant 0 : i32
    return %c0_i32, %c0_i32_0, %c0_i32_1 : i32, i32, i32
  }
  func.func @transform_3(%arg0: i32) -> (i32, i32, i32) {
    %c0_i32 = arith.constant 0 : i32
    %c0_i32_0 = arith.constant 0 : i32
    %c0_i32_1 = arith.constant 0 : i32
    %c0_i32_2 = arith.constant 0 : i32
    return %c0_i32, %c0_i32_0, %c0_i32_1 : i32, i32, i32
  }
  func.func @transform_4(%arg0: i32) -> (i32, i32) {
    %c0_i32 = arith.constant 0 : i32
    %c0_i32_0 = arith.constant 0 : i32
    %c0_i32_1 = arith.constant 0 : i32
    return %c0_i32, %c0_i32_0 : i32, i32
  }
  func.func @transform_5(%arg0: i32) -> (i32, i32, i32) {
    %c0_i32 = arith.constant 0 : i32
    %c0_i32_0 = arith.constant 0 : i32
    %c0_i32_1 = arith.constant 0 : i32
    %c0_i32_2 = arith.constant 0 : i32
    return %c0_i32, %c0_i32_0, %c0_i32_1 : i32, i32, i32
  }
  func.func @transform_6(%arg0: i32) -> (i32, i32) {
    %c0_i32 = arith.constant 0 : i32
    %c0_i32_0 = arith.constant 0 : i32
    %c0_i32_1 = arith.constant 0 : i32
    return %c0_i32, %c0_i32_0 : i32, i32
  }
  func.func @transform_7(%arg0: i32) -> (i32, i32) {
    %c0_i32 = arith.constant 0 : i32
    %c0_i32_0 = arith.constant 0 : i32
    %c0_i32_1 = arith.constant 0 : i32
    return %c0_i32, %c0_i32_0 : i32, i32
  }
  func.func @transform_8(%arg0: i32) -> (i32, i32) {
    %c0_i32 = arith.constant 0 : i32
    %c0_i32_0 = arith.constant 0 : i32
    %c0_i32_1 = arith.constant 0 : i32
    return %c0_i32, %c0_i32_0 : i32, i32
  }
  func.func @transform_9(%arg0: i32) -> (i32, i32, i32) {
    %c0_i32 = arith.constant 0 : i32
    %c0_i32_0 = arith.constant 0 : i32
    %c0_i32_1 = arith.constant 0 : i32
    return %arg0, %c0_i32, %c0_i32_0 : i32, i32, i32
  }
}

</mosaic_0001>

<llo_original>
// kernel: bottleneck_ir_forward.1
$region0: #{bottleneck_ir_forward.1}
  #allocation0 [shape = 'u32[]', space=smem, size = 0x4, offset = 0x4, fixed_abs, tag = 'smem constant byte address 0x4 - core index']
  #allocation1 [shape = 'u32[144,128]{1,0:T(1,128)}', space=vmem, size = 0x12000, scoped, tag = 'internal scratch']
  #allocation2 [shape = 'f32[18,18,4]{2,1,0:T(8,128)}', space=vmem, size = 0x36000, scoped, tag = 'scratch operand']
  #allocation3 [shape = 'f32[18,18,8]{2,1,0:T(8,128)}', space=vmem, size = 0x36000, scoped, tag = 'scratch operand']
  %s0 = inlined_call_operand.hbm [shape: f32[2,16,16,4], index: 0, kind: input, shape index: {}]
  %s1 = inlined_call_operand.hbm [shape: f32[9,4,8], index: 1, kind: input, shape index: {}]
  %s2 = inlined_call_operand.hbm [shape: f32[1,1,4], index: 2, kind: input, shape index: {}]
  %s3 = inlined_call_operand.hbm [shape: f32[1,1,4], index: 3, kind: input, shape index: {}]
  %s4 = inlined_call_operand.hbm [shape: f32[1,8], index: 4, kind: input, shape index: {}]
  %s5 = inlined_call_operand.hbm [shape: f32[9,8,8], index: 5, kind: input, shape index: {}]
  %s6 = inlined_call_operand.hbm [shape: f32[1,8], index: 6, kind: input, shape index: {}]
  %s7 = inlined_call_operand.hbm [shape: f32[4,8], index: 7, kind: input, shape index: {}]
  %s8 = inlined_call_operand.hbm [shape: f32[1,8], index: 8, kind: input, shape index: {}]
  %s9 = inlined_call_operand.hbm [shape: f32[2,256,8], index: 9, kind: output, shape index: {}]
  %s10 = sld [smem:[#allocation0]]
  $region105: #{bottleneck_ir_forward.1} parent=0
    _
  %s12 = ssub.s32 1, %s10
  %s13 = scalar_select 0, %s12, %s10
  $region1: #{bottleneck_ir_forward.1} parent=0
    #allocation4 [shape = 'u8[262144]{0}', space=vmem, size = 0x40000, scoped, tag = 'input window, operand 0']
    #allocation5 [shape = 's32[2]{0}', space=sflag, size = 0x8, scoped, tag = 'scoped memory for bottleneck_ir_forward.1']
    #allocation6 [shape = 's32[2]{0}', space=sflag, size = 0x8, scoped, tag = 'scoped memory for bottleneck_ir_forward.1']
    #allocation7 [shape = 'u8[18432]{0}', space=vmem, size = 0x4800, scoped, tag = 'input window, operand 1, single buffered']
    #allocation8 [shape = 's32[1]{0}', space=sflag, size = 0x4, scoped, tag = 'scoped memory for bottleneck_ir_forward.1']
    #allocation9 [shape = 'u8[512]{0}', space=vmem, size = 0x400, scoped, tag = 'input window, operand 2, single buffered']
    #allocation10 [shape = 'u8[512]{0}', space=vmem, size = 0x400, scoped, tag = 'input window, operand 3, single buffered']
    #allocation11 [shape = 's32[1]{0}', space=sflag, size = 0x4, scoped, tag = 'scoped memory for bottleneck_ir_forward.1']
    #allocation12 [shape = 'u8[512]{0}', space=vmem, size = 0x400, scoped, tag = 'input window, operand 4, single buffered']
    #allocation13 [shape = 'u8[36864]{0}', space=vmem, size = 0x9000, scoped, tag = 'input window, operand 5, single buffered']
    #allocation14 [shape = 's32[1]{0}', space=sflag, size = 0x4, scoped, tag = 'scoped memory for bottleneck_ir_forward.1']
    #allocation15 [shape = 'u8[512]{0}', space=vmem, size = 0x400, scoped, tag = 'input window, operand 6, single buffered']
    #allocation16 [shape = 'u8[2048]{0}', space=vmem, size = 0x800, scoped, tag = 'input window, operand 7, single buffered']
    #allocation17 [shape = 's32[1]{0}', space=sflag, size = 0x4, scoped, tag = 'scoped memory for bottleneck_ir_forward.1']
    #allocation18 [shape = 'u8[512]{0}', space=vmem, size = 0x400, scoped, tag = 'input window, operand 8, single buffered']
    #allocation19 [shape = 'u8[262144]{0}', space=vmem, size = 0x40000, scoped, tag = 'output window, operand 0']
    %14 = vsyncpa [#allocation5], 0
    %s15 = scalar_lea.sflag [#allocation5], 1
    %16 = vsyncpa %s15, 0
    %17 = vsyncpa [#allocation8], 0
    %18 = vsyncpa [#allocation11], 0
    %19 = vsyncpa [#allocation14], 0
    %20 = vsyncpa [#allocation17], 0
    %21 = vsyncpa [#allocation6], 0
    %s22 = scalar_lea.sflag [#allocation6], 1
    %23 = vsyncpa %s22, 0
    loop: start=0, step=1, limit=4
    $region2: #{bottleneck_ir_forward.1} parent=1 // loop_pre_header
      _
    $region3: #{bottleneck_ir_forward.1} parent=1 // loop_header
      %s25 = sphi 0, %s29
      %p26 = scmp.ge.s32.totalorder %s25, 4
      %s35 = sphi 0, %s37
      %s38 = sphi 0, %s35
      %s39 = sphi 0, %s38
      %s55 = sphi 0, %s39
      %s59 = sphi 0, %s59
      %s61 = sphi 0, %s59
      %s62 = sphi 0, %s61
      %s76 = sphi 0, %s62
      %s80 = sphi 0, %s80
      %s82 = sphi 0, %s80
      %s83 = sphi 0, %s82
      %s97 = sphi 0, %s83
      %s101 = sphi 0, %s101
      %s103 = sphi 0, %s101
      %s104 = sphi 0, %s103
      %s118 = sphi 0, %s104
      %s122 = sphi 0, %s122
      %s124 = sphi 0, %s122
      %s125 = sphi 0, %s124
      %s139 = sphi 0, %s125
      %s143 = sphi 0, %s143
      %s145 = sphi 0, %s143
      %s146 = sphi 0, %s145
      %s160 = sphi 0, %s146
      %s164 = sphi 0, %s164
      %s166 = sphi 0, %s164
      %s167 = sphi 0, %s166
      %s181 = sphi 0, %s167
      %s185 = sphi 0, %s185
      %s187 = sphi 0, %s185
      %s188 = sphi 0, %s187
      %s202 = sphi 0, %s188
      %s206 = sphi 0, %s206
      %s208 = sphi 0, %s206
      %s209 = sphi 0, %s208
      %s223 = sphi 0, %s209
      %s229 = sphi 0, %s231
      %s232 = sphi 0, %s229
      %s233 = sphi 0, %s232
      %s249 = sphi 0, %s233
    $region4: #{bottleneck_ir_forward.1} parent=1 // loop_header_branch
      %28 = sbr.rel (%p26) target = $region8
    $region5: #{bottleneck_ir_forward.1} parent=1 // loop_body
      %s30 = ssub.s32 %s25, 1
      %s31 = ssub.s32 %s25, 2
      %s32 = sadd.s32 %s25, 1
      %s33 = ssub.s32 %s25, %s32
      %p34 = scmp.eq.s32.totalorder %s33, 0
      %s36 = sadd.s32 %s35, 1
      %s37 = scalar_select %p34, %s35, %s36
      %p40 = pneg %p34
      %p41 = scmp.eq.s32.totalorder %s25, 1
      %p42 = por %p40, %p41
      %p43 = scmp.ne.s32.totalorder %s35, %s38
      %p44 = scmp.eq.s32.totalorder %s25, 0
      %p45 = por %p43, %p44
      %p46 = scmp.ne.s32.totalorder %s35, %s38
      %p47 = scmp.eq.s32.totalorder %s30, 1
      %p48 = por %p46, %p47
      %p49 = scmp.ne.s32.totalorder %s38, %s39
      %p50 = scmp.eq.s32.totalorder %s30, 0
      %p51 = por %p49, %p50
      %p52 = scmp.ne.s32.totalorder %s38, %s39
      %p53 = scmp.eq.s32.totalorder %s31, 1
      %p54 = por %p52, %p53
      %p56 = scmp.ne.s32.totalorder %s39, %s55
      %p57 = scmp.eq.s32.totalorder %s31, 0
      %p58 = por %p56, %p57
      %s60 = sadd.s32 %s59, 1
      %p63 = scmp.eq.s32.totalorder %s25, 1
      %p64 = scmp.ne.s32.totalorder %s59, %s61
      %p65 = scmp.eq.s32.totalorder %s25, 0
      %p66 = por %p64, %p65
      %p67 = scmp.ne.s32.totalorder %s59, %s61
      %p68 = scmp.eq.s32.totalorder %s30, 1
      %p69 = por %p67, %p68
      %p70 = scmp.ne.s32.totalorder %s61, %s62
      %p71 = scmp.eq.s32.totalorder %s30, 0
      %p72 = por %p70, %p71
      %p73 = scmp.ne.s32.totalorder %s61, %s62
      %p74 = scmp.eq.s32.totalorder %s31, 1
      %p75 = por %p73, %p74
      %p77 = scmp.ne.s32.totalorder %s62, %s76
      %p78 = scmp.eq.s32.totalorder %s31, 0
      %p79 = por %p77, %p78
      %s81 = sadd.s32 %s80, 1
      %p84 = scmp.eq.s32.totalorder %s25, 1
      %p85 = scmp.ne.s32.totalorder %s80, %s82
      %p86 = scmp.eq.s32.totalorder %s25, 0
      %p87 = por %p85, %p86
      %p88 = scmp.ne.s32.totalorder %s80, %s82
      %p89 = scmp.eq.s32.totalorder %s30, 1
      %p90 = por %p88, %p89
      %p91 = scmp.ne.s32.totalorder %s82, %s83
      %p92 = scmp.eq.s32.totalorder %s30, 0
      %p93 = por %p91, %p92
      %p94 = scmp.ne.s32.totalorder %s82, %s83
      %p95 = scmp.eq.s32.totalorder %s31, 1
      %p96 = por %p94, %p95
      %p98 = scmp.ne.s32.totalorder %s83, %s97
      %p99 = scmp.eq.s32.totalorder %s31, 0
      %p100 = por %p98, %p99
      %s102 = sadd.s32 %s101, 1
      %p105 = scmp.eq.s32.totalorder %s25, 1
      %p106 = scmp.ne.s32.totalorder %s101, %s103
      %p107 = scmp.eq.s32.totalorder %s25, 0
      %p108 = por %p106, %p107
      %p109 = scmp.ne.s32.totalorder %s101, %s103
      %p110 = scmp.eq.s32.totalorder %s30, 1
      %p111 = por %p109, %p110
      %p112 = scmp.ne.s32.totalorder %s103, %s104
      %p113 = scmp.eq.s32.totalorder %s30, 0
      %p114 = por %p112, %p113
      %p115 = scmp.ne.s32.totalorder %s103, %s104
      %p116 = scmp.eq.s32.totalorder %s31, 1
      %p117 = por %p115, %p116
      %p119 = scmp.ne.s32.totalorder %s104, %s118
      %p120 = scmp.eq.s32.totalorder %s31, 0
      %p121 = por %p119, %p120
      %s123 = sadd.s32 %s122, 1
      %p126 = scmp.eq.s32.totalorder %s25, 1
      %p127 = scmp.ne.s32.totalorder %s122, %s124
      %p128 = scmp.eq.s32.totalorder %s25, 0
      %p129 = por %p127, %p128
      %p130 = scmp.ne.s32.totalorder %s122, %s124
      %p131 = scmp.eq.s32.totalorder %s30, 1
      %p132 = por %p130, %p131
      %p133 = scmp.ne.s32.totalorder %s124, %s125
      %p134 = scmp.eq.s32.totalorder %s30, 0
      %p135 = por %p133, %p134
      %p136 = scmp.ne.s32.totalorder %s124, %s125
      %p137 = scmp.eq.s32.totalorder %s31, 1
      %p138 = por %p136, %p137
      %p140 = scmp.ne.s32.totalorder %s125, %s139
      %p141 = scmp.eq.s32.totalorder %s31, 0
      %p142 = por %p140, %p141
      %s144 = sadd.s32 %s143, 1
      %p147 = scmp.eq.s32.totalorder %s25, 1
      %p148 = scmp.ne.s32.totalorder %s143, %s145
      %p149 = scmp.eq.s32.totalorder %s25, 0
      %p150 = por %p148, %p149
      %p151 = scmp.ne.s32.totalorder %s143, %s145
      %p152 = scmp.eq.s32.totalorder %s30, 1
      %p153 = por %p151, %p152
      %p154 = scmp.ne.s32.totalorder %s145, %s146
      %p155 = scmp.eq.s32.totalorder %s30, 0
      %p156 = por %p154, %p155
      %p157 = scmp.ne.s32.totalorder %s145, %s146
      %p158 = scmp.eq.s32.totalorder %s31, 1
      %p159 = por %p157, %p158
      %p161 = scmp.ne.s32.totalorder %s146, %s160
      %p162 = scmp.eq.s32.totalorder %s31, 0
      %p163 = por %p161, %p162
      %s165 = sadd.s32 %s164, 1
      %p168 = scmp.eq.s32.totalorder %s25, 1
      %p169 = scmp.ne.s32.totalorder %s164, %s166
      %p170 = scmp.eq.s32.totalorder %s25, 0
      %p171 = por %p169, %p170
      %p172 = scmp.ne.s32.totalorder %s164, %s166
      %p173 = scmp.eq.s32.totalorder %s30, 1
      %p174 = por %p172, %p173
      %p175 = scmp.ne.s32.totalorder %s166, %s167
      %p176 = scmp.eq.s32.totalorder %s30, 0
      %p177 = por %p175, %p176
      %p178 = scmp.ne.s32.totalorder %s166, %s167
      %p179 = scmp.eq.s32.totalorder %s31, 1
      %p180 = por %p178, %p179
      %p182 = scmp.ne.s32.totalorder %s167, %s181
      %p183 = scmp.eq.s32.totalorder %s31, 0
      %p184 = por %p182, %p183
      %s186 = sadd.s32 %s185, 1
      %p189 = scmp.eq.s32.totalorder %s25, 1
      %p190 = scmp.ne.s32.totalorder %s185, %s187
      %p191 = scmp.eq.s32.totalorder %s25, 0
      %p192 = por %p190, %p191
      %p193 = scmp.ne.s32.totalorder %s185, %s187
      %p194 = scmp.eq.s32.totalorder %s30, 1
      %p195 = por %p193, %p194
      %p196 = scmp.ne.s32.totalorder %s187, %s188
      %p197 = scmp.eq.s32.totalorder %s30, 0
      %p198 = por %p196, %p197
      %p199 = scmp.ne.s32.totalorder %s187, %s188
      %p200 = scmp.eq.s32.totalorder %s31, 1
      %p201 = por %p199, %p200
      %p203 = scmp.ne.s32.totalorder %s188, %s202
      %p204 = scmp.eq.s32.totalorder %s31, 0
      %p205 = por %p203, %p204
      %s207 = sadd.s32 %s206, 1
      %p210 = scmp.eq.s32.totalorder %s25, 1
      %p211 = scmp.ne.s32.totalorder %s206, %s208
      %p212 = scmp.eq.s32.totalorder %s25, 0
      %p213 = por %p211, %p212
      %p214 = scmp.ne.s32.totalorder %s206, %s208
      %p215 = scmp.eq.s32.totalorder %s30, 1
      %p216 = por %p214, %p215
      %p217 = scmp.ne.s32.totalorder %s208, %s209
      %p218 = scmp.eq.s32.totalorder %s30, 0
      %p219 = por %p217, %p218
      %p220 = scmp.ne.s32.totalorder %s208, %s209
      %p221 = scmp.eq.s32.totalorder %s31, 1
      %p222 = por %p220, %p221
      %p224 = scmp.ne.s32.totalorder %s209, %s223
      %p225 = scmp.eq.s32.totalorder %s31, 0
      %p226 = por %p224, %p225
      %s227 = ssub.s32 %s25, %s32
      %p228 = scmp.eq.s32.totalorder %s227, 0
      %s230 = sadd.s32 %s229, 1
      %s231 = scalar_select %p228, %s229, %s230
      %p234 = pneg %p228
      %p235 = scmp.eq.s32.totalorder %s25, 1
      %p236 = por %p234, %p235
      %p237 = scmp.ne.s32.totalorder %s229, %s232
      %p238 = scmp.eq.s32.totalorder %s25, 0
      %p239 = por %p237, %p238
      %p240 = scmp.ne.s32.totalorder %s229, %s232
      %p241 = scmp.eq.s32.totalorder %s30, 1
      %p242 = por %p240, %p241
      %p243 = scmp.ne.s32.totalorder %s232, %s233
      %p244 = scmp.eq.s32.totalorder %s30, 0
      %p245 = por %p243, %p244
      %p246 = scmp.ne.s32.totalorder %s232, %s233
      %p247 = scmp.eq.s32.totalorder %s31, 1
      %p248 = por %p246, %p247
      %p250 = scmp.ne.s32.totalorder %s233, %s249
      %p251 = scmp.eq.s32.totalorder %s31, 0
      %p252 = por %p250, %p251
      %p253 = scmp.le.s32.totalorder 1, %s25
      %p254 = scmp.lt.s32.totalorder %s25, 3
      %p255 = pnand %p253, %p254
      %p256 = pneg %p255
      // Predicated region
      $region9: #{bottleneck_ir_forward.1} parent=5 // pred_check
        _
      $region10: #{bottleneck_ir_forward.1} parent=5 // pred_check_branch
        %258 = sbr.rel (%p255) target = $region12
      $region11: #{bottleneck_ir_forward.1} parent=5 // pred_region
        %s259 = ssub.s32 %s25, 1
        // Predicated region
        $region13: #{bottleneck_ir_forward.1} parent=11 // pred_check
          %p260 = pneg %p72
        $region14: #{bottleneck_ir_forward.1} parent=11 // pred_check_branch
          %262 = sbr.rel (%p260) target = $region16
        $region15: #{bottleneck_ir_forward.1} parent=11 // pred_region
          %s264 = ssub.s32 576, 576
          %265 = vsyncadd [#allocation8], %s264
          %s266 = sshll.u32 [#allocation7], 4
          %s267 = int_to_ptr.vmem [resolvable:$true] %s266
          %272 = dma.hbm_to_vmem [thread:$0]  %s1, 576, %s267, [#allocation8], 64, 64, 4
        $region16: #{bottleneck_ir_forward.1} parent=11 // pred_fallthru
          _
        // Predicated region
        $region17: #{bottleneck_ir_forward.1} parent=11 // pred_check
          %p273 = pneg %p93
        $region18: #{bottleneck_ir_forward.1} parent=11 // pred_check_branch
          %275 = sbr.rel (%p273) target = $region20
        $region19: #{bottleneck_ir_forward.1} parent=11 // pred_region
          %s277 = ssub.s32 16, 16
          %278 = vsyncadd [#allocation8], %s277
          %s280 = sshll.u32 [#allocation9], 4
          %s281 = int_to_ptr.vmem [resolvable:$true] %s280
          %283 = dma.hbm_to_vmem [thread:$0]  %s2, 16, %s281, [#allocation8]
        $region20: #{bottleneck_ir_forward.1} parent=11 // pred_fallthru
          _
        // Predicated region
        $region21: #{bottleneck_ir_forward.1} parent=11 // pred_check
          %p284 = pneg %p114
        $region22: #{bottleneck_ir_forward.1} parent=11 // pred_check_branch
          %286 = sbr.rel (%p284) target = $region24
        $region23: #{bottleneck_ir_forward.1} parent=11 // pred_region
          %s288 = ssub.s32 16, 16
          %289 = vsyncadd [#allocation11], %s288
          %s291 = sshll.u32 [#allocation10], 4
          %s292 = int_to_ptr.vmem [resolvable:$true] %s291
          %294 = dma.hbm_to_vmem [thread:$0]  %s3, 16, %s292, [#allocation11]
        $region24: #{bottleneck_ir_forward.1} parent=11 // pred_fallthru
          _
        // Predicated region
        $region25: #{bottleneck_ir_forward.1} parent=11 // pred_check
          %p295 = pneg %p135
        $region26: #{bottleneck_ir_forward.1} parent=11 // pred_check_branch
          %297 = sbr.rel (%p295) target = $region28
        $region27: #{bottleneck_ir_forward.1} parent=11 // pred_region
          %s299 = ssub.s32 16, 16
          %300 = vsyncadd [#allocation11], %s299
          %s302 = sshll.u32 [#allocation12], 4
          %s303 = int_to_ptr.vmem [resolvable:$true] %s302
          %305 = dma.hbm_to_vmem [thread:$0]  %s4, 16, %s303, [#allocation11]
        $region28: #{bottleneck_ir_forward.1} parent=11 // pred_fallthru
          _
        // Predicated region
        $region29: #{bottleneck_ir_forward.1} parent=11 // pred_check
          %p306 = pneg %p156
        $region30: #{bottleneck_ir_forward.1} parent=11 // pred_check_branch
          %308 = sbr.rel (%p306) target = $region32
        $region31: #{bottleneck_ir_forward.1} parent=11 // pred_region
          %s310 = ssub.s32 1152, 1152
          %311 = vsyncadd [#allocation14], %s310
          %s312 = sshll.u32 [#allocation13], 4
          %s313 = int_to_ptr.vmem [resolvable:$true] %s312
          %318 = dma.hbm_to_vmem [thread:$0]  %s5, 1152, %s313, [#allocation14], 128, 128, 8
        $region32: #{bottleneck_ir_forward.1} parent=11 // pred_fallthru
          _
        // Predicated region
        $region33: #{bottleneck_ir_forward.1} parent=11 // pred_check
          %p319 = pneg %p177
        $region34: #{bottleneck_ir_forward.1} parent=11 // pred_check_branch
          %321 = sbr.rel (%p319) target = $region36
        $region35: #{bottleneck_ir_forward.1} parent=11 // pred_region
          %s323 = ssub.s32 16, 16
          %324 = vsyncadd [#allocation14], %s323
          %s326 = sshll.u32 [#allocation15], 4
          %s327 = int_to_ptr.vmem [resolvable:$true] %s326
          %329 = dma.hbm_to_vmem [thread:$0]  %s6, 16, %s327, [#allocation14]
        $region36: #{bottleneck_ir_forward.1} parent=11 // pred_fallthru
          _
        // Predicated region
        $region37: #{bottleneck_ir_forward.1} parent=11 // pred_check
          %p330 = pneg %p198
        $region38: #{bottleneck_ir_forward.1} parent=11 // pred_check_branch
          %332 = sbr.rel (%p330) target = $region40
        $region39: #{bottleneck_ir_forward.1} parent=11 // pred_region
          %s334 = ssub.s32 64, 64
          %335 = vsyncadd [#allocation17], %s334
          %s337 = sshll.u32 [#allocation16], 4
          %s338 = int_to_ptr.vmem [resolvable:$true] %s337
          %340 = dma.hbm_to_vmem [thread:$0]  %s7, 64, %s338, [#allocation17]
        $region40: #{bottleneck_ir_forward.1} parent=11 // pred_fallthru
          _
        // Predicated region
        $region41: #{bottleneck_ir_forward.1} parent=11 // pred_check
          %p341 = pneg %p219
        $region42: #{bottleneck_ir_forward.1} parent=11 // pred_check_branch
          %343 = sbr.rel (%p341) target = $region44
        $region43: #{bottleneck_ir_forward.1} parent=11 // pred_region
          %s345 = ssub.s32 16, 16
          %346 = vsyncadd [#allocation17], %s345
          %s348 = sshll.u32 [#allocation18], 4
          %s349 = int_to_ptr.vmem [resolvable:$true] %s348
          %351 = dma.hbm_to_vmem [thread:$0]  %s8, 16, %s349, [#allocation17]
        $region44: #{bottleneck_ir_forward.1} parent=11 // pred_fallthru
          _
      $region12: #{bottleneck_ir_forward.1} parent=5 // pred_fallthru
        _
      %p352 = scmp.lt.s32.totalorder %s25, 2
      // Predicated region
      $region45: #{bottleneck_ir_forward.1} parent=5 // pred_check
        %p353 = pneg %p352
      $region46: #{bottleneck_ir_forward.1} parent=5 // pred_check_branch
        %355 = sbr.rel (%p353) target = $region48
      $region47: #{bottleneck_ir_forward.1} parent=5 // pred_region
        // Predicated region
        $region49: #{bottleneck_ir_forward.1} parent=47 // pred_check
          %p356 = pneg %p45
        $region50: #{bottleneck_ir_forward.1} parent=47 // pred_check_branch
          %358 = sbr.rel (%p356) target = $region52
        $region51: #{bottleneck_ir_forward.1} parent=47 // pred_region
          %s359 = sand.u32 %s35, 1
          %s360 = scalar_lea.sflag [#allocation5], %s359
          %s361 = sand.u32 %s35, 1
          %s362 = smul.addr %s361, 256
          %s363 = scalar_lea.vmem [#allocation4], %s362
          %s365 = ssub.s32 4096, 4096
          %366 = vsyncadd %s360, %s365
          %s367 = smul.addr %s25, 32
          %s368 = smul.addr %s367, 128
          %s369 = scalar_lea.hbm %s0, %s368
          %s370 = sshll.u32 %s363, 4
          %s371 = int_to_ptr.vmem [resolvable:$true] %s370
          %376 = dma.hbm_to_vmem [thread:$0]  %s369, 4096, %s371, %s360, 128, 128, 8
        $region52: #{bottleneck_ir_forward.1} parent=47 // pred_fallthru
          _
      $region48: #{bottleneck_ir_forward.1} parent=5 // pred_fallthru
        _
      %p377 = scmp.le.s32.totalorder 1, %s25
      %p378 = scmp.lt.s32.totalorder %s25, 3
      %p379 = pnand %p377, %p378
      %p380 = pneg %p379
      // Predicated region
      $region53: #{bottleneck_ir_forward.1} parent=5 // pred_check
        _
      $region54: #{bottleneck_ir_forward.1} parent=5 // pred_check_branch
        %382 = sbr.rel (%p379) target = $region56
      $region55: #{bottleneck_ir_forward.1} parent=5 // pred_region
        %s383 = ssub.s32 %s25, 1
        %s384 = sand.u32 %s38, 1
        %s385 = scalar_lea.sflag [#allocation5], %s384
        %s386 = sand.u32 %s38, 1
        %s387 = smul.addr %s386, 256
        %s388 = scalar_lea.vmem [#allocation4], %s387
        // Predicated region
        $region57: #{bottleneck_ir_forward.1} parent=55 // pred_check
          %p389 = pneg %p51
        $region58: #{bottleneck_ir_forward.1} parent=55 // pred_check_branch
          %391 = sbr.rel (%p389) target = $region60
        $region59: #{bottleneck_ir_forward.1} parent=55 // pred_region
          %392 = dma.done %s385, 4096
        $region60: #{bottleneck_ir_forward.1} parent=55 // pred_fallthru
          _
        // Predicated region
        $region61: #{bottleneck_ir_forward.1} parent=55 // pred_check
          %p393 = pneg %p72
        $region62: #{bottleneck_ir_forward.1} parent=55 // pred_check_branch
          %395 = sbr.rel (%p393) target = $region64
        $region63: #{bottleneck_ir_forward.1} parent=55 // pred_region
          %396 = dma.done [#allocation8], 576
        $region64: #{bottleneck_ir_forward.1} parent=55 // pred_fallthru
          _
        // Predicated region
        $region65: #{bottleneck_ir_forward.1} parent=55 // pred_check
          %p397 = pneg %p93
        $region66: #{bottleneck_ir_forward.1} parent=55 // pred_check_branch
          %399 = sbr.rel (%p397) target = $region68
        $region67: #{bottleneck_ir_forward.1} parent=55 // pred_region
          %400 = dma.done [#allocation8], 16
        $region68: #{bottleneck_ir_forward.1} parent=55 // pred_fallthru
          _
        // Predicated region
        $region69: #{bottleneck_ir_forward.1} parent=55 // pred_check
          %p401 = pneg %p114
        $region70: #{bottleneck_ir_forward.1} parent=55 // pred_check_branch
          %403 = sbr.rel (%p401) target = $region72
        $region71: #{bottleneck_ir_forward.1} parent=55 // pred_region
          %404 = dma.done [#allocation11], 16
        $region72: #{bottleneck_ir_forward.1} parent=55 // pred_fallthru
          _
        // Predicated region
        $region73: #{bottleneck_ir_forward.1} parent=55 // pred_check
          %p405 = pneg %p135
        $region74: #{bottleneck_ir_forward.1} parent=55 // pred_check_branch
          %407 = sbr.rel (%p405) target = $region76
        $region75: #{bottleneck_ir_forward.1} parent=55 // pred_region
          %408 = dma.done [#allocation11], 16
        $region76: #{bottleneck_ir_forward.1} parent=55 // pred_fallthru
          _
        // Predicated region
        $region77: #{bottleneck_ir_forward.1} parent=55 // pred_check
          %p409 = pneg %p156
        $region78: #{bottleneck_ir_forward.1} parent=55 // pred_check_branch
          %411 = sbr.rel (%p409) target = $region80
        $region79: #{bottleneck_ir_forward.1} parent=55 // pred_region
          %412 = dma.done [#allocation14], 1152
        $region80: #{bottleneck_ir_forward.1} parent=55 // pred_fallthru
          _
        // Predicated region
        $region81: #{bottleneck_ir_forward.1} parent=55 // pred_check
          %p413 = pneg %p177
        $region82: #{bottleneck_ir_forward.1} parent=55 // pred_check_branch
          %415 = sbr.rel (%p413) target = $region84
        $region83: #{bottleneck_ir_forward.1} parent=55 // pred_region
          %416 = dma.done [#allocation14], 16
        $region84: #{bottleneck_ir_forward.1} parent=55 // pred_fallthru
          _
        // Predicated region
        $region85: #{bottleneck_ir_forward.1} parent=55 // pred_check
          %p417 = pneg %p198
        $region86: #{bottleneck_ir_forward.1} parent=55 // pred_check_branch
          %419 = sbr.rel (%p417) target = $region88
        $region87: #{bottleneck_ir_forward.1} parent=55 // pred_region
          %420 = dma.done [#allocation17], 64
        $region88: #{bottleneck_ir_forward.1} parent=55 // pred_fallthru
          _
        // Predicated region
        $region89: #{bottleneck_ir_forward.1} parent=55 // pred_check
          %p421 = pneg %p219
        $region90: #{bottleneck_ir_forward.1} parent=55 // pred_check_branch
          %423 = sbr.rel (%p421) target = $region92
        $region91: #{bottleneck_ir_forward.1} parent=55 // pred_region
          %424 = dma.done [#allocation17], 16
        $region92: #{bottleneck_ir_forward.1} parent=55 // pred_fallthru
          _
        %s425 = sand.u32 %s38, 1
        %s426 = scalar_lea.sflag [#allocation5], %s425
        %s427 = sand.u32 %s38, 1
        %s428 = smul.addr %s427, 256
        %s429 = scalar_lea.vmem [#allocation4], %s428
        %p430 = pneg %p51
        %p431 = pneg %p48
        %p432 = pneg %p72
        %p433 = pneg %p69
        %p434 = pneg %p93
        %p435 = pneg %p90
        %p436 = pneg %p114
        %p437 = pneg %p111
        %p438 = pneg %p135
        %p439 = pneg %p132
        %p440 = pneg %p156
        %p441 = pneg %p153
        %p442 = pneg %p177
        %p443 = pneg %p174
        %p444 = pneg %p198
        %p445 = pneg %p195
        %p446 = pneg %p219
        %p447 = pneg %p216
        %p448 = pneg %p245
        %p449 = pneg %p242
        %s450 = sand.u32 %s232, 1
        %s451 = scalar_lea.sflag [#allocation6], %s450
        %s452 = sand.u32 %s232, 1
        %s453 = smul.addr %s452, 256
        %s454 = scalar_lea.vmem [#allocation19], %s453
        %vm455 = vcmask 31744
        %456 = vst.msk [vmem:[#allocation2] sm:$0xff] %vm455, 0.0
        %457 = vst.msk [vmem:[#allocation2 + $0x8] sm:$0xff] %vm455, 0.0
        %vm458 = vcmask 25600
        %459 = vst.msk [vmem:[#allocation2 + $0x10] sm:$0x3] %vm458, 0.0
        %s460 = scalar_lea.vmem [#allocation2], 408
        %461 = vst.msk [vmem:[%s460] sm:$0xff] %vm455, 0.0
        %462 = vst.msk [vmem:[%s460 + $0x8] sm:$0xff] %vm455, 0.0
        %463 = vst.msk [vmem:[%s460 + $0x10] sm:$0x3] %vm458, 0.0
        %vm464 = vcmask 24576
        %465 = vst.msk [vmem:[#allocation2] sm:$0x1] %vm464, 0.0
        %466 = vst.msk [vmem:[#allocation2 + $0x18] sm:$0x1] %vm464, 0.0
        %467 = vst.msk [vmem:[#allocation2 + $0x30] sm:$0x1] %vm464, 0.0
        %468 = vst.msk [vmem:[#allocation2 + $0x48] sm:$0x1] %vm464, 0.0
        %469 = vst.msk [vmem:[#allocation2 + $0x60] sm:$0x1] %vm464, 0.0
        %470 = vst.msk [vmem:[#allocation2 + $0x78] sm:$0x1] %vm464, 0.0
        %471 = vst.msk [vmem:[#allocation2 + $0x90] sm:$0x1] %vm464, 0.0
        %472 = vst.msk [vmem:[#allocation2 + $0xa8] sm:$0x1] %vm464, 0.0
        %473 = vst.msk [vmem:[#allocation2 + $0xc0] sm:$0x1] %vm464, 0.0
        %474 = vst.msk [vmem:[#allocation2 + $0xd8] sm:$0x1] %vm464, 0.0
        %475 = vst.msk [vmem:[#allocation2 + $0xf0] sm:$0x1] %vm464, 0.0
        %476 = vst.msk [vmem:[#allocation2 + $0x108] sm:$0x1] %vm464, 0.0
        %477 = vst.msk [vmem:[#allocation2 + $0x120] sm:$0x1] %vm464, 0.0
        %478 = vst.msk [vmem:[#allocation2 + $0x138] sm:$0x1] %vm464, 0.0
        %479 = vst.msk [vmem:[#allocation2 + $0x150] sm:$0x1] %vm464, 0.0
        %480 = vst.msk [vmem:[#allocation2 + $0x168] sm:$0x1] %vm464, 0.0
        %481 = vst.msk [vmem:[#allocation2 + $0x180] sm:$0x1] %vm464, 0.0
        %482 = vst.msk [vmem:[#allocation2 + $0x198] sm:$0x1] %vm464, 0.0
        %483 = vst.msk [vmem:[#allocation2 + $0x11] sm:$0x1] %vm464, 0.0
        %484 = vst.msk [vmem:[#allocation2 + $0x29] sm:$0x1] %vm464, 0.0
        %485 = vst.msk [vmem:[#allocation2 + $0x41] sm:$0x1] %vm464, 0.0
        %486 = vst.msk [vmem:[#allocation2 + $0x59] sm:$0x1] %vm464, 0.0
        %487 = vst.msk [vmem:[#allocation2 + $0x71] sm:$0x1] %vm464, 0.0
        %488 = vst.msk [vmem:[#allocation2 + $0x89] sm:$0x1] %vm464, 0.0
        %489 = vst.msk [vmem:[#allocation2 + $0xa1] sm:$0x1] %vm464, 0.0
        %490 = vst.msk [vmem:[#allocation2 + $0xb9] sm:$0x1] %vm464, 0.0
        %491 = vst.msk [vmem:[#allocation2 + $0xd1] sm:$0x1] %vm464, 0.0
        %492 = vst.msk [vmem:[#allocation2 + $0xe9] sm:$0x1] %vm464, 0.0
        %493 = vst.msk [vmem:[#allocation2 + $0x101] sm:$0x1] %vm464, 0.0
        %494 = vst.msk [vmem:[#allocation2 + $0x119] sm:$0x1] %vm464, 0.0
        %495 = vst.msk [vmem:[#allocation2 + $0x131] sm:$0x1] %vm464, 0.0
        %496 = vst.msk [vmem:[#allocation2 + $0x149] sm:$0x1] %vm464, 0.0
        %497 = vst.msk [vmem:[#allocation2 + $0x161] sm:$0x1] %vm464, 0.0
        %498 = vst.msk [vmem:[#allocation2 + $0x179] sm:$0x1] %vm464, 0.0
        %499 = vst.msk [vmem:[#allocation2 + $0x191] sm:$0x1] %vm464, 0.0
        %500 = vst.msk [vmem:[#allocation2 + $0x1a9] sm:$0x1] %vm464, 0.0
        %vm501 = vcmask 64512
        %502 = vst.msk [vmem:[#allocation3] sm:$0xff] %vm501, 0.0
        %503 = vst.msk [vmem:[#allocation3 + $0x8] sm:$0xff] %vm501, 0.0
        %vm504 = vcmask 58368
        %505 = vst.msk [vmem:[#allocation3 + $0x10] sm:$0x3] %vm504, 0.0
        %s506 = scalar_lea.vmem [#allocation3], 408
        %507 = vst.msk [vmem:[%s506] sm:$0xff] %vm501, 0.0
        %508 = vst.msk [vmem:[%s506 + $0x8] sm:$0xff] %vm501, 0.0
        %509 = vst.msk [vmem:[%s506 + $0x10] sm:$0x3] %vm504, 0.0
        %vm510 = vcmask 57344
        %511 = vst.msk [vmem:[#allocation3] sm:$0x1] %vm510, 0.0
        %512 = vst.msk [vmem:[#allocation3 + $0x18] sm:$0x1] %vm510, 0.0
        %513 = vst.msk [vmem:[#allocation3 + $0x30] sm:$0x1] %vm510, 0.0
        %514 = vst.msk [vmem:[#allocation3 + $0x48] sm:$0x1] %vm510, 0.0
        %515 = vst.msk [vmem:[#allocation3 + $0x60] sm:$0x1] %vm510, 0.0
        %516 = vst.msk [vmem:[#allocation3 + $0x78] sm:$0x1] %vm510, 0.0
        %517 = vst.msk [vmem:[#allocation3 + $0x90] sm:$0x1] %vm510, 0.0
        %518 = vst.msk [vmem:[#allocation3 + $0xa8] sm:$0x1] %vm510, 0.0
        %519 = vst.msk [vmem:[#allocation3 + $0xc0] sm:$0x1] %vm510, 0.0
        %520 = vst.msk [vmem:[#allocation3 + $0xd8] sm:$0x1] %vm510, 0.0
        %521 = vst.msk [vmem:[#allocation3 + $0xf0] sm:$0x1] %vm510, 0.0
        %522 = vst.msk [vmem:[#allocation3 + $0x108] sm:$0x1] %vm510, 0.0
        %523 = vst.msk [vmem:[#allocation3 + $0x120] sm:$0x1] %vm510, 0.0
        %524 = vst.msk [vmem:[#allocation3 + $0x138] sm:$0x1] %vm510, 0.0
        %525 = vst.msk [vmem:[#allocation3 + $0x150] sm:$0x1] %vm510, 0.0
        %526 = vst.msk [vmem:[#allocation3 + $0x168] sm:$0x1] %vm510, 0.0
        %527 = vst.msk [vmem:[#allocation3 + $0x180] sm:$0x1] %vm510, 0.0
        %528 = vst.msk [vmem:[#allocation3 + $0x198] sm:$0x1] %vm510, 0.0
        %529 = vst.msk [vmem:[#allocation3 + $0x11] sm:$0x1] %vm510, 0.0
        %530 = vst.msk [vmem:[#allocation3 + $0x29] sm:$0x1] %vm510, 0.0
        %531 = vst.msk [vmem:[#allocation3 + $0x41] sm:$0x1] %vm510, 0.0
        %532 = vst.msk [vmem:[#allocation3 + $0x59] sm:$0x1] %vm510, 0.0
        %533 = vst.msk [vmem:[#allocation3 + $0x71] sm:$0x1] %vm510, 0.0
        %534 = vst.msk [vmem:[#allocation3 + $0x89] sm:$0x1] %vm510, 0.0
        %535 = vst.msk [vmem:[#allocation3 + $0xa1] sm:$0x1] %vm510, 0.0
        %536 = vst.msk [vmem:[#allocation3 + $0xb9] sm:$0x1] %vm510, 0.0
        %537 = vst.msk [vmem:[#allocation3 + $0xd1] sm:$0x1] %vm510, 0.0
        %538 = vst.msk [vmem:[#allocation3 + $0xe9] sm:$0x1] %vm510, 0.0
        %539 = vst.msk [vmem:[#allocation3 + $0x101] sm:$0x1] %vm510, 0.0
        %540 = vst.msk [vmem:[#allocation3 + $0x119] sm:$0x1] %vm510, 0.0
        %541 = vst.msk [vmem:[#allocation3 + $0x131] sm:$0x1] %vm510, 0.0
        %542 = vst.msk [vmem:[#allocation3 + $0x149] sm:$0x1] %vm510, 0.0
        %543 = vst.msk [vmem:[#allocation3 + $0x161] sm:$0x1] %vm510, 0.0
        %544 = vst.msk [vmem:[#allocation3 + $0x179] sm:$0x1] %vm510, 0.0
        %545 = vst.msk [vmem:[#allocation3 + $0x191] sm:$0x1] %vm510, 0.0
        %546 = vst.msk [vmem:[#allocation3 + $0x1a9] sm:$0x1] %vm510, 0.0
        %v547 = vld [vmem:[%s388] sm:$0xff]
        %v548 = vld [vmem:[%s388 + $0x8] sm:$0xff]
        %v549 = vld [vmem:[%s388 + $0x10] sm:$0xff]
        %v550 = vld [vmem:[%s388 + $0x18] sm:$0xff]
        %v551 = vld [vmem:[%s388 + $0x20] sm:$0xff]
        %v552 = vld [vmem:[%s388 + $0x28] sm:$0xff]
        %v553 = vld [vmem:[%s388 + $0x30] sm:$0xff]
        %v554 = vld [vmem:[%s388 + $0x38] sm:$0xff]
        %v555 = vld [vmem:[%s388 + $0x40] sm:$0xff]
        %v556 = vld [vmem:[%s388 + $0x48] sm:$0xff]
        %v557 = vld [vmem:[%s388 + $0x50] sm:$0xff]
        %v558 = vld [vmem:[%s388 + $0x58] sm:$0xff]
        %v559 = vld [vmem:[%s388 + $0x60] sm:$0xff]
        %v560 = vld [vmem:[%s388 + $0x68] sm:$0xff]
        %v561 = vld [vmem:[%s388 + $0x70] sm:$0xff]
        %v562 = vld [vmem:[%s388 + $0x78] sm:$0xff]
        %v563 = vld [vmem:[%s388 + $0x80] sm:$0xff]
        %v564 = vld [vmem:[%s388 + $0x88] sm:$0xff]
        %v565 = vld [vmem:[%s388 + $0x90] sm:$0xff]
        %v566 = vld [vmem:[%s388 + $0x98] sm:$0xff]
        %v567 = vld [vmem:[%s388 + $0xa0] sm:$0xff]
        %v568 = vld [vmem:[%s388 + $0xa8] sm:$0xff]
        %v569 = vld [vmem:[%s388 + $0xb0] sm:$0xff]
        %v570 = vld [vmem:[%s388 + $0xb8] sm:$0xff]
        %v571 = vld [vmem:[%s388 + $0xc0] sm:$0xff]
        %v572 = vld [vmem:[%s388 + $0xc8] sm:$0xff]
        %v573 = vld [vmem:[%s388 + $0xd0] sm:$0xff]
        %v574 = vld [vmem:[%s388 + $0xd8] sm:$0xff]
        %v575 = vld [vmem:[%s388 + $0xe0] sm:$0xff]
        %v576 = vld [vmem:[%s388 + $0xe8] sm:$0xff]
        %v577 = vld [vmem:[%s388 + $0xf0] sm:$0xff]
        %v578 = vld [vmem:[%s388 + $0xf8] sm:$0xff]
        %v579 = vld [vmem:[#allocation9] sm:$0x1]
        %v581 = vlaneseq
        %v582 = vshrl.u32 %v581, 7
        %v583 = vsub.s32 0, %v582
        %v584 = vrot.slane %v579, %v583
        %v586 = vmul.f32 %v547, %v584
        %v587 = vmul.f32 %v548, %v584
        %v588 = vmul.f32 %v549, %v584
        %v589 = vmul.f32 %v550, %v584
        %v590 = vmul.f32 %v551, %v584
        %v591 = vmul.f32 %v552, %v584
        %v592 = vmul.f32 %v553, %v584
        %v593 = vmul.f32 %v554, %v584
        %v594 = vmul.f32 %v555, %v584
        %v595 = vmul.f32 %v556, %v584
        %v596 = vmul.f32 %v557, %v584
        %v597 = vmul.f32 %v558, %v584
        %v598 = vmul.f32 %v559, %v584
        %v599 = vmul.f32 %v560, %v584
        %v600 = vmul.f32 %v561, %v584
        %v601 = vmul.f32 %v562, %v584
        %v602 = vmul.f32 %v563, %v584
        %v603 = vmul.f32 %v564, %v584
        %v604 = vmul.f32 %v565, %v584
        %v605 = vmul.f32 %v566, %v584
        %v606 = vmul.f32 %v567, %v584
        %v607 = vmul.f32 %v568, %v584
        %v608 = vmul.f32 %v569, %v584
        %v609 = vmul.f32 %v570, %v584
        %v610 = vmul.f32 %v571, %v584
        %v611 = vmul.f32 %v572, %v584
        %v612 = vmul.f32 %v573, %v584
        %v613 = vmul.f32 %v574, %v584
        %v614 = vmul.f32 %v575, %v584
        %v615 = vmul.f32 %v576, %v584
        %v616 = vmul.f32 %v577, %v584
        %v617 = vmul.f32 %v578, %v584
        %v618 = vld [vmem:[#allocation10] sm:$0x1]
        %v620 = vlaneseq
        %v621 = vshrl.u32 %v620, 7
        %v622 = vsub.s32 0, %v621
        %v623 = vrot.slane %v618, %v622
        %v625 = vadd.f32 %v586, %v623
        %v626 = vadd.f32 %v587, %v623
        %v627 = vadd.f32 %v588, %v623
        %v628 = vadd.f32 %v589, %v623
        %v629 = vadd.f32 %v590, %v623
        %v630 = vadd.f32 %v591, %v623
        %v631 = vadd.f32 %v592, %v623
        %v632 = vadd.f32 %v593, %v623
        %v633 = vadd.f32 %v594, %v623
        %v634 = vadd.f32 %v595, %v623
        %v635 = vadd.f32 %v596, %v623
        %v636 = vadd.f32 %v597, %v623
        %v637 = vadd.f32 %v598, %v623
        %v638 = vadd.f32 %v599, %v623
        %v639 = vadd.f32 %v600, %v623
        %v640 = vadd.f32 %v601, %v623
        %v641 = vadd.f32 %v602, %v623
        %v642 = vadd.f32 %v603, %v623
        %v643 = vadd.f32 %v604, %v623
        %v644 = vadd.f32 %v605, %v623
        %v645 = vadd.f32 %v606, %v623
        %v646 = vadd.f32 %v607, %v623
        %v647 = vadd.f32 %v608, %v623
        %v648 = vadd.f32 %v609, %v623
        %v649 = vadd.f32 %v610, %v623
        %v650 = vadd.f32 %v611, %v623
        %v651 = vadd.f32 %v612, %v623
        %v652 = vadd.f32 %v613, %v623
        %v653 = vadd.f32 %v614, %v623
        %v654 = vadd.f32 %v615, %v623
        %v655 = vadd.f32 %v616, %v623
        %v656 = vadd.f32 %v617, %v623
        %s657 = scalar_lea.vmem [#allocation2], 24
        %658 = vst.msk [vmem:[%s657 + $0x1] sm:$0xff] %vm455, %v625
        %659 = vst.msk [vmem:[%s657 + $0x9] sm:$0xff] %vm455, %v626
        %660 = vst.msk [vmem:[%s657 + $0x19] sm:$0xff] %vm455, %v627
        %661 = vst.msk [vmem:[%s657 + $0x21] sm:$0xff] %vm455, %v628
        %662 = vst.msk [vmem:[%s657 + $0x31] sm:$0xff] %vm455, %v629
        %663 = vst.msk [vmem:[%s657 + $0x39] sm:$0xff] %vm455, %v630
        %664 = vst.msk [vmem:[%s657 + $0x49] sm:$0xff] %vm455, %v631
        %665 = vst.msk [vmem:[%s657 + $0x51] sm:$0xff] %vm455, %v632
        %666 = vst.msk [vmem:[%s657 + $0x61] sm:$0xff] %vm455, %v633
        %667 = vst.msk [vmem:[%s657 + $0x69] sm:$0xff] %vm455, %v634
        %668 = vst.msk [vmem:[%s657 + $0x79] sm:$0xff] %vm455, %v635
        %669 = vst.msk [vmem:[%s657 + $0x81] sm:$0xff] %vm455, %v636
        %670 = vst.msk [vmem:[%s657 + $0x91] sm:$0xff] %vm455, %v637
        %671 = vst.msk [vmem:[%s657 + $0x99] sm:$0xff] %vm455, %v638
        %672 = vst.msk [vmem:[%s657 + $0xa9] sm:$0xff] %vm455, %v639
        %673 = vst.msk [vmem:[%s657 + $0xb1] sm:$0xff] %vm455, %v640
        %674 = vst.msk [vmem:[%s657 + $0xc1] sm:$0xff] %vm455, %v641
        %675 = vst.msk [vmem:[%s657 + $0xc9] sm:$0xff] %vm455, %v642
        %676 = vst.msk [vmem:[%s657 + $0xd9] sm:$0xff] %vm455, %v643
        %677 = vst.msk [vmem:[%s657 + $0xe1] sm:$0xff] %vm455, %v644
        %678 = vst.msk [vmem:[%s657 + $0xf1] sm:$0xff] %vm455, %v645
        %679 = vst.msk [vmem:[%s657 + $0xf9] sm:$0xff] %vm455, %v646
        %680 = vst.msk [vmem:[%s657 + $0x109] sm:$0xff] %vm455, %v647
        %681 = vst.msk [vmem:[%s657 + $0x111] sm:$0xff] %vm455, %v648
        %682 = vst.msk [vmem:[%s657 + $0x121] sm:$0xff] %vm455, %v649
        %683 = vst.msk [vmem:[%s657 + $0x129] sm:$0xff] %vm455, %v650
        %684 = vst.msk [vmem:[%s657 + $0x139] sm:$0xff] %vm455, %v651
        %685 = vst.msk [vmem:[%s657 + $0x141] sm:$0xff] %vm455, %v652
        %686 = vst.msk [vmem:[%s657 + $0x151] sm:$0xff] %vm455, %v653
        %687 = vst.msk [vmem:[%s657 + $0x159] sm:$0xff] %vm455, %v654
        %688 = vst.msk [vmem:[%s657 + $0x169] sm:$0xff] %vm455, %v655
        %689 = vst.msk [vmem:[%s657 + $0x171] sm:$0xff] %vm455, %v656
        %v690 = vld [vmem:[#allocation2] sm:$0xff]
        %v691 = vld [vmem:[#allocation2 + $0x8] sm:$0xff]
        %v692 = vld [vmem:[#allocation2 + $0x18] sm:$0xff]
        %v693 = vld [vmem:[#allocation2 + $0x20] sm:$0xff]
        %v694 = vld [vmem:[#allocation2 + $0x30] sm:$0xff]
        %v695 = vld [vmem:[#allocation2 + $0x38] sm:$0xff]
        %v696 = vld [vmem:[#allocation2 + $0x48] sm:$0xff]
        %v697 = vld [vmem:[#allocation2 + $0x50] sm:$0xff]
        %v698 = vld [vmem:[#allocation2 + $0x60] sm:$0xff]
        %v699 = vld [vmem:[#allocation2 + $0x68] sm:$0xff]
        %v700 = vld [vmem:[#allocation2 + $0x78] sm:$0xff]
        %v701 = vld [vmem:[#allocation2 + $0x80] sm:$0xff]
        %v702 = vld [vmem:[#allocation2 + $0x90] sm:$0xff]
        %v703 = vld [vmem:[#allocation2 + $0x98] sm:$0xff]
        %v704 = vld [vmem:[#allocation2 + $0xa8] sm:$0xff]
        %v705 = vld [vmem:[#allocation2 + $0xb0] sm:$0xff]
        %v706 = vld [vmem:[#allocation2 + $0xc0] sm:$0xff]
        %v707 = vld [vmem:[#allocation2 + $0xc8] sm:$0xff]
        %v708 = vld [vmem:[#allocation2 + $0xd8] sm:$0xff]
        %v709 = vld [vmem:[#allocation2 + $0xe0] sm:$0xff]
        %v710 = vld [vmem:[#allocation2 + $0xf0] sm:$0xff]
        %v711 = vld [vmem:[#allocation2 + $0xf8] sm:$0xff]
        %v712 = vld [vmem:[#allocation2 + $0x108] sm:$0xff]
        %v713 = vld [vmem:[#allocation2 + $0x110] sm:$0xff]
        %v714 = vld [vmem:[#allocation2 + $0x120] sm:$0xff]
        %v715 = vld [vmem:[#allocation2 + $0x128] sm:$0xff]
        %v716 = vld [vmem:[#allocation2 + $0x138] sm:$0xff]
        %v717 = vld [vmem:[#allocation2 + $0x140] sm:$0xff]
        %v718 = vld [vmem:[#allocation2 + $0x150] sm:$0xff]
        %v719 = vld [vmem:[#allocation2 + $0x158] sm:$0xff]
        %v720 = vld [vmem:[#allocation2 + $0x168] sm:$0xff]
        %v721 = vld [vmem:[#allocation2 + $0x170] sm:$0xff]
        %v722 = vld [vmem:[#allocation7] sm:$0xf]
        %v723 = vld [vmem:[#allocation2 + $0x1] sm:$0xff]
        %v724 = vld [vmem:[#allocation2 + $0x9] sm:$0xff]
        %v725 = vld [vmem:[#allocation2 + $0x19] sm:$0xff]
        %v726 = vld [vmem:[#allocation2 + $0x21] sm:$0xff]
        %v727 = vld [vmem:[#allocation2 + $0x31] sm:$0xff]
        %v728 = vld [vmem:[#allocation2 + $0x39] sm:$0xff]
        %v729 = vld [vmem:[#allocation2 + $0x49] sm:$0xff]
        %v730 = vld [vmem:[#allocation2 + $0x51] sm:$0xff]
        %v731 = vld [vmem:[#allocation2 + $0x61] sm:$0xff]
        %v732 = vld [vmem:[#allocation2 + $0x69] sm:$0xff]
        %v733 = vld [vmem:[#allocation2 + $0x79] sm:$0xff]
        %v734 = vld [vmem:[#allocation2 + $0x81] sm:$0xff]
        %v735 = vld [vmem:[#allocation2 + $0x91] sm:$0xff]
        %v736 = vld [vmem:[#allocation2 + $0x99] sm:$0xff]
        %v737 = vld [vmem:[#allocation2 + $0xa9] sm:$0xff]
        %v738 = vld [vmem:[#allocation2 + $0xb1] sm:$0xff]
        %v739 = vld [vmem:[#allocation2 + $0xc1] sm:$0xff]
        %v740 = vld [vmem:[#allocation2 + $0xc9] sm:$0xff]
        %v741 = vld [vmem:[#allocation2 + $0xd9] sm:$0xff]
        %v742 = vld [vmem:[#allocation2 + $0xe1] sm:$0xff]
        %v743 = vld [vmem:[#allocation2 + $0xf1] sm:$0xff]
        %v744 = vld [vmem:[#allocation2 + $0xf9] sm:$0xff]
        %v745 = vld [vmem:[#allocation2 + $0x109] sm:$0xff]
        %v746 = vld [vmem:[#allocation2 + $0x111] sm:$0xff]
        %v747 = vld [vmem:[#allocation2 + $0x121] sm:$0xff]
        %v748 = vld [vmem:[#allocation2 + $0x129] sm:$0xff]
        %v749 = vld [vmem:[#allocation2 + $0x139] sm:$0xff]
        %v750 = vld [vmem:[#allocation2 + $0x141] sm:$0xff]
        %v751 = vld [vmem:[#allocation2 + $0x151] sm:$0xff]
        %v752 = vld [vmem:[#allocation2 + $0x159] sm:$0xff]
        %v753 = vld [vmem:[#allocation2 + $0x169] sm:$0xff]
        %v754 = vld [vmem:[#allocation2 + $0x171] sm:$0xff]
        %s755 = scalar_lea.vmem [#allocation7], 4
        %v756 = vld [vmem:[%s755] sm:$0xf]
        %v758 = vsel %vm455, %v723, 0
        %v761 = vsel %vm455, %v724, 0
        %v764 = vsel %vm455, %v725, 0
        %v767 = vsel %vm455, %v726, 0
        %v770 = vsel %vm455, %v727, 0
        %v773 = vsel %vm455, %v728, 0
        %v776 = vsel %vm455, %v729, 0
        %v779 = vsel %vm455, %v730, 0
        %v782 = vsel %vm455, %v731, 0
        %v785 = vsel %vm455, %v732, 0
        %v788 = vsel %vm455, %v733, 0
        %v791 = vsel %vm455, %v734, 0
        %v794 = vsel %vm455, %v735, 0
        %v797 = vsel %vm455, %v736, 0
        %v800 = vsel %vm455, %v737, 0
        %v803 = vsel %vm455, %v738, 0
        %v806 = vsel %vm455, %v739, 0
        %v809 = vsel %vm455, %v740, 0
        %v812 = vsel %vm455, %v741, 0
        %v815 = vsel %vm455, %v742, 0
        %v818 = vsel %vm455, %v743, 0
        %v821 = vsel %vm455, %v744, 0
        %v824 = vsel %vm455, %v745, 0
        %v827 = vsel %vm455, %v746, 0
        %v830 = vsel %vm455, %v747, 0
        %v833 = vsel %vm455, %v748, 0
        %v836 = vsel %vm455, %v749, 0
        %v839 = vsel %vm455, %v750, 0
        %v842 = vsel %vm455, %v751, 0
        %v845 = vsel %vm455, %v752, 0
        %v848 = vsel %vm455, %v753, 0
        %v851 = vsel %vm455, %v754, 0
        %vm853 = vcmask 1043456
        %v855 = vsel %vm853, %v756, 0
        %857 = vmatprep.subr.mxu0 0.0
        %858 = vmatpush1.msra.mxu0 %v855
        %859 = vmatprep.subr.mxu0 0.0
        %860 = vmatpush1.msra.mxu0 0.0
        %861 = vmatprep.subr.mxu0 0.0
        %862 = vmatpush1.msra.mxu0 0.0
        %863 = vmatprep.subr.mxu0 0.0
        %864 = vmatpush1.msra.mxu0 0.0
        %865 = vmatprep.subr.mxu0 0.0
        %866 = vmatpush1.msra.mxu0 0.0
        %867 = vmatprep.subr.mxu0 0.0
        %868 = vmatpush1.msra.mxu0 0.0
        %869 = vmatprep.subr.mxu0 0.0
        %870 = vmatpush1.msra.mxu0 0.0
        %871 = vmatprep.subr.mxu0 0.0
        %872 = vmatpush1.msra.mxu0 0.0
        %873 = vmatprep.subr.mxu0 0.0
        %874 = vmatpush1.msra.mxu0 0.0
        %875 = vmatprep.subr.mxu0 0.0
        %876 = vmatpush1.msra.mxu0 0.0
        %877 = vmatprep.subr.mxu0 0.0
        %878 = vmatpush1.msra.mxu0 0.0
        %879 = vmatprep.subr.mxu0 0.0
        %880 = vmatpush1.msra.mxu0 0.0
        %881 = vmatprep.subr.mxu0 0.0
        %882 = vmatpush1.msra.mxu0 0.0
        %883 = vmatprep.subr.mxu0 0.0
        %884 = vmatpush1.msra.mxu0 0.0
        %885 = vmatprep.subr.mxu0 0.0
        %886 = vmatpush1.msra.mxu0 0.0
        %887 = vmatprep.subr.mxu0 0.0
        %888 = vmatpush1.msra.mxu0 0.0
        %889 = vmatprep.subr.mxu0 0.0
        %890 = vmatpush1.msra.mxu0 0.0
        %891 = vmatprep.subr.mxu0 0.0
        %892 = vmatpush1.msra.mxu0 0.0
        %893 = vmatprep.subr.mxu0 0.0
        %894 = vmatpush1.msra.mxu0 0.0
        %895 = vmatprep.subr.mxu0 0.0
        %896 = vmatpush1.msra.mxu0 0.0
        %897 = vmatprep.subr.mxu0 0.0
        %898 = vmatpush1.msra.mxu0 0.0
        %899 = vmatprep.subr.mxu0 0.0
        %900 = vmatpush1.msra.mxu0 0.0
        %901 = vmatprep.subr.mxu0 0.0
        %902 = vmatpush1.msra.mxu0 0.0
        %903 = vmatprep.subr.mxu0 0.0
        %904 = vmatpush1.msra.mxu0 0.0
        %905 = vmatprep.subr.mxu0 0.0
        %906 = vmatpush1.msra.mxu0 0.0
        %907 = vmatprep.subr.mxu0 0.0
        %908 = vmatpush1.msra.mxu0 0.0
        %909 = vmatprep.subr.mxu0 0.0
        %910 = vmatpush1.msra.mxu0 0.0
        %911 = vmatprep.subr.mxu0 0.0
        %912 = vmatpush1.msra.mxu0 0.0
        %913 = vmatprep.subr.mxu0 0.0
        %914 = vmatpush1.msra.mxu0 0.0
        %915 = vmatprep.subr.mxu0 0.0
        %916 = vmatpush1.msra.mxu0 0.0
        %917 = vmatprep.subr.mxu0 0.0
        %918 = vmatpush1.msra.mxu0 0.0
        %919 = vmatprep.subr.mxu0 0.0
        %920 = vmatpush1.msra.mxu0 0.0
        %921 = vmatprep.mubr.f32.mxu0 0.0
        %922 = vmatmul.mubr.f32.gmra.mrb[0].mxu0 %v758
        %v923 = vpop.f32.mrb[0].mxu0
        %v924 = vadd.f32 0.0, %v923
        %v925 = vpop.f32.mrb[0].mxu0
        %926 = vmatprep.mubr.f32.mxu0 0.0
        %927 = vmatmul.mubr.f32.gmra.mrb[0].mxu0 %v761
        %v928 = vpop.f32.mrb[0].mxu0
        %v929 = vadd.f32 0.0, %v928
        %v930 = vpop.f32.mrb[0].mxu0
        %931 = vmatprep.mubr.f32.mxu0 0.0
        %932 = vmatmul.mubr.f32.gmra.mrb[0].mxu0 %v764
        %v933 = vpop.f32.mrb[0].mxu0
        %v934 = vadd.f32 0.0, %v933
        %v935 = vpop.f32.mrb[0].mxu0
        %936 = vmatprep.mubr.f32.mxu0 0.0
        %937 = vmatmul.mubr.f32.gmra.mrb[0].mxu0 %v767
        %v938 = vpop.f32.mrb[0].mxu0
        %v939 = vadd.f32 0.0, %v938
        %v940 = vpop.f32.mrb[0].mxu0
        %941 = vmatprep.mubr.f32.mxu0 0.0
        %942 = vmatmul.mubr.f32.gmra.mrb[0].mxu0 %v770
        %v943 = vpop.f32.mrb[0].mxu0
        %v944 = vadd.f32 0.0, %v943
        %v945 = vpop.f32.mrb[0].mxu0
        %946 = vmatprep.mubr.f32.mxu0 0.0
        %947 = vmatmul.mubr.f32.gmra.mrb[0].mxu0 %v773
        %v948 = vpop.f32.mrb[0].mxu0
        %v949 = vadd.f32 0.0, %v948
        %v950 = vpop.f32.mrb[0].mxu0
        %951 = vmatprep.mubr.f32.mxu0 0.0
        %952 = vmatmul.mubr.f32.gmra.mrb[0].mxu0 %v776
        %v953 = vpop.f32.mrb[0].mxu0
        %v954 = vadd.f32 0.0, %v953
        %v955 = vpop.f32.mrb[0].mxu0
        %956 = vmatprep.mubr.f32.mxu0 0.0
        %957 = vmatmul.mubr.f32.gmra.mrb[0].mxu0 %v779
        %v958 = vpop.f32.mrb[0].mxu0
        %v959 = vadd.f32 0.0, %v958
        %v960 = vpop.f32.mrb[0].mxu0
        %961 = vmatprep.mubr.f32.mxu0 0.0
        %962 = vmatmul.mubr.f32.gmra.mrb[0].mxu0 %v782
        %v963 = vpop.f32.mrb[0].mxu0
        %v964 = vadd.f32 0.0, %v963
        %v965 = vpop.f32.mrb[0].mxu0
        %966 = vmatprep.mubr.f32.mxu0 0.0
        %967 = vmatmul.mubr.f32.gmra.mrb[0].mxu0 %v785
        %v968 = vpop.f32.mrb[0].mxu0
        %v969 = vadd.f32 0.0, %v968
        %v970 = vpop.f32.mrb[0].mxu0
        %971 = vmatprep.mubr.f32.mxu0 0.0
        %972 = vmatmul.mubr.f32.gmra.mrb[0].mxu0 %v788
        %v973 = vpop.f32.mrb[0].mxu0
        %v974 = vadd.f32 0.0, %v973
        %v975 = vpop.f32.mrb[0].mxu0
        %976 = vmatprep.mubr.f32.mxu0 0.0
        %977 = vmatmul.mubr.f32.gmra.mrb[0].mxu0 %v791
        %v978 = vpop.f32.mrb[0].mxu0
        %v979 = vadd.f32 0.0, %v978
        %v980 = vpop.f32.mrb[0].mxu0
        %981 = vmatprep.mubr.f32.mxu0 0.0
        %982 = vmatmul.mubr.f32.gmra.mrb[0].mxu0 %v794
        %v983 = vpop.f32.mrb[0].mxu0
        %v984 = vadd.f32 0.0, %v983
        %v985 = vpop.f32.mrb[0].mxu0
        %986 = vmatprep.mubr.f32.mxu0 0.0
        %987 = vmatmul.mubr.f32.gmra.mrb[0].mxu0 %v797
        %v988 = vpop.f32.mrb[0].mxu0
        %v989 = vadd.f32 0.0, %v988
        %v990 = vpop.f32.mrb[0].mxu0
        %991 = vmatprep.mubr.f32.mxu0 0.0
        %992 = vmatmul.mubr.f32.gmra.mrb[0].mxu0 %v800
        %v993 = vpop.f32.mrb[0].mxu0
        %v994 = vadd.f32 0.0, %v993
        %v995 = vpop.f32.mrb[0].mxu0
        %996 = vmatprep.mubr.f32.mxu0 0.0
        %997 = vmatmul.mubr.f32.gmra.mrb[0].mxu0 %v803
        %v998 = vpop.f32.mrb[0].mxu0
        %v999 = vadd.f32 0.0, %v998
        %v1000 = vpop.f32.mrb[0].mxu0
        %1001 = vmatprep.mubr.f32.mxu0 0.0
        %1002 = vmatmul.mubr.f32.gmra.mrb[0].mxu0 %v806
        %v1003 = vpop.f32.mrb[0].mxu0
        %v1004 = vadd.f32 0.0, %v1003
        %v1005 = vpop.f32.mrb[0].mxu0
        %1006 = vmatprep.mubr.f32.mxu0 0.0
        %1007 = vmatmul.mubr.f32.gmra.mrb[0].mxu0 %v809
        %v1008 = vpop.f32.mrb[0].mxu0
        %v1009 = vadd.f32 0.0, %v1008
        %v1010 = vpop.f32.mrb[0].mxu0
        %1011 = vmatprep.mubr.f32.mxu0 0.0
        %1012 = vmatmul.mubr.f32.gmra.mrb[0].mxu0 %v812
        %v1013 = vpop.f32.mrb[0].mxu0
        %v1014 = vadd.f32 0.0, %v1013
        %v1015 = vpop.f32.mrb[0].mxu0
        %1016 = vmatprep.mubr.f32.mxu0 0.0
        %1017 = vmatmul.mubr.f32.gmra.mrb[0].mxu0 %v815
        %v1018 = vpop.f32.mrb[0].mxu0
        %v1019 = vadd.f32 0.0, %v1018
        %v1020 = vpop.f32.mrb[0].mxu0
        %1021 = vmatprep.mubr.f32.mxu0 0.0
        %1022 = vmatmul.mubr.f32.gmra.mrb[0].mxu0 %v818
        %v1023 = vpop.f32.mrb[0].mxu0
        %v1024 = vadd.f32 0.0, %v1023
        %v1025 = vpop.f32.mrb[0].mxu0
        %1026 = vmatprep.mubr.f32.mxu0 0.0
        %1027 = vmatmul.mubr.f32.gmra.mrb[0].mxu0 %v821
        %v1028 = vpop.f32.mrb[0].mxu0
        %v1029 = vadd.f32 0.0, %v1028
        %v1030 = vpop.f32.mrb[0].mxu0
        %1031 = vmatprep.mubr.f32.mxu0 0.0
        %1032 = vmatmul.mubr.f32.gmra.mrb[0].mxu0 %v824
        %v1033 = vpop.f32.mrb[0].mxu0
        %v1034 = vadd.f32 0.0, %v1033
        %v1035 = vpop.f32.mrb[0].mxu0
        %1036 = vmatprep.mubr.f32.mxu0 0.0
        %1037 = vmatmul.mubr.f32.gmra.mrb[0].mxu0 %v827
        %v1038 = vpop.f32.mrb[0].mxu0
        %v1039 = vadd.f32 0.0, %v1038
        %v1040 = vpop.f32.mrb[0].mxu0
        %1041 = vmatprep.mubr.f32.mxu0 0.0
        %1042 = vmatmul.mubr.f32.gmra.mrb[0].mxu0 %v830
        %v1043 = vpop.f32.mrb[0].mxu0
        %v1044 = vadd.f32 0.0, %v1043
        %v1045 = vpop.f32.mrb[0].mxu0
        %1046 = vmatprep.mubr.f32.mxu0 0.0
        %1047 = vmatmul.mubr.f32.gmra.mrb[0].mxu0 %v833
        %v1048 = vpop.f32.mrb[0].mxu0
        %v1049 = vadd.f32 0.0, %v1048
        %v1050 = vpop.f32.mrb[0].mxu0
        %1051 = vmatprep.mubr.f32.mxu0 0.0
        %1052 = vmatmul.mubr.f32.gmra.mrb[0].mxu0 %v836
        %v1053 = vpop.f32.mrb[0].mxu0
        %v1054 = vadd.f32 0.0, %v1053
        %v1055 = vpop.f32.mrb[0].mxu0
        %1056 = vmatprep.mubr.f32.mxu0 0.0
        %1057 = vmatmul.mubr.f32.gmra.mrb[0].mxu0 %v839
        %v1058 = vpop.f32.mrb[0].mxu0
        %v1059 = vadd.f32 0.0, %v1058
        %v1060 = vpop.f32.mrb[0].mxu0
        %1061 = vmatprep.mubr.f32.mxu0 0.0
        %1062 = vmatmul.mubr.f32.gmra.mrb[0].mxu0 %v842
        %v1063 = vpop.f32.mrb[0].mxu0
        %v1064 = vadd.f32 0.0, %v1063
        %v1065 = vpop.f32.mrb[0].mxu0
        %1066 = vmatprep.mubr.f32.mxu0 0.0
        %1067 = vmatmul.mubr.f32.gmra.mrb[0].mxu0 %v845
        %v1068 = vpop.f32.mrb[0].mxu0
        %v1069 = vadd.f32 0.0, %v1068
        %v1070 = vpop.f32.mrb[0].mxu0
        %1071 = vmatprep.mubr.f32.mxu0 0.0
        %1072 = vmatmul.mubr.f32.gmra.mrb[0].mxu0 %v848
        %v1073 = vpop.f32.mrb[0].mxu0
        %v1074 = vadd.f32 0.0, %v1073
        %v1075 = vpop.f32.mrb[0].mxu0
        %1076 = vmatprep.mubr.f32.mxu0 0.0
        %1077 = vmatmul.mubr.f32.gmra.mrb[0].mxu0 %v851
        %v1078 = vpop.f32.mrb[0].mxu0
        %v1079 = vadd.f32 0.0, %v1078
        %v1080 = vpop.f32.mrb[0].mxu0
        %1081 = vdwg.mxu0
        %v1082 = vld [vmem:[#allocation2 + $0x2] sm:$0xff]
        %v1083 = vld [vmem:[#allocation2 + $0xa] sm:$0xff]
        %v1084 = vld [vmem:[#allocation2 + $0x1a] sm:$0xff]
        %v1085 = vld [vmem:[#allocation2 + $0x22] sm:$0xff]
        %v1086 = vld [vmem:[#allocation2 + $0x32] sm:$0xff]
        %v1087 = vld [vmem:[#allocation2 + $0x3a] sm:$0xff]
        %v1088 = vld [vmem:[#allocation2 + $0x4a] sm:$0xff]
        %v1089 = vld [vmem:[#allocation2 + $0x52] sm:$0xff]
        %v1090 = vld [vmem:[#allocation2 + $0x62] sm:$0xff]
        %v1091 = vld [vmem:[#allocation2 + $0x6a] sm:$0xff]
        %v1092 = vld [vmem:[#allocation2 + $0x7a] sm:$0xff]
        %v1093 = vld [vmem:[#allocation2 + $0x82] sm:$0xff]
        %v1094 = vld [vmem:[#allocation2 + $0x92] sm:$0xff]
        %v1095 = vld [vmem:[#allocation2 + $0x9a] sm:$0xff]
        %v1096 = vld [vmem:[#allocation2 + $0xaa] sm:$0xff]
        %v1097 = vld [vmem:[#allocation2 + $0xb2] sm:$0xff]
        %v1098 = vld [vmem:[#allocation2 + $0xc2] sm:$0xff]
        %v1099 = vld [vmem:[#allocation2 + $0xca] sm:$0xff]
        %v1100 = vld [vmem:[#allocation2 + $0xda] sm:$0xff]
        %v1101 = vld [vmem:[#allocation2 + $0xe2] sm:$0xff]
        %v1102 = vld [vmem:[#allocation2 + $0xf2] sm:$0xff]
        %v1103 = vld [vmem:[#allocation2 + $0xfa] sm:$0xff]
        %v1104 = vld [vmem:[#allocation2 + $0x10a] sm:$0xff]
        %v1105 = vld [vmem:[#allocation2 + $0x112] sm:$0xff]
        %v1106 = vld [vmem:[#allocation2 + $0x122] sm:$0xff]
        %v1107 = vld [vmem:[#allocation2 + $0x12a] sm:$0xff]
        %v1108 = vld [vmem:[#allocation2 + $0x13a] sm:$0xff]
        %v1109 = vld [vmem:[#allocation2 + $0x142] sm:$0xff]
        %v1110 = vld [vmem:[#allocation2 + $0x152] sm:$0xff]
        %v1111 = vld [vmem:[#allocation2 + $0x15a] sm:$0xff]
        %v1112 = vld [vmem:[#allocation2 + $0x16a] sm:$0xff]
        %v1113 = vld [vmem:[#allocation2 + $0x172] sm:$0xff]
        %s1114 = scalar_lea.vmem [#allocation7], 8
        %v1115 = vld [vmem:[%s1114] sm:$0xf]
        %v1116 = vld [vmem:[%s657] sm:$0xff]
        %v1117 = vld [vmem:[%s657 + $0x8] sm:$0xff]
        %v1118 = vld [vmem:[%s657 + $0x18] sm:$0xff]
        %v1119 = vld [vmem:[%s657 + $0x20] sm:$0xff]
        %v1120 = vld [vmem:[%s657 + $0x30] sm:$0xff]
        %v1121 = vld [vmem:[%s657 + $0x38] sm:$0xff]
        %v1122 = vld [vmem:[%s657 + $0x48] sm:$0xff]
        %v1123 = vld [vmem:[%s657 + $0x50] sm:$0xff]
        %v1124 = vld [vmem:[%s657 + $0x60] sm:$0xff]
        %v1125 = vld [vmem:[%s657 + $0x68] sm:$0xff]
        %v1126 = vld [vmem:[%s657 + $0x78] sm:$0xff]
        %v1127 = vld [vmem:[%s657 + $0x80] sm:$0xff]
        %v1128 = vld [vmem:[%s657 + $0x90] sm:$0xff]
        %v1129 = vld [vmem:[%s657 + $0x98] sm:$0xff]
        %v1130 = vld [vmem:[%s657 + $0xa8] sm:$0xff]
        %v1131 = vld [vmem:[%s657 + $0xb0] sm:$0xff]
        %v1132 = vld [vmem:[%s657 + $0xc0] sm:$0xff]
        %v1133 = vld [vmem:[%s657 + $0xc8] sm:$0xff]
        %v1134 = vld [vmem:[%s657 + $0xd8] sm:$0xff]
        %v1135 = vld [vmem:[%s657 + $0xe0] sm:$0xff]
        %v1136 = vld [vmem:[%s657 + $0xf0] sm:$0xff]
        %v1137 = vld [vmem:[%s657 + $0xf8] sm:$0xff]
        %v1138 = vld [vmem:[%s657 + $0x108] sm:$0xff]
        %v1139 = vld [vmem:[%s657 + $0x110] sm:$0xff]
        %v1140 = vld [vmem:[%s657 + $0x120] sm:$0xff]
        %v1141 = vld [vmem:[%s657 + $0x128] sm:$0xff]
        %v1142 = vld [vmem:[%s657 + $0x138] sm:$0xff]
        %v1143 = vld [vmem:[%s657 + $0x140] sm:$0xff]
        %v1144 = vld [vmem:[%s657 + $0x150] sm:$0xff]
        %v1145 = vld [vmem:[%s657 + $0x158] sm:$0xff]
        %v1146 = vld [vmem:[%s657 + $0x168] sm:$0xff]
        %v1147 = vld [vmem:[%s657 + $0x170] sm:$0xff]
        %s1148 = scalar_lea.vmem [#allocation7], 12
        %v1149 = vld [vmem:[%s1148] sm:$0xf]
        %v1151 = vsel %vm455, %v1116, 0
        %v1154 = vsel %vm455, %v1117, 0
        %v1157 = vsel %vm455, %v1118, 0
        %v1160 = vsel %vm455, %v1119, 0
        %v1163 = vsel %vm455, %v1120, 0
        %v1166 = vsel %vm455, %v1121, 0
        %v1169 = vsel %vm455, %v1122, 0
        %v1172 = vsel %vm455, %v1123, 0
        %v1175 = vsel %vm455, %v1124, 0
        %v1178 = vsel %vm455, %v1125, 0
        %v1181 = vsel %vm455, %v1126, 0
        %v1184 = vsel %vm455, %v1127, 0
        %v1187 = vsel %vm455, %v1128, 0
        %v1190 = vsel %vm455, %v1129, 0
        %v1193 = vsel %vm455, %v1130, 0
        %v1196 = vsel %vm455, %v1131, 0
        %v1199 = vsel %vm455, %v1132, 0
        %v1202 = vsel %vm455, %v1133, 0
        %v1205 = vsel %vm455, %v1134, 0
        %v1208 = vsel %vm455, %v1135, 0
        %v1211 = vsel %vm455, %v1136, 0
        %v1214 = vsel %vm455, %v1137, 0
        %v1217 = vsel %vm455, %v1138, 0
        %v1220 = vsel %vm455, %v1139, 0
        %v1223 = vsel %vm455, %v1140, 0
        %v1226 = vsel %vm455, %v1141, 0
        %v1229 = vsel %vm455, %v1142, 0
        %v1232 = vsel %vm455, %v1143, 0
        %v1235 = vsel %vm455, %v1144, 0
        %v1238 = vsel %vm455, %v1145, 0
        %v1241 = vsel %vm455, %v1146, 0
        %v1244 = vsel %vm455, %v1147, 0
        %v1247 = vsel %vm853, %v1149, 0
        %1249 = vmatprep.subr.mxu0 0.0
        %1250 = vmatpush1.msra.mxu0 %v1247
        %1251 = vmatprep.subr.mxu0 0.0
        %1252 = vmatpush1.msra.mxu0 0.0
        %1253 = vmatprep.subr.mxu0 0.0
        %1254 = vmatpush1.msra.mxu0 0.0
        %1255 = vmatprep.subr.mxu0 0.0
        %1256 = vmatpush1.msra.mxu0 0.0
        %1257 = vmatprep.subr.mxu0 0.0
        %1258 = vmatpush1.msra.mxu0 0.0
        %1259 = vmatprep.subr.mxu0 0.0
        %1260 = vmatpush1.msra.mxu0 0.0
        %1261 = vmatprep.subr.mxu0 0.0
        %1262 = vmatpush1.msra.mxu0 0.0
        %1263 = vmatprep.subr.mxu0 0.0
        %1264 = vmatpush1.msra.mxu0 0.0
        %1265 = vmatprep.subr.mxu0 0.0
        %1266 = vmatpush1.msra.mxu0 0.0
        %1267 = vmatprep.subr.mxu0 0.0
        %1268 = vmatpush1.msra.mxu0 0.0
        %1269 = vmatprep.subr.mxu0 0.0
        %1270 = vmatpush1.msra.mxu0 0.0
        %1271 = vmatprep.subr.mxu0 0.0
        %1272 = vmatpush1.msra.mxu0 0.0
        %1273 = vmatprep.subr.mxu0 0.0
        %1274 = vmatpush1.msra.mxu0 0.0
        %1275 = vmatprep.subr.mxu0 0.0
        %1276 = vmatpush1.msra.mxu0 0.0
        %1277 = vmatprep.subr.mxu0 0.0
        %1278 = vmatpush1.msra.mxu0 0.0
        %1279 = vmatprep.subr.mxu0 0.0
        %1280 = vmatpush1.msra.mxu0 0.0
        %1281 = vmatprep.subr.mxu0 0.0
        %1282 = vmatpush1.msra.mxu0 0.0
        %1283 = vmatprep.subr.mxu0 0.0
        %1284 = vmatpush1.msra.mxu0 0.0
        %1285 = vmatprep.subr.mxu0 0.0
        %1286 = vmatpush1.msra.mxu0 0.0
        %1287 = vmatprep.subr.mxu0 0.0
        %1288 = vmatpush1.msra.mxu0 0.0
        %1289 = vmatprep.subr.mxu0 0.0
        %1290 = vmatpush1.msra.mxu0 0.0
        %1291 = vmatprep.subr.mxu0 0.0
        %1292 = vmatpush1.msra.mxu0 0.0
        %1293 = vmatprep.subr.mxu0 0.0
        %1294 = vmatpush1.msra.mxu0 0.0
        %1295 = vmatprep.subr.mxu0 0.0
        %1296 = vmatpush1.msra.mxu0 0.0
        %1297 = vmatprep.subr.mxu0 0.0
        %1298 = vmatpush1.msra.mxu0 0.0
        %1299 = vmatprep.subr.mxu0 0.0
        %1300 = vmatpush1.msra.mxu0 0.0
        %1301 = vmatprep.subr.mxu0 0.0
        %1302 = vmatpush1.msra.mxu0 0.0
        %1303 = vmatprep.subr.mxu0 0.0
        %1304 = vmatpush1.msra.mxu0 0.0
        %1305 = vmatprep.subr.mxu0 0.0
        %1306 = vmatpush1.msra.mxu0 0.0
        %1307 = vmatprep.subr.mxu0 0.0
        %1308 = vmatpush1.msra.mxu0 0.0
        %1309 = vmatprep.subr.mxu0 0.0
        %1310 = vmatpush1.msra.mxu0 0.0
        %1311 = vmatprep.subr.mxu0 0.0
        %1312 = vmatpush1.msra.mxu0 0.0
        %1313 = vmatprep.mubr.f32.mxu0 0.0
        %1314 = vmatmul.mubr.f32.gmra.mrb[0].mxu0 %v1151
        %v1315 = vpop.f32.mrb[0].mxu0
        %v1316 = vadd.f32 0.0, %v1315
        %v1317 = vpop.f32.mrb[0].mxu0
        %1318 = vmatprep.mubr.f32.mxu0 0.0
        %1319 = vmatmul.mubr.f32.gmra.mrb[0].mxu0 %v1154
        %v1320 = vpop.f32.mrb[0].mxu0
        %v1321 = vadd.f32 0.0, %v1320
        %v1322 = vpop.f32.mrb[0].mxu0
        %1323 = vmatprep.mubr.f32.mxu0 0.0
        %1324 = vmatmul.mubr.f32.gmra.mrb[0].mxu0 %v1157
        %v1325 = vpop.f32.mrb[0].mxu0
        %v1326 = vadd.f32 0.0, %v1325
        %v1327 = vpop.f32.mrb[0].mxu0
        %1328 = vmatprep.mubr.f32.mxu0 0.0
        %1329 = vmatmul.mubr.f32.gmra.mrb[0].mxu0 %v1160
        %v1330 = vpop.f32.mrb[0].mxu0
        %v1331 = vadd.f32 0.0, %v1330
        %v1332 = vpop.f32.mrb[0].mxu0
        %1333 = vmatprep.mubr.f32.mxu0 0.0
        %1334 = vmatmul.mubr.f32.gmra.mrb[0].mxu0 %v1163
        %v1335 = vpop.f32.mrb[0].mxu0
        %v1336 = vadd.f32 0.0, %v1335
        %v1337 = vpop.f32.mrb[0].mxu0
        %1338 = vmatprep.mubr.f32.mxu0 0.0
        %1339 = vmatmul.mubr.f32.gmra.mrb[0].mxu0 %v1166
        %v1340 = vpop.f32.mrb[0].mxu0
        %v1341 = vadd.f32 0.0, %v1340
        %v1342 = vpop.f32.mrb[0].mxu0
        %1343 = vmatprep.mubr.f32.mxu0 0.0
        %1344 = vmatmul.mubr.f32.gmra.mrb[0].mxu0 %v1169
        %v1345 = vpop.f32.mrb[0].mxu0
        %v1346 = vadd.f32 0.0, %v1345
        %v1347 = vpop.f32.mrb[0].mxu0
        %1348 = vmatprep.mubr.f32.mxu0 0.0
        %1349 = vmatmul.mubr.f32.gmra.mrb[0].mxu0 %v1172
        %v1350 = vpop.f32.mrb[0].mxu0
        %v1351 = vadd.f32 0.0, %v1350
        %v1352 = vpop.f32.mrb[0].mxu0
        %1353 = vmatprep.mubr.f32.mxu0 0.0
        %1354 = vmatmul.mubr.f32.gmra.mrb[0].mxu0 %v1175
        %v1355 = vpop.f32.mrb[0].mxu0
        %v1356 = vadd.f32 0.0, %v1355
        %v1357 = vpop.f32.mrb[0].mxu0
        %1358 = vmatprep.mubr.f32.mxu0 0.0
        %1359 = vmatmul.mubr.f32.gmra.mrb[0].mxu0 %v1178
        %v1360 = vpop.f32.mrb[0].mxu0
        %v1361 = vadd.f32 0.0, %v1360
        %v1362 = vpop.f32.mrb[0].mxu0
        %1363 = vmatprep.mubr.f32.mxu0 0.0
        %1364 = vmatmul.mubr.f32.gmra.mrb[0].mxu0 %v1181
        %v1365 = vpop.f32.mrb[0].mxu0
        %v1366 = vadd.f32 0.0, %v1365
        %v1367 = vpop.f32.mrb[0].mxu0
        %1368 = vmatprep.mubr.f32.mxu0 0.0
        %1369 = vmatmul.mubr.f32.gmra.mrb[0].mxu0 %v1184
        %v1370 = vpop.f32.mrb[0].mxu0
        %v1371 = vadd.f32 0.0, %v1370
        %v1372 = vpop.f32.mrb[0].mxu0
        %1373 = vmatprep.mubr.f32.mxu0 0.0
        %1374 = vmatmul.mubr.f32.gmra.mrb[0].mxu0 %v1187
        %v1375 = vpop.f32.mrb[0].mxu0
        %v1376 = vadd.f32 0.0, %v1375
        %v1377 = vpop.f32.mrb[0].mxu0
        %1378 = vmatprep.mubr.f32.mxu0 0.0
        %1379 = vmatmul.mubr.f32.gmra.mrb[0].mxu0 %v1190
        %v1380 = vpop.f32.mrb[0].mxu0
        %v1381 = vadd.f32 0.0, %v1380
        %v1382 = vpop.f32.mrb[0].mxu0
        %1383 = vmatprep.mubr.f32.mxu0 0.0
        %1384 = vmatmul.mubr.f32.gmra.mrb[0].mxu0 %v1193
        %v1385 = vpop.f32.mrb[0].mxu0
        %v1386 = vadd.f32 0.0, %v1385
        %v1387 = vpop.f32.mrb[0].mxu0
        %1388 = vmatprep.mubr.f32.mxu0 0.0
        %1389 = vmatmul.mubr.f32.gmra.mrb[0].mxu0 %v1196
        %v1390 = vpop.f32.mrb[0].mxu0
        %v1391 = vadd.f32 0.0, %v1390
        %v1392 = vpop.f32.mrb[0].mxu0
        %1393 = vmatprep.mubr.f32.mxu0 0.0
        %1394 = vmatmul.mubr.f32.gmra.mrb[0].mxu0 %v1199
        %v1395 = vpop.f32.mrb[0].mxu0
        %v1396 = vadd.f32 0.0, %v1395
        %v1397 = vpop.f32.mrb[0].mxu0
        %1398 = vmatprep.mubr.f32.mxu0 0.0
        %1399 = vmatmul.mubr.f32.gmra.mrb[0].mxu0 %v1202
        %v1400 = vpop.f32.mrb[0].mxu0
        %v1401 = vadd.f32 0.0, %v1400
        %v1402 = vpop.f32.mrb[0].mxu0
        %1403 = vmatprep.mubr.f32.mxu0 0.0
        %1404 = vmatmul.mubr.f32.gmra.mrb[0].mxu0 %v1205
        %v1405 = vpop.f32.mrb[0].mxu0
        %v1406 = vadd.f32 0.0, %v1405
        %v1407 = vpop.f32.mrb[0].mxu0
        %1408 = vmatprep.mubr.f32.mxu0 0.0
        %1409 = vmatmul.mubr.f32.gmra.mrb[0].mxu0 %v1208
        %v1410 = vpop.f32.mrb[0].mxu0
        %v1411 = vadd.f32 0.0, %v1410
        %v1412 = vpop.f32.mrb[0].mxu0
        %1413 = vmatprep.mubr.f32.mxu0 0.0
        %1414 = vmatmul.mubr.f32.gmra.mrb[0].mxu0 %v1211
        %v1415 = vpop.f32.mrb[0].mxu0
        %v1416 = vadd.f32 0.0, %v1415
        %v1417 = vpop.f32.mrb[0].mxu0
        %1418 = vmatprep.mubr.f32.mxu0 0.0
        %1419 = vmatmul.mubr.f32.gmra.mrb[0].mxu0 %v1214
        %v1420 = vpop.f32.mrb[0].mxu0
        %v1421 = vadd.f32 0.0, %v1420
        %v1422 = vpop.f32.mrb[0].mxu0
        %1423 = vmatprep.mubr.f32.mxu0 0.0
        %1424 = vmatmul.mubr.f32.gmra.mrb[0].mxu0 %v1217
        %v1425 = vpop.f32.mrb[0].mxu0
        %v1426 = vadd.f32 0.0, %v1425
        %v1427 = vpop.f32.mrb[0].mxu0
        %1428 = vmatprep.mubr.f32.mxu0 0.0
        %1429 = vmatmul.mubr.f32.gmra.mrb[0].mxu0 %v1220
        %v1430 = vpop.f32.mrb[0].mxu0
        %v1431 = vadd.f32 0.0, %v1430
        %v1432 = vpop.f32.mrb[0].mxu0
        %1433 = vmatprep.mubr.f32.mxu0 0.0
        %1434 = vmatmul.mubr.f32.gmra.mrb[0].mxu0 %v1223
        %v1435 = vpop.f32.mrb[0].mxu0
        %v1436 = vadd.f32 0.0, %v1435
        %v1437 = vpop.f32.mrb[0].mxu0
        %1438 = vmatprep.mubr.f32.mxu0 0.0
        %1439 = vmatmul.mubr.f32.gmra.mrb[0].mxu0 %v1226
        %v1440 = vpop.f32.mrb[0].mxu0
        %v1441 = vadd.f32 0.0, %v1440
        %v1442 = vpop.f32.mrb[0].mxu0
        %1443 = vmatprep.mubr.f32.mxu0 0.0
        %1444 = vmatmul.mubr.f32.gmra.mrb[0].mxu0 %v1229
        %v1445 = vpop.f32.mrb[0].mxu0
        %v1446 = vadd.f32 0.0, %v1445
        %v1447 = vpop.f32.mrb[0].mxu0
        %1448 = vmatprep.mubr.f32.mxu0 0.0
        %1449 = vmatmul.mubr.f32.gmra.mrb[0].mxu0 %v1232
        %v1450 = vpop.f32.mrb[0].mxu0
        %v1451 = vadd.f32 0.0, %v1450
        %v1452 = vpop.f32.mrb[0].mxu0
        %1453 = vmatprep.mubr.f32.mxu0 0.0
        %1454 = vmatmul.mubr.f32.gmra.mrb[0].mxu0 %v1235
        %v1455 = vpop.f32.mrb[0].mxu0
        %v1456 = vadd.f32 0.0, %v1455
        %v1457 = vpop.f32.mrb[0].mxu0
        %1458 = vmatprep.mubr.f32.mxu0 0.0
        %1459 = vmatmul.mubr.f32.gmra.mrb[0].mxu0 %v1238
        %v1460 = vpop.f32.mrb[0].mxu0
        %v1461 = vadd.f32 0.0, %v1460
        %v1462 = vpop.f32.mrb[0].mxu0
        %1463 = vmatprep.mubr.f32.mxu0 0.0
        %1464 = vmatmul.mubr.f32.gmra.mrb[0].mxu0 %v1241
        %v1465 = vpop.f32.mrb[0].mxu0
        %v1466 = vadd.f32 0.0, %v1465
        %v1467 = vpop.f32.mrb[0].mxu0
        %1468 = vmatprep.mubr.f32.mxu0 0.0
        %1469 = vmatmul.mubr.f32.gmra.mrb[0].mxu0 %v1244
        %v1470 = vpop.f32.mrb[0].mxu0
        %v1471 = vadd.f32 0.0, %v1470
        %v1472 = vpop.f32.mrb[0].mxu0
        %1473 = vdwg.mxu0
        %v1474 = vld [vmem:[%s657 + $0x1] sm:$0xff]
        %v1475 = vld [vmem:[%s657 + $0x9] sm:$0xff]
        %v1476 = vld [vmem:[%s657 + $0x19] sm:$0xff]
        %v1477 = vld [vmem:[%s657 + $0x21] sm:$0xff]
        %v1478 = vld [vmem:[%s657 + $0x31] sm:$0xff]
        %v1479 = vld [vmem:[%s657 + $0x39] sm:$0xff]
        %v1480 = vld [vmem:[%s657 + $0x49] sm:$0xff]
        %v1481 = vld [vmem:[%s657 + $0x51] sm:$0xff]
        %v1482 = vld [vmem:[%s657 + $0x61] sm:$0xff]
        %v1483 = vld [vmem:[%s657 + $0x69] sm:$0xff]
        %v1484 = vld [vmem:[%s657 + $0x79] sm:$0xff]
        %v1485 = vld [vmem:[%s657 + $0x81] sm:$0xff]
        %v1486 = vld [vmem:[%s657 + $0x91] sm:$0xff]
        %v1487 = vld [vmem:[%s657 + $0x99] sm:$0xff]
        %v1488 = vld [vmem:[%s657 + $0xa9] sm:$0xff]
        %v1489 = vld [vmem:[%s657 + $0xb1] sm:$0xff]
        %v1490 = vld [vmem:[%s657 + $0xc1] sm:$0xff]
        %v1491 = vld [vmem:[%s657 + $0xc9] sm:$0xff]
        %v1492 = vld [vmem:[%s657 + $0xd9] sm:$0xff]
        %v1493 = vld [vmem:[%s657 + $0xe1] sm:$0xff]
        %v1494 = vld [vmem:[%s657 + $0xf1] sm:$0xff]
        %v1495 = vld [vmem:[%s657 + $0xf9] sm:$0xff]
        %v1496 = vld [vmem:[%s657 + $0x109] sm:$0xff]
        %v1497 = vld [vmem:[%s657 + $0x111] sm:$0xff]
        %v1498 = vld [vmem:[%s657 + $0x121] sm:$0xff]
        %v1499 = vld [vmem:[%s657 + $0x129] sm:$0xff]
        %v1500 = vld [vmem:[%s657 + $0x139] sm:$0xff]
        %v1501 = vld [vmem:[%s657 + $0x141] sm:$0xff]
        %v1502 = vld [vmem:[%s657 + $0x151] sm:$0xff]
        %v1503 = vld [vmem:[%s657 + $0x159] sm:$0xff]
        %v1504 = vld [vmem:[%s657 + $0x169] sm:$0xff]
        %v1505 = vld [vmem:[%s657 + $0x171] sm:$0xff]
        %s1506 = scalar_lea.vmem [#allocation7], 16
        %v1507 = vld [vmem:[%s1506] sm:$0xf]
        %v1508 = vld [vmem:[%s657 + $0x2] sm:$0xff]
        %v1509 = vld [vmem:[%s657 + $0xa] sm:$0xff]
        %v1510 = vld [vmem:[%s657 + $0x1a] sm:$0xff]
        %v1511 = vld [vmem:[%s657 + $0x22] sm:$0xff]
        %v1512 = vld [vmem:[%s657 + $0x32] sm:$0xff]
        %v1513 = vld [vmem:[%s657 + $0x3a] sm:$0xff]
        %v1514 = vld [vmem:[%s657 + $0x4a] sm:$0xff]
        %v1515 = vld [vmem:[%s657 + $0x52] sm:$0xff]
        %v1516 = vld [vmem:[%s657 + $0x62] sm:$0xff]
        %v1517 = vld [vmem:[%s657 + $0x6a] sm:$0xff]
        %v1518 = vld [vmem:[%s657 + $0x7a] sm:$0xff]
        %v1519 = vld [vmem:[%s657 + $0x82] sm:$0xff]
        %v1520 = vld [vmem:[%s657 + $0x92] sm:$0xff]
        %v1521 = vld [vmem:[%s657 + $0x9a] sm:$0xff]
        %v1522 = vld [vmem:[%s657 + $0xaa] sm:$0xff]
        %v1523 = vld [vmem:[%s657 + $0xb2] sm:$0xff]
        %v1524 = vld [vmem:[%s657 + $0xc2] sm:$0xff]
        %v1525 = vld [vmem:[%s657 + $0xca] sm:$0xff]
        %v1526 = vld [vmem:[%s657 + $0xda] sm:$0xff]
        %v1527 = vld [vmem:[%s657 + $0xe2] sm:$0xff]
        %v1528 = vld [vmem:[%s657 + $0xf2] sm:$0xff]
        %v1529 = vld [vmem:[%s657 + $0xfa] sm:$0xff]
        %v1530 = vld [vmem:[%s657 + $0x10a] sm:$0xff]
        %v1531 = vld [vmem:[%s657 + $0x112] sm:$0xff]
        %v1532 = vld [vmem:[%s657 + $0x122] sm:$0xff]
        %v1533 = vld [vmem:[%s657 + $0x12a] sm:$0xff]
        %v1534 = vld [vmem:[%s657 + $0x13a] sm:$0xff]
        %v1535 = vld [vmem:[%s657 + $0x142] sm:$0xff]
        %v1536 = vld [vmem:[%s657 + $0x152] sm:$0xff]
        %v1537 = vld [vmem:[%s657 + $0x15a] sm:$0xff]
        %v1538 = vld [vmem:[%s657 + $0x16a] sm:$0xff]
        %v1539 = vld [vmem:[%s657 + $0x172] sm:$0xff]
        %s1540 = scalar_lea.vmem [#allocation7], 20
        %v1541 = vld [vmem:[%s1540] sm:$0xf]
        %v1543 = vsel %vm455, %v1508, 0
        %v1546 = vsel %vm455, %v1509, 0
        %v1549 = vsel %vm455, %v1510, 0
        %v1552 = vsel %vm455, %v1511, 0
        %v1555 = vsel %vm455, %v1512, 0
        %v1558 = vsel %vm455, %v1513, 0
        %v1561 = vsel %vm455, %v1514, 0
        %v1564 = vsel %vm455, %v1515, 0
        %v1567 = vsel %vm455, %v1516, 0
        %v1570 = vsel %vm455, %v1517, 0
        %v1573 = vsel %vm455, %v1518, 0
        %v1576 = vsel %vm455, %v1519, 0
        %v1579 = vsel %vm455, %v1520, 0
        %v1582 = vsel %vm455, %v1521, 0
        %v1585 = vsel %vm455, %v1522, 0
        %v1588 = vsel %vm455, %v1523, 0
        %v1591 = vsel %vm455, %v1524, 0
        %v1594 = vsel %vm455, %v1525, 0
        %v1597 = vsel %vm455, %v1526, 0
        %v1600 = vsel %vm455, %v1527, 0
        %v1603 = vsel %vm455, %v1528, 0
        %v1606 = vsel %vm455, %v1529, 0
        %v1609 = vsel %vm455, %v1530, 0
        %v1612 = vsel %vm455, %v1531, 0
        %v1615 = vsel %vm455, %v1532, 0
        %v1618 = vsel %vm455, %v1533, 0
        %v1621 = vsel %vm455, %v1534, 0
        %v1624 = vsel %vm455, %v1535, 0
        %v1627 = vsel %vm455, %v1536, 0
        %v1630 = vsel %vm455, %v1537, 0
        %v1633 = vsel %vm455, %v1538, 0
        %v1636 = vsel %vm455, %v1539, 0
        %v1639 = vsel %vm853, %v1541, 0
        %1641 = vmatprep.subr.mxu0 0.0
        %1642 = vmatpush1.msra.mxu0 %v1639
        %1643 = vmatprep.subr.mxu0 0.0
        %1644 = vmatpush1.msra.mxu0 0.0
        %1645 = vmatprep.subr.mxu0 0.0
        %1646 = vmatpush1.msra.mxu0 0.0
        %1647 = vmatprep.subr.mxu0 0.0
        %1648 = vmatpush1.msra.mxu0 0.0
        %1649 = vmatprep.subr.mxu0 0.0
        %1650 = vmatpush1.msra.mxu0 0.0
        %1651 = vmatprep.subr.mxu0 0.0
        %1652 = vmatpush1.msra.mxu0 0.0
        %1653 = vmatprep.subr.mxu0 0.0
        %1654 = vmatpush1.msra.mxu0 0.0
        %1655 = vmatprep.subr.mxu0 0.0
        %1656 = vmatpush1.msra.mxu0 0.0
        %1657 = vmatprep.subr.mxu0 0.0
        %1658 = vmatpush1.msra.mxu0 0.0
        %1659 = vmatprep.subr.mxu0 0.0
        %1660 = vmatpush1.msra.mxu0 0.0
        %1661 = vmatprep.subr.mxu0 0.0
        %1662 = vmatpush1.msra.mxu0 0.0
        %1663 = vmatprep.subr.mxu0 0.0
        %1664 = vmatpush1.msra.mxu0 0.0
        %1665 = vmatprep.subr.mxu0 0.0
        %1666 = vmatpush1.msra.mxu0 0.0
        %1667 = vmatprep.subr.mxu0 0.0
        %1668 = vmatpush1.msra.mxu0 0.0
        %1669 = vmatprep.subr.mxu0 0.0
        %1670 = vmatpush1.msra.mxu0 0.0
        %1671 = vmatprep.subr.mxu0 0.0
        %1672 = vmatpush1.msra.mxu0 0.0
        %1673 = vmatprep.subr.mxu0 0.0
        %1674 = vmatpush1.msra.mxu0 0.0
        %1675 = vmatprep.subr.mxu0 0.0
        %1676 = vmatpush1.msra.mxu0 0.0
        %1677 = vmatprep.subr.mxu0 0.0
        %1678 = vmatpush1.msra.mxu0 0.0
        %1679 = vmatprep.subr.mxu0 0.0
        %1680 = vmatpush1.msra.mxu0 0.0
        %1681 = vmatprep.subr.mxu0 0.0
        %1682 = vmatpush1.msra.mxu0 0.0
        %1683 = vmatprep.subr.mxu0 0.0
        %1684 = vmatpush1.msra.mxu0 0.0
        %1685 = vmatprep.subr.mxu0 0.0
        %1686 = vmatpush1.msra.mxu0 0.0
        %1687 = vmatprep.subr.mxu0 0.0
        %1688 = vmatpush1.msra.mxu0 0.0
        %1689 = vmatprep.subr.mxu0 0.0
        %1690 = vmatpush1.msra.mxu0 0.0
        %1691 = vmatprep.subr.mxu0 0.0
        %1692 = vmatpush1.msra.mxu0 0.0
        %1693 = vmatprep.subr.mxu0 0.0
        %1694 = vmatpush1.msra.mxu0 0.0
        %1695 = vmatprep.subr.mxu0 0.0
        %1696 = vmatpush1.msra.mxu0 0.0
        %1697 = vmatprep.subr.mxu0 0.0
        %1698 = vmatpush1.msra.mxu0 0.0
        %1699 = vmatprep.subr.mxu0 0.0
        %1700 = vmatpush1.msra.mxu0 0.0
        %1701 = vmatprep.subr.mxu0 0.0
        %1702 = vmatpush1.msra.mxu0 0.0
        %1703 = vmatprep.subr.mxu0 0.0
        %1704 = vmatpush1.msra.mxu0 0.0
        %1705 = vmatprep.mubr.f32.mxu0 0.0
        %1706 = vmatmul.mubr.f32.gmra.mrb[0].mxu0 %v1543
        %v1707 = vpop.f32.mrb[0].mxu0
        %v1708 = vadd.f32 0.0, %v1707
        %v1709 = vpop.f32.mrb[0].mxu0
        %1710 = vmatprep.mubr.f32.mxu0 0.0
        %1711 = vmatmul.mubr.f32.gmra.mrb[0].mxu0 %v1546
        %v1712 = vpop.f32.mrb[0].mxu0
        %v1713 = vadd.f32 0.0, %v1712
        %v1714 = vpop.f32.mrb[0].mxu0
        %1715 = vmatprep.mubr.f32.mxu0 0.0
        %1716 = vmatmul.mubr.f32.gmra.mrb[0].mxu0 %v1549
        %v1717 = vpop.f32.mrb[0].mxu0
        %v1718 = vadd.f32 0.0, %v1717
        %v1719 = vpop.f32.mrb[0].mxu0
        %1720 = vmatprep.mubr.f32.mxu0 0.0
        %1721 = vmatmul.mubr.f32.gmra.mrb[0].mxu0 %v1552
        %v1722 = vpop.f32.mrb[0].mxu0
        %v1723 = vadd.f32 0.0, %v1722
        %v1724 = vpop.f32.mrb[0].mxu0
        %1725 = vmatprep.mubr.f32.mxu0 0.0
        %1726 = vmatmul.mubr.f32.gmra.mrb[0].mxu0 %v1555
        %v1727 = vpop.f32.mrb[0].mxu0
        %v1728 = vadd.f32 0.0, %v1727
        %v1729 = vpop.f32.mrb[0].mxu0
        %1730 = vmatprep.mubr.f32.mxu0 0.0
        %1731 = vmatmul.mubr.f32.gmra.mrb[0].mxu0 %v1558
        %v1732 = vpop.f32.mrb[0].mxu0
        %v1733 = vadd.f32 0.0, %v1732
        %v1734 = vpop.f32.mrb[0].mxu0
        %1735 = vmatprep.mubr.f32.mxu0 0.0
        %1736 = vmatmul.mubr.f32.gmra.mrb[0].mxu0 %v1561
        %v1737 = vpop.f32.mrb[0].mxu0
        %v1738 = vadd.f32 0.0, %v1737
        %v1739 = vpop.f32.mrb[0].mxu0
        %1740 = vmatprep.mubr.f32.mxu0 0.0
        %1741 = vmatmul.mubr.f32.gmra.mrb[0].mxu0 %v1564
        %v1742 = vpop.f32.mrb[0].mxu0
        %v1743 = vadd.f32 0.0, %v1742
        %v1744 = vpop.f32.mrb[0].mxu0
        %1745 = vmatprep.mubr.f32.mxu0 0.0
        %1746 = vmatmul.mubr.f32.gmra.mrb[0].mxu0 %v1567
        %v1747 = vpop.f32.mrb[0].mxu0
        %v1748 = vadd.f32 0.0, %v1747
        %v1749 = vpop.f32.mrb[0].mxu0
        %1750 = vmatprep.mubr.f32.mxu0 0.0
        %1751 = vmatmul.mubr.f32.gmra.mrb[0].mxu0 %v1570
        %v1752 = vpop.f32.mrb[0].mxu0
        %v1753 = vadd.f32 0.0, %v1752
        %v1754 = vpop.f32.mrb[0].mxu0
        %1755 = vmatprep.mubr.f32.mxu0 0.0
        %1756 = vmatmul.mubr.f32.gmra.mrb[0].mxu0 %v1573
        %v1757 = vpop.f32.mrb[0].mxu0
        %v1758 = vadd.f32 0.0, %v1757
        %v1759 = vpop.f32.mrb[0].mxu0
        %1760 = vmatprep.mubr.f32.mxu0 0.0
        %1761 = vmatmul.mubr.f32.gmra.mrb[0].mxu0 %v1576
        %v1762 = vpop.f32.mrb[0].mxu0
        %v1763 = vadd.f32 0.0, %v1762
        %v1764 = vpop.f32.mrb[0].mxu0
        %1765 = vmatprep.mubr.f32.mxu0 0.0
        %1766 = vmatmul.mubr.f32.gmra.mrb[0].mxu0 %v1579
        %v1767 = vpop.f32.mrb[0].mxu0
        %v1768 = vadd.f32 0.0, %v1767
        %v1769 = vpop.f32.mrb[0].mxu0
        %1770 = vmatprep.mubr.f32.mxu0 0.0
        %1771 = vmatmul.mubr.f32.gmra.mrb[0].mxu0 %v1582
        %v1772 = vpop.f32.mrb[0].mxu0
        %v1773 = vadd.f32 0.0, %v1772
        %v1774 = vpop.f32.mrb[0].mxu0
        %1775 = vmatprep.mubr.f32.mxu0 0.0
        %1776 = vmatmul.mubr.f32.gmra.mrb[0].mxu0 %v1585
        %v1777 = vpop.f32.mrb[0].mxu0
        %v1778 = vadd.f32 0.0, %v1777
        %v1779 = vpop.f32.mrb[0].mxu0
        %1780 = vmatprep.mubr.f32.mxu0 0.0
        %1781 = vmatmul.mubr.f32.gmra.mrb[0].mxu0 %v1588
        %v1782 = vpop.f32.mrb[0].mxu0
        %v1783 = vadd.f32 0.0, %v1782
        %v1784 = vpop.f32.mrb[0].mxu0
        %1785 = vmatprep.mubr.f32.mxu0 0.0
        %1786 = vmatmul.mubr.f32.gmra.mrb[0].mxu0 %v1591
        %v1787 = vpop.f32.mrb[0].mxu0
        %v1788 = vadd.f32 0.0, %v1787
        %v1789 = vpop.f32.mrb[0].mxu0
        %1790 = vmatprep.mubr.f32.mxu0 0.0
        %1791 = vmatmul.mubr.f32.gmra.mrb[0].mxu0 %v1594
        %v1792 = vpop.f32.mrb[0].mxu0
        %v1793 = vadd.f32 0.0, %v1792
        %v1794 = vpop.f32.mrb[0].mxu0
        %1795 = vmatprep.mubr.f32.mxu0 0.0
        %1796 = vmatmul.mubr.f32.gmra.mrb[0].mxu0 %v1597
        %v1797 = vpop.f32.mrb[0].mxu0
        %v1798 = vadd.f32 0.0, %v1797
        %v1799 = vpop.f32.mrb[0].mxu0
        %1800 = vmatprep.mubr.f32.mxu0 0.0
        %1801 = vmatmul.mubr.f32.gmra.mrb[0].mxu0 %v1600
        %v1802 = vpop.f32.mrb[0].mxu0
        %v1803 = vadd.f32 0.0, %v1802
        %v1804 = vpop.f32.mrb[0].mxu0
        %1805 = vmatprep.mubr.f32.mxu0 0.0
        %1806 = vmatmul.mubr.f32.gmra.mrb[0].mxu0 %v1603
        %v1807 = vpop.f32.mrb[0].mxu0
        %v1808 = vadd.f32 0.0, %v1807
        %v1809 = vpop.f32.mrb[0].mxu0
        %1810 = vmatprep.mubr.f32.mxu0 0.0
        %1811 = vmatmul.mubr.f32.gmra.mrb[0].mxu0 %v1606
        %v1812 = vpop.f32.mrb[0].mxu0
        %v1813 = vadd.f32 0.0, %v1812
        %v1814 = vpop.f32.mrb[0].mxu0
        %1815 = vmatprep.mubr.f32.mxu0 0.0
        %1816 = vmatmul.mubr.f32.gmra.mrb[0].mxu0 %v1609
        %v1817 = vpop.f32.mrb[0].mxu0
        %v1818 = vadd.f32 0.0, %v1817
        %v1819 = vpop.f32.mrb[0].mxu0
        %1820 = vmatprep.mubr.f32.mxu0 0.0
        %1821 = vmatmul.mubr.f32.gmra.mrb[0].mxu0 %v1612
        %v1822 = vpop.f32.mrb[0].mxu0
        %v1823 = vadd.f32 0.0, %v1822
        %v1824 = vpop.f32.mrb[0].mxu0
        %1825 = vmatprep.mubr.f32.mxu0 0.0
        %1826 = vmatmul.mubr.f32.gmra.mrb[0].mxu0 %v1615
        %v1827 = vpop.f32.mrb[0].mxu0
        %v1828 = vadd.f32 0.0, %v1827
        %v1829 = vpop.f32.mrb[0].mxu0
        %1830 = vmatprep.mubr.f32.mxu0 0.0
        %1831 = vmatmul.mubr.f32.gmra.mrb[0].mxu0 %v1618
        %v1832 = vpop.f32.mrb[0].mxu0
        %v1833 = vadd.f32 0.0, %v1832
        %v1834 = vpop.f32.mrb[0].mxu0
        %1835 = vmatprep.mubr.f32.mxu0 0.0
        %1836 = vmatmul.mubr.f32.gmra.mrb[0].mxu0 %v1621
        %v1837 = vpop.f32.mrb[0].mxu0
        %v1838 = vadd.f32 0.0, %v1837
        %v1839 = vpop.f32.mrb[0].mxu0
        %1840 = vmatprep.mubr.f32.mxu0 0.0
        %1841 = vmatmul.mubr.f32.gmra.mrb[0].mxu0 %v1624
        %v1842 = vpop.f32.mrb[0].mxu0
        %v1843 = vadd.f32 0.0, %v1842
        %v1844 = vpop.f32.mrb[0].mxu0
        %1845 = vmatprep.mubr.f32.mxu0 0.0
        %1846 = vmatmul.mubr.f32.gmra.mrb[0].mxu0 %v1627
        %v1847 = vpop.f32.mrb[0].mxu0
        %v1848 = vadd.f32 0.0, %v1847
        %v1849 = vpop.f32.mrb[0].mxu0
        %1850 = vmatprep.mubr.f32.mxu0 0.0
        %1851 = vmatmul.mubr.f32.gmra.mrb[0].mxu0 %v1630
        %v1852 = vpop.f32.mrb[0].mxu0
        %v1853 = vadd.f32 0.0, %v1852
        %v1854 = vpop.f32.mrb[0].mxu0
        %1855 = vmatprep.mubr.f32.mxu0 0.0
        %1856 = vmatmul.mubr.f32.gmra.mrb[0].mxu0 %v1633
        %v1857 = vpop.f32.mrb[0].mxu0
        %v1858 = vadd.f32 0.0, %v1857
        %v1859 = vpop.f32.mrb[0].mxu0
        %1860 = vmatprep.mubr.f32.mxu0 0.0
        %1861 = vmatmul.mubr.f32.gmra.mrb[0].mxu0 %v1636
        %v1862 = vpop.f32.mrb[0].mxu0
        %v1863 = vadd.f32 0.0, %v1862
        %v1864 = vpop.f32.mrb[0].mxu0
        %1865 = vdwg.mxu0
        %s1866 = scalar_lea.vmem [#allocation2], 48
        %v1867 = vld [vmem:[%s1866] sm:$0xff]
        %v1868 = vld [vmem:[%s1866 + $0x8] sm:$0xff]
        %v1869 = vld [vmem:[%s1866 + $0x18] sm:$0xff]
        %v1870 = vld [vmem:[%s1866 + $0x20] sm:$0xff]
        %v1871 = vld [vmem:[%s1866 + $0x30] sm:$0xff]
        %v1872 = vld [vmem:[%s1866 + $0x38] sm:$0xff]
        %v1873 = vld [vmem:[%s1866 + $0x48] sm:$0xff]
        %v1874 = vld [vmem:[%s1866 + $0x50] sm:$0xff]
        %v1875 = vld [vmem:[%s1866 + $0x60] sm:$0xff]
        %v1876 = vld [vmem:[%s1866 + $0x68] sm:$0xff]
        %v1877 = vld [vmem:[%s1866 + $0x78] sm:$0xff]
        %v1878 = vld [vmem:[%s1866 + $0x80] sm:$0xff]
        %v1879 = vld [vmem:[%s1866 + $0x90] sm:$0xff]
        %v1880 = vld [vmem:[%s1866 + $0x98] sm:$0xff]
        %v1881 = vld [vmem:[%s1866 + $0xa8] sm:$0xff]
        %v1882 = vld [vmem:[%s1866 + $0xb0] sm:$0xff]
        %v1883 = vld [vmem:[%s1866 + $0xc0] sm:$0xff]
        %v1884 = vld [vmem:[%s1866 + $0xc8] sm:$0xff]
        %v1885 = vld [vmem:[%s1866 + $0xd8] sm:$0xff]
        %v1886 = vld [vmem:[%s1866 + $0xe0] sm:$0xff]
        %v1887 = vld [vmem:[%s1866 + $0xf0] sm:$0xff]
        %v1888 = vld [vmem:[%s1866 + $0xf8] sm:$0xff]
        %v1889 = vld [vmem:[%s1866 + $0x108] sm:$0xff]
        %v1890 = vld [vmem:[%s1866 + $0x110] sm:$0xff]
        %v1891 = vld [vmem:[%s1866 + $0x120] sm:$0xff]
        %v1892 = vld [vmem:[%s1866 + $0x128] sm:$0xff]
        %v1893 = vld [vmem:[%s1866 + $0x138] sm:$0xff]
        %v1894 = vld [vmem:[%s1866 + $0x140] sm:$0xff]
        %v1895 = vld [vmem:[%s1866 + $0x150] sm:$0xff]
        %v1896 = vld [vmem:[%s1866 + $0x158] sm:$0xff]
        %v1897 = vld [vmem:[%s1866 + $0x168] sm:$0xff]
        %v1898 = vld [vmem:[%s1866 + $0x170] sm:$0xff]
        %s1899 = scalar_lea.vmem [#allocation7], 24
        %v1900 = vld [vmem:[%s1899] sm:$0xf]
        %v1901 = vld [vmem:[%s1866 + $0x1] sm:$0xff]
        %v1902 = vld [vmem:[%s1866 + $0x9] sm:$0xff]
        %v1903 = vld [vmem:[%s1866 + $0x19] sm:$0xff]
        %v1904 = vld [vmem:[%s1866 + $0x21] sm:$0xff]
        %v1905 = vld [vmem:[%s1866 + $0x31] sm:$0xff]
        %v1906 = vld [vmem:[%s1866 + $0x39] sm:$0xff]
        %v1907 = vld [vmem:[%s1866 + $0x49] sm:$0xff]
        %v1908 = vld [vmem:[%s1866 + $0x51] sm:$0xff]
        %v1909 = vld [vmem:[%s1866 + $0x61] sm:$0xff]
        %v1910 = vld [vmem:[%s1866 + $0x69] sm:$0xff]
        %v1911 = vld [vmem:[%s1866 + $0x79] sm:$0xff]
        %v1912 = vld [vmem:[%s1866 + $0x81] sm:$0xff]
        %v1913 = vld [vmem:[%s1866 + $0x91] sm:$0xff]
        %v1914 = vld [vmem:[%s1866 + $0x99] sm:$0xff]
        %v1915 = vld [vmem:[%s1866 + $0xa9] sm:$0xff]
        %v1916 = vld [vmem:[%s1866 + $0xb1] sm:$0xff]
        %v1917 = vld [vmem:[%s1866 + $0xc1] sm:$0xff]
        %v1918 = vld [vmem:[%s1866 + $0xc9] sm:$0xff]
        %v1919 = vld [vmem:[%s1866 + $0xd9] sm:$0xff]
        %v1920 = vld [vmem:[%s1866 + $0xe1] sm:$0xff]
        %v1921 = vld [vmem:[%s1866 + $0xf1] sm:$0xff]
        %v1922 = vld [vmem:[%s1866 + $0xf9] sm:$0xff]
        %v1923 = vld [vmem:[%s1866 + $0x109] sm:$0xff]
        %v1924 = vld [vmem:[%s1866 + $0x111] sm:$0xff]
        %v1925 = vld [vmem:[%s1866 + $0x121] sm:$0xff]
        %v1926 = vld [vmem:[%s1866 + $0x129] sm:$0xff]
        %v1927 = vld [vmem:[%s1866 + $0x139] sm:$0xff]
        %v1928 = vld [vmem:[%s1866 + $0x141] sm:$0xff]
        %v1929 = vld [vmem:[%s1866 + $0x151] sm:$0xff]
        %v1930 = vld [vmem:[%s1866 + $0x159] sm:$0xff]
        %v1931 = vld [vmem:[%s1866 + $0x169] sm:$0xff]
        %v1932 = vld [vmem:[%s1866 + $0x171] sm:$0xff]
        %s1933 = scalar_lea.vmem [#allocation7], 28
        %v1934 = vld [vmem:[%s1933] sm:$0xf]
        %v1936 = vsel %vm455, %v1901, 0
        %v1939 = vsel %vm455, %v1902, 0
        %v1942 = vsel %vm455, %v1903, 0
        %v1945 = vsel %vm455, %v1904, 0
        %v1948 = vsel %vm455, %v1905, 0
        %v1951 = vsel %vm455, %v1906, 0
        %v1954 = vsel %vm455, %v1907, 0
        %v1957 = vsel %vm455, %v1908, 0
        %v1960 = vsel %vm455, %v1909, 0
        %v1963 = vsel %vm455, %v1910, 0
        %v1966 = vsel %vm455, %v1911, 0
        %v1969 = vsel %vm455, %v1912, 0
        %v1972 = vsel %vm455, %v1913, 0
        %v1975 = vsel %vm455, %v1914, 0
        %v1978 = vsel %vm455, %v1915, 0
        %v1981 = vsel %vm455, %v1916, 0
        %v1984 = vsel %vm455, %v1917, 0
        %v1987 = vsel %vm455, %v1918, 0
        %v1990 = vsel %vm455, %v1919, 0
        %v1993 = vsel %vm455, %v1920, 0
        %v1996 = vsel %vm455, %v1921, 0
        %v1999 = vsel %vm455, %v1922, 0
        %v2002 = vsel %vm455, %v1923, 0
        %v2005 = vsel %vm455, %v1924, 0
        %v2008 = vsel %vm455, %v1925, 0
        %v2011 = vsel %vm455, %v1926, 0
        %v2014 = vsel %vm455, %v1927, 0
        %v2017 = vsel %vm455, %v1928, 0
        %v2020 = vsel %vm455, %v1929, 0
        %v2023 = vsel %vm455, %v1930, 0
        %v2026 = vsel %vm455, %v1931, 0
        %v2029 = vsel %vm455, %v1932, 0
        %v2032 = vsel %vm853, %v1934, 0
        %2034 = vmatprep.subr.mxu0 0.0
        %2035 = vmatpush1.msra.mxu0 %v2032
        %2036 = vmatprep.subr.mxu0 0.0
        %2037 = vmatpush1.msra.mxu0 0.0
        %2038 = vmatprep.subr.mxu0 0.0
        %2039 = vmatpush1.msra.mxu0 0.0
        %2040 = vmatprep.subr.mxu0 0.0
        %2041 = vmatpush1.msra.mxu0 0.0
        %2042 = vmatprep.subr.mxu0 0.0
        %2043 = vmatpush1.msra.mxu0 0.0
        %2044 = vmatprep.subr.mxu0 0.0
        %2045 = vmatpush1.msra.mxu0 0.0
        %2046 = vmatprep.subr.mxu0 0.0
        %2047 = vmatpush1.msra.mxu0 0.0
        %2048 = vmatprep.subr.mxu0 0.0
        %2049 = vmatpush1.msra.mxu0 0.0
        %2050 = vmatprep.subr.mxu0 0.0
        %2051 = vmatpush1.msra.mxu0 0.0
        %2052 = vmatprep.subr.mxu0 0.0
        %2053 = vmatpush1.msra.mxu0 0.0
        %2054 = vmatprep.subr.mxu0 0.0
        %2055 = vmatpush1.msra.mxu0 0.0
        %2056 = vmatprep.subr.mxu0 0.0
        %2057 = vmatpush1.msra.mxu0 0.0
        %2058 = vmatprep.subr.mxu0 0.0
        %2059 = vmatpush1.msra.mxu0 0.0
        %2060 = vmatprep.subr.mxu0 0.0
        %2061 = vmatpush1.msra.mxu0 0.0
        %2062 = vmatprep.subr.mxu0 0.0
        %2063 = vmatpush1.msra.mxu0 0.0
        %2064 = vmatprep.subr.mxu0 0.0
        %2065 = vmatpush1.msra.mxu0 0.0
        %2066 = vmatprep.subr.mxu0 0.0
        %2067 = vmatpush1.msra.mxu0 0.0
        %2068 = vmatprep.subr.mxu0 0.0
        %2069 = vmatpush1.msra.mxu0 0.0
        %2070 = vmatprep.subr.mxu0 0.0
        %2071 = vmatpush1.msra.mxu0 0.0
        %2072 = vmatprep.subr.mxu0 0.0
        %2073 = vmatpush1.msra.mxu0 0.0
        %2074 = vmatprep.subr.mxu0 0.0
        %2075 = vmatpush1.msra.mxu0 0.0
        %2076 = vmatprep.subr.mxu0 0.0
        %2077 = vmatpush1.msra.mxu0 0.0
        %2078 = vmatprep.subr.mxu0 0.0
        %2079 = vmatpush1.msra.mxu0 0.0
        %2080 = vmatprep.subr.mxu0 0.0
        %2081 = vmatpush1.msra.mxu0 0.0
        %2082 = vmatprep.subr.mxu0 0.0
        %2083 = vmatpush1.msra.mxu0 0.0
        %2084 = vmatprep.subr.mxu0 0.0
        %2085 = vmatpush1.msra.mxu0 0.0
        %2086 = vmatprep.subr.mxu0 0.0
        %2087 = vmatpush1.msra.mxu0 0.0
        %2088 = vmatprep.subr.mxu0 0.0
        %2089 = vmatpush1.msra.mxu0 0.0
        %2090 = vmatprep.subr.mxu0 0.0
        %2091 = vmatpush1.msra.mxu0 0.0
        %2092 = vmatprep.subr.mxu0 0.0
        %2093 = vmatpush1.msra.mxu0 0.0
        %2094 = vmatprep.subr.mxu0 0.0
        %2095 = vmatpush1.msra.mxu0 0.0
        %2096 = vmatprep.subr.mxu0 0.0
        %2097 = vmatpush1.msra.mxu0 0.0
        %2098 = vmatprep.mubr.f32.mxu0 0.0
        %2099 = vmatmul.mubr.f32.gmra.mrb[0].mxu0 %v1936
        %v2100 = vpop.f32.mrb[0].mxu0
        %v2101 = vadd.f32 0.0, %v2100
        %v2102 = vpop.f32.mrb[0].mxu0
        %2103 = vmatprep.mubr.f32.mxu0 0.0
        %2104 = vmatmul.mubr.f32.gmra.mrb[0].mxu0 %v1939
        %v2105 = vpop.f32.mrb[0].mxu0
        %v2106 = vadd.f32 0.0, %v2105
        %v2107 = vpop.f32.mrb[0].mxu0
        %2108 = vmatprep.mubr.f32.mxu0 0.0
        %2109 = vmatmul.mubr.f32.gmra.mrb[0].mxu0 %v1942
        %v2110 = vpop.f32.mrb[0].mxu0
        %v2111 = vadd.f32 0.0, %v2110
        %v2112 = vpop.f32.mrb[0].mxu0
        %2113 = vmatprep.mubr.f32.mxu0 0.0
        %2114 = vmatmul.mubr.f32.gmra.mrb[0].mxu0 %v1945
        %v2115 = vpop.f32.mrb[0].mxu0
        %v2116 = vadd.f32 0.0, %v2115
        %v2117 = vpop.f32.mrb[0].mxu0
        %2118 = vmatprep.mubr.f32.mxu0 0.0
        %2119 = vmatmul.mubr.f32.gmra.mrb[0].mxu0 %v1948
        %v2120 = vpop.f32.mrb[0].mxu0
        %v2121 = vadd.f32 0.0, %v2120
        %v2122 = vpop.f32.mrb[0].mxu0
        %2123 = vmatprep.mubr.f32.mxu0 0.0
        %2124 = vmatmul.mubr.f32.gmra.mrb[0].mxu0 %v1951
        %v2125 = vpop.f32.mrb[0].mxu0
        %v2126 = vadd.f32 0.0, %v2125
        %v2127 = vpop.f32.mrb[0].mxu0
        %2128 = vmatprep.mubr.f32.mxu0 0.0
        %2129 = vmatmul.mubr.f32.gmra.mrb[0].mxu0 %v1954
        %v2130 = vpop.f32.mrb[0].mxu0
        %v2131 = vadd.f32 0.0, %v2130
        %v2132 = vpop.f32.mrb[0].mxu0
        %2133 = vmatprep.mubr.f32.mxu0 0.0
        %2134 = vmatmul.mubr.f32.gmra.mrb[0].mxu0 %v1957
        %v2135 = vpop.f32.mrb[0].mxu0
        %v2136 = vadd.f32 0.0, %v2135
        %v2137 = vpop.f32.mrb[0].mxu0
        %2138 = vmatprep.mubr.f32.mxu0 0.0
        %2139 = vmatmul.mubr.f32.gmra.mrb[0].mxu0 %v1960
        %v2140 = vpop.f32.mrb[0].mxu0
        %v2141 = vadd.f32 0.0, %v2140
        %v2142 = vpop.f32.mrb[0].mxu0
        %2143 = vmatprep.mubr.f32.mxu0 0.0
        %2144 = vmatmul.mubr.f32.gmra.mrb[0].mxu0 %v1963
        %v2145 = vpop.f32.mrb[0].mxu0
        %v2146 = vadd.f32 0.0, %v2145
        %v2147 = vpop.f32.mrb[0].mxu0
        %2148 = vmatprep.mubr.f32.mxu0 0.0
        %2149 = vmatmul.mubr.f32.gmra.mrb[0].mxu0 %v1966
        %v2150 = vpop.f32.mrb[0].mxu0
        %v2151 = vadd.f32 0.0, %v2150
        %v2152 = vpop.f32.mrb[0].mxu0
        %2153 = vmatprep.mubr.f32.mxu0 0.0
        %2154 = vmatmul.mubr.f32.gmra.mrb[0].mxu0 %v1969
        %v2155 = vpop.f32.mrb[0].mxu0
        %v2156 = vadd.f32 0.0, %v2155
        %v2157 = vpop.f32.mrb[0].mxu0
        %2158 = vmatprep.mubr.f32.mxu0 0.0
        %2159 = vmatmul.mubr.f32.gmra.mrb[0].mxu0 %v1972
        %v2160 = vpop.f32.mrb[0].mxu0
        %v2161 = vadd.f32 0.0, %v2160
        %v2162 = vpop.f32.mrb[0].mxu0
        %2163 = vmatprep.mubr.f32.mxu0 0.0
        %2164 = vmatmul.mubr.f32.gmra.mrb[0].mxu0 %v1975
        %v2165 = vpop.f32.mrb[0].mxu0
        %v2166 = vadd.f32 0.0, %v2165
        %v2167 = vpop.f32.mrb[0].mxu0
        %2168 = vmatprep.mubr.f32.mxu0 0.0
        %2169 = vmatmul.mubr.f32.gmra.mrb[0].mxu0 %v1978
        %v2170 = vpop.f32.mrb[0].mxu0
        %v2171 = vadd.f32 0.0, %v2170
        %v2172 = vpop.f32.mrb[0].mxu0
        %2173 = vmatprep.mubr.f32.mxu0 0.0
        %2174 = vmatmul.mubr.f32.gmra.mrb[0].mxu0 %v1981
        %v2175 = vpop.f32.mrb[0].mxu0
        %v2176 = vadd.f32 0.0, %v2175
        %v2177 = vpop.f32.mrb[0].mxu0
        %2178 = vmatprep.mubr.f32.mxu0 0.0
        %2179 = vmatmul.mubr.f32.gmra.mrb[0].mxu0 %v1984
        %v2180 = vpop.f32.mrb[0].mxu0
        %v2181 = vadd.f32 0.0, %v2180
        %v2182 = vpop.f32.mrb[0].mxu0
        %2183 = vmatprep.mubr.f32.mxu0 0.0
        %2184 = vmatmul.mubr.f32.gmra.mrb[0].mxu0 %v1987
        %v2185 = vpop.f32.mrb[0].mxu0
        %v2186 = vadd.f32 0.0, %v2185
        %v2187 = vpop.f32.mrb[0].mxu0
        %2188 = vmatprep.mubr.f32.mxu0 0.0
        %2189 = vmatmul.mubr.f32.gmra.mrb[0].mxu0 %v1990
        %v2190 = vpop.f32.mrb[0].mxu0
        %v2191 = vadd.f32 0.0, %v2190
        %v2192 = vpop.f32.mrb[0].mxu0
        %2193 = vmatprep.mubr.f32.mxu0 0.0
        %2194 = vmatmul.mubr.f32.gmra.mrb[0].mxu0 %v1993
        %v2195 = vpop.f32.mrb[0].mxu0
        %v2196 = vadd.f32 0.0, %v2195
        %v2197 = vpop.f32.mrb[0].mxu0
        %2198 = vmatprep.mubr.f32.mxu0 0.0
        %2199 = vmatmul.mubr.f32.gmra.mrb[0].mxu0 %v1996
        %v2200 = vpop.f32.mrb[0].mxu0
        %v2201 = vadd.f32 0.0, %v2200
        %v2202 = vpop.f32.mrb[0].mxu0
        %2203 = vmatprep.mubr.f32.mxu0 0.0
        %2204 = vmatmul.mubr.f32.gmra.mrb[0].mxu0 %v1999
        %v2205 = vpop.f32.mrb[0].mxu0
        %v2206 = vadd.f32 0.0, %v2205
        %v2207 = vpop.f32.mrb[0].mxu0
        %2208 = vmatprep.mubr.f32.mxu0 0.0
        %2209 = vmatmul.mubr.f32.gmra.mrb[0].mxu0 %v2002
        %v2210 = vpop.f32.mrb[0].mxu0
        %v2211 = vadd.f32 0.0, %v2210
        %v2212 = vpop.f32.mrb[0].mxu0
        %2213 = vmatprep.mubr.f32.mxu0 0.0
        %2214 = vmatmul.mubr.f32.gmra.mrb[0].mxu0 %v2005
        %v2215 = vpop.f32.mrb[0].mxu0
        %v2216 = vadd.f32 0.0, %v2215
        %v2217 = vpop.f32.mrb[0].mxu0
        %2218 = vmatprep.mubr.f32.mxu0 0.0
        %2219 = vmatmul.mubr.f32.gmra.mrb[0].mxu0 %v2008
        %v2220 = vpop.f32.mrb[0].mxu0
        %v2221 = vadd.f32 0.0, %v2220
        %v2222 = vpop.f32.mrb[0].mxu0
        %2223 = vmatprep.mubr.f32.mxu0 0.0
        %2224 = vmatmul.mubr.f32.gmra.mrb[0].mxu0 %v2011
        %v2225 = vpop.f32.mrb[0].mxu0
        %v2226 = vadd.f32 0.0, %v2225
        %v2227 = vpop.f32.mrb[0].mxu0
        %2228 = vmatprep.mubr.f32.mxu0 0.0
        %2229 = vmatmul.mubr.f32.gmra.mrb[0].mxu0 %v2014
        %v2230 = vpop.f32.mrb[0].mxu0
        %v2231 = vadd.f32 0.0, %v2230
        %v2232 = vpop.f32.mrb[0].mxu0
        %2233 = vmatprep.mubr.f32.mxu0 0.0
        %2234 = vmatmul.mubr.f32.gmra.mrb[0].mxu0 %v2017
        %v2235 = vpop.f32.mrb[0].mxu0
        %v2236 = vadd.f32 0.0, %v2235
        %v2237 = vpop.f32.mrb[0].mxu0
        %2238 = vmatprep.mubr.f32.mxu0 0.0
        %2239 = vmatmul.mubr.f32.gmra.mrb[0].mxu0 %v2020
        %v2240 = vpop.f32.mrb[0].mxu0
        %v2241 = vadd.f32 0.0, %v2240
        %v2242 = vpop.f32.mrb[0].mxu0
        %2243 = vmatprep.mubr.f32.mxu0 0.0
        %2244 = vmatmul.mubr.f32.gmra.mrb[0].mxu0 %v2023
        %v2245 = vpop.f32.mrb[0].mxu0
        %v2246 = vadd.f32 0.0, %v2245
        %v2247 = vpop.f32.mrb[0].mxu0
        %2248 = vmatprep.mubr.f32.mxu0 0.0
        %2249 = vmatmul.mubr.f32.gmra.mrb[0].mxu0 %v2026
        %v2250 = vpop.f32.mrb[0].mxu0
        %v2251 = vadd.f32 0.0, %v2250
        %v2252 = vpop.f32.mrb[0].mxu0
        %2253 = vmatprep.mubr.f32.mxu0 0.0
        %2254 = vmatmul.mubr.f32.gmra.mrb[0].mxu0 %v2029
        %v2255 = vpop.f32.mrb[0].mxu0
        %v2256 = vadd.f32 0.0, %v2255
        %v2257 = vpop.f32.mrb[0].mxu0
        %2258 = vdwg.mxu0
        %v2259 = vld [vmem:[%s1866 + $0x2] sm:$0xff]
        %v2260 = vld [vmem:[%s1866 + $0xa] sm:$0xff]
        %v2261 = vld [vmem:[%s1866 + $0x1a] sm:$0xff]
        %v2262 = vld [vmem:[%s1866 + $0x22] sm:$0xff]
        %v2263 = vld [vmem:[%s1866 + $0x32] sm:$0xff]
        %v2264 = vld [vmem:[%s1866 + $0x3a] sm:$0xff]
        %v2265 = vld [vmem:[%s1866 + $0x4a] sm:$0xff]
        %v2266 = vld [vmem:[%s1866 + $0x52] sm:$0xff]
        %v2267 = vld [vmem:[%s1866 + $0x62] sm:$0xff]
        %v2268 = vld [vmem:[%s1866 + $0x6a] sm:$0xff]
        %v2269 = vld [vmem:[%s1866 + $0x7a] sm:$0xff]
        %v2270 = vld [vmem:[%s1866 + $0x82] sm:$0xff]
        %v2271 = vld [vmem:[%s1866 + $0x92] sm:$0xff]
        %v2272 = vld [vmem:[%s1866 + $0x9a] sm:$0xff]
        %v2273 = vld [vmem:[%s1866 + $0xaa] sm:$0xff]
        %v2274 = vld [vmem:[%s1866 + $0xb2] sm:$0xff]
        %v2275 = vld [vmem:[%s1866 + $0xc2] sm:$0xff]
        %v2276 = vld [vmem:[%s1866 + $0xca] sm:$0xff]
        %v2277 = vld [vmem:[%s1866 + $0xda] sm:$0xff]
        %v2278 = vld [vmem:[%s1866 + $0xe2] sm:$0xff]
        %v2279 = vld [vmem:[%s1866 + $0xf2] sm:$0xff]
        %v2280 = vld [vmem:[%s1866 + $0xfa] sm:$0xff]
        %v2281 = vld [vmem:[%s1866 + $0x10a] sm:$0xff]
        %v2282 = vld [vmem:[%s1866 + $0x112] sm:$0xff]
        %v2283 = vld [vmem:[%s1866 + $0x122] sm:$0xff]
        %v2284 = vld [vmem:[%s1866 + $0x12a] sm:$0xff]
        %v2285 = vld [vmem:[%s1866 + $0x13a] sm:$0xff]
        %v2286 = vld [vmem:[%s1866 + $0x142] sm:$0xff]
        %v2287 = vld [vmem:[%s1866 + $0x152] sm:$0xff]
        %v2288 = vld [vmem:[%s1866 + $0x15a] sm:$0xff]
        %v2289 = vld [vmem:[%s1866 + $0x16a] sm:$0xff]
        %v2290 = vld [vmem:[%s1866 + $0x172] sm:$0xff]
        %s2291 = scalar_lea.vmem [#allocation7], 32
        %v2292 = vld [vmem:[%s2291] sm:$0xf]
        %v2294 = vsel %vm455, %v2259, 0
        %v2297 = vsel %vm455, %v2260, 0
        %v2300 = vsel %vm455, %v2261, 0
        %v2303 = vsel %vm455, %v2262, 0
        %v2306 = vsel %vm455, %v2263, 0
        %v2309 = vsel %vm455, %v2264, 0
        %v2312 = vsel %vm455, %v2265, 0
        %v2315 = vsel %vm455, %v2266, 0
        %v2318 = vsel %vm455, %v2267, 0
        %v2321 = vsel %vm455, %v2268, 0
        %v2324 = vsel %vm455, %v2269, 0
        %v2327 = vsel %vm455, %v2270, 0
        %v2330 = vsel %vm455, %v2271, 0
        %v2333 = vsel %vm455, %v2272, 0
        %v2336 = vsel %vm455, %v2273, 0
        %v2339 = vsel %vm455, %v2274, 0
        %v2342 = vsel %vm455, %v2275, 0
        %v2345 = vsel %vm455, %v2276, 0
        %v2348 = vsel %vm455, %v2277, 0
        %v2351 = vsel %vm455, %v2278, 0
        %v2354 = vsel %vm455, %v2279, 0
        %v2357 = vsel %vm455, %v2280, 0
        %v2360 = vsel %vm455, %v2281, 0
        %v2363 = vsel %vm455, %v2282, 0
        %v2366 = vsel %vm455, %v2283, 0
        %v2369 = vsel %vm455, %v2284, 0
        %v2372 = vsel %vm455, %v2285, 0
        %v2375 = vsel %vm455, %v2286, 0
        %v2378 = vsel %vm455, %v2287, 0
        %v2381 = vsel %vm455, %v2288, 0
        %v2384 = vsel %vm455, %v2289, 0
        %v2387 = vsel %vm455, %v2290, 0
        %v2390 = vsel %vm853, %v2292, 0
        %2392 = vmatprep.subr.mxu0 0.0
        %2393 = vmatpush1.msra.mxu0 %v2390
        %2394 = vmatprep.subr.mxu0 0.0
        %2395 = vmatpush1.msra.mxu0 0.0
        %2396 = vmatprep.subr.mxu0 0.0
        %2397 = vmatpush1.msra.mxu0 0.0
        %2398 = vmatprep.subr.mxu0 0.0
        %2399 = vmatpush1.msra.mxu0 0.0
        %2400 = vmatprep.subr.mxu0 0.0
        %2401 = vmatpush1.msra.mxu0 0.0
        %2402 = vmatprep.subr.mxu0 0.0
        %2403 = vmatpush1.msra.mxu0 0.0
        %2404 = vmatprep.subr.mxu0 0.0
        %2405 = vmatpush1.msra.mxu0 0.0
        %2406 = vmatprep.subr.mxu0 0.0
        %2407 = vmatpush1.msra.mxu0 0.0
        %2408 = vmatprep.subr.mxu0 0.0
        %2409 = vmatpush1.msra.mxu0 0.0
        %2410 = vmatprep.subr.mxu0 0.0
        %2411 = vmatpush1.msra.mxu0 0.0
        %2412 = vmatprep.subr.mxu0 0.0
        %2413 = vmatpush1.msra.mxu0 0.0
        %2414 = vmatprep.subr.mxu0 0.0
        %2415 = vmatpush1.msra.mxu0 0.0
        %2416 = vmatprep.subr.mxu0 0.0
        %2417 = vmatpush1.msra.mxu0 0.0
        %2418 = vmatprep.subr.mxu0 0.0
        %2419 = vmatpush1.msra.mxu0 0.0
        %2420 = vmatprep.subr.mxu0 0.0
        %2421 = vmatpush1.msra.mxu0 0.0
        %2422 = vmatprep.subr.mxu0 0.0
        %2423 = vmatpush1.msra.mxu0 0.0
        %2424 = vmatprep.subr.mxu0 0.0
        %2425 = vmatpush1.msra.mxu0 0.0
        %2426 = vmatprep.subr.mxu0 0.0
        %2427 = vmatpush1.msra.mxu0 0.0
        %2428 = vmatprep.subr.mxu0 0.0
        %2429 = vmatpush1.msra.mxu0 0.0
        %2430 = vmatprep.subr.mxu0 0.0
        %2431 = vmatpush1.msra.mxu0 0.0
        %2432 = vmatprep.subr.mxu0 0.0
        %2433 = vmatpush1.msra.mxu0 0.0
        %2434 = vmatprep.subr.mxu0 0.0
        %2435 = vmatpush1.msra.mxu0 0.0
        %2436 = vmatprep.subr.mxu0 0.0
        %2437 = vmatpush1.msra.mxu0 0.0
        %2438 = vmatprep.subr.mxu0 0.0
        %2439 = vmatpush1.msra.mxu0 0.0
        %2440 = vmatprep.subr.mxu0 0.0
        %2441 = vmatpush1.msra.mxu0 0.0
        %2442 = vmatprep.subr.mxu0 0.0
        %2443 = vmatpush1.msra.mxu0 0.0
        %2444 = vmatprep.subr.mxu0 0.0
        %2445 = vmatpush1.msra.mxu0 0.0
        %2446 = vmatprep.subr.mxu0 0.0
        %2447 = vmatpush1.msra.mxu0 0.0
        %2448 = vmatprep.subr.mxu0 0.0
        %2449 = vmatpush1.msra.mxu0 0.0
        %2450 = vmatprep.subr.mxu0 0.0
        %2451 = vmatpush1.msra.mxu0 0.0
        %2452 = vmatprep.subr.mxu0 0.0
        %2453 = vmatpush1.msra.mxu0 0.0
        %2454 = vmatprep.subr.mxu0 0.0
        %2455 = vmatpush1.msra.mxu0 0.0
        %2456 = vmatprep.mubr.f32.mxu0 0.0
        %2457 = vmatmul.mubr.f32.gmra.mrb[0].mxu0 %v2294
        %v2458 = vpop.f32.mrb[0].mxu0
        %v2459 = vadd.f32 0.0, %v2458
        %v2460 = vpop.f32.mrb[0].mxu0
        %2461 = vmatprep.mubr.f32.mxu0 0.0
        %2462 = vmatmul.mubr.f32.gmra.mrb[0].mxu0 %v2297
        %v2463 = vpop.f32.mrb[0].mxu0
        %v2464 = vadd.f32 0.0, %v2463
        %v2465 = vpop.f32.mrb[0].mxu0
        %2466 = vmatprep.mubr.f32.mxu0 0.0
        %2467 = vmatmul.mubr.f32.gmra.mrb[0].mxu0 %v2300
        %v2468 = vpop.f32.mrb[0].mxu0
        %v2469 = vadd.f32 0.0, %v2468
        %v2470 = vpop.f32.mrb[0].mxu0
        %2471 = vmatprep.mubr.f32.mxu0 0.0
        %2472 = vmatmul.mubr.f32.gmra.mrb[0].mxu0 %v2303
        %v2473 = vpop.f32.mrb[0].mxu0
        %v2474 = vadd.f32 0.0, %v2473
        %v2475 = vpop.f32.mrb[0].mxu0
        %2476 = vmatprep.mubr.f32.mxu0 0.0
        %2477 = vmatmul.mubr.f32.gmra.mrb[0].mxu0 %v2306
        %v2478 = vpop.f32.mrb[0].mxu0
        %v2479 = vadd.f32 0.0, %v2478
        %v2480 = vpop.f32.mrb[0].mxu0
        %2481 = vmatprep.mubr.f32.mxu0 0.0
        %2482 = vmatmul.mubr.f32.gmra.mrb[0].mxu0 %v2309
        %v2483 = vpop.f32.mrb[0].mxu0
        %v2484 = vadd.f32 0.0, %v2483
        %v2485 = vpop.f32.mrb[0].mxu0
        %2486 = vmatprep.mubr.f32.mxu0 0.0
        %2487 = vmatmul.mubr.f32.gmra.mrb[0].mxu0 %v2312
        %v2488 = vpop.f32.mrb[0].mxu0
        %v2489 = vadd.f32 0.0, %v2488
        %v2490 = vpop.f32.mrb[0].mxu0
        %2491 = vmatprep.mubr.f32.mxu0 0.0
        %2492 = vmatmul.mubr.f32.gmra.mrb[0].mxu0 %v2315
        %v2493 = vpop.f32.mrb[0].mxu0
        %v2494 = vadd.f32 0.0, %v2493
        %v2495 = vpop.f32.mrb[0].mxu0
        %2496 = vmatprep.mubr.f32.mxu0 0.0
        %2497 = vmatmul.mubr.f32.gmra.mrb[0].mxu0 %v2318
        %v2498 = vpop.f32.mrb[0].mxu0
        %v2499 = vadd.f32 0.0, %v2498
        %v2500 = vpop.f32.mrb[0].mxu0
        %2501 = vmatprep.mubr.f32.mxu0 0.0
        %2502 = vmatmul.mubr.f32.gmra.mrb[0].mxu0 %v2321
        %v2503 = vpop.f32.mrb[0].mxu0
        %v2504 = vadd.f32 0.0, %v2503
        %v2505 = vpop.f32.mrb[0].mxu0
        %2506 = vmatprep.mubr.f32.mxu0 0.0
        %2507 = vmatmul.mubr.f32.gmra.mrb[0].mxu0 %v2324
        %v2508 = vpop.f32.mrb[0].mxu0
        %v2509 = vadd.f32 0.0, %v2508
        %v2510 = vpop.f32.mrb[0].mxu0
        %2511 = vmatprep.mubr.f32.mxu0 0.0
        %2512 = vmatmul.mubr.f32.gmra.mrb[0].mxu0 %v2327
        %v2513 = vpop.f32.mrb[0].mxu0
        %v2514 = vadd.f32 0.0, %v2513
        %v2515 = vpop.f32.mrb[0].mxu0
        %2516 = vmatprep.mubr.f32.mxu0 0.0
        %2517 = vmatmul.mubr.f32.gmra.mrb[0].mxu0 %v2330
        %v2518 = vpop.f32.mrb[0].mxu0
        %v2519 = vadd.f32 0.0, %v2518
        %v2520 = vpop.f32.mrb[0].mxu0
        %2521 = vmatprep.mubr.f32.mxu0 0.0
        %2522 = vmatmul.mubr.f32.gmra.mrb[0].mxu0 %v2333
        %v2523 = vpop.f32.mrb[0].mxu0
        %v2524 = vadd.f32 0.0, %v2523
        %v2525 = vpop.f32.mrb[0].mxu0
        %2526 = vmatprep.mubr.f32.mxu0 0.0
        %2527 = vmatmul.mubr.f32.gmra.mrb[0].mxu0 %v2336
        %v2528 = vpop.f32.mrb[0].mxu0
        %v2529 = vadd.f32 0.0, %v2528
        %v2530 = vpop.f32.mrb[0].mxu0
        %2531 = vmatprep.mubr.f32.mxu0 0.0
        %2532 = vmatmul.mubr.f32.gmra.mrb[0].mxu0 %v2339
        %v2533 = vpop.f32.mrb[0].mxu0
        %v2534 = vadd.f32 0.0, %v2533
        %v2535 = vpop.f32.mrb[0].mxu0
        %2536 = vmatprep.mubr.f32.mxu0 0.0
        %2537 = vmatmul.mubr.f32.gmra.mrb[0].mxu0 %v2342
        %v2538 = vpop.f32.mrb[0].mxu0
        %v2539 = vadd.f32 0.0, %v2538
        %v2540 = vpop.f32.mrb[0].mxu0
        %2541 = vmatprep.mubr.f32.mxu0 0.0
        %2542 = vmatmul.mubr.f32.gmra.mrb[0].mxu0 %v2345
        %v2543 = vpop.f32.mrb[0].mxu0
        %v2544 = vadd.f32 0.0, %v2543
        %v2545 = vpop.f32.mrb[0].mxu0
        %2546 = vmatprep.mubr.f32.mxu0 0.0
        %2547 = vmatmul.mubr.f32.gmra.mrb[0].mxu0 %v2348
        %v2548 = vpop.f32.mrb[0].mxu0
        %v2549 = vadd.f32 0.0, %v2548
        %v2550 = vpop.f32.mrb[0].mxu0
        %2551 = vmatprep.mubr.f32.mxu0 0.0
        %2552 = vmatmul.mubr.f32.gmra.mrb[0].mxu0 %v2351
        %v2553 = vpop.f32.mrb[0].mxu0
        %v2554 = vadd.f32 0.0, %v2553
        %v2555 = vpop.f32.mrb[0].mxu0
        %2556 = vmatprep.mubr.f32.mxu0 0.0
        %2557 = vmatmul.mubr.f32.gmra.mrb[0].mxu0 %v2354
        %v2558 = vpop.f32.mrb[0].mxu0
        %v2559 = vadd.f32 0.0, %v2558
        %v2560 = vpop.f32.mrb[0].mxu0
        %2561 = vmatprep.mubr.f32.mxu0 0.0
        %2562 = vmatmul.mubr.f32.gmra.mrb[0].mxu0 %v2357
        %v2563 = vpop.f32.mrb[0].mxu0
        %v2564 = vadd.f32 0.0, %v2563
        %v2565 = vpop.f32.mrb[0].mxu0
        %2566 = vmatprep.mubr.f32.mxu0 0.0
        %2567 = vmatmul.mubr.f32.gmra.mrb[0].mxu0 %v2360
        %v2568 = vpop.f32.mrb[0].mxu0
        %v2569 = vadd.f32 0.0, %v2568
        %v2570 = vpop.f32.mrb[0].mxu0
        %2571 = vmatprep.mubr.f32.mxu0 0.0
        %2572 = vmatmul.mubr.f32.gmra.mrb[0].mxu0 %v2363
        %v2573 = vpop.f32.mrb[0].mxu0
        %v2574 = vadd.f32 0.0, %v2573
        %v2575 = vpop.f32.mrb[0].mxu0
        %2576 = vmatprep.mubr.f32.mxu0 0.0
        %2577 = vmatmul.mubr.f32.gmra.mrb[0].mxu0 %v2366
        %v2578 = vpop.f32.mrb[0].mxu0
        %v2579 = vadd.f32 0.0, %v2578
        %v2580 = vpop.f32.mrb[0].mxu0
        %2581 = vmatprep.mubr.f32.mxu0 0.0
        %2582 = vmatmul.mubr.f32.gmra.mrb[0].mxu0 %v2369
        %v2583 = vpop.f32.mrb[0].mxu0
        %v2584 = vadd.f32 0.0, %v2583
        %v2585 = vpop.f32.mrb[0].mxu0
        %2586 = vmatprep.mubr.f32.mxu0 0.0
        %2587 = vmatmul.mubr.f32.gmra.mrb[0].mxu0 %v2372
        %v2588 = vpop.f32.mrb[0].mxu0
        %v2589 = vadd.f32 0.0, %v2588
        %v2590 = vpop.f32.mrb[0].mxu0
        %2591 = vmatprep.mubr.f32.mxu0 0.0
        %2592 = vmatmul.mubr.f32.gmra.mrb[0].mxu0 %v2375
        %v2593 = vpop.f32.mrb[0].mxu0
        %v2594 = vadd.f32 0.0, %v2593
        %v2595 = vpop.f32.mrb[0].mxu0
        %2596 = vmatprep.mubr.f32.mxu0 0.0
        %2597 = vmatmul.mubr.f32.gmra.mrb[0].mxu0 %v2378
        %v2598 = vpop.f32.mrb[0].mxu0
        %v2599 = vadd.f32 0.0, %v2598
        %v2600 = vpop.f32.mrb[0].mxu0
        %2601 = vmatprep.mubr.f32.mxu0 0.0
        %2602 = vmatmul.mubr.f32.gmra.mrb[0].mxu0 %v2381
        %v2603 = vpop.f32.mrb[0].mxu0
        %v2604 = vadd.f32 0.0, %v2603
        %v2605 = vpop.f32.mrb[0].mxu0
        %2606 = vmatprep.mubr.f32.mxu0 0.0
        %2607 = vmatmul.mubr.f32.gmra.mrb[0].mxu0 %v2384
        %v2608 = vpop.f32.mrb[0].mxu0
        %v2609 = vadd.f32 0.0, %v2608
        %v2610 = vpop.f32.mrb[0].mxu0
        %2611 = vmatprep.mubr.f32.mxu0 0.0
        %2612 = vmatmul.mubr.f32.gmra.mrb[0].mxu0 %v2387
        %v2613 = vpop.f32.mrb[0].mxu0
        %v2614 = vadd.f32 0.0, %v2613
        %v2615 = vpop.f32.mrb[0].mxu0
        %2616 = vdwg.mxu0
        %v2618 = vsel %vm455, %v690, 0
        %v2621 = vsel %vm455, %v691, 0
        %v2624 = vsel %vm455, %v692, 0
        %v2627 = vsel %vm455, %v693, 0
        %v2630 = vsel %vm455, %v694, 0
        %v2633 = vsel %vm455, %v695, 0
        %v2636 = vsel %vm455, %v696, 0
        %v2639 = vsel %vm455, %v697, 0
        %v2642 = vsel %vm455, %v698, 0
        %v2645 = vsel %vm455, %v699, 0
        %v2648 = vsel %vm455, %v700, 0
        %v2651 = vsel %vm455, %v701, 0
        %v2654 = vsel %vm455, %v702, 0
        %v2657 = vsel %vm455, %v703, 0
        %v2660 = vsel %vm455, %v704, 0
        %v2663 = vsel %vm455, %v705, 0
        %v2666 = vsel %vm455, %v706, 0
        %v2669 = vsel %vm455, %v707, 0
        %v2672 = vsel %vm455, %v708, 0
        %v2675 = vsel %vm455, %v709, 0
        %v2678 = vsel %vm455, %v710, 0
        %v2681 = vsel %vm455, %v711, 0
        %v2684 = vsel %vm455, %v712, 0
        %v2687 = vsel %vm455, %v713, 0
        %v2690 = vsel %vm455, %v714, 0
        %v2693 = vsel %vm455, %v715, 0
        %v2696 = vsel %vm455, %v716, 0
        %v2699 = vsel %vm455, %v717, 0
        %v2702 = vsel %vm455, %v718, 0
        %v2705 = vsel %vm455, %v719, 0
        %v2708 = vsel %vm455, %v720, 0
        %v2711 = vsel %vm455, %v721, 0
        %v2714 = vsel %vm853, %v722, 0
        %2716 = vmatprep.subr.mxu0 0.0
        %2717 = vmatpush1.msra.mxu0 %v2714
        %2718 = vmatprep.subr.mxu0 0.0
        %2719 = vmatpush1.msra.mxu0 0.0
        %2720 = vmatprep.subr.mxu0 0.0
        %2721 = vmatpush1.msra.mxu0 0.0
        %2722 = vmatprep.subr.mxu0 0.0
        %2723 = vmatpush1.msra.mxu0 0.0
        %2724 = vmatprep.subr.mxu0 0.0
        %2725 = vmatpush1.msra.mxu0 0.0
        %2726 = vmatprep.subr.mxu0 0.0
        %2727 = vmatpush1.msra.mxu0 0.0
        %2728 = vmatprep.subr.mxu0 0.0
        %2729 = vmatpush1.msra.mxu0 0.0
        %2730 = vmatprep.subr.mxu0 0.0
        %2731 = vmatpush1.msra.mxu0 0.0
        %2732 = vmatprep.subr.mxu0 0.0
        %2733 = vmatpush1.msra.mxu0 0.0
        %2734 = vmatprep.subr.mxu0 0.0
        %2735 = vmatpush1.msra.mxu0 0.0
        %2736 = vmatprep.subr.mxu0 0.0
        %2737 = vmatpush1.msra.mxu0 0.0
        %2738 = vmatprep.subr.mxu0 0.0
        %2739 = vmatpush1.msra.mxu0 0.0
        %2740 = vmatprep.subr.mxu0 0.0
        %2741 = vmatpush1.msra.mxu0 0.0
        %2742 = vmatprep.subr.mxu0 0.0
        %2743 = vmatpush1.msra.mxu0 0.0
        %2744 = vmatprep.subr.mxu0 0.0
        %2745 = vmatpush1.msra.mxu0 0.0
        %2746 = vmatprep.subr.mxu0 0.0
        %2747 = vmatpush1.msra.mxu0 0.0
        %2748 = vmatprep.subr.mxu0 0.0
        %2749 = vmatpush1.msra.mxu0 0.0
        %2750 = vmatprep.subr.mxu0 0.0
        %2751 = vmatpush1.msra.mxu0 0.0
        %2752 = vmatprep.subr.mxu0 0.0
        %2753 = vmatpush1.msra.mxu0 0.0
        %2754 = vmatprep.subr.mxu0 0.0
        %2755 = vmatpush1.msra.mxu0 0.0
        %2756 = vmatprep.subr.mxu0 0.0
        %2757 = vmatpush1.msra.mxu0 0.0
        %2758 = vmatprep.subr.mxu0 0.0
        %2759 = vmatpush1.msra.mxu0 0.0
        %2760 = vmatprep.subr.mxu0 0.0
        %2761 = vmatpush1.msra.mxu0 0.0
        %2762 = vmatprep.subr.mxu0 0.0
        %2763 = vmatpush1.msra.mxu0 0.0
        %2764 = vmatprep.subr.mxu0 0.0
        %2765 = vmatpush1.msra.mxu0 0.0
        %2766 = vmatprep.subr.mxu0 0.0
        %2767 = vmatpush1.msra.mxu0 0.0
        %2768 = vmatprep.subr.mxu0 0.0
        %2769 = vmatpush1.msra.mxu0 0.0
        %2770 = vmatprep.subr.mxu0 0.0
        %2771 = vmatpush1.msra.mxu0 0.0
        %2772 = vmatprep.subr.mxu0 0.0
        %2773 = vmatpush1.msra.mxu0 0.0
        %2774 = vmatprep.subr.mxu0 0.0
        %2775 = vmatpush1.msra.mxu0 0.0
        %2776 = vmatprep.subr.mxu0 0.0
        %2777 = vmatpush1.msra.mxu0 0.0
        %2778 = vmatprep.subr.mxu0 0.0
        %2779 = vmatpush1.msra.mxu0 0.0
        %2780 = vmatprep.mubr.f32.mxu0 0.0
        %2781 = vmatmul.mubr.f32.gmra.mrb[0].mxu0 %v2618
        %v2782 = vpop.f32.mrb[0].mxu0
        %v2783 = vadd.f32 %v924, %v2782
        %v2784 = vpop.f32.mrb[0].mxu0
        %2785 = vmatprep.mubr.f32.mxu0 0.0
        %2786 = vmatmul.mubr.f32.gmra.mrb[0].mxu0 %v2621
        %v2787 = vpop.f32.mrb[0].mxu0
        %v2788 = vadd.f32 %v929, %v2787
        %v2789 = vpop.f32.mrb[0].mxu0
        %2790 = vmatprep.mubr.f32.mxu0 0.0
        %2791 = vmatmul.mubr.f32.gmra.mrb[0].mxu0 %v2624
        %v2792 = vpop.f32.mrb[0].mxu0
        %v2793 = vadd.f32 %v934, %v2792
        %v2794 = vpop.f32.mrb[0].mxu0
        %2795 = vmatprep.mubr.f32.mxu0 0.0
        %2796 = vmatmul.mubr.f32.gmra.mrb[0].mxu0 %v2627
        %v2797 = vpop.f32.mrb[0].mxu0
        %v2798 = vadd.f32 %v939, %v2797
        %v2799 = vpop.f32.mrb[0].mxu0
        %2800 = vmatprep.mubr.f32.mxu0 0.0
        %2801 = vmatmul.mubr.f32.gmra.mrb[0].mxu0 %v2630
        %v2802 = vpop.f32.mrb[0].mxu0
        %v2803 = vadd.f32 %v944, %v2802
        %v2804 = vpop.f32.mrb[0].mxu0
        %2805 = vmatprep.mubr.f32.mxu0 0.0
        %2806 = vmatmul.mubr.f32.gmra.mrb[0].mxu0 %v2633
        %v2807 = vpop.f32.mrb[0].mxu0
        %v2808 = vadd.f32 %v949, %v2807
        %v2809 = vpop.f32.mrb[0].mxu0
        %2810 = vmatprep.mubr.f32.mxu0 0.0
        %2811 = vmatmul.mubr.f32.gmra.mrb[0].mxu0 %v2636
        %v2812 = vpop.f32.mrb[0].mxu0
        %v2813 = vadd.f32 %v954, %v2812
        %v2814 = vpop.f32.mrb[0].mxu0
        %2815 = vmatprep.mubr.f32.mxu0 0.0
        %2816 = vmatmul.mubr.f32.gmra.mrb[0].mxu0 %v2639
        %v2817 = vpop.f32.mrb[0].mxu0
        %v2818 = vadd.f32 %v959, %v2817
        %v2819 = vpop.f32.mrb[0].mxu0
        %2820 = vmatprep.mubr.f32.mxu0 0.0
        %2821 = vmatmul.mubr.f32.gmra.mrb[0].mxu0 %v2642
        %v2822 = vpop.f32.mrb[0].mxu0
        %v2823 = vadd.f32 %v964, %v2822
        %v2824 = vpop.f32.mrb[0].mxu0
        %2825 = vmatprep.mubr.f32.mxu0 0.0
        %2826 = vmatmul.mubr.f32.gmra.mrb[0].mxu0 %v2645
        %v2827 = vpop.f32.mrb[0].mxu0
        %v2828 = vadd.f32 %v969, %v2827
        %v2829 = vpop.f32.mrb[0].mxu0
        %2830 = vmatprep.mubr.f32.mxu0 0.0
        %2831 = vmatmul.mubr.f32.gmra.mrb[0].mxu0 %v2648
        %v2832 = vpop.f32.mrb[0].mxu0
        %v2833 = vadd.f32 %v974, %v2832
        %v2834 = vpop.f32.mrb[0].mxu0
        %2835 = vmatprep.mubr.f32.mxu0 0.0
        %2836 = vmatmul.mubr.f32.gmra.mrb[0].mxu0 %v2651
        %v2837 = vpop.f32.mrb[0].mxu0
        %v2838 = vadd.f32 %v979, %v2837
        %v2839 = vpop.f32.mrb[0].mxu0
        %2840 = vmatprep.mubr.f32.mxu0 0.0
        %2841 = vmatmul.mubr.f32.gmra.mrb[0].mxu0 %v2654
        %v2842 = vpop.f32.mrb[0].mxu0
        %v2843 = vadd.f32 %v984, %v2842
        %v2844 = vpop.f32.mrb[0].mxu0
        %2845 = vmatprep.mubr.f32.mxu0 0.0
        %2846 = vmatmul.mubr.f32.gmra.mrb[0].mxu0 %v2657
        %v2847 = vpop.f32.mrb[0].mxu0
        %v2848 = vadd.f32 %v989, %v2847
        %v2849 = vpop.f32.mrb[0].mxu0
        %2850 = vmatprep.mubr.f32.mxu0 0.0
        %2851 = vmatmul.mubr.f32.gmra.mrb[0].mxu0 %v2660
        %v2852 = vpop.f32.mrb[0].mxu0
        %v2853 = vadd.f32 %v994, %v2852
        %v2854 = vpop.f32.mrb[0].mxu0
        %2855 = vmatprep.mubr.f32.mxu0 0.0
        %2856 = vmatmul.mubr.f32.gmra.mrb[0].mxu0 %v2663
        %v2857 = vpop.f32.mrb[0].mxu0
        %v2858 = vadd.f32 %v999, %v2857
        %v2859 = vpop.f32.mrb[0].mxu0
        %2860 = vmatprep.mubr.f32.mxu0 0.0
        %2861 = vmatmul.mubr.f32.gmra.mrb[0].mxu0 %v2666
        %v2862 = vpop.f32.mrb[0].mxu0
        %v2863 = vadd.f32 %v1004, %v2862
        %v2864 = vpop.f32.mrb[0].mxu0
        %2865 = vmatprep.mubr.f32.mxu0 0.0
        %2866 = vmatmul.mubr.f32.gmra.mrb[0].mxu0 %v2669
        %v2867 = vpop.f32.mrb[0].mxu0
        %v2868 = vadd.f32 %v1009, %v2867
        %v2869 = vpop.f32.mrb[0].mxu0
        %2870 = vmatprep.mubr.f32.mxu0 0.0
        %2871 = vmatmul.mubr.f32.gmra.mrb[0].mxu0 %v2672
        %v2872 = vpop.f32.mrb[0].mxu0
        %v2873 = vadd.f32 %v1014, %v2872
        %v2874 = vpop.f32.mrb[0].mxu0
        %2875 = vmatprep.mubr.f32.mxu0 0.0
        %2876 = vmatmul.mubr.f32.gmra.mrb[0].mxu0 %v2675
        %v2877 = vpop.f32.mrb[0].mxu0
        %v2878 = vadd.f32 %v1019, %v2877
        %v2879 = vpop.f32.mrb[0].mxu0
        %2880 = vmatprep.mubr.f32.mxu0 0.0
        %2881 = vmatmul.mubr.f32.gmra.mrb[0].mxu0 %v2678
        %v2882 = vpop.f32.mrb[0].mxu0
        %v2883 = vadd.f32 %v1024, %v2882
        %v2884 = vpop.f32.mrb[0].mxu0
        %2885 = vmatprep.mubr.f32.mxu0 0.0
        %2886 = vmatmul.mubr.f32.gmra.mrb[0].mxu0 %v2681
        %v2887 = vpop.f32.mrb[0].mxu0
        %v2888 = vadd.f32 %v1029, %v2887
        %v2889 = vpop.f32.mrb[0].mxu0
        %2890 = vmatprep.mubr.f32.mxu0 0.0
        %2891 = vmatmul.mubr.f32.gmra.mrb[0].mxu0 %v2684
        %v2892 = vpop.f32.mrb[0].mxu0
        %v2893 = vadd.f32 %v1034, %v2892
        %v2894 = vpop.f32.mrb[0].mxu0
        %2895 = vmatprep.mubr.f32.mxu0 0.0
        %2896 = vmatmul.mubr.f32.gmra.mrb[0].mxu0 %v2687
        %v2897 = vpop.f32.mrb[0].mxu0
        %v2898 = vadd.f32 %v1039, %v2897
        %v2899 = vpop.f32.mrb[0].mxu0
        %2900 = vmatprep.mubr.f32.mxu0 0.0
        %2901 = vmatmul.mubr.f32.gmra.mrb[0].mxu0 %v2690
        %v2902 = vpop.f32.mrb[0].mxu0
        %v2903 = vadd.f32 %v1044, %v2902
        %v2904 = vpop.f32.mrb[0].mxu0
        %2905 = vmatprep.mubr.f32.mxu0 0.0
        %2906 = vmatmul.mubr.f32.gmra.mrb[0].mxu0 %v2693
        %v2907 = vpop.f32.mrb[0].mxu0
        %v2908 = vadd.f32 %v1049, %v2907
        %v2909 = vpop.f32.mrb[0].mxu0
        %2910 = vmatprep.mubr.f32.mxu0 0.0
        %2911 = vmatmul.mubr.f32.gmra.mrb[0].mxu0 %v2696
        %v2912 = vpop.f32.mrb[0].mxu0
        %v2913 = vadd.f32 %v1054, %v2912
        %v2914 = vpop.f32.mrb[0].mxu0
        %2915 = vmatprep.mubr.f32.mxu0 0.0
        %2916 = vmatmul.mubr.f32.gmra.mrb[0].mxu0 %v2699
        %v2917 = vpop.f32.mrb[0].mxu0
        %v2918 = vadd.f32 %v1059, %v2917
        %v2919 = vpop.f32.mrb[0].mxu0
        %2920 = vmatprep.mubr.f32.mxu0 0.0
        %2921 = vmatmul.mubr.f32.gmra.mrb[0].mxu0 %v2702
        %v2922 = vpop.f32.mrb[0].mxu0
        %v2923 = vadd.f32 %v1064, %v2922
        %v2924 = vpop.f32.mrb[0].mxu0
        %2925 = vmatprep.mubr.f32.mxu0 0.0
        %2926 = vmatmul.mubr.f32.gmra.mrb[0].mxu0 %v2705
        %v2927 = vpop.f32.mrb[0].mxu0
        %v2928 = vadd.f32 %v1069, %v2927
        %v2929 = vpop.f32.mrb[0].mxu0
        %2930 = vmatprep.mubr.f32.mxu0 0.0
        %2931 = vmatmul.mubr.f32.gmra.mrb[0].mxu0 %v2708
        %v2932 = vpop.f32.mrb[0].mxu0
        %v2933 = vadd.f32 %v1074, %v2932
        %v2934 = vpop.f32.mrb[0].mxu0
        %2935 = vmatprep.mubr.f32.mxu0 0.0
        %2936 = vmatmul.mubr.f32.gmra.mrb[0].mxu0 %v2711
        %v2937 = vpop.f32.mrb[0].mxu0
        %v2938 = vadd.f32 %v1079, %v2937
        %v2939 = vpop.f32.mrb[0].mxu0
        %2940 = vdwg.mxu0
        %v2942 = vsel %vm455, %v1082, 0
        %v2945 = vsel %vm455, %v1083, 0
        %v2948 = vsel %vm455, %v1084, 0
        %v2951 = vsel %vm455, %v1085, 0
        %v2954 = vsel %vm455, %v1086, 0
        %v2957 = vsel %vm455, %v1087, 0
        %v2960 = vsel %vm455, %v1088, 0
        %v2963 = vsel %vm455, %v1089, 0
        %v2966 = vsel %vm455, %v1090, 0
        %v2969 = vsel %vm455, %v1091, 0
        %v2972 = vsel %vm455, %v1092, 0
        %v2975 = vsel %vm455, %v1093, 0
        %v2978 = vsel %vm455, %v1094, 0
        %v2981 = vsel %vm455, %v1095, 0
        %v2984 = vsel %vm455, %v1096, 0
        %v2987 = vsel %vm455, %v1097, 0
        %v2990 = vsel %vm455, %v1098, 0
        %v2993 = vsel %vm455, %v1099, 0
        %v2996 = vsel %vm455, %v1100, 0
        %v2999 = vsel %vm455, %v1101, 0
        %v3002 = vsel %vm455, %v1102, 0
        %v3005 = vsel %vm455, %v1103, 0
        %v3008 = vsel %vm455, %v1104, 0
        %v3011 = vsel %vm455, %v1105, 0
        %v3014 = vsel %vm455, %v1106, 0
        %v3017 = vsel %vm455, %v1107, 0
        %v3020 = vsel %vm455, %v1108, 0
        %v3023 = vsel %vm455, %v1109, 0
        %v3026 = vsel %vm455, %v1110, 0
        %v3029 = vsel %vm455, %v1111, 0
        %v3032 = vsel %vm455, %v1112, 0
        %v3035 = vsel %vm455, %v1113, 0
        %v3038 = vsel %vm853, %v1115, 0
        %3040 = vmatprep.subr.mxu0 0.0
        %3041 = vmatpush1.msra.mxu0 %v3038
        %3042 = vmatprep.subr.mxu0 0.0
        %3043 = vmatpush1.msra.mxu0 0.0
        %3044 = vmatprep.subr.mxu0 0.0
        %3045 = vmatpush1.msra.mxu0 0.0
        %3046 = vmatprep.subr.mxu0 0.0
        %3047 = vmatpush1.msra.mxu0 0.0
        %3048 = vmatprep.subr.mxu0 0.0
        %3049 = vmatpush1.msra.mxu0 0.0
        %3050 = vmatprep.subr.mxu0 0.0
        %3051 = vmatpush1.msra.mxu0 0.0
        %3052 = vmatprep.subr.mxu0 0.0
        %3053 = vmatpush1.msra.mxu0 0.0
        %3054 = vmatprep.subr.mxu0 0.0
        %3055 = vmatpush1.msra.mxu0 0.0
        %3056 = vmatprep.subr.mxu0 0.0
        %3057 = vmatpush1.msra.mxu0 0.0
        %3058 = vmatprep.subr.mxu0 0.0
        %3059 = vmatpush1.msra.mxu0 0.0
        %3060 = vmatprep.subr.mxu0 0.0
        %3061 = vmatpush1.msra.mxu0 0.0
        %3062 = vmatprep.subr.mxu0 0.0
        %3063 = vmatpush1.msra.mxu0 0.0
        %3064 = vmatprep.subr.mxu0 0.0
        %3065 = vmatpush1.msra.mxu0 0.0
        %3066 = vmatprep.subr.mxu0 0.0
        %3067 = vmatpush1.msra.mxu0 0.0
        %3068 = vmatprep.subr.mxu0 0.0
        %3069 = vmatpush1.msra.mxu0 0.0
        %3070 = vmatprep.subr.mxu0 0.0
        %3071 = vmatpush1.msra.mxu0 0.0
        %3072 = vmatprep.subr.mxu0 0.0
        %3073 = vmatpush1.msra.mxu0 0.0
        %3074 = vmatprep.subr.mxu0 0.0
        %3075 = vmatpush1.msra.mxu0 0.0
        %3076 = vmatprep.subr.mxu0 0.0
        %3077 = vmatpush1.msra.mxu0 0.0
        %3078 = vmatprep.subr.mxu0 0.0
        %3079 = vmatpush1.msra.mxu0 0.0
        %3080 = vmatprep.subr.mxu0 0.0
        %3081 = vmatpush1.msra.mxu0 0.0
        %3082 = vmatprep.subr.mxu0 0.0
        %3083 = vmatpush1.msra.mxu0 0.0
        %3084 = vmatprep.subr.mxu0 0.0
        %3085 = vmatpush1.msra.mxu0 0.0
        %3086 = vmatprep.subr.mxu0 0.0
        %3087 = vmatpush1.msra.mxu0 0.0
        %3088 = vmatprep.subr.mxu0 0.0
        %3089 = vmatpush1.msra.mxu0 0.0
        %3090 = vmatprep.subr.mxu0 0.0
        %3091 = vmatpush1.msra.mxu0 0.0
        %3092 = vmatprep.subr.mxu0 0.0
        %3093 = vmatpush1.msra.mxu0 0.0
        %3094 = vmatprep.subr.mxu0 0.0
        %3095 = vmatpush1.msra.mxu0 0.0
        %3096 = vmatprep.subr.mxu0 0.0
        %3097 = vmatpush1.msra.mxu0 0.0
        %3098 = vmatprep.subr.mxu0 0.0
        %3099 = vmatpush1.msra.mxu0 0.0
        %3100 = vmatprep.subr.mxu0 0.0
        %3101 = vmatpush1.msra.mxu0 0.0
        %3102 = vmatprep.subr.mxu0 0.0
        %3103 = vmatpush1.msra.mxu0 0.0
        %3104 = vmatprep.mubr.f32.mxu0 0.0
        %3105 = vmatmul.mubr.f32.gmra.mrb[0].mxu0 %v2942
        %v3106 = vpop.f32.mrb[0].mxu0
        %v3107 = vadd.f32 %v1316, %v3106
        %v3108 = vpop.f32.mrb[0].mxu0
        %3109 = vmatprep.mubr.f32.mxu0 0.0
        %3110 = vmatmul.mubr.f32.gmra.mrb[0].mxu0 %v2945
        %v3111 = vpop.f32.mrb[0].mxu0
        %v3112 = vadd.f32 %v1321, %v3111
        %v3113 = vpop.f32.mrb[0].mxu0
        %3114 = vmatprep.mubr.f32.mxu0 0.0
        %3115 = vmatmul.mubr.f32.gmra.mrb[0].mxu0 %v2948
        %v3116 = vpop.f32.mrb[0].mxu0
        %v3117 = vadd.f32 %v1326, %v3116
        %v3118 = vpop.f32.mrb[0].mxu0
        %3119 = vmatprep.mubr.f32.mxu0 0.0
        %3120 = vmatmul.mubr.f32.gmra.mrb[0].mxu0 %v2951
        %v3121 = vpop.f32.mrb[0].mxu0
        %v3122 = vadd.f32 %v1331, %v3121
        %v3123 = vpop.f32.mrb[0].mxu0
        %3124 = vmatprep.mubr.f32.mxu0 0.0
        %3125 = vmatmul.mubr.f32.gmra.mrb[0].mxu0 %v2954
        %v3126 = vpop.f32.mrb[0].mxu0
        %v3127 = vadd.f32 %v1336, %v3126
        %v3128 = vpop.f32.mrb[0].mxu0
        %3129 = vmatprep.mubr.f32.mxu0 0.0
        %3130 = vmatmul.mubr.f32.gmra.mrb[0].mxu0 %v2957
        %v3131 = vpop.f32.mrb[0].mxu0
        %v3132 = vadd.f32 %v1341, %v3131
        %v3133 = vpop.f32.mrb[0].mxu0
        %3134 = vmatprep.mubr.f32.mxu0 0.0
        %3135 = vmatmul.mubr.f32.gmra.mrb[0].mxu0 %v2960
        %v3136 = vpop.f32.mrb[0].mxu0
        %v3137 = vadd.f32 %v1346, %v3136
        %v3138 = vpop.f32.mrb[0].mxu0
        %3139 = vmatprep.mubr.f32.mxu0 0.0
        %3140 = vmatmul.mubr.f32.gmra.mrb[0].mxu0 %v2963
        %v3141 = vpop.f32.mrb[0].mxu0
        %v3142 = vadd.f32 %v1351, %v3141
        %v3143 = vpop.f32.mrb[0].mxu0
        %3144 = vmatprep.mubr.f32.mxu0 0.0
        %3145 = vmatmul.mubr.f32.gmra.mrb[0].mxu0 %v2966
        %v3146 = vpop.f32.mrb[0].mxu0
        %v3147 = vadd.f32 %v1356, %v3146
        %v3148 = vpop.f32.mrb[0].mxu0
        %3149 = vmatprep.mubr.f32.mxu0 0.0
        %3150 = vmatmul.mubr.f32.gmra.mrb[0].mxu0 %v2969
        %v3151 = vpop.f32.mrb[0].mxu0
        %v3152 = vadd.f32 %v1361, %v3151
        %v3153 = vpop.f32.mrb[0].mxu0
        %3154 = vmatprep.mubr.f32.mxu0 0.0
        %3155 = vmatmul.mubr.f32.gmra.mrb[0].mxu0 %v2972
        %v3156 = vpop.f32.mrb[0].mxu0
        %v3157 = vadd.f32 %v1366, %v3156
        %v3158 = vpop.f32.mrb[0].mxu0
        %3159 = vmatprep.mubr.f32.mxu0 0.0
        %3160 = vmatmul.mubr.f32.gmra.mrb[0].mxu0 %v2975
        %v3161 = vpop.f32.mrb[0].mxu0
        %v3162 = vadd.f32 %v1371, %v3161
        %v3163 = vpop.f32.mrb[0].mxu0
        %3164 = vmatprep.mubr.f32.mxu0 0.0
        %3165 = vmatmul.mubr.f32.gmra.mrb[0].mxu0 %v2978
        %v3166 = vpop.f32.mrb[0].mxu0
        %v3167 = vadd.f32 %v1376, %v3166
        %v3168 = vpop.f32.mrb[0].mxu0
        %3169 = vmatprep.mubr.f32.mxu0 0.0
        %3170 = vmatmul.mubr.f32.gmra.mrb[0].mxu0 %v2981
        %v3171 = vpop.f32.mrb[0].mxu0
        %v3172 = vadd.f32 %v1381, %v3171
        %v3173 = vpop.f32.mrb[0].mxu0
        %3174 = vmatprep.mubr.f32.mxu0 0.0
        %3175 = vmatmul.mubr.f32.gmra.mrb[0].mxu0 %v2984
        %v3176 = vpop.f32.mrb[0].mxu0
        %v3177 = vadd.f32 %v1386, %v3176
        %v3178 = vpop.f32.mrb[0].mxu0
        %3179 = vmatprep.mubr.f32.mxu0 0.0
        %3180 = vmatmul.mubr.f32.gmra.mrb[0].mxu0 %v2987
        %v3181 = vpop.f32.mrb[0].mxu0
        %v3182 = vadd.f32 %v1391, %v3181
        %v3183 = vpop.f32.mrb[0].mxu0
        %3184 = vmatprep.mubr.f32.mxu0 0.0
        %3185 = vmatmul.mubr.f32.gmra.mrb[0].mxu0 %v2990
        %v3186 = vpop.f32.mrb[0].mxu0
        %v3187 = vadd.f32 %v1396, %v3186
        %v3188 = vpop.f32.mrb[0].mxu0
        %3189 = vmatprep.mubr.f32.mxu0 0.0
        %3190 = vmatmul.mubr.f32.gmra.mrb[0].mxu0 %v2993
        %v3191 = vpop.f32.mrb[0].mxu0
        %v3192 = vadd.f32 %v1401, %v3191
        %v3193 = vpop.f32.mrb[0].mxu0
        %3194 = vmatprep.mubr.f32.mxu0 0.0
        %3195 = vmatmul.mubr.f32.gmra.mrb[0].mxu0 %v2996
        %v3196 = vpop.f32.mrb[0].mxu0
        %v3197 = vadd.f32 %v1406, %v3196
        %v3198 = vpop.f32.mrb[0].mxu0
        %3199 = vmatprep.mubr.f32.mxu0 0.0
        %3200 = vmatmul.mubr.f32.gmra.mrb[0].mxu0 %v2999
        %v3201 = vpop.f32.mrb[0].mxu0
        %v3202 = vadd.f32 %v1411, %v3201
        %v3203 = vpop.f32.mrb[0].mxu0
        %3204 = vmatprep.mubr.f32.mxu0 0.0
        %3205 = vmatmul.mubr.f32.gmra.mrb[0].mxu0 %v3002
        %v3206 = vpop.f32.mrb[0].mxu0
        %v3207 = vadd.f32 %v1416, %v3206
        %v3208 = vpop.f32.mrb[0].mxu0
        %3209 = vmatprep.mubr.f32.mxu0 0.0
        %3210 = vmatmul.mubr.f32.gmra.mrb[0].mxu0 %v3005
        %v3211 = vpop.f32.mrb[0].mxu0
        %v3212 = vadd.f32 %v1421, %v3211
        %v3213 = vpop.f32.mrb[0].mxu0
        %3214 = vmatprep.mubr.f32.mxu0 0.0
        %3215 = vmatmul.mubr.f32.gmra.mrb[0].mxu0 %v3008
        %v3216 = vpop.f32.mrb[0].mxu0
        %v3217 = vadd.f32 %v1426, %v3216
        %v3218 = vpop.f32.mrb[0].mxu0
        %3219 = vmatprep.mubr.f32.mxu0 0.0
        %3220 = vmatmul.mubr.f32.gmra.mrb[0].mxu0 %v3011
        %v3221 = vpop.f32.mrb[0].mxu0
        %v3222 = vadd.f32 %v1431, %v3221
        %v3223 = vpop.f32.mrb[0].mxu0
        %3224 = vmatprep.mubr.f32.mxu0 0.0
        %3225 = vmatmul.mubr.f32.gmra.mrb[0].mxu0 %v3014
        %v3226 = vpop.f32.mrb[0].mxu0
        %v3227 = vadd.f32 %v1436, %v3226
        %v3228 = vpop.f32.mrb[0].mxu0
        %3229 = vmatprep.mubr.f32.mxu0 0.0
        %3230 = vmatmul.mubr.f32.gmra.mrb[0].mxu0 %v3017
        %v3231 = vpop.f32.mrb[0].mxu0
        %v3232 = vadd.f32 %v1441, %v3231
        %v3233 = vpop.f32.mrb[0].mxu0
        %3234 = vmatprep.mubr.f32.mxu0 0.0
        %3235 = vmatmul.mubr.f32.gmra.mrb[0].mxu0 %v3020
        %v3236 = vpop.f32.mrb[0].mxu0
        %v3237 = vadd.f32 %v1446, %v3236
        %v3238 = vpop.f32.mrb[0].mxu0
        %3239 = vmatprep.mubr.f32.mxu0 0.0
        %3240 = vmatmul.mubr.f32.gmra.mrb[0].mxu0 %v3023
        %v3241 = vpop.f32.mrb[0].mxu0
        %v3242 = vadd.f32 %v1451, %v3241
        %v3243 = vpop.f32.mrb[0].mxu0
        %3244 = vmatprep.mubr.f32.mxu0 0.0
        %3245 = vmatmul.mubr.f32.gmra.mrb[0].mxu0 %v3026
        %v3246 = vpop.f32.mrb[0].mxu0
        %v3247 = vadd.f32 %v1456, %v3246
        %v3248 = vpop.f32.mrb[0].mxu0
        %3249 = vmatprep.mubr.f32.mxu0 0.0
        %3250 = vmatmul.mubr.f32.gmra.mrb[0].mxu0 %v3029
        %v3251 = vpop.f32.mrb[0].mxu0
        %v3252 = vadd.f32 %v1461, %v3251
        %v3253 = vpop.f32.mrb[0].mxu0
        %3254 = vmatprep.mubr.f32.mxu0 0.0
        %3255 = vmatmul.mubr.f32.gmra.mrb[0].mxu0 %v3032
        %v3256 = vpop.f32.mrb[0].mxu0
        %v3257 = vadd.f32 %v1466, %v3256
        %v3258 = vpop.f32.mrb[0].mxu0
        %3259 = vmatprep.mubr.f32.mxu0 0.0
        %3260 = vmatmul.mubr.f32.gmra.mrb[0].mxu0 %v3035
        %v3261 = vpop.f32.mrb[0].mxu0
        %v3262 = vadd.f32 %v1471, %v3261
        %v3263 = vpop.f32.mrb[0].mxu0
        %3264 = vdwg.mxu0
        %v3266 = vsel %vm455, %v1474, 0
        %v3269 = vsel %vm455, %v1475, 0
        %v3272 = vsel %vm455, %v1476, 0
        %v3275 = vsel %vm455, %v1477, 0
        %v3278 = vsel %vm455, %v1478, 0
        %v3281 = vsel %vm455, %v1479, 0
        %v3284 = vsel %vm455, %v1480, 0
        %v3287 = vsel %vm455, %v1481, 0
        %v3290 = vsel %vm455, %v1482, 0
        %v3293 = vsel %vm455, %v1483, 0
        %v3296 = vsel %vm455, %v1484, 0
        %v3299 = vsel %vm455, %v1485, 0
        %v3302 = vsel %vm455, %v1486, 0
        %v3305 = vsel %vm455, %v1487, 0
        %v3308 = vsel %vm455, %v1488, 0
        %v3311 = vsel %vm455, %v1489, 0
        %v3314 = vsel %vm455, %v1490, 0
        %v3317 = vsel %vm455, %v1491, 0
        %v3320 = vsel %vm455, %v1492, 0
        %v3323 = vsel %vm455, %v1493, 0
        %v3326 = vsel %vm455, %v1494, 0
        %v3329 = vsel %vm455, %v1495, 0
        %v3332 = vsel %vm455, %v1496, 0
        %v3335 = vsel %vm455, %v1497, 0
        %v3338 = vsel %vm455, %v1498, 0
        %v3341 = vsel %vm455, %v1499, 0
        %v3344 = vsel %vm455, %v1500, 0
        %v3347 = vsel %vm455, %v1501, 0
        %v3350 = vsel %vm455, %v1502, 0
        %v3353 = vsel %vm455, %v1503, 0
        %v3356 = vsel %vm455, %v1504, 0
        %v3359 = vsel %vm455, %v1505, 0
        %v3362 = vsel %vm853, %v1507, 0
        %3364 = vmatprep.subr.mxu0 0.0
        %3365 = vmatpush1.msra.mxu0 %v3362
        %3366 = vmatprep.subr.mxu0 0.0
        %3367 = vmatpush1.msra.mxu0 0.0
        %3368 = vmatprep.subr.mxu0 0.0
        %3369 = vmatpush1.msra.mxu0 0.0
        %3370 = vmatprep.subr.mxu0 0.0
        %3371 = vmatpush1.msra.mxu0 0.0
        %3372 = vmatprep.subr.mxu0 0.0
        %3373 = vmatpush1.msra.mxu0 0.0
        %3374 = vmatprep.subr.mxu0 0.0
        %3375 = vmatpush1.msra.mxu0 0.0
        %3376 = vmatprep.subr.mxu0 0.0
        %3377 = vmatpush1.msra.mxu0 0.0
        %3378 = vmatprep.subr.mxu0 0.0
        %3379 = vmatpush1.msra.mxu0 0.0
        %3380 = vmatprep.subr.mxu0 0.0
        %3381 = vmatpush1.msra.mxu0 0.0
        %3382 = vmatprep.subr.mxu0 0.0
        %3383 = vmatpush1.msra.mxu0 0.0
        %3384 = vmatprep.subr.mxu0 0.0
        %3385 = vmatpush1.msra.mxu0 0.0
        %3386 = vmatprep.subr.mxu0 0.0
        %3387 = vmatpush1.msra.mxu0 0.0
        %3388 = vmatprep.subr.mxu0 0.0
        %3389 = vmatpush1.msra.mxu0 0.0
        %3390 = vmatprep.subr.mxu0 0.0
        %3391 = vmatpush1.msra.mxu0 0.0
        %3392 = vmatprep.subr.mxu0 0.0
        %3393 = vmatpush1.msra.mxu0 0.0
        %3394 = vmatprep.subr.mxu0 0.0
        %3395 = vmatpush1.msra.mxu0 0.0
        %3396 = vmatprep.subr.mxu0 0.0
        %3397 = vmatpush1.msra.mxu0 0.0
        %3398 = vmatprep.subr.mxu0 0.0
        %3399 = vmatpush1.msra.mxu0 0.0
        %3400 = vmatprep.subr.mxu0 0.0
        %3401 = vmatpush1.msra.mxu0 0.0
        %3402 = vmatprep.subr.mxu0 0.0
        %3403 = vmatpush1.msra.mxu0 0.0
        %3404 = vmatprep.subr.mxu0 0.0
        %3405 = vmatpush1.msra.mxu0 0.0
        %3406 = vmatprep.subr.mxu0 0.0
        %3407 = vmatpush1.msra.mxu0 0.0
        %3408 = vmatprep.subr.mxu0 0.0
        %3409 = vmatpush1.msra.mxu0 0.0
        %3410 = vmatprep.subr.mxu0 0.0
        %3411 = vmatpush1.msra.mxu0 0.0
        %3412 = vmatprep.subr.mxu0 0.0
        %3413 = vmatpush1.msra.mxu0 0.0
        %3414 = vmatprep.subr.mxu0 0.0
        %3415 = vmatpush1.msra.mxu0 0.0
        %3416 = vmatprep.subr.mxu0 0.0
        %3417 = vmatpush1.msra.mxu0 0.0
        %3418 = vmatprep.subr.mxu0 0.0
        %3419 = vmatpush1.msra.mxu0 0.0
        %3420 = vmatprep.subr.mxu0 0.0
        %3421 = vmatpush1.msra.mxu0 0.0
        %3422 = vmatprep.subr.mxu0 0.0
        %3423 = vmatpush1.msra.mxu0 0.0
        %3424 = vmatprep.subr.mxu0 0.0
        %3425 = vmatpush1.msra.mxu0 0.0
        %3426 = vmatprep.subr.mxu0 0.0
        %3427 = vmatpush1.msra.mxu0 0.0
        %3428 = vmatprep.mubr.f32.mxu0 0.0
        %3429 = vmatmul.mubr.f32.gmra.mrb[0].mxu0 %v3266
        %v3430 = vpop.f32.mrb[0].mxu0
        %v3431 = vadd.f32 %v1708, %v3430
        %v3432 = vpop.f32.mrb[0].mxu0
        %3433 = vmatprep.mubr.f32.mxu0 0.0
        %3434 = vmatmul.mubr.f32.gmra.mrb[0].mxu0 %v3269
        %v3435 = vpop.f32.mrb[0].mxu0
        %v3436 = vadd.f32 %v1713, %v3435
        %v3437 = vpop.f32.mrb[0].mxu0
        %3438 = vmatprep.mubr.f32.mxu0 0.0
        %3439 = vmatmul.mubr.f32.gmra.mrb[0].mxu0 %v3272
        %v3440 = vpop.f32.mrb[0].mxu0
        %v3441 = vadd.f32 %v1718, %v3440
        %v3442 = vpop.f32.mrb[0].mxu0
        %3443 = vmatprep.mubr.f32.mxu0 0.0
        %3444 = vmatmul.mubr.f32.gmra.mrb[0].mxu0 %v3275
        %v3445 = vpop.f32.mrb[0].mxu0
        %v3446 = vadd.f32 %v1723, %v3445
        %v3447 = vpop.f32.mrb[0].mxu0
        %3448 = vmatprep.mubr.f32.mxu0 0.0
        %3449 = vmatmul.mubr.f32.gmra.mrb[0].mxu0 %v3278
        %v3450 = vpop.f32.mrb[0].mxu0
        %v3451 = vadd.f32 %v1728, %v3450
        %v3452 = vpop.f32.mrb[0].mxu0
        %3453 = vmatprep.mubr.f32.mxu0 0.0
        %3454 = vmatmul.mubr.f32.gmra.mrb[0].mxu0 %v3281
        %v3455 = vpop.f32.mrb[0].mxu0
        %v3456 = vadd.f32 %v1733, %v3455
        %v3457 = vpop.f32.mrb[0].mxu0
        %3458 = vmatprep.mubr.f32.mxu0 0.0
        %3459 = vmatmul.mubr.f32.gmra.mrb[0].mxu0 %v3284
        %v3460 = vpop.f32.mrb[0].mxu0
        %v3461 = vadd.f32 %v1738, %v3460
        %v3462 = vpop.f32.mrb[0].mxu0
        %3463 = vmatprep.mubr.f32.mxu0 0.0
        %3464 = vmatmul.mubr.f32.gmra.mrb[0].mxu0 %v3287
        %v3465 = vpop.f32.mrb[0].mxu0
        %v3466 = vadd.f32 %v1743, %v3465
        %v3467 = vpop.f32.mrb[0].mxu0
        %3468 = vmatprep.mubr.f32.mxu0 0.0
        %3469 = vmatmul.mubr.f32.gmra.mrb[0].mxu0 %v3290
        %v3470 = vpop.f32.mrb[0].mxu0
        %v3471 = vadd.f32 %v1748, %v3470
        %v3472 = vpop.f32.mrb[0].mxu0
        %3473 = vmatprep.mubr.f32.mxu0 0.0
        %3474 = vmatmul.mubr.f32.gmra.mrb[0].mxu0 %v3293
        %v3475 = vpop.f32.mrb[0].mxu0
        %v3476 = vadd.f32 %v1753, %v3475
        %v3477 = vpop.f32.mrb[0].mxu0
        %3478 = vmatprep.mubr.f32.mxu0 0.0
        %3479 = vmatmul.mubr.f32.gmra.mrb[0].mxu0 %v3296
        %v3480 = vpop.f32.mrb[0].mxu0
        %v3481 = vadd.f32 %v1758, %v3480
        %v3482 = vpop.f32.mrb[0].mxu0
        %3483 = vmatprep.mubr.f32.mxu0 0.0
        %3484 = vmatmul.mubr.f32.gmra.mrb[0].mxu0 %v3299
        %v3485 = vpop.f32.mrb[0].mxu0
        %v3486 = vadd.f32 %v1763, %v3485
        %v3487 = vpop.f32.mrb[0].mxu0
        %3488 = vmatprep.mubr.f32.mxu0 0.0
        %3489 = vmatmul.mubr.f32.gmra.mrb[0].mxu0 %v3302
        %v3490 = vpop.f32.mrb[0].mxu0
        %v3491 = vadd.f32 %v1768, %v3490
        %v3492 = vpop.f32.mrb[0].mxu0
        %3493 = vmatprep.mubr.f32.mxu0 0.0
        %3494 = vmatmul.mubr.f32.gmra.mrb[0].mxu0 %v3305
        %v3495 = vpop.f32.mrb[0].mxu0
        %v3496 = vadd.f32 %v1773, %v3495
        %v3497 = vpop.f32.mrb[0].mxu0
        %3498 = vmatprep.mubr.f32.mxu0 0.0
        %3499 = vmatmul.mubr.f32.gmra.mrb[0].mxu0 %v3308
        %v3500 = vpop.f32.mrb[0].mxu0
        %v3501 = vadd.f32 %v1778, %v3500
        %v3502 = vpop.f32.mrb[0].mxu0
        %3503 = vmatprep.mubr.f32.mxu0 0.0
        %3504 = vmatmul.mubr.f32.gmra.mrb[0].mxu0 %v3311
        %v3505 = vpop.f32.mrb[0].mxu0
        %v3506 = vadd.f32 %v1783, %v3505
        %v3507 = vpop.f32.mrb[0].mxu0
        %3508 = vmatprep.mubr.f32.mxu0 0.0
        %3509 = vmatmul.mubr.f32.gmra.mrb[0].mxu0 %v3314
        %v3510 = vpop.f32.mrb[0].mxu0
        %v3511 = vadd.f32 %v1788, %v3510
        %v3512 = vpop.f32.mrb[0].mxu0
        %3513 = vmatprep.mubr.f32.mxu0 0.0
        %3514 = vmatmul.mubr.f32.gmra.mrb[0].mxu0 %v3317
        %v3515 = vpop.f32.mrb[0].mxu0
        %v3516 = vadd.f32 %v1793, %v3515
        %v3517 = vpop.f32.mrb[0].mxu0
        %3518 = vmatprep.mubr.f32.mxu0 0.0
        %3519 = vmatmul.mubr.f32.gmra.mrb[0].mxu0 %v3320
        %v3520 = vpop.f32.mrb[0].mxu0
        %v3521 = vadd.f32 %v1798, %v3520
        %v3522 = vpop.f32.mrb[0].mxu0
        %3523 = vmatprep.mubr.f32.mxu0 0.0
        %3524 = vmatmul.mubr.f32.gmra.mrb[0].mxu0 %v3323
        %v3525 = vpop.f32.mrb[0].mxu0
        %v3526 = vadd.f32 %v1803, %v3525
        %v3527 = vpop.f32.mrb[0].mxu0
        %3528 = vmatprep.mubr.f32.mxu0 0.0
        %3529 = vmatmul.mubr.f32.gmra.mrb[0].mxu0 %v3326
        %v3530 = vpop.f32.mrb[0].mxu0
        %v3531 = vadd.f32 %v1808, %v3530
        %v3532 = vpop.f32.mrb[0].mxu0
        %3533 = vmatprep.mubr.f32.mxu0 0.0
        %3534 = vmatmul.mubr.f32.gmra.mrb[0].mxu0 %v3329
        %v3535 = vpop.f32.mrb[0].mxu0
        %v3536 = vadd.f32 %v1813, %v3535
        %v3537 = vpop.f32.mrb[0].mxu0
        %3538 = vmatprep.mubr.f32.mxu0 0.0
        %3539 = vmatmul.mubr.f32.gmra.mrb[0].mxu0 %v3332
        %v3540 = vpop.f32.mrb[0].mxu0
        %v3541 = vadd.f32 %v1818, %v3540
        %v3542 = vpop.f32.mrb[0].mxu0
        %3543 = vmatprep.mubr.f32.mxu0 0.0
        %3544 = vmatmul.mubr.f32.gmra.mrb[0].mxu0 %v3335
        %v3545 = vpop.f32.mrb[0].mxu0
        %v3546 = vadd.f32 %v1823, %v3545
        %v3547 = vpop.f32.mrb[0].mxu0
        %3548 = vmatprep.mubr.f32.mxu0 0.0
        %3549 = vmatmul.mubr.f32.gmra.mrb[0].mxu0 %v3338
        %v3550 = vpop.f32.mrb[0].mxu0
        %v3551 = vadd.f32 %v1828, %v3550
        %v3552 = vpop.f32.mrb[0].mxu0
        %3553 = vmatprep.mubr.f32.mxu0 0.0
        %3554 = vmatmul.mubr.f32.gmra.mrb[0].mxu0 %v3341
        %v3555 = vpop.f32.mrb[0].mxu0
        %v3556 = vadd.f32 %v1833, %v3555
        %v3557 = vpop.f32.mrb[0].mxu0
        %3558 = vmatprep.mubr.f32.mxu0 0.0
        %3559 = vmatmul.mubr.f32.gmra.mrb[0].mxu0 %v3344
        %v3560 = vpop.f32.mrb[0].mxu0
        %v3561 = vadd.f32 %v1838, %v3560
        %v3562 = vpop.f32.mrb[0].mxu0
        %3563 = vmatprep.mubr.f32.mxu0 0.0
        %3564 = vmatmul.mubr.f32.gmra.mrb[0].mxu0 %v3347
        %v3565 = vpop.f32.mrb[0].mxu0
        %v3566 = vadd.f32 %v1843, %v3565
        %v3567 = vpop.f32.mrb[0].mxu0
        %3568 = vmatprep.mubr.f32.mxu0 0.0
        %3569 = vmatmul.mubr.f32.gmra.mrb[0].mxu0 %v3350
        %v3570 = vpop.f32.mrb[0].mxu0
        %v3571 = vadd.f32 %v1848, %v3570
        %v3572 = vpop.f32.mrb[0].mxu0
        %3573 = vmatprep.mubr.f32.mxu0 0.0
        %3574 = vmatmul.mubr.f32.gmra.mrb[0].mxu0 %v3353
        %v3575 = vpop.f32.mrb[0].mxu0
        %v3576 = vadd.f32 %v1853, %v3575
        %v3577 = vpop.f32.mrb[0].mxu0
        %3578 = vmatprep.mubr.f32.mxu0 0.0
        %3579 = vmatmul.mubr.f32.gmra.mrb[0].mxu0 %v3356
        %v3580 = vpop.f32.mrb[0].mxu0
        %v3581 = vadd.f32 %v1858, %v3580
        %v3582 = vpop.f32.mrb[0].mxu0
        %3583 = vmatprep.mubr.f32.mxu0 0.0
        %3584 = vmatmul.mubr.f32.gmra.mrb[0].mxu0 %v3359
        %v3585 = vpop.f32.mrb[0].mxu0
        %v3586 = vadd.f32 %v1863, %v3585
        %v3587 = vpop.f32.mrb[0].mxu0
        %3588 = vdwg.mxu0
        %v3590 = vsel %vm455, %v1867, 0
        %v3593 = vsel %vm455, %v1868, 0
        %v3596 = vsel %vm455, %v1869, 0
        %v3599 = vsel %vm455, %v1870, 0
        %v3602 = vsel %vm455, %v1871, 0
        %v3605 = vsel %vm455, %v1872, 0
        %v3608 = vsel %vm455, %v1873, 0
        %v3611 = vsel %vm455, %v1874, 0
        %v3614 = vsel %vm455, %v1875, 0
        %v3617 = vsel %vm455, %v1876, 0
        %v3620 = vsel %vm455, %v1877, 0
        %v3623 = vsel %vm455, %v1878, 0
        %v3626 = vsel %vm455, %v1879, 0
        %v3629 = vsel %vm455, %v1880, 0
        %v3632 = vsel %vm455, %v1881, 0
        %v3635 = vsel %vm455, %v1882, 0
        %v3638 = vsel %vm455, %v1883, 0
        %v3641 = vsel %vm455, %v1884, 0
        %v3644 = vsel %vm455, %v1885, 0
        %v3647 = vsel %vm455, %v1886, 0
        %v3650 = vsel %vm455, %v1887, 0
        %v3653 = vsel %vm455, %v1888, 0
        %v3656 = vsel %vm455, %v1889, 0
        %v3659 = vsel %vm455, %v1890, 0
        %v3662 = vsel %vm455, %v1891, 0
        %v3665 = vsel %vm455, %v1892, 0
        %v3668 = vsel %vm455, %v1893, 0
        %v3671 = vsel %vm455, %v1894, 0
        %v3674 = vsel %vm455, %v1895, 0
        %v3677 = vsel %vm455, %v1896, 0
        %v3680 = vsel %vm455, %v1897, 0
        %v3683 = vsel %vm455, %v1898, 0
        %v3686 = vsel %vm853, %v1900, 0
        %3688 = vmatprep.subr.mxu0 0.0
        %3689 = vmatpush1.msra.mxu0 %v3686
        %3690 = vmatprep.subr.mxu0 0.0
        %3691 = vmatpush1.msra.mxu0 0.0
        %3692 = vmatprep.subr.mxu0 0.0
        %3693 = vmatpush1.msra.mxu0 0.0
        %3694 = vmatprep.subr.mxu0 0.0
        %3695 = vmatpush1.msra.mxu0 0.0
        %3696 = vmatprep.subr.mxu0 0.0
        %3697 = vmatpush1.msra.mxu0 0.0
        %3698 = vmatprep.subr.mxu0 0.0
        %3699 = vmatpush1.msra.mxu0 0.0
        %3700 = vmatprep.subr.mxu0 0.0
        %3701 = vmatpush1.msra.mxu0 0.0
        %3702 = vmatprep.subr.mxu0 0.0
        %3703 = vmatpush1.msra.mxu0 0.0
        %3704 = vmatprep.subr.mxu0 0.0
        %3705 = vmatpush1.msra.mxu0 0.0
        %3706 = vmatprep.subr.mxu0 0.0
        %3707 = vmatpush1.msra.mxu0 0.0
        %3708 = vmatprep.subr.mxu0 0.0
        %3709 = vmatpush1.msra.mxu0 0.0
        %3710 = vmatprep.subr.mxu0 0.0
        %3711 = vmatpush1.msra.mxu0 0.0
        %3712 = vmatprep.subr.mxu0 0.0
        %3713 = vmatpush1.msra.mxu0 0.0
        %3714 = vmatprep.subr.mxu0 0.0
        %3715 = vmatpush1.msra.mxu0 0.0
        %3716 = vmatprep.subr.mxu0 0.0
        %3717 = vmatpush1.msra.mxu0 0.0
        %3718 = vmatprep.subr.mxu0 0.0
        %3719 = vmatpush1.msra.mxu0 0.0
        %3720 = vmatprep.subr.mxu0 0.0
        %3721 = vmatpush1.msra.mxu0 0.0
        %3722 = vmatprep.subr.mxu0 0.0
        %3723 = vmatpush1.msra.mxu0 0.0
        %3724 = vmatprep.subr.mxu0 0.0
        %3725 = vmatpush1.msra.mxu0 0.0
        %3726 = vmatprep.subr.mxu0 0.0
        %3727 = vmatpush1.msra.mxu0 0.0
        %3728 = vmatprep.subr.mxu0 0.0
        %3729 = vmatpush1.msra.mxu0 0.0
        %3730 = vmatprep.subr.mxu0 0.0
        %3731 = vmatpush1.msra.mxu0 0.0
        %3732 = vmatprep.subr.mxu0 0.0
        %3733 = vmatpush1.msra.mxu0 0.0
        %3734 = vmatprep.subr.mxu0 0.0
        %3735 = vmatpush1.msra.mxu0 0.0
        %3736 = vmatprep.subr.mxu0 0.0
        %3737 = vmatpush1.msra.mxu0 0.0
        %3738 = vmatprep.subr.mxu0 0.0
        %3739 = vmatpush1.msra.mxu0 0.0
        %3740 = vmatprep.subr.mxu0 0.0
        %3741 = vmatpush1.msra.mxu0 0.0
        %3742 = vmatprep.subr.mxu0 0.0
        %3743 = vmatpush1.msra.mxu0 0.0
        %3744 = vmatprep.subr.mxu0 0.0
        %3745 = vmatpush1.msra.mxu0 0.0
        %3746 = vmatprep.subr.mxu0 0.0
        %3747 = vmatpush1.msra.mxu0 0.0
        %3748 = vmatprep.subr.mxu0 0.0
        %3749 = vmatpush1.msra.mxu0 0.0
        %3750 = vmatprep.subr.mxu0 0.0
        %3751 = vmatpush1.msra.mxu0 0.0
        %3752 = vmatprep.mubr.f32.mxu0 0.0
        %3753 = vmatmul.mubr.f32.gmra.mrb[0].mxu0 %v3590
        %v3754 = vpop.f32.mrb[0].mxu0
        %v3755 = vadd.f32 %v2101, %v3754
        %v3756 = vpop.f32.mrb[0].mxu0
        %3757 = vmatprep.mubr.f32.mxu0 0.0
        %3758 = vmatmul.mubr.f32.gmra.mrb[0].mxu0 %v3593
        %v3759 = vpop.f32.mrb[0].mxu0
        %v3760 = vadd.f32 %v2106, %v3759
        %v3761 = vpop.f32.mrb[0].mxu0
        %3762 = vmatprep.mubr.f32.mxu0 0.0
        %3763 = vmatmul.mubr.f32.gmra.mrb[0].mxu0 %v3596
        %v3764 = vpop.f32.mrb[0].mxu0
        %v3765 = vadd.f32 %v2111, %v3764
        %v3766 = vpop.f32.mrb[0].mxu0
        %3767 = vmatprep.mubr.f32.mxu0 0.0
        %3768 = vmatmul.mubr.f32.gmra.mrb[0].mxu0 %v3599
        %v3769 = vpop.f32.mrb[0].mxu0
        %v3770 = vadd.f32 %v2116, %v3769
        %v3771 = vpop.f32.mrb[0].mxu0
        %3772 = vmatprep.mubr.f32.mxu0 0.0
        %3773 = vmatmul.mubr.f32.gmra.mrb[0].mxu0 %v3602
        %v3774 = vpop.f32.mrb[0].mxu0
        %v3775 = vadd.f32 %v2121, %v3774
        %v3776 = vpop.f32.mrb[0].mxu0
        %3777 = vmatprep.mubr.f32.mxu0 0.0
        %3778 = vmatmul.mubr.f32.gmra.mrb[0].mxu0 %v3605
        %v3779 = vpop.f32.mrb[0].mxu0
        %v3780 = vadd.f32 %v2126, %v3779
        %v3781 = vpop.f32.mrb[0].mxu0
        %3782 = vmatprep.mubr.f32.mxu0 0.0
        %3783 = vmatmul.mubr.f32.gmra.mrb[0].mxu0 %v3608
        %v3784 = vpop.f32.mrb[0].mxu0
        %v3785 = vadd.f32 %v2131, %v3784
        %v3786 = vpop.f32.mrb[0].mxu0
        %3787 = vmatprep.mubr.f32.mxu0 0.0
        %3788 = vmatmul.mubr.f32.gmra.mrb[0].mxu0 %v3611
        %v3789 = vpop.f32.mrb[0].mxu0
        %v3790 = vadd.f32 %v2136, %v3789
        %v3791 = vpop.f32.mrb[0].mxu0
        %3792 = vmatprep.mubr.f32.mxu0 0.0
        %3793 = vmatmul.mubr.f32.gmra.mrb[0].mxu0 %v3614
        %v3794 = vpop.f32.mrb[0].mxu0
        %v3795 = vadd.f32 %v2141, %v3794
        %v3796 = vpop.f32.mrb[0].mxu0
        %3797 = vmatprep.mubr.f32.mxu0 0.0
        %3798 = vmatmul.mubr.f32.gmra.mrb[0].mxu0 %v3617
        %v3799 = vpop.f32.mrb[0].mxu0
        %v3800 = vadd.f32 %v2146, %v3799
        %v3801 = vpop.f32.mrb[0].mxu0
        %3802 = vmatprep.mubr.f32.mxu0 0.0
        %3803 = vmatmul.mubr.f32.gmra.mrb[0].mxu0 %v3620
        %v3804 = vpop.f32.mrb[0].mxu0
        %v3805 = vadd.f32 %v2151, %v3804
        %v3806 = vpop.f32.mrb[0].mxu0
        %3807 = vmatprep.mubr.f32.mxu0 0.0
        %3808 = vmatmul.mubr.f32.gmra.mrb[0].mxu0 %v3623
        %v3809 = vpop.f32.mrb[0].mxu0
        %v3810 = vadd.f32 %v2156, %v3809
        %v3811 = vpop.f32.mrb[0].mxu0
        %3812 = vmatprep.mubr.f32.mxu0 0.0
        %3813 = vmatmul.mubr.f32.gmra.mrb[0].mxu0 %v3626
        %v3814 = vpop.f32.mrb[0].mxu0
        %v3815 = vadd.f32 %v2161, %v3814
        %v3816 = vpop.f32.mrb[0].mxu0
        %3817 = vmatprep.mubr.f32.mxu0 0.0
        %3818 = vmatmul.mubr.f32.gmra.mrb[0].mxu0 %v3629
        %v3819 = vpop.f32.mrb[0].mxu0
        %v3820 = vadd.f32 %v2166, %v3819
        %v3821 = vpop.f32.mrb[0].mxu0
        %3822 = vmatprep.mubr.f32.mxu0 0.0
        %3823 = vmatmul.mubr.f32.gmra.mrb[0].mxu0 %v3632
        %v3824 = vpop.f32.mrb[0].mxu0
        %v3825 = vadd.f32 %v2171, %v3824
        %v3826 = vpop.f32.mrb[0].mxu0
        %3827 = vmatprep.mubr.f32.mxu0 0.0
        %3828 = vmatmul.mubr.f32.gmra.mrb[0].mxu0 %v3635
        %v3829 = vpop.f32.mrb[0].mxu0
        %v3830 = vadd.f32 %v2176, %v3829
        %v3831 = vpop.f32.mrb[0].mxu0
        %3832 = vmatprep.mubr.f32.mxu0 0.0
        %3833 = vmatmul.mubr.f32.gmra.mrb[0].mxu0 %v3638
        %v3834 = vpop.f32.mrb[0].mxu0
        %v3835 = vadd.f32 %v2181, %v3834
        %v3836 = vpop.f32.mrb[0].mxu0
        %3837 = vmatprep.mubr.f32.mxu0 0.0
        %3838 = vmatmul.mubr.f32.gmra.mrb[0].mxu0 %v3641
        %v3839 = vpop.f32.mrb[0].mxu0
        %v3840 = vadd.f32 %v2186, %v3839
        %v3841 = vpop.f32.mrb[0].mxu0
        %3842 = vmatprep.mubr.f32.mxu0 0.0
        %3843 = vmatmul.mubr.f32.gmra.mrb[0].mxu0 %v3644
        %v3844 = vpop.f32.mrb[0].mxu0
        %v3845 = vadd.f32 %v2191, %v3844
        %v3846 = vpop.f32.mrb[0].mxu0
        %3847 = vmatprep.mubr.f32.mxu0 0.0
        %3848 = vmatmul.mubr.f32.gmra.mrb[0].mxu0 %v3647
        %v3849 = vpop.f32.mrb[0].mxu0
        %v3850 = vadd.f32 %v2196, %v3849
        %v3851 = vpop.f32.mrb[0].mxu0
        %3852 = vmatprep.mubr.f32.mxu0 0.0
        %3853 = vmatmul.mubr.f32.gmra.mrb[0].mxu0 %v3650
        %v3854 = vpop.f32.mrb[0].mxu0
        %v3855 = vadd.f32 %v2201, %v3854
        %v3856 = vpop.f32.mrb[0].mxu0
        %3857 = vmatprep.mubr.f32.mxu0 0.0
        %3858 = vmatmul.mubr.f32.gmra.mrb[0].mxu0 %v3653
        %v3859 = vpop.f32.mrb[0].mxu0
        %v3860 = vadd.f32 %v2206, %v3859
        %v3861 = vpop.f32.mrb[0].mxu0
        %3862 = vmatprep.mubr.f32.mxu0 0.0
        %3863 = vmatmul.mubr.f32.gmra.mrb[0].mxu0 %v3656
        %v3864 = vpop.f32.mrb[0].mxu0
        %v3865 = vadd.f32 %v2211, %v3864
        %v3866 = vpop.f32.mrb[0].mxu0
        %3867 = vmatprep.mubr.f32.mxu0 0.0
        %3868 = vmatmul.mubr.f32.gmra.mrb[0].mxu0 %v3659
        %v3869 = vpop.f32.mrb[0].mxu0
        %v3870 = vadd.f32 %v2216, %v3869
        %v3871 = vpop.f32.mrb[0].mxu0
        %3872 = vmatprep.mubr.f32.mxu0 0.0
        %3873 = vmatmul.mubr.f32.gmra.mrb[0].mxu0 %v3662
        %v3874 = vpop.f32.mrb[0].mxu0
        %v3875 = vadd.f32 %v2221, %v3874
        %v3876 = vpop.f32.mrb[0].mxu0
        %3877 = vmatprep.mubr.f32.mxu0 0.0
        %3878 = vmatmul.mubr.f32.gmra.mrb[0].mxu0 %v3665
        %v3879 = vpop.f32.mrb[0].mxu0
        %v3880 = vadd.f32 %v2226, %v3879
        %v3881 = vpop.f32.mrb[0].mxu0
        %3882 = vmatprep.mubr.f32.mxu0 0.0
        %3883 = vmatmul.mubr.f32.gmra.mrb[0].mxu0 %v3668
        %v3884 = vpop.f32.mrb[0].mxu0
        %v3885 = vadd.f32 %v2231, %v3884
        %v3886 = vpop.f32.mrb[0].mxu0
        %3887 = vmatprep.mubr.f32.mxu0 0.0
        %3888 = vmatmul.mubr.f32.gmra.mrb[0].mxu0 %v3671
        %v3889 = vpop.f32.mrb[0].mxu0
        %v3890 = vadd.f32 %v2236, %v3889
        %v3891 = vpop.f32.mrb[0].mxu0
        %3892 = vmatprep.mubr.f32.mxu0 0.0
        %3893 = vmatmul.mubr.f32.gmra.mrb[0].mxu0 %v3674
        %v3894 = vpop.f32.mrb[0].mxu0
        %v3895 = vadd.f32 %v2241, %v3894
        %v3896 = vpop.f32.mrb[0].mxu0
        %3897 = vmatprep.mubr.f32.mxu0 0.0
        %3898 = vmatmul.mubr.f32.gmra.mrb[0].mxu0 %v3677
        %v3899 = vpop.f32.mrb[0].mxu0
        %v3900 = vadd.f32 %v2246, %v3899
        %v3901 = vpop.f32.mrb[0].mxu0
        %3902 = vmatprep.mubr.f32.mxu0 0.0
        %3903 = vmatmul.mubr.f32.gmra.mrb[0].mxu0 %v3680
        %v3904 = vpop.f32.mrb[0].mxu0
        %v3905 = vadd.f32 %v2251, %v3904
        %v3906 = vpop.f32.mrb[0].mxu0
        %3907 = vmatprep.mubr.f32.mxu0 0.0
        %3908 = vmatmul.mubr.f32.gmra.mrb[0].mxu0 %v3683
        %v3909 = vpop.f32.mrb[0].mxu0
        %v3910 = vadd.f32 %v2256, %v3909
        %v3911 = vpop.f32.mrb[0].mxu0
        %3912 = vdwg.mxu0
        %v3913 = vadd.f32 %v2783, %v3107
        %v3914 = vadd.f32 %v2788, %v3112
        %v3915 = vadd.f32 %v2793, %v3117
        %v3916 = vadd.f32 %v2798, %v3122
        %v3917 = vadd.f32 %v2803, %v3127
        %v3918 = vadd.f32 %v2808, %v3132
        %v3919 = vadd.f32 %v2813, %v3137
        %v3920 = vadd.f32 %v2818, %v3142
        %v3921 = vadd.f32 %v2823, %v3147
        %v3922 = vadd.f32 %v2828, %v3152
        %v3923 = vadd.f32 %v2833, %v3157
        %v3924 = vadd.f32 %v2838, %v3162
        %v3925 = vadd.f32 %v2843, %v3167
        %v3926 = vadd.f32 %v2848, %v3172
        %v3927 = vadd.f32 %v2853, %v3177
        %v3928 = vadd.f32 %v2858, %v3182
        %v3929 = vadd.f32 %v2863, %v3187
        %v3930 = vadd.f32 %v2868, %v3192
        %v3931 = vadd.f32 %v2873, %v3197
        %v3932 = vadd.f32 %v2878, %v3202
        %v3933 = vadd.f32 %v2883, %v3207
        %v3934 = vadd.f32 %v2888, %v3212
        %v3935 = vadd.f32 %v2893, %v3217
        %v3936 = vadd.f32 %v2898, %v3222
        %v3937 = vadd.f32 %v2903, %v3227
        %v3938 = vadd.f32 %v2908, %v3232
        %v3939 = vadd.f32 %v2913, %v3237
        %v3940 = vadd.f32 %v2918, %v3242
        %v3941 = vadd.f32 %v2923, %v3247
        %v3942 = vadd.f32 %v2928, %v3252
        %v3943 = vadd.f32 %v2933, %v3257
        %v3944 = vadd.f32 %v2938, %v3262
        %v3945 = vadd.f32 %v3431, %v3755
        %v3946 = vadd.f32 %v3436, %v3760
        %v3947 = vadd.f32 %v3441, %v3765
        %v3948 = vadd.f32 %v3446, %v3770
        %v3949 = vadd.f32 %v3451, %v3775
        %v3950 = vadd.f32 %v3456, %v3780
        %v3951 = vadd.f32 %v3461, %v3785
        %v3952 = vadd.f32 %v3466, %v3790
        %v3953 = vadd.f32 %v3471, %v3795
        %v3954 = vadd.f32 %v3476, %v3800
        %v3955 = vadd.f32 %v3481, %v3805
        %v3956 = vadd.f32 %v3486, %v3810
        %v3957 = vadd.f32 %v3491, %v3815
        %v3958 = vadd.f32 %v3496, %v3820
        %v3959 = vadd.f32 %v3501, %v3825
        %v3960 = vadd.f32 %v3506, %v3830
        %v3961 = vadd.f32 %v3511, %v3835
        %v3962 = vadd.f32 %v3516, %v3840
        %v3963 = vadd.f32 %v3521, %v3845
        %v3964 = vadd.f32 %v3526, %v3850
        %v3965 = vadd.f32 %v3531, %v3855
        %v3966 = vadd.f32 %v3536, %v3860
        %v3967 = vadd.f32 %v3541, %v3865
        %v3968 = vadd.f32 %v3546, %v3870
        %v3969 = vadd.f32 %v3551, %v3875
        %v3970 = vadd.f32 %v3556, %v3880
        %v3971 = vadd.f32 %v3561, %v3885
        %v3972 = vadd.f32 %v3566, %v3890
        %v3973 = vadd.f32 %v3571, %v3895
        %v3974 = vadd.f32 %v3576, %v3900
        %v3975 = vadd.f32 %v3581, %v3905
        %v3976 = vadd.f32 %v3586, %v3910
        %v3977 = vadd.f32 %v3913, %v3945
        %v3978 = vadd.f32 %v3914, %v3946
        %v3979 = vadd.f32 %v3915, %v3947
        %v3980 = vadd.f32 %v3916, %v3948
        %v3981 = vadd.f32 %v3917, %v3949
        %v3982 = vadd.f32 %v3918, %v3950
        %v3983 = vadd.f32 %v3919, %v3951
        %v3984 = vadd.f32 %v3920, %v3952
        %v3985 = vadd.f32 %v3921, %v3953
        %v3986 = vadd.f32 %v3922, %v3954
        %v3987 = vadd.f32 %v3923, %v3955
        %v3988 = vadd.f32 %v3924, %v3956
        %v3989 = vadd.f32 %v3925, %v3957
        %v3990 = vadd.f32 %v3926, %v3958
        %v3991 = vadd.f32 %v3927, %v3959
        %v3992 = vadd.f32 %v3928, %v3960
        %v3993 = vadd.f32 %v3929, %v3961
        %v3994 = vadd.f32 %v3930, %v3962
        %v3995 = vadd.f32 %v3931, %v3963
        %v3996 = vadd.f32 %v3932, %v3964
        %v3997 = vadd.f32 %v3933, %v3965
        %v3998 = vadd.f32 %v3934, %v3966
        %v3999 = vadd.f32 %v3935, %v3967
        %v4000 = vadd.f32 %v3936, %v3968
        %v4001 = vadd.f32 %v3937, %v3969
        %v4002 = vadd.f32 %v3938, %v3970
        %v4003 = vadd.f32 %v3939, %v3971
        %v4004 = vadd.f32 %v3940, %v3972
        %v4005 = vadd.f32 %v3941, %v3973
        %v4006 = vadd.f32 %v3942, %v3974
        %v4007 = vadd.f32 %v3943, %v3975
        %v4008 = vadd.f32 %v3944, %v3976
        %v4009 = vadd.f32 %v3977, %v2459
        %v4010 = vadd.f32 %v3978, %v2464
        %v4011 = vadd.f32 %v3979, %v2469
        %v4012 = vadd.f32 %v3980, %v2474
        %v4013 = vadd.f32 %v3981, %v2479
        %v4014 = vadd.f32 %v3982, %v2484
        %v4015 = vadd.f32 %v3983, %v2489
        %v4016 = vadd.f32 %v3984, %v2494
        %v4017 = vadd.f32 %v3985, %v2499
        %v4018 = vadd.f32 %v3986, %v2504
        %v4019 = vadd.f32 %v3987, %v2509
        %v4020 = vadd.f32 %v3988, %v2514
        %v4021 = vadd.f32 %v3989, %v2519
        %v4022 = vadd.f32 %v3990, %v2524
        %v4023 = vadd.f32 %v3991, %v2529
        %v4024 = vadd.f32 %v3992, %v2534
        %v4025 = vadd.f32 %v3993, %v2539
        %v4026 = vadd.f32 %v3994, %v2544
        %v4027 = vadd.f32 %v3995, %v2549
        %v4028 = vadd.f32 %v3996, %v2554
        %v4029 = vadd.f32 %v3997, %v2559
        %v4030 = vadd.f32 %v3998, %v2564
        %v4031 = vadd.f32 %v3999, %v2569
        %v4032 = vadd.f32 %v4000, %v2574
        %v4033 = vadd.f32 %v4001, %v2579
        %v4034 = vadd.f32 %v4002, %v2584
        %v4035 = vadd.f32 %v4003, %v2589
        %v4036 = vadd.f32 %v4004, %v2594
        %v4037 = vadd.f32 %v4005, %v2599
        %v4038 = vadd.f32 %v4006, %v2604
        %v4039 = vadd.f32 %v4007, %v2609
        %v4040 = vadd.f32 %v4008, %v2614
        %vm4041 = vcmp.gt.f32.partialorder %v4009, 0.0
        %vm4042 = vcmp.gt.f32.partialorder %v4010, 0.0
        %vm4043 = vcmp.gt.f32.partialorder %v4011, 0.0
        %vm4044 = vcmp.gt.f32.partialorder %v4012, 0.0
        %vm4045 = vcmp.gt.f32.partialorder %v4013, 0.0
        %vm4046 = vcmp.gt.f32.partialorder %v4014, 0.0
        %vm4047 = vcmp.gt.f32.partialorder %v4015, 0.0
        %vm4048 = vcmp.gt.f32.partialorder %v4016, 0.0
        %vm4049 = vcmp.gt.f32.partialorder %v4017, 0.0
        %vm4050 = vcmp.gt.f32.partialorder %v4018, 0.0
        %vm4051 = vcmp.gt.f32.partialorder %v4019, 0.0
        %vm4052 = vcmp.gt.f32.partialorder %v4020, 0.0
        %vm4053 = vcmp.gt.f32.partialorder %v4021, 0.0
        %vm4054 = vcmp.gt.f32.partialorder %v4022, 0.0
        %vm4055 = vcmp.gt.f32.partialorder %v4023, 0.0
        %vm4056 = vcmp.gt.f32.partialorder %v4024, 0.0
        %vm4057 = vcmp.gt.f32.partialorder %v4025, 0.0
        %vm4058 = vcmp.gt.f32.partialorder %v4026, 0.0
        %vm4059 = vcmp.gt.f32.partialorder %v4027, 0.0
        %vm4060 = vcmp.gt.f32.partialorder %v4028, 0.0
        %vm4061 = vcmp.gt.f32.partialorder %v4029, 0.0
        %vm4062 = vcmp.gt.f32.partialorder %v4030, 0.0
        %vm4063 = vcmp.gt.f32.partialorder %v4031, 0.0
        %vm4064 = vcmp.gt.f32.partialorder %v4032, 0.0
        %vm4065 = vcmp.gt.f32.partialorder %v4033, 0.0
        %vm4066 = vcmp.gt.f32.partialorder %v4034, 0.0
        %vm4067 = vcmp.gt.f32.partialorder %v4035, 0.0
        %vm4068 = vcmp.gt.f32.partialorder %v4036, 0.0
        %vm4069 = vcmp.gt.f32.partialorder %v4037, 0.0
        %vm4070 = vcmp.gt.f32.partialorder %v4038, 0.0
        %vm4071 = vcmp.gt.f32.partialorder %v4039, 0.0
        %vm4072 = vcmp.gt.f32.partialorder %v4040, 0.0
        %v4073 = vld [vmem:[#allocation12] sm:$0x1]
        %v4075 = vlaneseq
        %v4076 = vshrl.u32 %v4075, 7
        %v4077 = vsub.s32 0, %v4076
        %v4078 = vrot.slane %v4073, %v4077
        %v4080 = vmul.f32 %v4078, %v4009
        %v4081 = vmul.f32 %v4078, %v4010
        %v4082 = vmul.f32 %v4078, %v4011
        %v4083 = vmul.f32 %v4078, %v4012
        %v4084 = vmul.f32 %v4078, %v4013
        %v4085 = vmul.f32 %v4078, %v4014
        %v4086 = vmul.f32 %v4078, %v4015
        %v4087 = vmul.f32 %v4078, %v4016
        %v4088 = vmul.f32 %v4078, %v4017
        %v4089 = vmul.f32 %v4078, %v4018
        %v4090 = vmul.f32 %v4078, %v4019
        %v4091 = vmul.f32 %v4078, %v4020
        %v4092 = vmul.f32 %v4078, %v4021
        %v4093 = vmul.f32 %v4078, %v4022
        %v4094 = vmul.f32 %v4078, %v4023
        %v4095 = vmul.f32 %v4078, %v4024
        %v4096 = vmul.f32 %v4078, %v4025
        %v4097 = vmul.f32 %v4078, %v4026
        %v4098 = vmul.f32 %v4078, %v4027
        %v4099 = vmul.f32 %v4078, %v4028
        %v4100 = vmul.f32 %v4078, %v4029
        %v4101 = vmul.f32 %v4078, %v4030
        %v4102 = vmul.f32 %v4078, %v4031
        %v4103 = vmul.f32 %v4078, %v4032
        %v4104 = vmul.f32 %v4078, %v4033
        %v4105 = vmul.f32 %v4078, %v4034
        %v4106 = vmul.f32 %v4078, %v4035
        %v4107 = vmul.f32 %v4078, %v4036
        %v4108 = vmul.f32 %v4078, %v4037
        %v4109 = vmul.f32 %v4078, %v4038
        %v4110 = vmul.f32 %v4078, %v4039
        %v4111 = vmul.f32 %v4078, %v4040
        %v4112 = vsel %vm4041, %v4009, %v4080
        %v4113 = vsel %vm4042, %v4010, %v4081
        %v4114 = vsel %vm4043, %v4011, %v4082
        %v4115 = vsel %vm4044, %v4012, %v4083
        %v4116 = vsel %vm4045, %v4013, %v4084
        %v4117 = vsel %vm4046, %v4014, %v4085
        %v4118 = vsel %vm4047, %v4015, %v4086
        %v4119 = vsel %vm4048, %v4016, %v4087
        %v4120 = vsel %vm4049, %v4017, %v4088
        %v4121 = vsel %vm4050, %v4018, %v4089
        %v4122 = vsel %vm4051, %v4019, %v4090
        %v4123 = vsel %vm4052, %v4020, %v4091
        %v4124 = vsel %vm4053, %v4021, %v4092
        %v4125 = vsel %vm4054, %v4022, %v4093
        %v4126 = vsel %vm4055, %v4023, %v4094
        %v4127 = vsel %vm4056, %v4024, %v4095
        %v4128 = vsel %vm4057, %v4025, %v4096
        %v4129 = vsel %vm4058, %v4026, %v4097
        %v4130 = vsel %vm4059, %v4027, %v4098
        %v4131 = vsel %vm4060, %v4028, %v4099
        %v4132 = vsel %vm4061, %v4029, %v4100
        %v4133 = vsel %vm4062, %v4030, %v4101
        %v4134 = vsel %vm4063, %v4031, %v4102
        %v4135 = vsel %vm4064, %v4032, %v4103
        %v4136 = vsel %vm4065, %v4033, %v4104
        %v4137 = vsel %vm4066, %v4034, %v4105
        %v4138 = vsel %vm4067, %v4035, %v4106
        %v4139 = vsel %vm4068, %v4036, %v4107
        %v4140 = vsel %vm4069, %v4037, %v4108
        %v4141 = vsel %vm4070, %v4038, %v4109
        %v4142 = vsel %vm4071, %v4039, %v4110
        %v4143 = vsel %vm4072, %v4040, %v4111
        %s4144 = scalar_lea.vmem [#allocation3], 24
        %4145 = vst.msk [vmem:[%s4144 + $0x1] sm:$0xff] %vm501, %v4112
        %4146 = vst.msk [vmem:[%s4144 + $0x9] sm:$0xff] %vm501, %v4113
        %4147 = vst.msk [vmem:[%s4144 + $0x19] sm:$0xff] %vm501, %v4114
        %4148 = vst.msk [vmem:[%s4144 + $0x21] sm:$0xff] %vm501, %v4115
        %4149 = vst.msk [vmem:[%s4144 + $0x31] sm:$0xff] %vm501, %v4116
        %4150 = vst.msk [vmem:[%s4144 + $0x39] sm:$0xff] %vm501, %v4117
        %4151 = vst.msk [vmem:[%s4144 + $0x49] sm:$0xff] %vm501, %v4118
        %4152 = vst.msk [vmem:[%s4144 + $0x51] sm:$0xff] %vm501, %v4119
        %4153 = vst.msk [vmem:[%s4144 + $0x61] sm:$0xff] %vm501, %v4120
        %4154 = vst.msk [vmem:[%s4144 + $0x69] sm:$0xff] %vm501, %v4121
        %4155 = vst.msk [vmem:[%s4144 + $0x79] sm:$0xff] %vm501, %v4122
        %4156 = vst.msk [vmem:[%s4144 + $0x81] sm:$0xff] %vm501, %v4123
        %4157 = vst.msk [vmem:[%s4144 + $0x91] sm:$0xff] %vm501, %v4124
        %4158 = vst.msk [vmem:[%s4144 + $0x99] sm:$0xff] %vm501, %v4125
        %4159 = vst.msk [vmem:[%s4144 + $0xa9] sm:$0xff] %vm501, %v4126
        %4160 = vst.msk [vmem:[%s4144 + $0xb1] sm:$0xff] %vm501, %v4127
        %4161 = vst.msk [vmem:[%s4144 + $0xc1] sm:$0xff] %vm501, %v4128
        %4162 = vst.msk [vmem:[%s4144 + $0xc9] sm:$0xff] %vm501, %v4129
        %4163 = vst.msk [vmem:[%s4144 + $0xd9] sm:$0xff] %vm501, %v4130
        %4164 = vst.msk [vmem:[%s4144 + $0xe1] sm:$0xff] %vm501, %v4131
        %4165 = vst.msk [vmem:[%s4144 + $0xf1] sm:$0xff] %vm501, %v4132
        %4166 = vst.msk [vmem:[%s4144 + $0xf9] sm:$0xff] %vm501, %v4133
        %4167 = vst.msk [vmem:[%s4144 + $0x109] sm:$0xff] %vm501, %v4134
        %4168 = vst.msk [vmem:[%s4144 + $0x111] sm:$0xff] %vm501, %v4135
        %4169 = vst.msk [vmem:[%s4144 + $0x121] sm:$0xff] %vm501, %v4136
        %4170 = vst.msk [vmem:[%s4144 + $0x129] sm:$0xff] %vm501, %v4137
        %4171 = vst.msk [vmem:[%s4144 + $0x139] sm:$0xff] %vm501, %v4138
        %4172 = vst.msk [vmem:[%s4144 + $0x141] sm:$0xff] %vm501, %v4139
        %4173 = vst.msk [vmem:[%s4144 + $0x151] sm:$0xff] %vm501, %v4140
        %4174 = vst.msk [vmem:[%s4144 + $0x159] sm:$0xff] %vm501, %v4141
        %4175 = vst.msk [vmem:[%s4144 + $0x169] sm:$0xff] %vm501, %v4142
        %4176 = vst.msk [vmem:[%s4144 + $0x171] sm:$0xff] %vm501, %v4143
        %v4177 = vld [vmem:[#allocation3] sm:$0xff]
        %v4178 = vld [vmem:[#allocation3 + $0x8] sm:$0xff]
        %v4179 = vld [vmem:[#allocation3 + $0x18] sm:$0xff]
        %v4180 = vld [vmem:[#allocation3 + $0x20] sm:$0xff]
        %v4181 = vld [vmem:[#allocation3 + $0x30] sm:$0xff]
        %v4182 = vld [vmem:[#allocation3 + $0x38] sm:$0xff]
        %v4183 = vld [vmem:[#allocation3 + $0x48] sm:$0xff]
        %v4184 = vld [vmem:[#allocation3 + $0x50] sm:$0xff]
        %v4185 = vld [vmem:[#allocation3 + $0x60] sm:$0xff]
        %v4186 = vld [vmem:[#allocation3 + $0x68] sm:$0xff]
        %v4187 = vld [vmem:[#allocation3 + $0x78] sm:$0xff]
        %v4188 = vld [vmem:[#allocation3 + $0x80] sm:$0xff]
        %v4189 = vld [vmem:[#allocation3 + $0x90] sm:$0xff]
        %v4190 = vld [vmem:[#allocation3 + $0x98] sm:$0xff]
        %v4191 = vld [vmem:[#allocation3 + $0xa8] sm:$0xff]
        %v4192 = vld [vmem:[#allocation3 + $0xb0] sm:$0xff]
        %v4193 = vld [vmem:[#allocation3 + $0xc0] sm:$0xff]
        %v4194 = vld [vmem:[#allocation3 + $0xc8] sm:$0xff]
        %v4195 = vld [vmem:[#allocation3 + $0xd8] sm:$0xff]
        %v4196 = vld [vmem:[#allocation3 + $0xe0] sm:$0xff]
        %v4197 = vld [vmem:[#allocation3 + $0xf0] sm:$0xff]
        %v4198 = vld [vmem:[#allocation3 + $0xf8] sm:$0xff]
        %v4199 = vld [vmem:[#allocation3 + $0x108] sm:$0xff]
        %v4200 = vld [vmem:[#allocation3 + $0x110] sm:$0xff]
        %v4201 = vld [vmem:[#allocation3 + $0x120] sm:$0xff]
        %v4202 = vld [vmem:[#allocation3 + $0x128] sm:$0xff]
        %v4203 = vld [vmem:[#allocation3 + $0x138] sm:$0xff]
        %v4204 = vld [vmem:[#allocation3 + $0x140] sm:$0xff]
        %v4205 = vld [vmem:[#allocation3 + $0x150] sm:$0xff]
        %v4206 = vld [vmem:[#allocation3 + $0x158] sm:$0xff]
        %v4207 = vld [vmem:[#allocation3 + $0x168] sm:$0xff]
        %v4208 = vld [vmem:[#allocation3 + $0x170] sm:$0xff]
        %v4209 = vld [vmem:[#allocation13] sm:$0xff]
        %v4210 = vld [vmem:[#allocation3 + $0x1] sm:$0xff]
        %v4211 = vld [vmem:[#allocation3 + $0x9] sm:$0xff]
        %v4212 = vld [vmem:[#allocation3 + $0x19] sm:$0xff]
        %v4213 = vld [vmem:[#allocation3 + $0x21] sm:$0xff]
        %v4214 = vld [vmem:[#allocation3 + $0x31] sm:$0xff]
        %v4215 = vld [vmem:[#allocation3 + $0x39] sm:$0xff]
        %v4216 = vld [vmem:[#allocation3 + $0x49] sm:$0xff]
        %v4217 = vld [vmem:[#allocation3 + $0x51] sm:$0xff]
        %v4218 = vld [vmem:[#allocation3 + $0x61] sm:$0xff]
        %v4219 = vld [vmem:[#allocation3 + $0x69] sm:$0xff]
        %v4220 = vld [vmem:[#allocation3 + $0x79] sm:$0xff]
        %v4221 = vld [vmem:[#allocation3 + $0x81] sm:$0xff]
        %v4222 = vld [vmem:[#allocation3 + $0x91] sm:$0xff]
        %v4223 = vld [vmem:[#allocation3 + $0x99] sm:$0xff]
        %v4224 = vld [vmem:[#allocation3 + $0xa9] sm:$0xff]
        %v4225 = vld [vmem:[#allocation3 + $0xb1] sm:$0xff]
        %v4226 = vld [vmem:[#allocation3 + $0xc1] sm:$0xff]
        %v4227 = vld [vmem:[#allocation3 + $0xc9] sm:$0xff]
        %v4228 = vld [vmem:[#allocation3 + $0xd9] sm:$0xff]
        %v4229 = vld [vmem:[#allocation3 + $0xe1] sm:$0xff]
        %v4230 = vld [vmem:[#allocation3 + $0xf1] sm:$0xff]
        %v4231 = vld [vmem:[#allocation3 + $0xf9] sm:$0xff]
        %v4232 = vld [vmem:[#allocation3 + $0x109] sm:$0xff]
        %v4233 = vld [vmem:[#allocation3 + $0x111] sm:$0xff]
        %v4234 = vld [vmem:[#allocation3 + $0x121] sm:$0xff]
        %v4235 = vld [vmem:[#allocation3 + $0x129] sm:$0xff]
        %v4236 = vld [vmem:[#allocation3 + $0x139] sm:$0xff]
        %v4237 = vld [vmem:[#allocation3 + $0x141] sm:$0xff]
        %v4238 = vld [vmem:[#allocation3 + $0x151] sm:$0xff]
        %v4239 = vld [vmem:[#allocation3 + $0x159] sm:$0xff]
        %v4240 = vld [vmem:[#allocation3 + $0x169] sm:$0xff]
        %v4241 = vld [vmem:[#allocation3 + $0x171] sm:$0xff]
        %s4242 = scalar_lea.vmem [#allocation13], 8
        %v4243 = vld [vmem:[%s4242] sm:$0xff]
        %v4245 = vsel %vm501, %v4210, 0
        %v4248 = vsel %vm501, %v4211, 0
        %v4251 = vsel %vm501, %v4212, 0
        %v4254 = vsel %vm501, %v4213, 0
        %v4257 = vsel %vm501, %v4214, 0
        %v4260 = vsel %vm501, %v4215, 0
        %v4263 = vsel %vm501, %v4216, 0
        %v4266 = vsel %vm501, %v4217, 0
        %v4269 = vsel %vm501, %v4218, 0
        %v4272 = vsel %vm501, %v4219, 0
        %v4275 = vsel %vm501, %v4220, 0
        %v4278 = vsel %vm501, %v4221, 0
        %v4281 = vsel %vm501, %v4222, 0
        %v4284 = vsel %vm501, %v4223, 0
        %v4287 = vsel %vm501, %v4224, 0
        %v4290 = vsel %vm501, %v4225, 0
        %v4293 = vsel %vm501, %v4226, 0
        %v4296 = vsel %vm501, %v4227, 0
        %v4299 = vsel %vm501, %v4228, 0
        %v4302 = vsel %vm501, %v4229, 0
        %v4305 = vsel %vm501, %v4230, 0
        %v4308 = vsel %vm501, %v4231, 0
        %v4311 = vsel %vm501, %v4232, 0
        %v4314 = vsel %vm501, %v4233, 0
        %v4317 = vsel %vm501, %v4234, 0
        %v4320 = vsel %vm501, %v4235, 0
        %v4323 = vsel %vm501, %v4236, 0
        %v4326 = vsel %vm501, %v4237, 0
        %v4329 = vsel %vm501, %v4238, 0
        %v4332 = vsel %vm501, %v4239, 0
        %v4335 = vsel %vm501, %v4240, 0
        %v4338 = vsel %vm501, %v4241, 0
        %4340 = vmatprep.subr.mxu0 0.0
        %4341 = vmatpush1.msra.mxu0 %v4243
        %4342 = vmatprep.subr.mxu0 0.0
        %4343 = vmatpush1.msra.mxu0 0.0
        %4344 = vmatprep.subr.mxu0 0.0
        %4345 = vmatpush1.msra.mxu0 0.0
        %4346 = vmatprep.subr.mxu0 0.0
        %4347 = vmatpush1.msra.mxu0 0.0
        %4348 = vmatprep.subr.mxu0 0.0
        %4349 = vmatpush1.msra.mxu0 0.0
        %4350 = vmatprep.subr.mxu0 0.0
        %4351 = vmatpush1.msra.mxu0 0.0
        %4352 = vmatprep.subr.mxu0 0.0
        %4353 = vmatpush1.msra.mxu0 0.0
        %4354 = vmatprep.subr.mxu0 0.0
        %4355 = vmatpush1.msra.mxu0 0.0
        %4356 = vmatprep.subr.mxu0 0.0
        %4357 = vmatpush1.msra.mxu0 0.0
        %4358 = vmatprep.subr.mxu0 0.0
        %4359 = vmatpush1.msra.mxu0 0.0
        %4360 = vmatprep.subr.mxu0 0.0
        %4361 = vmatpush1.msra.mxu0 0.0
        %4362 = vmatprep.subr.mxu0 0.0
        %4363 = vmatpush1.msra.mxu0 0.0
        %4364 = vmatprep.subr.mxu0 0.0
        %4365 = vmatpush1.msra.mxu0 0.0
        %4366 = vmatprep.subr.mxu0 0.0
        %4367 = vmatpush1.msra.mxu0 0.0
        %4368 = vmatprep.subr.mxu0 0.0
        %4369 = vmatpush1.msra.mxu0 0.0
        %4370 = vmatprep.subr.mxu0 0.0
        %4371 = vmatpush1.msra.mxu0 0.0
        %4372 = vmatprep.subr.mxu0 0.0
        %4373 = vmatpush1.msra.mxu0 0.0
        %4374 = vmatprep.subr.mxu0 0.0
        %4375 = vmatpush1.msra.mxu0 0.0
        %4376 = vmatprep.subr.mxu0 0.0
        %4377 = vmatpush1.msra.mxu0 0.0
        %4378 = vmatprep.subr.mxu0 0.0
        %4379 = vmatpush1.msra.mxu0 0.0
        %4380 = vmatprep.subr.mxu0 0.0
        %4381 = vmatpush1.msra.mxu0 0.0
        %4382 = vmatprep.subr.mxu0 0.0
        %4383 = vmatpush1.msra.mxu0 0.0
        %4384 = vmatprep.subr.mxu0 0.0
        %4385 = vmatpush1.msra.mxu0 0.0
        %4386 = vmatprep.subr.mxu0 0.0
        %4387 = vmatpush1.msra.mxu0 0.0
        %4388 = vmatprep.subr.mxu0 0.0
        %4389 = vmatpush1.msra.mxu0 0.0
        %4390 = vmatprep.subr.mxu0 0.0
        %4391 = vmatpush1.msra.mxu0 0.0
        %4392 = vmatprep.subr.mxu0 0.0
        %4393 = vmatpush1.msra.mxu0 0.0
        %4394 = vmatprep.subr.mxu0 0.0
        %4395 = vmatpush1.msra.mxu0 0.0
        %4396 = vmatprep.subr.mxu0 0.0
        %4397 = vmatpush1.msra.mxu0 0.0
        %4398 = vmatprep.subr.mxu0 0.0
        %4399 = vmatpush1.msra.mxu0 0.0
        %4400 = vmatprep.subr.mxu0 0.0
        %4401 = vmatpush1.msra.mxu0 0.0
        %4402 = vmatprep.subr.mxu0 0.0
        %4403 = vmatpush1.msra.mxu0 0.0
        %4404 = vmatprep.mubr.f32.mxu0 0.0
        %4405 = vmatmul.mubr.f32.gmra.mrb[0].mxu0 %v4245
        %v4406 = vpop.f32.mrb[0].mxu0
        %v4407 = vadd.f32 0.0, %v4406
        %v4408 = vpop.f32.mrb[0].mxu0
        %4409 = vmatprep.mubr.f32.mxu0 0.0
        %4410 = vmatmul.mubr.f32.gmra.mrb[0].mxu0 %v4248
        %v4411 = vpop.f32.mrb[0].mxu0
        %v4412 = vadd.f32 0.0, %v4411
        %v4413 = vpop.f32.mrb[0].mxu0
        %4414 = vmatprep.mubr.f32.mxu0 0.0
        %4415 = vmatmul.mubr.f32.gmra.mrb[0].mxu0 %v4251
        %v4416 = vpop.f32.mrb[0].mxu0
        %v4417 = vadd.f32 0.0, %v4416
        %v4418 = vpop.f32.mrb[0].mxu0
        %4419 = vmatprep.mubr.f32.mxu0 0.0
        %4420 = vmatmul.mubr.f32.gmra.mrb[0].mxu0 %v4254
        %v4421 = vpop.f32.mrb[0].mxu0
        %v4422 = vadd.f32 0.0, %v4421
        %v4423 = vpop.f32.mrb[0].mxu0
        %4424 = vmatprep.mubr.f32.mxu0 0.0
        %4425 = vmatmul.mubr.f32.gmra.mrb[0].mxu0 %v4257
        %v4426 = vpop.f32.mrb[0].mxu0
        %v4427 = vadd.f32 0.0, %v4426
        %v4428 = vpop.f32.mrb[0].mxu0
        %4429 = vmatprep.mubr.f32.mxu0 0.0
        %4430 = vmatmul.mubr.f32.gmra.mrb[0].mxu0 %v4260
        %v4431 = vpop.f32.mrb[0].mxu0
        %v4432 = vadd.f32 0.0, %v4431
        %v4433 = vpop.f32.mrb[0].mxu0
        %4434 = vmatprep.mubr.f32.mxu0 0.0
        %4435 = vmatmul.mubr.f32.gmra.mrb[0].mxu0 %v4263
        %v4436 = vpop.f32.mrb[0].mxu0
        %v4437 = vadd.f32 0.0, %v4436
        %v4438 = vpop.f32.mrb[0].mxu0
        %4439 = vmatprep.mubr.f32.mxu0 0.0
        %4440 = vmatmul.mubr.f32.gmra.mrb[0].mxu0 %v4266
        %v4441 = vpop.f32.mrb[0].mxu0
        %v4442 = vadd.f32 0.0, %v4441
        %v4443 = vpop.f32.mrb[0].mxu0
        %4444 = vmatprep.mubr.f32.mxu0 0.0
        %4445 = vmatmul.mubr.f32.gmra.mrb[0].mxu0 %v4269
        %v4446 = vpop.f32.mrb[0].mxu0
        %v4447 = vadd.f32 0.0, %v4446
        %v4448 = vpop.f32.mrb[0].mxu0
        %4449 = vmatprep.mubr.f32.mxu0 0.0
        %4450 = vmatmul.mubr.f32.gmra.mrb[0].mxu0 %v4272
        %v4451 = vpop.f32.mrb[0].mxu0
        %v4452 = vadd.f32 0.0, %v4451
        %v4453 = vpop.f32.mrb[0].mxu0
        %4454 = vmatprep.mubr.f32.mxu0 0.0
        %4455 = vmatmul.mubr.f32.gmra.mrb[0].mxu0 %v4275
        %v4456 = vpop.f32.mrb[0].mxu0
        %v4457 = vadd.f32 0.0, %v4456
        %v4458 = vpop.f32.mrb[0].mxu0
        %4459 = vmatprep.mubr.f32.mxu0 0.0
        %4460 = vmatmul.mubr.f32.gmra.mrb[0].mxu0 %v4278
        %v4461 = vpop.f32.mrb[0].mxu0
        %v4462 = vadd.f32 0.0, %v4461
        %v4463 = vpop.f32.mrb[0].mxu0
        %4464 = vmatprep.mubr.f32.mxu0 0.0
        %4465 = vmatmul.mubr.f32.gmra.mrb[0].mxu0 %v4281
        %v4466 = vpop.f32.mrb[0].mxu0
        %v4467 = vadd.f32 0.0, %v4466
        %v4468 = vpop.f32.mrb[0].mxu0
        %4469 = vmatprep.mubr.f32.mxu0 0.0
        %4470 = vmatmul.mubr.f32.gmra.mrb[0].mxu0 %v4284
        %v4471 = vpop.f32.mrb[0].mxu0
        %v4472 = vadd.f32 0.0, %v4471
        %v4473 = vpop.f32.mrb[0].mxu0
        %4474 = vmatprep.mubr.f32.mxu0 0.0
        %4475 = vmatmul.mubr.f32.gmra.mrb[0].mxu0 %v4287
        %v4476 = vpop.f32.mrb[0].mxu0
        %v4477 = vadd.f32 0.0, %v4476
        %v4478 = vpop.f32.mrb[0].mxu0
        %4479 = vmatprep.mubr.f32.mxu0 0.0
        %4480 = vmatmul.mubr.f32.gmra.mrb[0].mxu0 %v4290
        %v4481 = vpop.f32.mrb[0].mxu0
        %v4482 = vadd.f32 0.0, %v4481
        %v4483 = vpop.f32.mrb[0].mxu0
        %4484 = vmatprep.mubr.f32.mxu0 0.0
        %4485 = vmatmul.mubr.f32.gmra.mrb[0].mxu0 %v4293
        %v4486 = vpop.f32.mrb[0].mxu0
        %v4487 = vadd.f32 0.0, %v4486
        %v4488 = vpop.f32.mrb[0].mxu0
        %4489 = vmatprep.mubr.f32.mxu0 0.0
        %4490 = vmatmul.mubr.f32.gmra.mrb[0].mxu0 %v4296
        %v4491 = vpop.f32.mrb[0].mxu0
        %v4492 = vadd.f32 0.0, %v4491
        %v4493 = vpop.f32.mrb[0].mxu0
        %4494 = vmatprep.mubr.f32.mxu0 0.0
        %4495 = vmatmul.mubr.f32.gmra.mrb[0].mxu0 %v4299
        %v4496 = vpop.f32.mrb[0].mxu0
        %v4497 = vadd.f32 0.0, %v4496
        %v4498 = vpop.f32.mrb[0].mxu0
        %4499 = vmatprep.mubr.f32.mxu0 0.0
        %4500 = vmatmul.mubr.f32.gmra.mrb[0].mxu0 %v4302
        %v4501 = vpop.f32.mrb[0].mxu0
        %v4502 = vadd.f32 0.0, %v4501
        %v4503 = vpop.f32.mrb[0].mxu0
        %4504 = vmatprep.mubr.f32.mxu0 0.0
        %4505 = vmatmul.mubr.f32.gmra.mrb[0].mxu0 %v4305
        %v4506 = vpop.f32.mrb[0].mxu0
        %v4507 = vadd.f32 0.0, %v4506
        %v4508 = vpop.f32.mrb[0].mxu0
        %4509 = vmatprep.mubr.f32.mxu0 0.0
        %4510 = vmatmul.mubr.f32.gmra.mrb[0].mxu0 %v4308
        %v4511 = vpop.f32.mrb[0].mxu0
        %v4512 = vadd.f32 0.0, %v4511
        %v4513 = vpop.f32.mrb[0].mxu0
        %4514 = vmatprep.mubr.f32.mxu0 0.0
        %4515 = vmatmul.mubr.f32.gmra.mrb[0].mxu0 %v4311
        %v4516 = vpop.f32.mrb[0].mxu0
        %v4517 = vadd.f32 0.0, %v4516
        %v4518 = vpop.f32.mrb[0].mxu0
        %4519 = vmatprep.mubr.f32.mxu0 0.0
        %4520 = vmatmul.mubr.f32.gmra.mrb[0].mxu0 %v4314
        %v4521 = vpop.f32.mrb[0].mxu0
        %v4522 = vadd.f32 0.0, %v4521
        %v4523 = vpop.f32.mrb[0].mxu0
        %4524 = vmatprep.mubr.f32.mxu0 0.0
        %4525 = vmatmul.mubr.f32.gmra.mrb[0].mxu0 %v4317
        %v4526 = vpop.f32.mrb[0].mxu0
        %v4527 = vadd.f32 0.0, %v4526
        %v4528 = vpop.f32.mrb[0].mxu0
        %4529 = vmatprep.mubr.f32.mxu0 0.0
        %4530 = vmatmul.mubr.f32.gmra.mrb[0].mxu0 %v4320
        %v4531 = vpop.f32.mrb[0].mxu0
        %v4532 = vadd.f32 0.0, %v4531
        %v4533 = vpop.f32.mrb[0].mxu0
        %4534 = vmatprep.mubr.f32.mxu0 0.0
        %4535 = vmatmul.mubr.f32.gmra.mrb[0].mxu0 %v4323
        %v4536 = vpop.f32.mrb[0].mxu0
        %v4537 = vadd.f32 0.0, %v4536
        %v4538 = vpop.f32.mrb[0].mxu0
        %4539 = vmatprep.mubr.f32.mxu0 0.0
        %4540 = vmatmul.mubr.f32.gmra.mrb[0].mxu0 %v4326
        %v4541 = vpop.f32.mrb[0].mxu0
        %v4542 = vadd.f32 0.0, %v4541
        %v4543 = vpop.f32.mrb[0].mxu0
        %4544 = vmatprep.mubr.f32.mxu0 0.0
        %4545 = vmatmul.mubr.f32.gmra.mrb[0].mxu0 %v4329
        %v4546 = vpop.f32.mrb[0].mxu0
        %v4547 = vadd.f32 0.0, %v4546
        %v4548 = vpop.f32.mrb[0].mxu0
        %4549 = vmatprep.mubr.f32.mxu0 0.0
        %4550 = vmatmul.mubr.f32.gmra.mrb[0].mxu0 %v4332
        %v4551 = vpop.f32.mrb[0].mxu0
        %v4552 = vadd.f32 0.0, %v4551
        %v4553 = vpop.f32.mrb[0].mxu0
        %4554 = vmatprep.mubr.f32.mxu0 0.0
        %4555 = vmatmul.mubr.f32.gmra.mrb[0].mxu0 %v4335
        %v4556 = vpop.f32.mrb[0].mxu0
        %v4557 = vadd.f32 0.0, %v4556
        %v4558 = vpop.f32.mrb[0].mxu0
        %4559 = vmatprep.mubr.f32.mxu0 0.0
        %4560 = vmatmul.mubr.f32.gmra.mrb[0].mxu0 %v4338
        %v4561 = vpop.f32.mrb[0].mxu0
        %v4562 = vadd.f32 0.0, %v4561
        %v4563 = vpop.f32.mrb[0].mxu0
        %4564 = vdwg.mxu0
        %v4565 = vld [vmem:[#allocation3 + $0x2] sm:$0xff]
        %v4566 = vld [vmem:[#allocation3 + $0xa] sm:$0xff]
        %v4567 = vld [vmem:[#allocation3 + $0x1a] sm:$0xff]
        %v4568 = vld [vmem:[#allocation3 + $0x22] sm:$0xff]
        %v4569 = vld [vmem:[#allocation3 + $0x32] sm:$0xff]
        %v4570 = vld [vmem:[#allocation3 + $0x3a] sm:$0xff]
        %v4571 = vld [vmem:[#allocation3 + $0x4a] sm:$0xff]
        %v4572 = vld [vmem:[#allocation3 + $0x52] sm:$0xff]
        %v4573 = vld [vmem:[#allocation3 + $0x62] sm:$0xff]
        %v4574 = vld [vmem:[#allocation3 + $0x6a] sm:$0xff]
        %v4575 = vld [vmem:[#allocation3 + $0x7a] sm:$0xff]
        %v4576 = vld [vmem:[#allocation3 + $0x82] sm:$0xff]
        %v4577 = vld [vmem:[#allocation3 + $0x92] sm:$0xff]
        %v4578 = vld [vmem:[#allocation3 + $0x9a] sm:$0xff]
        %v4579 = vld [vmem:[#allocation3 + $0xaa] sm:$0xff]
        %v4580 = vld [vmem:[#allocation3 + $0xb2] sm:$0xff]
        %v4581 = vld [vmem:[#allocation3 + $0xc2] sm:$0xff]
        %v4582 = vld [vmem:[#allocation3 + $0xca] sm:$0xff]
        %v4583 = vld [vmem:[#allocation3 + $0xda] sm:$0xff]
        %v4584 = vld [vmem:[#allocation3 + $0xe2] sm:$0xff]
        %v4585 = vld [vmem:[#allocation3 + $0xf2] sm:$0xff]
        %v4586 = vld [vmem:[#allocation3 + $0xfa] sm:$0xff]
        %v4587 = vld [vmem:[#allocation3 + $0x10a] sm:$0xff]
        %v4588 = vld [vmem:[#allocation3 + $0x112] sm:$0xff]
        %v4589 = vld [vmem:[#allocation3 + $0x122] sm:$0xff]
        %v4590 = vld [vmem:[#allocation3 + $0x12a] sm:$0xff]
        %v4591 = vld [vmem:[#allocation3 + $0x13a] sm:$0xff]
        %v4592 = vld [vmem:[#allocation3 + $0x142] sm:$0xff]
        %v4593 = vld [vmem:[#allocation3 + $0x152] sm:$0xff]
        %v4594 = vld [vmem:[#allocation3 + $0x15a] sm:$0xff]
        %v4595 = vld [vmem:[#allocation3 + $0x16a] sm:$0xff]
        %v4596 = vld [vmem:[#allocation3 + $0x172] sm:$0xff]
        %s4597 = scalar_lea.vmem [#allocation13], 16
        %v4598 = vld [vmem:[%s4597] sm:$0xff]
        %v4599 = vld [vmem:[%s4144] sm:$0xff]
        %v4600 = vld [vmem:[%s4144 + $0x8] sm:$0xff]
        %v4601 = vld [vmem:[%s4144 + $0x18] sm:$0xff]
        %v4602 = vld [vmem:[%s4144 + $0x20] sm:$0xff]
        %v4603 = vld [vmem:[%s4144 + $0x30] sm:$0xff]
        %v4604 = vld [vmem:[%s4144 + $0x38] sm:$0xff]
        %v4605 = vld [vmem:[%s4144 + $0x48] sm:$0xff]
        %v4606 = vld [vmem:[%s4144 + $0x50] sm:$0xff]
        %v4607 = vld [vmem:[%s4144 + $0x60] sm:$0xff]
        %v4608 = vld [vmem:[%s4144 + $0x68] sm:$0xff]
        %v4609 = vld [vmem:[%s4144 + $0x78] sm:$0xff]
        %v4610 = vld [vmem:[%s4144 + $0x80] sm:$0xff]
        %v4611 = vld [vmem:[%s4144 + $0x90] sm:$0xff]
        %v4612 = vld [vmem:[%s4144 + $0x98] sm:$0xff]
        %v4613 = vld [vmem:[%s4144 + $0xa8] sm:$0xff]
        %v4614 = vld [vmem:[%s4144 + $0xb0] sm:$0xff]
        %v4615 = vld [vmem:[%s4144 + $0xc0] sm:$0xff]
        %v4616 = vld [vmem:[%s4144 + $0xc8] sm:$0xff]
        %v4617 = vld [vmem:[%s4144 + $0xd8] sm:$0xff]
        %v4618 = vld [vmem:[%s4144 + $0xe0] sm:$0xff]
        %v4619 = vld [vmem:[%s4144 + $0xf0] sm:$0xff]
        %v4620 = vld [vmem:[%s4144 + $0xf8] sm:$0xff]
        %v4621 = vld [vmem:[%s4144 + $0x108] sm:$0xff]
        %v4622 = vld [vmem:[%s4144 + $0x110] sm:$0xff]
        %v4623 = vld [vmem:[%s4144 + $0x120] sm:$0xff]
        %v4624 = vld [vmem:[%s4144 + $0x128] sm:$0xff]
        %v4625 = vld [vmem:[%s4144 + $0x138] sm:$0xff]
        %v4626 = vld [vmem:[%s4144 + $0x140] sm:$0xff]
        %v4627 = vld [vmem:[%s4144 + $0x150] sm:$0xff]
        %v4628 = vld [vmem:[%s4144 + $0x158] sm:$0xff]
        %v4629 = vld [vmem:[%s4144 + $0x168] sm:$0xff]
        %v4630 = vld [vmem:[%s4144 + $0x170] sm:$0xff]
        %s4631 = scalar_lea.vmem [#allocation13], 24
        %v4632 = vld [vmem:[%s4631] sm:$0xff]
        %v4634 = vsel %vm501, %v4599, 0
        %v4637 = vsel %vm501, %v4600, 0
        %v4640 = vsel %vm501, %v4601, 0
        %v4643 = vsel %vm501, %v4602, 0
        %v4646 = vsel %vm501, %v4603, 0
        %v4649 = vsel %vm501, %v4604, 0
        %v4652 = vsel %vm501, %v4605, 0
        %v4655 = vsel %vm501, %v4606, 0
        %v4658 = vsel %vm501, %v4607, 0
        %v4661 = vsel %vm501, %v4608, 0
        %v4664 = vsel %vm501, %v4609, 0
        %v4667 = vsel %vm501, %v4610, 0
        %v4670 = vsel %vm501, %v4611, 0
        %v4673 = vsel %vm501, %v4612, 0
        %v4676 = vsel %vm501, %v4613, 0
        %v4679 = vsel %vm501, %v4614, 0
        %v4682 = vsel %vm501, %v4615, 0
        %v4685 = vsel %vm501, %v4616, 0
        %v4688 = vsel %vm501, %v4617, 0
        %v4691 = vsel %vm501, %v4618, 0
        %v4694 = vsel %vm501, %v4619, 0
        %v4697 = vsel %vm501, %v4620, 0
        %v4700 = vsel %vm501, %v4621, 0
        %v4703 = vsel %vm501, %v4622, 0
        %v4706 = vsel %vm501, %v4623, 0
        %v4709 = vsel %vm501, %v4624, 0
        %v4712 = vsel %vm501, %v4625, 0
        %v4715 = vsel %vm501, %v4626, 0
        %v4718 = vsel %vm501, %v4627, 0
        %v4721 = vsel %vm501, %v4628, 0
        %v4724 = vsel %vm501, %v4629, 0
        %v4727 = vsel %vm501, %v4630, 0
        %4729 = vmatprep.subr.mxu0 0.0
        %4730 = vmatpush1.msra.mxu0 %v4632
        %4731 = vmatprep.subr.mxu0 0.0
        %4732 = vmatpush1.msra.mxu0 0.0
        %4733 = vmatprep.subr.mxu0 0.0
        %4734 = vmatpush1.msra.mxu0 0.0
        %4735 = vmatprep.subr.mxu0 0.0
        %4736 = vmatpush1.msra.mxu0 0.0
        %4737 = vmatprep.subr.mxu0 0.0
        %4738 = vmatpush1.msra.mxu0 0.0
        %4739 = vmatprep.subr.mxu0 0.0
        %4740 = vmatpush1.msra.mxu0 0.0
        %4741 = vmatprep.subr.mxu0 0.0
        %4742 = vmatpush1.msra.mxu0 0.0
        %4743 = vmatprep.subr.mxu0 0.0
        %4744 = vmatpush1.msra.mxu0 0.0
        %4745 = vmatprep.subr.mxu0 0.0
        %4746 = vmatpush1.msra.mxu0 0.0
        %4747 = vmatprep.subr.mxu0 0.0
        %4748 = vmatpush1.msra.mxu0 0.0
        %4749 = vmatprep.subr.mxu0 0.0
        %4750 = vmatpush1.msra.mxu0 0.0
        %4751 = vmatprep.subr.mxu0 0.0
        %4752 = vmatpush1.msra.mxu0 0.0
        %4753 = vmatprep.subr.mxu0 0.0
        %4754 = vmatpush1.msra.mxu0 0.0
        %4755 = vmatprep.subr.mxu0 0.0
        %4756 = vmatpush1.msra.mxu0 0.0
        %4757 = vmatprep.subr.mxu0 0.0
        %4758 = vmatpush1.msra.mxu0 0.0
        %4759 = vmatprep.subr.mxu0 0.0
        %4760 = vmatpush1.msra.mxu0 0.0
        %4761 = vmatprep.subr.mxu0 0.0
        %4762 = vmatpush1.msra.mxu0 0.0
        %4763 = vmatprep.subr.mxu0 0.0
        %4764 = vmatpush1.msra.mxu0 0.0
        %4765 = vmatprep.subr.mxu0 0.0
        %4766 = vmatpush1.msra.mxu0 0.0
        %4767 = vmatprep.subr.mxu0 0.0
        %4768 = vmatpush1.msra.mxu0 0.0
        %4769 = vmatprep.subr.mxu0 0.0
        %4770 = vmatpush1.msra.mxu0 0.0
        %4771 = vmatprep.subr.mxu0 0.0
        %4772 = vmatpush1.msra.mxu0 0.0
        %4773 = vmatprep.subr.mxu0 0.0
        %4774 = vmatpush1.msra.mxu0 0.0
        %4775 = vmatprep.subr.mxu0 0.0
        %4776 = vmatpush1.msra.mxu0 0.0
        %4777 = vmatprep.subr.mxu0 0.0
        %4778 = vmatpush1.msra.mxu0 0.0
        %4779 = vmatprep.subr.mxu0 0.0
        %4780 = vmatpush1.msra.mxu0 0.0
        %4781 = vmatprep.subr.mxu0 0.0
        %4782 = vmatpush1.msra.mxu0 0.0
        %4783 = vmatprep.subr.mxu0 0.0
        %4784 = vmatpush1.msra.mxu0 0.0
        %4785 = vmatprep.subr.mxu0 0.0
        %4786 = vmatpush1.msra.mxu0 0.0
        %4787 = vmatprep.subr.mxu0 0.0
        %4788 = vmatpush1.msra.mxu0 0.0
        %4789 = vmatprep.subr.mxu0 0.0
        %4790 = vmatpush1.msra.mxu0 0.0
        %4791 = vmatprep.subr.mxu0 0.0
        %4792 = vmatpush1.msra.mxu0 0.0
        %4793 = vmatprep.mubr.f32.mxu0 0.0
        %4794 = vmatmul.mubr.f32.gmra.mrb[0].mxu0 %v4634
        %v4795 = vpop.f32.mrb[0].mxu0
        %v4796 = vadd.f32 0.0, %v4795
        %v4797 = vpop.f32.mrb[0].mxu0
        %4798 = vmatprep.mubr.f32.mxu0 0.0
        %4799 = vmatmul.mubr.f32.gmra.mrb[0].mxu0 %v4637
        %v4800 = vpop.f32.mrb[0].mxu0
        %v4801 = vadd.f32 0.0, %v4800
        %v4802 = vpop.f32.mrb[0].mxu0
        %4803 = vmatprep.mubr.f32.mxu0 0.0
        %4804 = vmatmul.mubr.f32.gmra.mrb[0].mxu0 %v4640
        %v4805 = vpop.f32.mrb[0].mxu0
        %v4806 = vadd.f32 0.0, %v4805
        %v4807 = vpop.f32.mrb[0].mxu0
        %4808 = vmatprep.mubr.f32.mxu0 0.0
        %4809 = vmatmul.mubr.f32.gmra.mrb[0].mxu0 %v4643
        %v4810 = vpop.f32.mrb[0].mxu0
        %v4811 = vadd.f32 0.0, %v4810
        %v4812 = vpop.f32.mrb[0].mxu0
        %4813 = vmatprep.mubr.f32.mxu0 0.0
        %4814 = vmatmul.mubr.f32.gmra.mrb[0].mxu0 %v4646
        %v4815 = vpop.f32.mrb[0].mxu0
        %v4816 = vadd.f32 0.0, %v4815
        %v4817 = vpop.f32.mrb[0].mxu0
        %4818 = vmatprep.mubr.f32.mxu0 0.0
        %4819 = vmatmul.mubr.f32.gmra.mrb[0].mxu0 %v4649
        %v4820 = vpop.f32.mrb[0].mxu0
        %v4821 = vadd.f32 0.0, %v4820
        %v4822 = vpop.f32.mrb[0].mxu0
        %4823 = vmatprep.mubr.f32.mxu0 0.0
        %4824 = vmatmul.mubr.f32.gmra.mrb[0].mxu0 %v4652
        %v4825 = vpop.f32.mrb[0].mxu0
        %v4826 = vadd.f32 0.0, %v4825
        %v4827 = vpop.f32.mrb[0].mxu0
        %4828 = vmatprep.mubr.f32.mxu0 0.0
        %4829 = vmatmul.mubr.f32.gmra.mrb[0].mxu0 %v4655
        %v4830 = vpop.f32.mrb[0].mxu0
        %v4831 = vadd.f32 0.0, %v4830
        %v4832 = vpop.f32.mrb[0].mxu0
        %4833 = vmatprep.mubr.f32.mxu0 0.0
        %4834 = vmatmul.mubr.f32.gmra.mrb[0].mxu0 %v4658
        %v4835 = vpop.f32.mrb[0].mxu0
        %v4836 = vadd.f32 0.0, %v4835
        %v4837 = vpop.f32.mrb[0].mxu0
        %4838 = vmatprep.mubr.f32.mxu0 0.0
        %4839 = vmatmul.mubr.f32.gmra.mrb[0].mxu0 %v4661
        %v4840 = vpop.f32.mrb[0].mxu0
        %v4841 = vadd.f32 0.0, %v4840
        %v4842 = vpop.f32.mrb[0].mxu0
        %4843 = vmatprep.mubr.f32.mxu0 0.0
        %4844 = vmatmul.mubr.f32.gmra.mrb[0].mxu0 %v4664
        %v4845 = vpop.f32.mrb[0].mxu0
        %v4846 = vadd.f32 0.0, %v4845
        %v4847 = vpop.f32.mrb[0].mxu0
        %4848 = vmatprep.mubr.f32.mxu0 0.0
        %4849 = vmatmul.mubr.f32.gmra.mrb[0].mxu0 %v4667
        %v4850 = vpop.f32.mrb[0].mxu0
        %v4851 = vadd.f32 0.0, %v4850
        %v4852 = vpop.f32.mrb[0].mxu0
        %4853 = vmatprep.mubr.f32.mxu0 0.0
        %4854 = vmatmul.mubr.f32.gmra.mrb[0].mxu0 %v4670
        %v4855 = vpop.f32.mrb[0].mxu0
        %v4856 = vadd.f32 0.0, %v4855
        %v4857 = vpop.f32.mrb[0].mxu0
        %4858 = vmatprep.mubr.f32.mxu0 0.0
        %4859 = vmatmul.mubr.f32.gmra.mrb[0].mxu0 %v4673
        %v4860 = vpop.f32.mrb[0].mxu0
        %v4861 = vadd.f32 0.0, %v4860
        %v4862 = vpop.f32.mrb[0].mxu0
        %4863 = vmatprep.mubr.f32.mxu0 0.0
        %4864 = vmatmul.mubr.f32.gmra.mrb[0].mxu0 %v4676
        %v4865 = vpop.f32.mrb[0].mxu0
        %v4866 = vadd.f32 0.0, %v4865
        %v4867 = vpop.f32.mrb[0].mxu0
        %4868 = vmatprep.mubr.f32.mxu0 0.0
        %4869 = vmatmul.mubr.f32.gmra.mrb[0].mxu0 %v4679
        %v4870 = vpop.f32.mrb[0].mxu0
        %v4871 = vadd.f32 0.0, %v4870
        %v4872 = vpop.f32.mrb[0].mxu0
        %4873 = vmatprep.mubr.f32.mxu0 0.0
        %4874 = vmatmul.mubr.f32.gmra.mrb[0].mxu0 %v4682
        %v4875 = vpop.f32.mrb[0].mxu0
        %v4876 = vadd.f32 0.0, %v4875
        %v4877 = vpop.f32.mrb[0].mxu0
        %4878 = vmatprep.mubr.f32.mxu0 0.0
        %4879 = vmatmul.mubr.f32.gmra.mrb[0].mxu0 %v4685
        %v4880 = vpop.f32.mrb[0].mxu0
        %v4881 = vadd.f32 0.0, %v4880
        %v4882 = vpop.f32.mrb[0].mxu0
        %4883 = vmatprep.mubr.f32.mxu0 0.0
        %4884 = vmatmul.mubr.f32.gmra.mrb[0].mxu0 %v4688
        %v4885 = vpop.f32.mrb[0].mxu0
        %v4886 = vadd.f32 0.0, %v4885
        %v4887 = vpop.f32.mrb[0].mxu0
        %4888 = vmatprep.mubr.f32.mxu0 0.0
        %4889 = vmatmul.mubr.f32.gmra.mrb[0].mxu0 %v4691
        %v4890 = vpop.f32.mrb[0].mxu0
        %v4891 = vadd.f32 0.0, %v4890
        %v4892 = vpop.f32.mrb[0].mxu0
        %4893 = vmatprep.mubr.f32.mxu0 0.0
        %4894 = vmatmul.mubr.f32.gmra.mrb[0].mxu0 %v4694
        %v4895 = vpop.f32.mrb[0].mxu0
        %v4896 = vadd.f32 0.0, %v4895
        %v4897 = vpop.f32.mrb[0].mxu0
        %4898 = vmatprep.mubr.f32.mxu0 0.0
        %4899 = vmatmul.mubr.f32.gmra.mrb[0].mxu0 %v4697
        %v4900 = vpop.f32.mrb[0].mxu0
        %v4901 = vadd.f32 0.0, %v4900
        %v4902 = vpop.f32.mrb[0].mxu0
        %4903 = vmatprep.mubr.f32.mxu0 0.0
        %4904 = vmatmul.mubr.f32.gmra.mrb[0].mxu0 %v4700
        %v4905 = vpop.f32.mrb[0].mxu0
        %v4906 = vadd.f32 0.0, %v4905
        %v4907 = vpop.f32.mrb[0].mxu0
        %4908 = vmatprep.mubr.f32.mxu0 0.0
        %4909 = vmatmul.mubr.f32.gmra.mrb[0].mxu0 %v4703
        %v4910 = vpop.f32.mrb[0].mxu0
        %v4911 = vadd.f32 0.0, %v4910
        %v4912 = vpop.f32.mrb[0].mxu0
        %4913 = vmatprep.mubr.f32.mxu0 0.0
        %4914 = vmatmul.mubr.f32.gmra.mrb[0].mxu0 %v4706
        %v4915 = vpop.f32.mrb[0].mxu0
        %v4916 = vadd.f32 0.0, %v4915
        %v4917 = vpop.f32.mrb[0].mxu0
        %4918 = vmatprep.mubr.f32.mxu0 0.0
        %4919 = vmatmul.mubr.f32.gmra.mrb[0].mxu0 %v4709
        %v4920 = vpop.f32.mrb[0].mxu0
        %v4921 = vadd.f32 0.0, %v4920
        %v4922 = vpop.f32.mrb[0].mxu0
        %4923 = vmatprep.mubr.f32.mxu0 0.0
        %4924 = vmatmul.mubr.f32.gmra.mrb[0].mxu0 %v4712
        %v4925 = vpop.f32.mrb[0].mxu0
        %v4926 = vadd.f32 0.0, %v4925
        %v4927 = vpop.f32.mrb[0].mxu0
        %4928 = vmatprep.mubr.f32.mxu0 0.0
        %4929 = vmatmul.mubr.f32.gmra.mrb[0].mxu0 %v4715
        %v4930 = vpop.f32.mrb[0].mxu0
        %v4931 = vadd.f32 0.0, %v4930
        %v4932 = vpop.f32.mrb[0].mxu0
        %4933 = vmatprep.mubr.f32.mxu0 0.0
        %4934 = vmatmul.mubr.f32.gmra.mrb[0].mxu0 %v4718
        %v4935 = vpop.f32.mrb[0].mxu0
        %v4936 = vadd.f32 0.0, %v4935
        %v4937 = vpop.f32.mrb[0].mxu0
        %4938 = vmatprep.mubr.f32.mxu0 0.0
        %4939 = vmatmul.mubr.f32.gmra.mrb[0].mxu0 %v4721
        %v4940 = vpop.f32.mrb[0].mxu0
        %v4941 = vadd.f32 0.0, %v4940
        %v4942 = vpop.f32.mrb[0].mxu0
        %4943 = vmatprep.mubr.f32.mxu0 0.0
        %4944 = vmatmul.mubr.f32.gmra.mrb[0].mxu0 %v4724
        %v4945 = vpop.f32.mrb[0].mxu0
        %v4946 = vadd.f32 0.0, %v4945
        %v4947 = vpop.f32.mrb[0].mxu0
        %4948 = vmatprep.mubr.f32.mxu0 0.0
        %4949 = vmatmul.mubr.f32.gmra.mrb[0].mxu0 %v4727
        %v4950 = vpop.f32.mrb[0].mxu0
        %v4951 = vadd.f32 0.0, %v4950
        %v4952 = vpop.f32.mrb[0].mxu0
        %4953 = vdwg.mxu0
        %v4954 = vld [vmem:[%s4144 + $0x1] sm:$0xff]
        %v4955 = vld [vmem:[%s4144 + $0x9] sm:$0xff]
        %v4956 = vld [vmem:[%s4144 + $0x19] sm:$0xff]
        %v4957 = vld [vmem:[%s4144 + $0x21] sm:$0xff]
        %v4958 = vld [vmem:[%s4144 + $0x31] sm:$0xff]
        %v4959 = vld [vmem:[%s4144 + $0x39] sm:$0xff]
        %v4960 = vld [vmem:[%s4144 + $0x49] sm:$0xff]
        %v4961 = vld [vmem:[%s4144 + $0x51] sm:$0xff]
        %v4962 = vld [vmem:[%s4144 + $0x61] sm:$0xff]
        %v4963 = vld [vmem:[%s4144 + $0x69] sm:$0xff]
        %v4964 = vld [vmem:[%s4144 + $0x79] sm:$0xff]
        %v4965 = vld [vmem:[%s4144 + $0x81] sm:$0xff]
        %v4966 = vld [vmem:[%s4144 + $0x91] sm:$0xff]
        %v4967 = vld [vmem:[%s4144 + $0x99] sm:$0xff]
        %v4968 = vld [vmem:[%s4144 + $0xa9] sm:$0xff]
        %v4969 = vld [vmem:[%s4144 + $0xb1] sm:$0xff]
        %v4970 = vld [vmem:[%s4144 + $0xc1] sm:$0xff]
        %v4971 = vld [vmem:[%s4144 + $0xc9] sm:$0xff]
        %v4972 = vld [vmem:[%s4144 + $0xd9] sm:$0xff]
        %v4973 = vld [vmem:[%s4144 + $0xe1] sm:$0xff]
        %v4974 = vld [vmem:[%s4144 + $0xf1] sm:$0xff]
        %v4975 = vld [vmem:[%s4144 + $0xf9] sm:$0xff]
        %v4976 = vld [vmem:[%s4144 + $0x109] sm:$0xff]
        %v4977 = vld [vmem:[%s4144 + $0x111] sm:$0xff]
        %v4978 = vld [vmem:[%s4144 + $0x121] sm:$0xff]
        %v4979 = vld [vmem:[%s4144 + $0x129] sm:$0xff]
        %v4980 = vld [vmem:[%s4144 + $0x139] sm:$0xff]
        %v4981 = vld [vmem:[%s4144 + $0x141] sm:$0xff]
        %v4982 = vld [vmem:[%s4144 + $0x151] sm:$0xff]
        %v4983 = vld [vmem:[%s4144 + $0x159] sm:$0xff]
        %v4984 = vld [vmem:[%s4144 + $0x169] sm:$0xff]
        %v4985 = vld [vmem:[%s4144 + $0x171] sm:$0xff]
        %s4986 = scalar_lea.vmem [#allocation13], 32
        %v4987 = vld [vmem:[%s4986] sm:$0xff]
        %v4988 = vld [vmem:[%s4144 + $0x2] sm:$0xff]
        %v4989 = vld [vmem:[%s4144 + $0xa] sm:$0xff]
        %v4990 = vld [vmem:[%s4144 + $0x1a] sm:$0xff]
        %v4991 = vld [vmem:[%s4144 + $0x22] sm:$0xff]
        %v4992 = vld [vmem:[%s4144 + $0x32] sm:$0xff]
        %v4993 = vld [vmem:[%s4144 + $0x3a] sm:$0xff]
        %v4994 = vld [vmem:[%s4144 + $0x4a] sm:$0xff]
        %v4995 = vld [vmem:[%s4144 + $0x52] sm:$0xff]
        %v4996 = vld [vmem:[%s4144 + $0x62] sm:$0xff]
        %v4997 = vld [vmem:[%s4144 + $0x6a] sm:$0xff]
        %v4998 = vld [vmem:[%s4144 + $0x7a] sm:$0xff]
        %v4999 = vld [vmem:[%s4144 + $0x82] sm:$0xff]
        %v5000 = vld [vmem:[%s4144 + $0x92] sm:$0xff]
        %v5001 = vld [vmem:[%s4144 + $0x9a] sm:$0xff]
        %v5002 = vld [vmem:[%s4144 + $0xaa] sm:$0xff]
        %v5003 = vld [vmem:[%s4144 + $0xb2] sm:$0xff]
        %v5004 = vld [vmem:[%s4144 + $0xc2] sm:$0xff]
        %v5005 = vld [vmem:[%s4144 + $0xca] sm:$0xff]
        %v5006 = vld [vmem:[%s4144 + $0xda] sm:$0xff]
        %v5007 = vld [vmem:[%s4144 + $0xe2] sm:$0xff]
        %v5008 = vld [vmem:[%s4144 + $0xf2] sm:$0xff]
        %v5009 = vld [vmem:[%s4144 + $0xfa] sm:$0xff]
        %v5010 = vld [vmem:[%s4144 + $0x10a] sm:$0xff]
        %v5011 = vld [vmem:[%s4144 + $0x112] sm:$0xff]
        %v5012 = vld [vmem:[%s4144 + $0x122] sm:$0xff]
        %v5013 = vld [vmem:[%s4144 + $0x12a] sm:$0xff]
        %v5014 = vld [vmem:[%s4144 + $0x13a] sm:$0xff]
        %v5015 = vld [vmem:[%s4144 + $0x142] sm:$0xff]
        %v5016 = vld [vmem:[%s4144 + $0x152] sm:$0xff]
        %v5017 = vld [vmem:[%s4144 + $0x15a] sm:$0xff]
        %v5018 = vld [vmem:[%s4144 + $0x16a] sm:$0xff]
        %v5019 = vld [vmem:[%s4144 + $0x172] sm:$0xff]
        %s5020 = scalar_lea.vmem [#allocation13], 40
        %v5021 = vld [vmem:[%s5020] sm:$0xff]
        %v5023 = vsel %vm501, %v4988, 0
        %v5026 = vsel %vm501, %v4989, 0
        %v5029 = vsel %vm501, %v4990, 0
        %v5032 = vsel %vm501, %v4991, 0
        %v5035 = vsel %vm501, %v4992, 0
        %v5038 = vsel %vm501, %v4993, 0
        %v5041 = vsel %vm501, %v4994, 0
        %v5044 = vsel %vm501, %v4995, 0
        %v5047 = vsel %vm501, %v4996, 0
        %v5050 = vsel %vm501, %v4997, 0
        %v5053 = vsel %vm501, %v4998, 0
        %v5056 = vsel %vm501, %v4999, 0
        %v5059 = vsel %vm501, %v5000, 0
        %v5062 = vsel %vm501, %v5001, 0
        %v5065 = vsel %vm501, %v5002, 0
        %v5068 = vsel %vm501, %v5003, 0
        %v5071 = vsel %vm501, %v5004, 0
        %v5074 = vsel %vm501, %v5005, 0
        %v5077 = vsel %vm501, %v5006, 0
        %v5080 = vsel %vm501, %v5007, 0
        %v5083 = vsel %vm501, %v5008, 0
        %v5086 = vsel %vm501, %v5009, 0
        %v5089 = vsel %vm501, %v5010, 0
        %v5092 = vsel %vm501, %v5011, 0
        %v5095 = vsel %vm501, %v5012, 0
        %v5098 = vsel %vm501, %v5013, 0
        %v5101 = vsel %vm501, %v5014, 0
        %v5104 = vsel %vm501, %v5015, 0
        %v5107 = vsel %vm501, %v5016, 0
        %v5110 = vsel %vm501, %v5017, 0
        %v5113 = vsel %vm501, %v5018, 0
        %v5116 = vsel %vm501, %v5019, 0
        %5118 = vmatprep.subr.mxu0 0.0
        %5119 = vmatpush1.msra.mxu0 %v5021
        %5120 = vmatprep.subr.mxu0 0.0
        %5121 = vmatpush1.msra.mxu0 0.0
        %5122 = vmatprep.subr.mxu0 0.0
        %5123 = vmatpush1.msra.mxu0 0.0
        %5124 = vmatprep.subr.mxu0 0.0
        %5125 = vmatpush1.msra.mxu0 0.0
        %5126 = vmatprep.subr.mxu0 0.0
        %5127 = vmatpush1.msra.mxu0 0.0
        %5128 = vmatprep.subr.mxu0 0.0
        %5129 = vmatpush1.msra.mxu0 0.0
        %5130 = vmatprep.subr.mxu0 0.0
        %5131 = vmatpush1.msra.mxu0 0.0
        %5132 = vmatprep.subr.mxu0 0.0
        %5133 = vmatpush1.msra.mxu0 0.0
        %5134 = vmatprep.subr.mxu0 0.0
        %5135 = vmatpush1.msra.mxu0 0.0
        %5136 = vmatprep.subr.mxu0 0.0
        %5137 = vmatpush1.msra.mxu0 0.0
        %5138 = vmatprep.subr.mxu0 0.0
        %5139 = vmatpush1.msra.mxu0 0.0
        %5140 = vmatprep.subr.mxu0 0.0
        %5141 = vmatpush1.msra.mxu0 0.0
        %5142 = vmatprep.subr.mxu0 0.0
        %5143 = vmatpush1.msra.mxu0 0.0
        %5144 = vmatprep.subr.mxu0 0.0
        %5145 = vmatpush1.msra.mxu0 0.0
        %5146 = vmatprep.subr.mxu0 0.0
        %5147 = vmatpush1.msra.mxu0 0.0
        %5148 = vmatprep.subr.mxu0 0.0
        %5149 = vmatpush1.msra.mxu0 0.0
        %5150 = vmatprep.subr.mxu0 0.0
        %5151 = vmatpush1.msra.mxu0 0.0
        %5152 = vmatprep.subr.mxu0 0.0
        %5153 = vmatpush1.msra.mxu0 0.0
        %5154 = vmatprep.subr.mxu0 0.0
        %5155 = vmatpush1.msra.mxu0 0.0
        %5156 = vmatprep.subr.mxu0 0.0
        %5157 = vmatpush1.msra.mxu0 0.0
        %5158 = vmatprep.subr.mxu0 0.0
        %5159 = vmatpush1.msra.mxu0 0.0
        %5160 = vmatprep.subr.mxu0 0.0
        %5161 = vmatpush1.msra.mxu0 0.0
        %5162 = vmatprep.subr.mxu0 0.0
        %5163 = vmatpush1.msra.mxu0 0.0
        %5164 = vmatprep.subr.mxu0 0.0
        %5165 = vmatpush1.msra.mxu0 0.0
        %5166 = vmatprep.subr.mxu0 0.0
        %5167 = vmatpush1.msra.mxu0 0.0
        %5168 = vmatprep.subr.mxu0 0.0
        %5169 = vmatpush1.msra.mxu0 0.0
        %5170 = vmatprep.subr.mxu0 0.0
        %5171 = vmatpush1.msra.mxu0 0.0
        %5172 = vmatprep.subr.mxu0 0.0
        %5173 = vmatpush1.msra.mxu0 0.0
        %5174 = vmatprep.subr.mxu0 0.0
        %5175 = vmatpush1.msra.mxu0 0.0
        %5176 = vmatprep.subr.mxu0 0.0
        %5177 = vmatpush1.msra.mxu0 0.0
        %5178 = vmatprep.subr.mxu0 0.0
        %5179 = vmatpush1.msra.mxu0 0.0
        %5180 = vmatprep.subr.mxu0 0.0
        %5181 = vmatpush1.msra.mxu0 0.0
        %5182 = vmatprep.mubr.f32.mxu0 0.0
        %5183 = vmatmul.mubr.f32.gmra.mrb[0].mxu0 %v5023
        %v5184 = vpop.f32.mrb[0].mxu0
        %v5185 = vadd.f32 0.0, %v5184
        %v5186 = vpop.f32.mrb[0].mxu0
        %5187 = vmatprep.mubr.f32.mxu0 0.0
        %5188 = vmatmul.mubr.f32.gmra.mrb[0].mxu0 %v5026
        %v5189 = vpop.f32.mrb[0].mxu0
        %v5190 = vadd.f32 0.0, %v5189
        %v5191 = vpop.f32.mrb[0].mxu0
        %5192 = vmatprep.mubr.f32.mxu0 0.0
        %5193 = vmatmul.mubr.f32.gmra.mrb[0].mxu0 %v5029
        %v5194 = vpop.f32.mrb[0].mxu0
        %v5195 = vadd.f32 0.0, %v5194
        %v5196 = vpop.f32.mrb[0].mxu0
        %5197 = vmatprep.mubr.f32.mxu0 0.0
        %5198 = vmatmul.mubr.f32.gmra.mrb[0].mxu0 %v5032
        %v5199 = vpop.f32.mrb[0].mxu0
        %v5200 = vadd.f32 0.0, %v5199
        %v5201 = vpop.f32.mrb[0].mxu0
        %5202 = vmatprep.mubr.f32.mxu0 0.0
        %5203 = vmatmul.mubr.f32.gmra.mrb[0].mxu0 %v5035
        %v5204 = vpop.f32.mrb[0].mxu0
        %v5205 = vadd.f32 0.0, %v5204
        %v5206 = vpop.f32.mrb[0].mxu0
        %5207 = vmatprep.mubr.f32.mxu0 0.0
        %5208 = vmatmul.mubr.f32.gmra.mrb[0].mxu0 %v5038
        %v5209 = vpop.f32.mrb[0].mxu0
        %v5210 = vadd.f32 0.0, %v5209
        %v5211 = vpop.f32.mrb[0].mxu0
        %5212 = vmatprep.mubr.f32.mxu0 0.0
        %5213 = vmatmul.mubr.f32.gmra.mrb[0].mxu0 %v5041
        %v5214 = vpop.f32.mrb[0].mxu0
        %v5215 = vadd.f32 0.0, %v5214
        %v5216 = vpop.f32.mrb[0].mxu0
        %5217 = vmatprep.mubr.f32.mxu0 0.0
        %5218 = vmatmul.mubr.f32.gmra.mrb[0].mxu0 %v5044
        %v5219 = vpop.f32.mrb[0].mxu0
        %v5220 = vadd.f32 0.0, %v5219
        %v5221 = vpop.f32.mrb[0].mxu0
        %5222 = vmatprep.mubr.f32.mxu0 0.0
        %5223 = vmatmul.mubr.f32.gmra.mrb[0].mxu0 %v5047
        %v5224 = vpop.f32.mrb[0].mxu0
        %v5225 = vadd.f32 0.0, %v5224
        %v5226 = vpop.f32.mrb[0].mxu0
        %5227 = vmatprep.mubr.f32.mxu0 0.0
        %5228 = vmatmul.mubr.f32.gmra.mrb[0].mxu0 %v5050
        %v5229 = vpop.f32.mrb[0].mxu0
        %v5230 = vadd.f32 0.0, %v5229
        %v5231 = vpop.f32.mrb[0].mxu0
        %5232 = vmatprep.mubr.f32.mxu0 0.0
        %5233 = vmatmul.mubr.f32.gmra.mrb[0].mxu0 %v5053
        %v5234 = vpop.f32.mrb[0].mxu0
        %v5235 = vadd.f32 0.0, %v5234
        %v5236 = vpop.f32.mrb[0].mxu0
        %5237 = vmatprep.mubr.f32.mxu0 0.0
        %5238 = vmatmul.mubr.f32.gmra.mrb[0].mxu0 %v5056
        %v5239 = vpop.f32.mrb[0].mxu0
        %v5240 = vadd.f32 0.0, %v5239
        %v5241 = vpop.f32.mrb[0].mxu0
        %5242 = vmatprep.mubr.f32.mxu0 0.0
        %5243 = vmatmul.mubr.f32.gmra.mrb[0].mxu0 %v5059
        %v5244 = vpop.f32.mrb[0].mxu0
        %v5245 = vadd.f32 0.0, %v5244
        %v5246 = vpop.f32.mrb[0].mxu0
        %5247 = vmatprep.mubr.f32.mxu0 0.0
        %5248 = vmatmul.mubr.f32.gmra.mrb[0].mxu0 %v5062
        %v5249 = vpop.f32.mrb[0].mxu0
        %v5250 = vadd.f32 0.0, %v5249
        %v5251 = vpop.f32.mrb[0].mxu0
        %5252 = vmatprep.mubr.f32.mxu0 0.0
        %5253 = vmatmul.mubr.f32.gmra.mrb[0].mxu0 %v5065
        %v5254 = vpop.f32.mrb[0].mxu0
        %v5255 = vadd.f32 0.0, %v5254
        %v5256 = vpop.f32.mrb[0].mxu0
        %5257 = vmatprep.mubr.f32.mxu0 0.0
        %5258 = vmatmul.mubr.f32.gmra.mrb[0].mxu0 %v5068
        %v5259 = vpop.f32.mrb[0].mxu0
        %v5260 = vadd.f32 0.0, %v5259
        %v5261 = vpop.f32.mrb[0].mxu0
        %5262 = vmatprep.mubr.f32.mxu0 0.0
        %5263 = vmatmul.mubr.f32.gmra.mrb[0].mxu0 %v5071
        %v5264 = vpop.f32.mrb[0].mxu0
        %v5265 = vadd.f32 0.0, %v5264
        %v5266 = vpop.f32.mrb[0].mxu0
        %5267 = vmatprep.mubr.f32.mxu0 0.0
        %5268 = vmatmul.mubr.f32.gmra.mrb[0].mxu0 %v5074
        %v5269 = vpop.f32.mrb[0].mxu0
        %v5270 = vadd.f32 0.0, %v5269
        %v5271 = vpop.f32.mrb[0].mxu0
        %5272 = vmatprep.mubr.f32.mxu0 0.0
        %5273 = vmatmul.mubr.f32.gmra.mrb[0].mxu0 %v5077
        %v5274 = vpop.f32.mrb[0].mxu0
        %v5275 = vadd.f32 0.0, %v5274
        %v5276 = vpop.f32.mrb[0].mxu0
        %5277 = vmatprep.mubr.f32.mxu0 0.0
        %5278 = vmatmul.mubr.f32.gmra.mrb[0].mxu0 %v5080
        %v5279 = vpop.f32.mrb[0].mxu0
        %v5280 = vadd.f32 0.0, %v5279
        %v5281 = vpop.f32.mrb[0].mxu0
        %5282 = vmatprep.mubr.f32.mxu0 0.0
        %5283 = vmatmul.mubr.f32.gmra.mrb[0].mxu0 %v5083
        %v5284 = vpop.f32.mrb[0].mxu0
        %v5285 = vadd.f32 0.0, %v5284
        %v5286 = vpop.f32.mrb[0].mxu0
        %5287 = vmatprep.mubr.f32.mxu0 0.0
        %5288 = vmatmul.mubr.f32.gmra.mrb[0].mxu0 %v5086
        %v5289 = vpop.f32.mrb[0].mxu0
        %v5290 = vadd.f32 0.0, %v5289
        %v5291 = vpop.f32.mrb[0].mxu0
        %5292 = vmatprep.mubr.f32.mxu0 0.0
        %5293 = vmatmul.mubr.f32.gmra.mrb[0].mxu0 %v5089
        %v5294 = vpop.f32.mrb[0].mxu0
        %v5295 = vadd.f32 0.0, %v5294
        %v5296 = vpop.f32.mrb[0].mxu0
        %5297 = vmatprep.mubr.f32.mxu0 0.0
        %5298 = vmatmul.mubr.f32.gmra.mrb[0].mxu0 %v5092
        %v5299 = vpop.f32.mrb[0].mxu0
        %v5300 = vadd.f32 0.0, %v5299
        %v5301 = vpop.f32.mrb[0].mxu0
        %5302 = vmatprep.mubr.f32.mxu0 0.0
        %5303 = vmatmul.mubr.f32.gmra.mrb[0].mxu0 %v5095
        %v5304 = vpop.f32.mrb[0].mxu0
        %v5305 = vadd.f32 0.0, %v5304
        %v5306 = vpop.f32.mrb[0].mxu0
        %5307 = vmatprep.mubr.f32.mxu0 0.0
        %5308 = vmatmul.mubr.f32.gmra.mrb[0].mxu0 %v5098
        %v5309 = vpop.f32.mrb[0].mxu0
        %v5310 = vadd.f32 0.0, %v5309
        %v5311 = vpop.f32.mrb[0].mxu0
        %5312 = vmatprep.mubr.f32.mxu0 0.0
        %5313 = vmatmul.mubr.f32.gmra.mrb[0].mxu0 %v5101
        %v5314 = vpop.f32.mrb[0].mxu0
        %v5315 = vadd.f32 0.0, %v5314
        %v5316 = vpop.f32.mrb[0].mxu0
        %5317 = vmatprep.mubr.f32.mxu0 0.0
        %5318 = vmatmul.mubr.f32.gmra.mrb[0].mxu0 %v5104
        %v5319 = vpop.f32.mrb[0].mxu0
        %v5320 = vadd.f32 0.0, %v5319
        %v5321 = vpop.f32.mrb[0].mxu0
        %5322 = vmatprep.mubr.f32.mxu0 0.0
        %5323 = vmatmul.mubr.f32.gmra.mrb[0].mxu0 %v5107
        %v5324 = vpop.f32.mrb[0].mxu0
        %v5325 = vadd.f32 0.0, %v5324
        %v5326 = vpop.f32.mrb[0].mxu0
        %5327 = vmatprep.mubr.f32.mxu0 0.0
        %5328 = vmatmul.mubr.f32.gmra.mrb[0].mxu0 %v5110
        %v5329 = vpop.f32.mrb[0].mxu0
        %v5330 = vadd.f32 0.0, %v5329
        %v5331 = vpop.f32.mrb[0].mxu0
        %5332 = vmatprep.mubr.f32.mxu0 0.0
        %5333 = vmatmul.mubr.f32.gmra.mrb[0].mxu0 %v5113
        %v5334 = vpop.f32.mrb[0].mxu0
        %v5335 = vadd.f32 0.0, %v5334
        %v5336 = vpop.f32.mrb[0].mxu0
        %5337 = vmatprep.mubr.f32.mxu0 0.0
        %5338 = vmatmul.mubr.f32.gmra.mrb[0].mxu0 %v5116
        %v5339 = vpop.f32.mrb[0].mxu0
        %v5340 = vadd.f32 0.0, %v5339
        %v5341 = vpop.f32.mrb[0].mxu0
        %5342 = vdwg.mxu0
        %s5343 = scalar_lea.vmem [#allocation3], 48
        %v5344 = vld [vmem:[%s5343] sm:$0xff]
        %v5345 = vld [vmem:[%s5343 + $0x8] sm:$0xff]
        %v5346 = vld [vmem:[%s5343 + $0x18] sm:$0xff]
        %v5347 = vld [vmem:[%s5343 + $0x20] sm:$0xff]
        %v5348 = vld [vmem:[%s5343 + $0x30] sm:$0xff]
        %v5349 = vld [vmem:[%s5343 + $0x38] sm:$0xff]
        %v5350 = vld [vmem:[%s5343 + $0x48] sm:$0xff]
        %v5351 = vld [vmem:[%s5343 + $0x50] sm:$0xff]
        %v5352 = vld [vmem:[%s5343 + $0x60] sm:$0xff]
        %v5353 = vld [vmem:[%s5343 + $0x68] sm:$0xff]
        %v5354 = vld [vmem:[%s5343 + $0x78] sm:$0xff]
        %v5355 = vld [vmem:[%s5343 + $0x80] sm:$0xff]
        %v5356 = vld [vmem:[%s5343 + $0x90] sm:$0xff]
        %v5357 = vld [vmem:[%s5343 + $0x98] sm:$0xff]
        %v5358 = vld [vmem:[%s5343 + $0xa8] sm:$0xff]
        %v5359 = vld [vmem:[%s5343 + $0xb0] sm:$0xff]
        %v5360 = vld [vmem:[%s5343 + $0xc0] sm:$0xff]
        %v5361 = vld [vmem:[%s5343 + $0xc8] sm:$0xff]
        %v5362 = vld [vmem:[%s5343 + $0xd8] sm:$0xff]
        %v5363 = vld [vmem:[%s5343 + $0xe0] sm:$0xff]
        %v5364 = vld [vmem:[%s5343 + $0xf0] sm:$0xff]
        %v5365 = vld [vmem:[%s5343 + $0xf8] sm:$0xff]
        %v5366 = vld [vmem:[%s5343 + $0x108] sm:$0xff]
        %v5367 = vld [vmem:[%s5343 + $0x110] sm:$0xff]
        %v5368 = vld [vmem:[%s5343 + $0x120] sm:$0xff]
        %v5369 = vld [vmem:[%s5343 + $0x128] sm:$0xff]
        %v5370 = vld [vmem:[%s5343 + $0x138] sm:$0xff]
        %v5371 = vld [vmem:[%s5343 + $0x140] sm:$0xff]
        %v5372 = vld [vmem:[%s5343 + $0x150] sm:$0xff]
        %v5373 = vld [vmem:[%s5343 + $0x158] sm:$0xff]
        %v5374 = vld [vmem:[%s5343 + $0x168] sm:$0xff]
        %v5375 = vld [vmem:[%s5343 + $0x170] sm:$0xff]
        %s5376 = scalar_lea.vmem [#allocation13], 48
        %v5377 = vld [vmem:[%s5376] sm:$0xff]
        %v5378 = vld [vmem:[%s5343 + $0x1] sm:$0xff]
        %v5379 = vld [vmem:[%s5343 + $0x9] sm:$0xff]
        %v5380 = vld [vmem:[%s5343 + $0x19] sm:$0xff]
        %v5381 = vld [vmem:[%s5343 + $0x21] sm:$0xff]
        %v5382 = vld [vmem:[%s5343 + $0x31] sm:$0xff]
        %v5383 = vld [vmem:[%s5343 + $0x39] sm:$0xff]
        %v5384 = vld [vmem:[%s5343 + $0x49] sm:$0xff]
        %v5385 = vld [vmem:[%s5343 + $0x51] sm:$0xff]
        %v5386 = vld [vmem:[%s5343 + $0x61] sm:$0xff]
        %v5387 = vld [vmem:[%s5343 + $0x69] sm:$0xff]
        %v5388 = vld [vmem:[%s5343 + $0x79] sm:$0xff]
        %v5389 = vld [vmem:[%s5343 + $0x81] sm:$0xff]
        %v5390 = vld [vmem:[%s5343 + $0x91] sm:$0xff]
        %v5391 = vld [vmem:[%s5343 + $0x99] sm:$0xff]
        %v5392 = vld [vmem:[%s5343 + $0xa9] sm:$0xff]
        %v5393 = vld [vmem:[%s5343 + $0xb1] sm:$0xff]
        %v5394 = vld [vmem:[%s5343 + $0xc1] sm:$0xff]
        %v5395 = vld [vmem:[%s5343 + $0xc9] sm:$0xff]
        %v5396 = vld [vmem:[%s5343 + $0xd9] sm:$0xff]
        %v5397 = vld [vmem:[%s5343 + $0xe1] sm:$0xff]
        %v5398 = vld [vmem:[%s5343 + $0xf1] sm:$0xff]
        %v5399 = vld [vmem:[%s5343 + $0xf9] sm:$0xff]
        %v5400 = vld [vmem:[%s5343 + $0x109] sm:$0xff]
        %v5401 = vld [vmem:[%s5343 + $0x111] sm:$0xff]
        %v5402 = vld [vmem:[%s5343 + $0x121] sm:$0xff]
        %v5403 = vld [vmem:[%s5343 + $0x129] sm:$0xff]
        %v5404 = vld [vmem:[%s5343 + $0x139] sm:$0xff]
        %v5405 = vld [vmem:[%s5343 + $0x141] sm:$0xff]
        %v5406 = vld [vmem:[%s5343 + $0x151] sm:$0xff]
        %v5407 = vld [vmem:[%s5343 + $0x159] sm:$0xff]
        %v5408 = vld [vmem:[%s5343 + $0x169] sm:$0xff]
        %v5409 = vld [vmem:[%s5343 + $0x171] sm:$0xff]
        %s5410 = scalar_lea.vmem [#allocation13], 56
        %v5411 = vld [vmem:[%s5410] sm:$0xff]
        %v5413 = vsel %vm501, %v5378, 0
        %v5416 = vsel %vm501, %v5379, 0
        %v5419 = vsel %vm501, %v5380, 0
        %v5422 = vsel %vm501, %v5381, 0
        %v5425 = vsel %vm501, %v5382, 0
        %v5428 = vsel %vm501, %v5383, 0
        %v5431 = vsel %vm501, %v5384, 0
        %v5434 = vsel %vm501, %v5385, 0
        %v5437 = vsel %vm501, %v5386, 0
        %v5440 = vsel %vm501, %v5387, 0
        %v5443 = vsel %vm501, %v5388, 0
        %v5446 = vsel %vm501, %v5389, 0
        %v5449 = vsel %vm501, %v5390, 0
        %v5452 = vsel %vm501, %v5391, 0
        %v5455 = vsel %vm501, %v5392, 0
        %v5458 = vsel %vm501, %v5393, 0
        %v5461 = vsel %vm501, %v5394, 0
        %v5464 = vsel %vm501, %v5395, 0
        %v5467 = vsel %vm501, %v5396, 0
        %v5470 = vsel %vm501, %v5397, 0
        %v5473 = vsel %vm501, %v5398, 0
        %v5476 = vsel %vm501, %v5399, 0
        %v5479 = vsel %vm501, %v5400, 0
        %v5482 = vsel %vm501, %v5401, 0
        %v5485 = vsel %vm501, %v5402, 0
        %v5488 = vsel %vm501, %v5403, 0
        %v5491 = vsel %vm501, %v5404, 0
        %v5494 = vsel %vm501, %v5405, 0
        %v5497 = vsel %vm501, %v5406, 0
        %v5500 = vsel %vm501, %v5407, 0
        %v5503 = vsel %vm501, %v5408, 0
        %v5506 = vsel %vm501, %v5409, 0
        %5508 = vmatprep.subr.mxu0 0.0
        %5509 = vmatpush1.msra.mxu0 %v5411
        %5510 = vmatprep.subr.mxu0 0.0
        %5511 = vmatpush1.msra.mxu0 0.0
        %5512 = vmatprep.subr.mxu0 0.0
        %5513 = vmatpush1.msra.mxu0 0.0
        %5514 = vmatprep.subr.mxu0 0.0
        %5515 = vmatpush1.msra.mxu0 0.0
        %5516 = vmatprep.subr.mxu0 0.0
        %5517 = vmatpush1.msra.mxu0 0.0
        %5518 = vmatprep.subr.mxu0 0.0
        %5519 = vmatpush1.msra.mxu0 0.0
        %5520 = vmatprep.subr.mxu0 0.0
        %5521 = vmatpush1.msra.mxu0 0.0
        %5522 = vmatprep.subr.mxu0 0.0
        %5523 = vmatpush1.msra.mxu0 0.0
        %5524 = vmatprep.subr.mxu0 0.0
        %5525 = vmatpush1.msra.mxu0 0.0
        %5526 = vmatprep.subr.mxu0 0.0
        %5527 = vmatpush1.msra.mxu0 0.0
        %5528 = vmatprep.subr.mxu0 0.0
        %5529 = vmatpush1.msra.mxu0 0.0
        %5530 = vmatprep.subr.mxu0 0.0
        %5531 = vmatpush1.msra.mxu0 0.0
        %5532 = vmatprep.subr.mxu0 0.0
        %5533 = vmatpush1.msra.mxu0 0.0
        %5534 = vmatprep.subr.mxu0 0.0
        %5535 = vmatpush1.msra.mxu0 0.0
        %5536 = vmatprep.subr.mxu0 0.0
        %5537 = vmatpush1.msra.mxu0 0.0
        %5538 = vmatprep.subr.mxu0 0.0
        %5539 = vmatpush1.msra.mxu0 0.0
        %5540 = vmatprep.subr.mxu0 0.0
        %5541 = vmatpush1.msra.mxu0 0.0
        %5542 = vmatprep.subr.mxu0 0.0
        %5543 = vmatpush1.msra.mxu0 0.0
        %5544 = vmatprep.subr.mxu0 0.0
        %5545 = vmatpush1.msra.mxu0 0.0
        %5546 = vmatprep.subr.mxu0 0.0
        %5547 = vmatpush1.msra.mxu0 0.0
        %5548 = vmatprep.subr.mxu0 0.0
        %5549 = vmatpush1.msra.mxu0 0.0
        %5550 = vmatprep.subr.mxu0 0.0
        %5551 = vmatpush1.msra.mxu0 0.0
        %5552 = vmatprep.subr.mxu0 0.0
        %5553 = vmatpush1.msra.mxu0 0.0
        %5554 = vmatprep.subr.mxu0 0.0
        %5555 = vmatpush1.msra.mxu0 0.0
        %5556 = vmatprep.subr.mxu0 0.0
        %5557 = vmatpush1.msra.mxu0 0.0
        %5558 = vmatprep.subr.mxu0 0.0
        %5559 = vmatpush1.msra.mxu0 0.0
        %5560 = vmatprep.subr.mxu0 0.0
        %5561 = vmatpush1.msra.mxu0 0.0
        %5562 = vmatprep.subr.mxu0 0.0
        %5563 = vmatpush1.msra.mxu0 0.0
        %5564 = vmatprep.subr.mxu0 0.0
        %5565 = vmatpush1.msra.mxu0 0.0
        %5566 = vmatprep.subr.mxu0 0.0
        %5567 = vmatpush1.msra.mxu0 0.0
        %5568 = vmatprep.subr.mxu0 0.0
        %5569 = vmatpush1.msra.mxu0 0.0
        %5570 = vmatprep.subr.mxu0 0.0
        %5571 = vmatpush1.msra.mxu0 0.0
        %5572 = vmatprep.mubr.f32.mxu0 0.0
        %5573 = vmatmul.mubr.f32.gmra.mrb[0].mxu0 %v5413
        %v5574 = vpop.f32.mrb[0].mxu0
        %v5575 = vadd.f32 0.0, %v5574
        %v5576 = vpop.f32.mrb[0].mxu0
        %5577 = vmatprep.mubr.f32.mxu0 0.0
        %5578 = vmatmul.mubr.f32.gmra.mrb[0].mxu0 %v5416
        %v5579 = vpop.f32.mrb[0].mxu0
        %v5580 = vadd.f32 0.0, %v5579
        %v5581 = vpop.f32.mrb[0].mxu0
        %5582 = vmatprep.mubr.f32.mxu0 0.0
        %5583 = vmatmul.mubr.f32.gmra.mrb[0].mxu0 %v5419
        %v5584 = vpop.f32.mrb[0].mxu0
        %v5585 = vadd.f32 0.0, %v5584
        %v5586 = vpop.f32.mrb[0].mxu0
        %5587 = vmatprep.mubr.f32.mxu0 0.0
        %5588 = vmatmul.mubr.f32.gmra.mrb[0].mxu0 %v5422
        %v5589 = vpop.f32.mrb[0].mxu0
        %v5590 = vadd.f32 0.0, %v5589
        %v5591 = vpop.f32.mrb[0].mxu0
        %5592 = vmatprep.mubr.f32.mxu0 0.0
        %5593 = vmatmul.mubr.f32.gmra.mrb[0].mxu0 %v5425
        %v5594 = vpop.f32.mrb[0].mxu0
        %v5595 = vadd.f32 0.0, %v5594
        %v5596 = vpop.f32.mrb[0].mxu0
        %5597 = vmatprep.mubr.f32.mxu0 0.0
        %5598 = vmatmul.mubr.f32.gmra.mrb[0].mxu0 %v5428
        %v5599 = vpop.f32.mrb[0].mxu0
        %v5600 = vadd.f32 0.0, %v5599
        %v5601 = vpop.f32.mrb[0].mxu0
        %5602 = vmatprep.mubr.f32.mxu0 0.0
        %5603 = vmatmul.mubr.f32.gmra.mrb[0].mxu0 %v5431
        %v5604 = vpop.f32.mrb[0].mxu0
        %v5605 = vadd.f32 0.0, %v5604
        %v5606 = vpop.f32.mrb[0].mxu0
        %5607 = vmatprep.mubr.f32.mxu0 0.0
        %5608 = vmatmul.mubr.f32.gmra.mrb[0].mxu0 %v5434
        %v5609 = vpop.f32.mrb[0].mxu0
        %v5610 = vadd.f32 0.0, %v5609
        %v5611 = vpop.f32.mrb[0].mxu0
        %5612 = vmatprep.mubr.f32.mxu0 0.0
        %5613 = vmatmul.mubr.f32.gmra.mrb[0].mxu0 %v5437
        %v5614 = vpop.f32.mrb[0].mxu0
        %v5615 = vadd.f32 0.0, %v5614
        %v5616 = vpop.f32.mrb[0].mxu0
        %5617 = vmatprep.mubr.f32.mxu0 0.0
        %5618 = vmatmul.mubr.f32.gmra.mrb[0].mxu0 %v5440
        %v5619 = vpop.f32.mrb[0].mxu0
        %v5620 = vadd.f32 0.0, %v5619
        %v5621 = vpop.f32.mrb[0].mxu0
        %5622 = vmatprep.mubr.f32.mxu0 0.0
        %5623 = vmatmul.mubr.f32.gmra.mrb[0].mxu0 %v5443
        %v5624 = vpop.f32.mrb[0].mxu0
        %v5625 = vadd.f32 0.0, %v5624
        %v5626 = vpop.f32.mrb[0].mxu0
        %5627 = vmatprep.mubr.f32.mxu0 0.0
        %5628 = vmatmul.mubr.f32.gmra.mrb[0].mxu0 %v5446
        %v5629 = vpop.f32.mrb[0].mxu0
        %v5630 = vadd.f32 0.0, %v5629
        %v5631 = vpop.f32.mrb[0].mxu0
        %5632 = vmatprep.mubr.f32.mxu0 0.0
        %5633 = vmatmul.mubr.f32.gmra.mrb[0].mxu0 %v5449
        %v5634 = vpop.f32.mrb[0].mxu0
        %v5635 = vadd.f32 0.0, %v5634
        %v5636 = vpop.f32.mrb[0].mxu0
        %5637 = vmatprep.mubr.f32.mxu0 0.0
        %5638 = vmatmul.mubr.f32.gmra.mrb[0].mxu0 %v5452
        %v5639 = vpop.f32.mrb[0].mxu0
        %v5640 = vadd.f32 0.0, %v5639
        %v5641 = vpop.f32.mrb[0].mxu0
        %5642 = vmatprep.mubr.f32.mxu0 0.0
        %5643 = vmatmul.mubr.f32.gmra.mrb[0].mxu0 %v5455
        %v5644 = vpop.f32.mrb[0].mxu0
        %v5645 = vadd.f32 0.0, %v5644
        %v5646 = vpop.f32.mrb[0].mxu0
        %5647 = vmatprep.mubr.f32.mxu0 0.0
        %5648 = vmatmul.mubr.f32.gmra.mrb[0].mxu0 %v5458
        %v5649 = vpop.f32.mrb[0].mxu0
        %v5650 = vadd.f32 0.0, %v5649
        %v5651 = vpop.f32.mrb[0].mxu0
        %5652 = vmatprep.mubr.f32.mxu0 0.0
        %5653 = vmatmul.mubr.f32.gmra.mrb[0].mxu0 %v5461
        %v5654 = vpop.f32.mrb[0].mxu0
        %v5655 = vadd.f32 0.0, %v5654
        %v5656 = vpop.f32.mrb[0].mxu0
        %5657 = vmatprep.mubr.f32.mxu0 0.0
        %5658 = vmatmul.mubr.f32.gmra.mrb[0].mxu0 %v5464
        %v5659 = vpop.f32.mrb[0].mxu0
        %v5660 = vadd.f32 0.0, %v5659
        %v5661 = vpop.f32.mrb[0].mxu0
        %5662 = vmatprep.mubr.f32.mxu0 0.0
        %5663 = vmatmul.mubr.f32.gmra.mrb[0].mxu0 %v5467
        %v5664 = vpop.f32.mrb[0].mxu0
        %v5665 = vadd.f32 0.0, %v5664
        %v5666 = vpop.f32.mrb[0].mxu0
        %5667 = vmatprep.mubr.f32.mxu0 0.0
        %5668 = vmatmul.mubr.f32.gmra.mrb[0].mxu0 %v5470
        %v5669 = vpop.f32.mrb[0].mxu0
        %v5670 = vadd.f32 0.0, %v5669
        %v5671 = vpop.f32.mrb[0].mxu0
        %5672 = vmatprep.mubr.f32.mxu0 0.0
        %5673 = vmatmul.mubr.f32.gmra.mrb[0].mxu0 %v5473
        %v5674 = vpop.f32.mrb[0].mxu0
        %v5675 = vadd.f32 0.0, %v5674
        %v5676 = vpop.f32.mrb[0].mxu0
        %5677 = vmatprep.mubr.f32.mxu0 0.0
        %5678 = vmatmul.mubr.f32.gmra.mrb[0].mxu0 %v5476
        %v5679 = vpop.f32.mrb[0].mxu0
        %v5680 = vadd.f32 0.0, %v5679
        %v5681 = vpop.f32.mrb[0].mxu0
        %5682 = vmatprep.mubr.f32.mxu0 0.0
        %5683 = vmatmul.mubr.f32.gmra.mrb[0].mxu0 %v5479
        %v5684 = vpop.f32.mrb[0].mxu0
        %v5685 = vadd.f32 0.0, %v5684
        %v5686 = vpop.f32.mrb[0].mxu0
        %5687 = vmatprep.mubr.f32.mxu0 0.0
        %5688 = vmatmul.mubr.f32.gmra.mrb[0].mxu0 %v5482
        %v5689 = vpop.f32.mrb[0].mxu0
        %v5690 = vadd.f32 0.0, %v5689
        %v5691 = vpop.f32.mrb[0].mxu0
        %5692 = vmatprep.mubr.f32.mxu0 0.0
        %5693 = vmatmul.mubr.f32.gmra.mrb[0].mxu0 %v5485
        %v5694 = vpop.f32.mrb[0].mxu0
        %v5695 = vadd.f32 0.0, %v5694
        %v5696 = vpop.f32.mrb[0].mxu0
        %5697 = vmatprep.mubr.f32.mxu0 0.0
        %5698 = vmatmul.mubr.f32.gmra.mrb[0].mxu0 %v5488
        %v5699 = vpop.f32.mrb[0].mxu0
        %v5700 = vadd.f32 0.0, %v5699
        %v5701 = vpop.f32.mrb[0].mxu0
        %5702 = vmatprep.mubr.f32.mxu0 0.0
        %5703 = vmatmul.mubr.f32.gmra.mrb[0].mxu0 %v5491
        %v5704 = vpop.f32.mrb[0].mxu0
        %v5705 = vadd.f32 0.0, %v5704
        %v5706 = vpop.f32.mrb[0].mxu0
        %5707 = vmatprep.mubr.f32.mxu0 0.0
        %5708 = vmatmul.mubr.f32.gmra.mrb[0].mxu0 %v5494
        %v5709 = vpop.f32.mrb[0].mxu0
        %v5710 = vadd.f32 0.0, %v5709
        %v5711 = vpop.f32.mrb[0].mxu0
        %5712 = vmatprep.mubr.f32.mxu0 0.0
        %5713 = vmatmul.mubr.f32.gmra.mrb[0].mxu0 %v5497
        %v5714 = vpop.f32.mrb[0].mxu0
        %v5715 = vadd.f32 0.0, %v5714
        %v5716 = vpop.f32.mrb[0].mxu0
        %5717 = vmatprep.mubr.f32.mxu0 0.0
        %5718 = vmatmul.mubr.f32.gmra.mrb[0].mxu0 %v5500
        %v5719 = vpop.f32.mrb[0].mxu0
        %v5720 = vadd.f32 0.0, %v5719
        %v5721 = vpop.f32.mrb[0].mxu0
        %5722 = vmatprep.mubr.f32.mxu0 0.0
        %5723 = vmatmul.mubr.f32.gmra.mrb[0].mxu0 %v5503
        %v5724 = vpop.f32.mrb[0].mxu0
        %v5725 = vadd.f32 0.0, %v5724
        %v5726 = vpop.f32.mrb[0].mxu0
        %5727 = vmatprep.mubr.f32.mxu0 0.0
        %5728 = vmatmul.mubr.f32.gmra.mrb[0].mxu0 %v5506
        %v5729 = vpop.f32.mrb[0].mxu0
        %v5730 = vadd.f32 0.0, %v5729
        %v5731 = vpop.f32.mrb[0].mxu0
        %5732 = vdwg.mxu0
        %v5733 = vld [vmem:[%s5343 + $0x2] sm:$0xff]
        %v5734 = vld [vmem:[%s5343 + $0xa] sm:$0xff]
        %v5735 = vld [vmem:[%s5343 + $0x1a] sm:$0xff]
        %v5736 = vld [vmem:[%s5343 + $0x22] sm:$0xff]
        %v5737 = vld [vmem:[%s5343 + $0x32] sm:$0xff]
        %v5738 = vld [vmem:[%s5343 + $0x3a] sm:$0xff]
        %v5739 = vld [vmem:[%s5343 + $0x4a] sm:$0xff]
        %v5740 = vld [vmem:[%s5343 + $0x52] sm:$0xff]
        %v5741 = vld [vmem:[%s5343 + $0x62] sm:$0xff]
        %v5742 = vld [vmem:[%s5343 + $0x6a] sm:$0xff]
        %v5743 = vld [vmem:[%s5343 + $0x7a] sm:$0xff]
        %v5744 = vld [vmem:[%s5343 + $0x82] sm:$0xff]
        %v5745 = vld [vmem:[%s5343 + $0x92] sm:$0xff]
        %v5746 = vld [vmem:[%s5343 + $0x9a] sm:$0xff]
        %v5747 = vld [vmem:[%s5343 + $0xaa] sm:$0xff]
        %v5748 = vld [vmem:[%s5343 + $0xb2] sm:$0xff]
        %v5749 = vld [vmem:[%s5343 + $0xc2] sm:$0xff]
        %v5750 = vld [vmem:[%s5343 + $0xca] sm:$0xff]
        %v5751 = vld [vmem:[%s5343 + $0xda] sm:$0xff]
        %v5752 = vld [vmem:[%s5343 + $0xe2] sm:$0xff]
        %v5753 = vld [vmem:[%s5343 + $0xf2] sm:$0xff]
        %v5754 = vld [vmem:[%s5343 + $0xfa] sm:$0xff]
        %v5755 = vld [vmem:[%s5343 + $0x10a] sm:$0xff]
        %v5756 = vld [vmem:[%s5343 + $0x112] sm:$0xff]
        %v5757 = vld [vmem:[%s5343 + $0x122] sm:$0xff]
        %v5758 = vld [vmem:[%s5343 + $0x12a] sm:$0xff]
        %v5759 = vld [vmem:[%s5343 + $0x13a] sm:$0xff]
        %v5760 = vld [vmem:[%s5343 + $0x142] sm:$0xff]
        %v5761 = vld [vmem:[%s5343 + $0x152] sm:$0xff]
        %v5762 = vld [vmem:[%s5343 + $0x15a] sm:$0xff]
        %v5763 = vld [vmem:[%s5343 + $0x16a] sm:$0xff]
        %v5764 = vld [vmem:[%s5343 + $0x172] sm:$0xff]
        %s5765 = scalar_lea.vmem [#allocation13], 64
        %v5766 = vld [vmem:[%s5765] sm:$0xff]
        %v5768 = vsel %vm501, %v5733, 0
        %v5771 = vsel %vm501, %v5734, 0
        %v5774 = vsel %vm501, %v5735, 0
        %v5777 = vsel %vm501, %v5736, 0
        %v5780 = vsel %vm501, %v5737, 0
        %v5783 = vsel %vm501, %v5738, 0
        %v5786 = vsel %vm501, %v5739, 0
        %v5789 = vsel %vm501, %v5740, 0
        %v5792 = vsel %vm501, %v5741, 0
        %v5795 = vsel %vm501, %v5742, 0
        %v5798 = vsel %vm501, %v5743, 0
        %v5801 = vsel %vm501, %v5744, 0
        %v5804 = vsel %vm501, %v5745, 0
        %v5807 = vsel %vm501, %v5746, 0
        %v5810 = vsel %vm501, %v5747, 0
        %v5813 = vsel %vm501, %v5748, 0
        %v5816 = vsel %vm501, %v5749, 0
        %v5819 = vsel %vm501, %v5750, 0
        %v5822 = vsel %vm501, %v5751, 0
        %v5825 = vsel %vm501, %v5752, 0
        %v5828 = vsel %vm501, %v5753, 0
        %v5831 = vsel %vm501, %v5754, 0
        %v5834 = vsel %vm501, %v5755, 0
        %v5837 = vsel %vm501, %v5756, 0
        %v5840 = vsel %vm501, %v5757, 0
        %v5843 = vsel %vm501, %v5758, 0
        %v5846 = vsel %vm501, %v5759, 0
        %v5849 = vsel %vm501, %v5760, 0
        %v5852 = vsel %vm501, %v5761, 0
        %v5855 = vsel %vm501, %v5762, 0
        %v5858 = vsel %vm501, %v5763, 0
        %v5861 = vsel %vm501, %v5764, 0
        %5863 = vmatprep.subr.mxu0 0.0
        %5864 = vmatpush1.msra.mxu0 %v5766
        %5865 = vmatprep.subr.mxu0 0.0
        %5866 = vmatpush1.msra.mxu0 0.0
        %5867 = vmatprep.subr.mxu0 0.0
        %5868 = vmatpush1.msra.mxu0 0.0
        %5869 = vmatprep.subr.mxu0 0.0
        %5870 = vmatpush1.msra.mxu0 0.0
        %5871 = vmatprep.subr.mxu0 0.0
        %5872 = vmatpush1.msra.mxu0 0.0
        %5873 = vmatprep.subr.mxu0 0.0
        %5874 = vmatpush1.msra.mxu0 0.0
        %5875 = vmatprep.subr.mxu0 0.0
        %5876 = vmatpush1.msra.mxu0 0.0
        %5877 = vmatprep.subr.mxu0 0.0
        %5878 = vmatpush1.msra.mxu0 0.0
        %5879 = vmatprep.subr.mxu0 0.0
        %5880 = vmatpush1.msra.mxu0 0.0
        %5881 = vmatprep.subr.mxu0 0.0
        %5882 = vmatpush1.msra.mxu0 0.0
        %5883 = vmatprep.subr.mxu0 0.0
        %5884 = vmatpush1.msra.mxu0 0.0
        %5885 = vmatprep.subr.mxu0 0.0
        %5886 = vmatpush1.msra.mxu0 0.0
        %5887 = vmatprep.subr.mxu0 0.0
        %5888 = vmatpush1.msra.mxu0 0.0
        %5889 = vmatprep.subr.mxu0 0.0
        %5890 = vmatpush1.msra.mxu0 0.0
        %5891 = vmatprep.subr.mxu0 0.0
        %5892 = vmatpush1.msra.mxu0 0.0
        %5893 = vmatprep.subr.mxu0 0.0
        %5894 = vmatpush1.msra.mxu0 0.0
        %5895 = vmatprep.subr.mxu0 0.0
        %5896 = vmatpush1.msra.mxu0 0.0
        %5897 = vmatprep.subr.mxu0 0.0
        %5898 = vmatpush1.msra.mxu0 0.0
        %5899 = vmatprep.subr.mxu0 0.0
        %5900 = vmatpush1.msra.mxu0 0.0
        %5901 = vmatprep.subr.mxu0 0.0
        %5902 = vmatpush1.msra.mxu0 0.0
        %5903 = vmatprep.subr.mxu0 0.0
        %5904 = vmatpush1.msra.mxu0 0.0
        %5905 = vmatprep.subr.mxu0 0.0
        %5906 = vmatpush1.msra.mxu0 0.0
        %5907 = vmatprep.subr.mxu0 0.0
        %5908 = vmatpush1.msra.mxu0 0.0
        %5909 = vmatprep.subr.mxu0 0.0
        %5910 = vmatpush1.msra.mxu0 0.0
        %5911 = vmatprep.subr.mxu0 0.0
        %5912 = vmatpush1.msra.mxu0 0.0
        %5913 = vmatprep.subr.mxu0 0.0
        %5914 = vmatpush1.msra.mxu0 0.0
        %5915 = vmatprep.subr.mxu0 0.0
        %5916 = vmatpush1.msra.mxu0 0.0
        %5917 = vmatprep.subr.mxu0 0.0
        %5918 = vmatpush1.msra.mxu0 0.0
        %5919 = vmatprep.subr.mxu0 0.0
        %5920 = vmatpush1.msra.mxu0 0.0
        %5921 = vmatprep.subr.mxu0 0.0
        %5922 = vmatpush1.msra.mxu0 0.0
        %5923 = vmatprep.subr.mxu0 0.0
        %5924 = vmatpush1.msra.mxu0 0.0
        %5925 = vmatprep.subr.mxu0 0.0
        %5926 = vmatpush1.msra.mxu0 0.0
        %5927 = vmatprep.mubr.f32.mxu0 0.0
        %5928 = vmatmul.mubr.f32.gmra.mrb[0].mxu0 %v5768
        %v5929 = vpop.f32.mrb[0].mxu0
        %v5930 = vadd.f32 0.0, %v5929
        %v5931 = vpop.f32.mrb[0].mxu0
        %5932 = vmatprep.mubr.f32.mxu0 0.0
        %5933 = vmatmul.mubr.f32.gmra.mrb[0].mxu0 %v5771
        %v5934 = vpop.f32.mrb[0].mxu0
        %v5935 = vadd.f32 0.0, %v5934
        %v5936 = vpop.f32.mrb[0].mxu0
        %5937 = vmatprep.mubr.f32.mxu0 0.0
        %5938 = vmatmul.mubr.f32.gmra.mrb[0].mxu0 %v5774
        %v5939 = vpop.f32.mrb[0].mxu0
        %v5940 = vadd.f32 0.0, %v5939
        %v5941 = vpop.f32.mrb[0].mxu0
        %5942 = vmatprep.mubr.f32.mxu0 0.0
        %5943 = vmatmul.mubr.f32.gmra.mrb[0].mxu0 %v5777
        %v5944 = vpop.f32.mrb[0].mxu0
        %v5945 = vadd.f32 0.0, %v5944
        %v5946 = vpop.f32.mrb[0].mxu0
        %5947 = vmatprep.mubr.f32.mxu0 0.0
        %5948 = vmatmul.mubr.f32.gmra.mrb[0].mxu0 %v5780
        %v5949 = vpop.f32.mrb[0].mxu0
        %v5950 = vadd.f32 0.0, %v5949
        %v5951 = vpop.f32.mrb[0].mxu0
        %5952 = vmatprep.mubr.f32.mxu0 0.0
        %5953 = vmatmul.mubr.f32.gmra.mrb[0].mxu0 %v5783
        %v5954 = vpop.f32.mrb[0].mxu0
        %v5955 = vadd.f32 0.0, %v5954
        %v5956 = vpop.f32.mrb[0].mxu0
        %5957 = vmatprep.mubr.f32.mxu0 0.0
        %5958 = vmatmul.mubr.f32.gmra.mrb[0].mxu0 %v5786
        %v5959 = vpop.f32.mrb[0].mxu0
        %v5960 = vadd.f32 0.0, %v5959
        %v5961 = vpop.f32.mrb[0].mxu0
        %5962 = vmatprep.mubr.f32.mxu0 0.0
        %5963 = vmatmul.mubr.f32.gmra.mrb[0].mxu0 %v5789
        %v5964 = vpop.f32.mrb[0].mxu0
        %v5965 = vadd.f32 0.0, %v5964
        %v5966 = vpop.f32.mrb[0].mxu0
        %5967 = vmatprep.mubr.f32.mxu0 0.0
        %5968 = vmatmul.mubr.f32.gmra.mrb[0].mxu0 %v5792
        %v5969 = vpop.f32.mrb[0].mxu0
        %v5970 = vadd.f32 0.0, %v5969
        %v5971 = vpop.f32.mrb[0].mxu0
        %5972 = vmatprep.mubr.f32.mxu0 0.0
        %5973 = vmatmul.mubr.f32.gmra.mrb[0].mxu0 %v5795
        %v5974 = vpop.f32.mrb[0].mxu0
        %v5975 = vadd.f32 0.0, %v5974
        %v5976 = vpop.f32.mrb[0].mxu0
        %5977 = vmatprep.mubr.f32.mxu0 0.0
        %5978 = vmatmul.mubr.f32.gmra.mrb[0].mxu0 %v5798
        %v5979 = vpop.f32.mrb[0].mxu0
        %v5980 = vadd.f32 0.0, %v5979
        %v5981 = vpop.f32.mrb[0].mxu0
        %5982 = vmatprep.mubr.f32.mxu0 0.0
        %5983 = vmatmul.mubr.f32.gmra.mrb[0].mxu0 %v5801
        %v5984 = vpop.f32.mrb[0].mxu0
        %v5985 = vadd.f32 0.0, %v5984
        %v5986 = vpop.f32.mrb[0].mxu0
        %5987 = vmatprep.mubr.f32.mxu0 0.0
        %5988 = vmatmul.mubr.f32.gmra.mrb[0].mxu0 %v5804
        %v5989 = vpop.f32.mrb[0].mxu0
        %v5990 = vadd.f32 0.0, %v5989
        %v5991 = vpop.f32.mrb[0].mxu0
        %5992 = vmatprep.mubr.f32.mxu0 0.0
        %5993 = vmatmul.mubr.f32.gmra.mrb[0].mxu0 %v5807
        %v5994 = vpop.f32.mrb[0].mxu0
        %v5995 = vadd.f32 0.0, %v5994
        %v5996 = vpop.f32.mrb[0].mxu0
        %5997 = vmatprep.mubr.f32.mxu0 0.0
        %5998 = vmatmul.mubr.f32.gmra.mrb[0].mxu0 %v5810
        %v5999 = vpop.f32.mrb[0].mxu0
        %v6000 = vadd.f32 0.0, %v5999
        %v6001 = vpop.f32.mrb[0].mxu0
        %6002 = vmatprep.mubr.f32.mxu0 0.0
        %6003 = vmatmul.mubr.f32.gmra.mrb[0].mxu0 %v5813
        %v6004 = vpop.f32.mrb[0].mxu0
        %v6005 = vadd.f32 0.0, %v6004
        %v6006 = vpop.f32.mrb[0].mxu0
        %6007 = vmatprep.mubr.f32.mxu0 0.0
        %6008 = vmatmul.mubr.f32.gmra.mrb[0].mxu0 %v5816
        %v6009 = vpop.f32.mrb[0].mxu0
        %v6010 = vadd.f32 0.0, %v6009
        %v6011 = vpop.f32.mrb[0].mxu0
        %6012 = vmatprep.mubr.f32.mxu0 0.0
        %6013 = vmatmul.mubr.f32.gmra.mrb[0].mxu0 %v5819
        %v6014 = vpop.f32.mrb[0].mxu0
        %v6015 = vadd.f32 0.0, %v6014
        %v6016 = vpop.f32.mrb[0].mxu0
        %6017 = vmatprep.mubr.f32.mxu0 0.0
        %6018 = vmatmul.mubr.f32.gmra.mrb[0].mxu0 %v5822
        %v6019 = vpop.f32.mrb[0].mxu0
        %v6020 = vadd.f32 0.0, %v6019
        %v6021 = vpop.f32.mrb[0].mxu0
        %6022 = vmatprep.mubr.f32.mxu0 0.0
        %6023 = vmatmul.mubr.f32.gmra.mrb[0].mxu0 %v5825
        %v6024 = vpop.f32.mrb[0].mxu0
        %v6025 = vadd.f32 0.0, %v6024
        %v6026 = vpop.f32.mrb[0].mxu0
        %6027 = vmatprep.mubr.f32.mxu0 0.0
        %6028 = vmatmul.mubr.f32.gmra.mrb[0].mxu0 %v5828
        %v6029 = vpop.f32.mrb[0].mxu0
        %v6030 = vadd.f32 0.0, %v6029
        %v6031 = vpop.f32.mrb[0].mxu0
        %6032 = vmatprep.mubr.f32.mxu0 0.0
        %6033 = vmatmul.mubr.f32.gmra.mrb[0].mxu0 %v5831
        %v6034 = vpop.f32.mrb[0].mxu0
        %v6035 = vadd.f32 0.0, %v6034
        %v6036 = vpop.f32.mrb[0].mxu0
        %6037 = vmatprep.mubr.f32.mxu0 0.0
        %6038 = vmatmul.mubr.f32.gmra.mrb[0].mxu0 %v5834
        %v6039 = vpop.f32.mrb[0].mxu0
        %v6040 = vadd.f32 0.0, %v6039
        %v6041 = vpop.f32.mrb[0].mxu0
        %6042 = vmatprep.mubr.f32.mxu0 0.0
        %6043 = vmatmul.mubr.f32.gmra.mrb[0].mxu0 %v5837
        %v6044 = vpop.f32.mrb[0].mxu0
        %v6045 = vadd.f32 0.0, %v6044
        %v6046 = vpop.f32.mrb[0].mxu0
        %6047 = vmatprep.mubr.f32.mxu0 0.0
        %6048 = vmatmul.mubr.f32.gmra.mrb[0].mxu0 %v5840
        %v6049 = vpop.f32.mrb[0].mxu0
        %v6050 = vadd.f32 0.0, %v6049
        %v6051 = vpop.f32.mrb[0].mxu0
        %6052 = vmatprep.mubr.f32.mxu0 0.0
        %6053 = vmatmul.mubr.f32.gmra.mrb[0].mxu0 %v5843
        %v6054 = vpop.f32.mrb[0].mxu0
        %v6055 = vadd.f32 0.0, %v6054
        %v6056 = vpop.f32.mrb[0].mxu0
        %6057 = vmatprep.mubr.f32.mxu0 0.0
        %6058 = vmatmul.mubr.f32.gmra.mrb[0].mxu0 %v5846
        %v6059 = vpop.f32.mrb[0].mxu0
        %v6060 = vadd.f32 0.0, %v6059
        %v6061 = vpop.f32.mrb[0].mxu0
        %6062 = vmatprep.mubr.f32.mxu0 0.0
        %6063 = vmatmul.mubr.f32.gmra.mrb[0].mxu0 %v5849
        %v6064 = vpop.f32.mrb[0].mxu0
        %v6065 = vadd.f32 0.0, %v6064
        %v6066 = vpop.f32.mrb[0].mxu0
        %6067 = vmatprep.mubr.f32.mxu0 0.0
        %6068 = vmatmul.mubr.f32.gmra.mrb[0].mxu0 %v5852
        %v6069 = vpop.f32.mrb[0].mxu0
        %v6070 = vadd.f32 0.0, %v6069
        %v6071 = vpop.f32.mrb[0].mxu0
        %6072 = vmatprep.mubr.f32.mxu0 0.0
        %6073 = vmatmul.mubr.f32.gmra.mrb[0].mxu0 %v5855
        %v6074 = vpop.f32.mrb[0].mxu0
        %v6075 = vadd.f32 0.0, %v6074
        %v6076 = vpop.f32.mrb[0].mxu0
        %6077 = vmatprep.mubr.f32.mxu0 0.0
        %6078 = vmatmul.mubr.f32.gmra.mrb[0].mxu0 %v5858
        %v6079 = vpop.f32.mrb[0].mxu0
        %v6080 = vadd.f32 0.0, %v6079
        %v6081 = vpop.f32.mrb[0].mxu0
        %6082 = vmatprep.mubr.f32.mxu0 0.0
        %6083 = vmatmul.mubr.f32.gmra.mrb[0].mxu0 %v5861
        %v6084 = vpop.f32.mrb[0].mxu0
        %v6085 = vadd.f32 0.0, %v6084
        %v6086 = vpop.f32.mrb[0].mxu0
        %6087 = vdwg.mxu0
        %v6089 = vsel %vm501, %v4177, 0
        %v6092 = vsel %vm501, %v4178, 0
        %v6095 = vsel %vm501, %v4179, 0
        %v6098 = vsel %vm501, %v4180, 0
        %v6101 = vsel %vm501, %v4181, 0
        %v6104 = vsel %vm501, %v4182, 0
        %v6107 = vsel %vm501, %v4183, 0
        %v6110 = vsel %vm501, %v4184, 0
        %v6113 = vsel %vm501, %v4185, 0
        %v6116 = vsel %vm501, %v4186, 0
        %v6119 = vsel %vm501, %v4187, 0
        %v6122 = vsel %vm501, %v4188, 0
        %v6125 = vsel %vm501, %v4189, 0
        %v6128 = vsel %vm501, %v4190, 0
        %v6131 = vsel %vm501, %v4191, 0
        %v6134 = vsel %vm501, %v4192, 0
        %v6137 = vsel %vm501, %v4193, 0
        %v6140 = vsel %vm501, %v4194, 0
        %v6143 = vsel %vm501, %v4195, 0
        %v6146 = vsel %vm501, %v4196, 0
        %v6149 = vsel %vm501, %v4197, 0
        %v6152 = vsel %vm501, %v4198, 0
        %v6155 = vsel %vm501, %v4199, 0
        %v6158 = vsel %vm501, %v4200, 0
        %v6161 = vsel %vm501, %v4201, 0
        %v6164 = vsel %vm501, %v4202, 0
        %v6167 = vsel %vm501, %v4203, 0
        %v6170 = vsel %vm501, %v4204, 0
        %v6173 = vsel %vm501, %v4205, 0
        %v6176 = vsel %vm501, %v4206, 0
        %v6179 = vsel %vm501, %v4207, 0
        %v6182 = vsel %vm501, %v4208, 0
        %6184 = vmatprep.subr.mxu0 0.0
        %6185 = vmatpush1.msra.mxu0 %v4209
        %6186 = vmatprep.subr.mxu0 0.0
        %6187 = vmatpush1.msra.mxu0 0.0
        %6188 = vmatprep.subr.mxu0 0.0
        %6189 = vmatpush1.msra.mxu0 0.0
        %6190 = vmatprep.subr.mxu0 0.0
        %6191 = vmatpush1.msra.mxu0 0.0
        %6192 = vmatprep.subr.mxu0 0.0
        %6193 = vmatpush1.msra.mxu0 0.0
        %6194 = vmatprep.subr.mxu0 0.0
        %6195 = vmatpush1.msra.mxu0 0.0
        %6196 = vmatprep.subr.mxu0 0.0
        %6197 = vmatpush1.msra.mxu0 0.0
        %6198 = vmatprep.subr.mxu0 0.0
        %6199 = vmatpush1.msra.mxu0 0.0
        %6200 = vmatprep.subr.mxu0 0.0
        %6201 = vmatpush1.msra.mxu0 0.0
        %6202 = vmatprep.subr.mxu0 0.0
        %6203 = vmatpush1.msra.mxu0 0.0
        %6204 = vmatprep.subr.mxu0 0.0
        %6205 = vmatpush1.msra.mxu0 0.0
        %6206 = vmatprep.subr.mxu0 0.0
        %6207 = vmatpush1.msra.mxu0 0.0
        %6208 = vmatprep.subr.mxu0 0.0
        %6209 = vmatpush1.msra.mxu0 0.0
        %6210 = vmatprep.subr.mxu0 0.0
        %6211 = vmatpush1.msra.mxu0 0.0
        %6212 = vmatprep.subr.mxu0 0.0
        %6213 = vmatpush1.msra.mxu0 0.0
        %6214 = vmatprep.subr.mxu0 0.0
        %6215 = vmatpush1.msra.mxu0 0.0
        %6216 = vmatprep.subr.mxu0 0.0
        %6217 = vmatpush1.msra.mxu0 0.0
        %6218 = vmatprep.subr.mxu0 0.0
        %6219 = vmatpush1.msra.mxu0 0.0
        %6220 = vmatprep.subr.mxu0 0.0
        %6221 = vmatpush1.msra.mxu0 0.0
        %6222 = vmatprep.subr.mxu0 0.0
        %6223 = vmatpush1.msra.mxu0 0.0
        %6224 = vmatprep.subr.mxu0 0.0
        %6225 = vmatpush1.msra.mxu0 0.0
        %6226 = vmatprep.subr.mxu0 0.0
        %6227 = vmatpush1.msra.mxu0 0.0
        %6228 = vmatprep.subr.mxu0 0.0
        %6229 = vmatpush1.msra.mxu0 0.0
        %6230 = vmatprep.subr.mxu0 0.0
        %6231 = vmatpush1.msra.mxu0 0.0
        %6232 = vmatprep.subr.mxu0 0.0
        %6233 = vmatpush1.msra.mxu0 0.0
        %6234 = vmatprep.subr.mxu0 0.0
        %6235 = vmatpush1.msra.mxu0 0.0
        %6236 = vmatprep.subr.mxu0 0.0
        %6237 = vmatpush1.msra.mxu0 0.0
        %6238 = vmatprep.subr.mxu0 0.0
        %6239 = vmatpush1.msra.mxu0 0.0
        %6240 = vmatprep.subr.mxu0 0.0
        %6241 = vmatpush1.msra.mxu0 0.0
        %6242 = vmatprep.subr.mxu0 0.0
        %6243 = vmatpush1.msra.mxu0 0.0
        %6244 = vmatprep.subr.mxu0 0.0
        %6245 = vmatpush1.msra.mxu0 0.0
        %6246 = vmatprep.subr.mxu0 0.0
        %6247 = vmatpush1.msra.mxu0 0.0
        %6248 = vmatprep.mubr.f32.mxu0 0.0
        %6249 = vmatmul.mubr.f32.gmra.mrb[0].mxu0 %v6089
        %v6250 = vpop.f32.mrb[0].mxu0
        %v6251 = vadd.f32 %v4407, %v6250
        %v6252 = vpop.f32.mrb[0].mxu0
        %6253 = vmatprep.mubr.f32.mxu0 0.0
        %6254 = vmatmul.mubr.f32.gmra.mrb[0].mxu0 %v6092
        %v6255 = vpop.f32.mrb[0].mxu0
        %v6256 = vadd.f32 %v4412, %v6255
        %v6257 = vpop.f32.mrb[0].mxu0
        %6258 = vmatprep.mubr.f32.mxu0 0.0
        %6259 = vmatmul.mubr.f32.gmra.mrb[0].mxu0 %v6095
        %v6260 = vpop.f32.mrb[0].mxu0
        %v6261 = vadd.f32 %v4417, %v6260
        %v6262 = vpop.f32.mrb[0].mxu0
        %6263 = vmatprep.mubr.f32.mxu0 0.0
        %6264 = vmatmul.mubr.f32.gmra.mrb[0].mxu0 %v6098
        %v6265 = vpop.f32.mrb[0].mxu0
        %v6266 = vadd.f32 %v4422, %v6265
        %v6267 = vpop.f32.mrb[0].mxu0
        %6268 = vmatprep.mubr.f32.mxu0 0.0
        %6269 = vmatmul.mubr.f32.gmra.mrb[0].mxu0 %v6101
        %v6270 = vpop.f32.mrb[0].mxu0
        %v6271 = vadd.f32 %v4427, %v6270
        %v6272 = vpop.f32.mrb[0].mxu0
        %6273 = vmatprep.mubr.f32.mxu0 0.0
        %6274 = vmatmul.mubr.f32.gmra.mrb[0].mxu0 %v6104
        %v6275 = vpop.f32.mrb[0].mxu0
        %v6276 = vadd.f32 %v4432, %v6275
        %v6277 = vpop.f32.mrb[0].mxu0
        %6278 = vmatprep.mubr.f32.mxu0 0.0
        %6279 = vmatmul.mubr.f32.gmra.mrb[0].mxu0 %v6107
        %v6280 = vpop.f32.mrb[0].mxu0
        %v6281 = vadd.f32 %v4437, %v6280
        %v6282 = vpop.f32.mrb[0].mxu0
        %6283 = vmatprep.mubr.f32.mxu0 0.0
        %6284 = vmatmul.mubr.f32.gmra.mrb[0].mxu0 %v6110
        %v6285 = vpop.f32.mrb[0].mxu0
        %v6286 = vadd.f32 %v4442, %v6285
        %v6287 = vpop.f32.mrb[0].mxu0
        %6288 = vmatprep.mubr.f32.mxu0 0.0
        %6289 = vmatmul.mubr.f32.gmra.mrb[0].mxu0 %v6113
        %v6290 = vpop.f32.mrb[0].mxu0
        %v6291 = vadd.f32 %v4447, %v6290
        %v6292 = vpop.f32.mrb[0].mxu0
        %6293 = vmatprep.mubr.f32.mxu0 0.0
        %6294 = vmatmul.mubr.f32.gmra.mrb[0].mxu0 %v6116
        %v6295 = vpop.f32.mrb[0].mxu0
        %v6296 = vadd.f32 %v4452, %v6295
        %v6297 = vpop.f32.mrb[0].mxu0
        %6298 = vmatprep.mubr.f32.mxu0 0.0
        %6299 = vmatmul.mubr.f32.gmra.mrb[0].mxu0 %v6119
        %v6300 = vpop.f32.mrb[0].mxu0
        %v6301 = vadd.f32 %v4457, %v6300
        %v6302 = vpop.f32.mrb[0].mxu0
        %6303 = vmatprep.mubr.f32.mxu0 0.0
        %6304 = vmatmul.mubr.f32.gmra.mrb[0].mxu0 %v6122
        %v6305 = vpop.f32.mrb[0].mxu0
        %v6306 = vadd.f32 %v4462, %v6305
        %v6307 = vpop.f32.mrb[0].mxu0
        %6308 = vmatprep.mubr.f32.mxu0 0.0
        %6309 = vmatmul.mubr.f32.gmra.mrb[0].mxu0 %v6125
        %v6310 = vpop.f32.mrb[0].mxu0
        %v6311 = vadd.f32 %v4467, %v6310
        %v6312 = vpop.f32.mrb[0].mxu0
        %6313 = vmatprep.mubr.f32.mxu0 0.0
        %6314 = vmatmul.mubr.f32.gmra.mrb[0].mxu0 %v6128
        %v6315 = vpop.f32.mrb[0].mxu0
        %v6316 = vadd.f32 %v4472, %v6315
        %v6317 = vpop.f32.mrb[0].mxu0
        %6318 = vmatprep.mubr.f32.mxu0 0.0
        %6319 = vmatmul.mubr.f32.gmra.mrb[0].mxu0 %v6131
        %v6320 = vpop.f32.mrb[0].mxu0
        %v6321 = vadd.f32 %v4477, %v6320
        %v6322 = vpop.f32.mrb[0].mxu0
        %6323 = vmatprep.mubr.f32.mxu0 0.0
        %6324 = vmatmul.mubr.f32.gmra.mrb[0].mxu0 %v6134
        %v6325 = vpop.f32.mrb[0].mxu0
        %v6326 = vadd.f32 %v4482, %v6325
        %v6327 = vpop.f32.mrb[0].mxu0
        %6328 = vmatprep.mubr.f32.mxu0 0.0
        %6329 = vmatmul.mubr.f32.gmra.mrb[0].mxu0 %v6137
        %v6330 = vpop.f32.mrb[0].mxu0
        %v6331 = vadd.f32 %v4487, %v6330
        %v6332 = vpop.f32.mrb[0].mxu0
        %6333 = vmatprep.mubr.f32.mxu0 0.0
        %6334 = vmatmul.mubr.f32.gmra.mrb[0].mxu0 %v6140
        %v6335 = vpop.f32.mrb[0].mxu0
        %v6336 = vadd.f32 %v4492, %v6335
        %v6337 = vpop.f32.mrb[0].mxu0
        %6338 = vmatprep.mubr.f32.mxu0 0.0
        %6339 = vmatmul.mubr.f32.gmra.mrb[0].mxu0 %v6143
        %v6340 = vpop.f32.mrb[0].mxu0
        %v6341 = vadd.f32 %v4497, %v6340
        %v6342 = vpop.f32.mrb[0].mxu0
        %6343 = vmatprep.mubr.f32.mxu0 0.0
        %6344 = vmatmul.mubr.f32.gmra.mrb[0].mxu0 %v6146
        %v6345 = vpop.f32.mrb[0].mxu0
        %v6346 = vadd.f32 %v4502, %v6345
        %v6347 = vpop.f32.mrb[0].mxu0
        %6348 = vmatprep.mubr.f32.mxu0 0.0
        %6349 = vmatmul.mubr.f32.gmra.mrb[0].mxu0 %v6149
        %v6350 = vpop.f32.mrb[0].mxu0
        %v6351 = vadd.f32 %v4507, %v6350
        %v6352 = vpop.f32.mrb[0].mxu0
        %6353 = vmatprep.mubr.f32.mxu0 0.0
        %6354 = vmatmul.mubr.f32.gmra.mrb[0].mxu0 %v6152
        %v6355 = vpop.f32.mrb[0].mxu0
        %v6356 = vadd.f32 %v4512, %v6355
        %v6357 = vpop.f32.mrb[0].mxu0
        %6358 = vmatprep.mubr.f32.mxu0 0.0
        %6359 = vmatmul.mubr.f32.gmra.mrb[0].mxu0 %v6155
        %v6360 = vpop.f32.mrb[0].mxu0
        %v6361 = vadd.f32 %v4517, %v6360
        %v6362 = vpop.f32.mrb[0].mxu0
        %6363 = vmatprep.mubr.f32.mxu0 0.0
        %6364 = vmatmul.mubr.f32.gmra.mrb[0].mxu0 %v6158
        %v6365 = vpop.f32.mrb[0].mxu0
        %v6366 = vadd.f32 %v4522, %v6365
        %v6367 = vpop.f32.mrb[0].mxu0
        %6368 = vmatprep.mubr.f32.mxu0 0.0
        %6369 = vmatmul.mubr.f32.gmra.mrb[0].mxu0 %v6161
        %v6370 = vpop.f32.mrb[0].mxu0
        %v6371 = vadd.f32 %v4527, %v6370
        %v6372 = vpop.f32.mrb[0].mxu0
        %6373 = vmatprep.mubr.f32.mxu0 0.0
        %6374 = vmatmul.mubr.f32.gmra.mrb[0].mxu0 %v6164
        %v6375 = vpop.f32.mrb[0].mxu0
        %v6376 = vadd.f32 %v4532, %v6375
        %v6377 = vpop.f32.mrb[0].mxu0
        %6378 = vmatprep.mubr.f32.mxu0 0.0
        %6379 = vmatmul.mubr.f32.gmra.mrb[0].mxu0 %v6167
        %v6380 = vpop.f32.mrb[0].mxu0
        %v6381 = vadd.f32 %v4537, %v6380
        %v6382 = vpop.f32.mrb[0].mxu0
        %6383 = vmatprep.mubr.f32.mxu0 0.0
        %6384 = vmatmul.mubr.f32.gmra.mrb[0].mxu0 %v6170
        %v6385 = vpop.f32.mrb[0].mxu0
        %v6386 = vadd.f32 %v4542, %v6385
        %v6387 = vpop.f32.mrb[0].mxu0
        %6388 = vmatprep.mubr.f32.mxu0 0.0
        %6389 = vmatmul.mubr.f32.gmra.mrb[0].mxu0 %v6173
        %v6390 = vpop.f32.mrb[0].mxu0
        %v6391 = vadd.f32 %v4547, %v6390
        %v6392 = vpop.f32.mrb[0].mxu0
        %6393 = vmatprep.mubr.f32.mxu0 0.0
        %6394 = vmatmul.mubr.f32.gmra.mrb[0].mxu0 %v6176
        %v6395 = vpop.f32.mrb[0].mxu0
        %v6396 = vadd.f32 %v4552, %v6395
        %v6397 = vpop.f32.mrb[0].mxu0
        %6398 = vmatprep.mubr.f32.mxu0 0.0
        %6399 = vmatmul.mubr.f32.gmra.mrb[0].mxu0 %v6179
        %v6400 = vpop.f32.mrb[0].mxu0
        %v6401 = vadd.f32 %v4557, %v6400
        %v6402 = vpop.f32.mrb[0].mxu0
        %6403 = vmatprep.mubr.f32.mxu0 0.0
        %6404 = vmatmul.mubr.f32.gmra.mrb[0].mxu0 %v6182
        %v6405 = vpop.f32.mrb[0].mxu0
        %v6406 = vadd.f32 %v4562, %v6405
        %v6407 = vpop.f32.mrb[0].mxu0
        %6408 = vdwg.mxu0
        %v6410 = vsel %vm501, %v4565, 0
        %v6413 = vsel %vm501, %v4566, 0
        %v6416 = vsel %vm501, %v4567, 0
        %v6419 = vsel %vm501, %v4568, 0
        %v6422 = vsel %vm501, %v4569, 0
        %v6425 = vsel %vm501, %v4570, 0
        %v6428 = vsel %vm501, %v4571, 0
        %v6431 = vsel %vm501, %v4572, 0
        %v6434 = vsel %vm501, %v4573, 0
        %v6437 = vsel %vm501, %v4574, 0
        %v6440 = vsel %vm501, %v4575, 0
        %v6443 = vsel %vm501, %v4576, 0
        %v6446 = vsel %vm501, %v4577, 0
        %v6449 = vsel %vm501, %v4578, 0
        %v6452 = vsel %vm501, %v4579, 0
        %v6455 = vsel %vm501, %v4580, 0
        %v6458 = vsel %vm501, %v4581, 0
        %v6461 = vsel %vm501, %v4582, 0
        %v6464 = vsel %vm501, %v4583, 0
        %v6467 = vsel %vm501, %v4584, 0
        %v6470 = vsel %vm501, %v4585, 0
        %v6473 = vsel %vm501, %v4586, 0
        %v6476 = vsel %vm501, %v4587, 0
        %v6479 = vsel %vm501, %v4588, 0
        %v6482 = vsel %vm501, %v4589, 0
        %v6485 = vsel %vm501, %v4590, 0
        %v6488 = vsel %vm501, %v4591, 0
        %v6491 = vsel %vm501, %v4592, 0
        %v6494 = vsel %vm501, %v4593, 0
        %v6497 = vsel %vm501, %v4594, 0
        %v6500 = vsel %vm501, %v4595, 0
        %v6503 = vsel %vm501, %v4596, 0
        %6505 = vmatprep.subr.mxu0 0.0
        %6506 = vmatpush1.msra.mxu0 %v4598
        %6507 = vmatprep.subr.mxu0 0.0
        %6508 = vmatpush1.msra.mxu0 0.0
        %6509 = vmatprep.subr.mxu0 0.0
        %6510 = vmatpush1.msra.mxu0 0.0
        %6511 = vmatprep.subr.mxu0 0.0
        %6512 = vmatpush1.msra.mxu0 0.0
        %6513 = vmatprep.subr.mxu0 0.0
        %6514 = vmatpush1.msra.mxu0 0.0
        %6515 = vmatprep.subr.mxu0 0.0
        %6516 = vmatpush1.msra.mxu0 0.0
        %6517 = vmatprep.subr.mxu0 0.0
        %6518 = vmatpush1.msra.mxu0 0.0
        %6519 = vmatprep.subr.mxu0 0.0
        %6520 = vmatpush1.msra.mxu0 0.0
        %6521 = vmatprep.subr.mxu0 0.0
        %6522 = vmatpush1.msra.mxu0 0.0
        %6523 = vmatprep.subr.mxu0 0.0
        %6524 = vmatpush1.msra.mxu0 0.0
        %6525 = vmatprep.subr.mxu0 0.0
        %6526 = vmatpush1.msra.mxu0 0.0
        %6527 = vmatprep.subr.mxu0 0.0
        %6528 = vmatpush1.msra.mxu0 0.0
        %6529 = vmatprep.subr.mxu0 0.0
        %6530 = vmatpush1.msra.mxu0 0.0
        %6531 = vmatprep.subr.mxu0 0.0
        %6532 = vmatpush1.msra.mxu0 0.0
        %6533 = vmatprep.subr.mxu0 0.0
        %6534 = vmatpush1.msra.mxu0 0.0
        %6535 = vmatprep.subr.mxu0 0.0
        %6536 = vmatpush1.msra.mxu0 0.0
        %6537 = vmatprep.subr.mxu0 0.0
        %6538 = vmatpush1.msra.mxu0 0.0
        %6539 = vmatprep.subr.mxu0 0.0
        %6540 = vmatpush1.msra.mxu0 0.0
        %6541 = vmatprep.subr.mxu0 0.0
        %6542 = vmatpush1.msra.mxu0 0.0
        %6543 = vmatprep.subr.mxu0 0.0
        %6544 = vmatpush1.msra.mxu0 0.0
        %6545 = vmatprep.subr.mxu0 0.0
        %6546 = vmatpush1.msra.mxu0 0.0
        %6547 = vmatprep.subr.mxu0 0.0
        %6548 = vmatpush1.msra.mxu0 0.0
        %6549 = vmatprep.subr.mxu0 0.0
        %6550 = vmatpush1.msra.mxu0 0.0
        %6551 = vmatprep.subr.mxu0 0.0
        %6552 = vmatpush1.msra.mxu0 0.0
        %6553 = vmatprep.subr.mxu0 0.0
        %6554 = vmatpush1.msra.mxu0 0.0
        %6555 = vmatprep.subr.mxu0 0.0
        %6556 = vmatpush1.msra.mxu0 0.0
        %6557 = vmatprep.subr.mxu0 0.0
        %6558 = vmatpush1.msra.mxu0 0.0
        %6559 = vmatprep.subr.mxu0 0.0
        %6560 = vmatpush1.msra.mxu0 0.0
        %6561 = vmatprep.subr.mxu0 0.0
        %6562 = vmatpush1.msra.mxu0 0.0
        %6563 = vmatprep.subr.mxu0 0.0
        %6564 = vmatpush1.msra.mxu0 0.0
        %6565 = vmatprep.subr.mxu0 0.0
        %6566 = vmatpush1.msra.mxu0 0.0
        %6567 = vmatprep.subr.mxu0 0.0
        %6568 = vmatpush1.msra.mxu0 0.0
        %6569 = vmatprep.mubr.f32.mxu0 0.0
        %6570 = vmatmul.mubr.f32.gmra.mrb[0].mxu0 %v6410
        %v6571 = vpop.f32.mrb[0].mxu0
        %v6572 = vadd.f32 %v4796, %v6571
        %v6573 = vpop.f32.mrb[0].mxu0
        %6574 = vmatprep.mubr.f32.mxu0 0.0
        %6575 = vmatmul.mubr.f32.gmra.mrb[0].mxu0 %v6413
        %v6576 = vpop.f32.mrb[0].mxu0
        %v6577 = vadd.f32 %v4801, %v6576
        %v6578 = vpop.f32.mrb[0].mxu0
        %6579 = vmatprep.mubr.f32.mxu0 0.0
        %6580 = vmatmul.mubr.f32.gmra.mrb[0].mxu0 %v6416
        %v6581 = vpop.f32.mrb[0].mxu0
        %v6582 = vadd.f32 %v4806, %v6581
        %v6583 = vpop.f32.mrb[0].mxu0
        %6584 = vmatprep.mubr.f32.mxu0 0.0
        %6585 = vmatmul.mubr.f32.gmra.mrb[0].mxu0 %v6419
        %v6586 = vpop.f32.mrb[0].mxu0
        %v6587 = vadd.f32 %v4811, %v6586
        %v6588 = vpop.f32.mrb[0].mxu0
        %6589 = vmatprep.mubr.f32.mxu0 0.0
        %6590 = vmatmul.mubr.f32.gmra.mrb[0].mxu0 %v6422
        %v6591 = vpop.f32.mrb[0].mxu0
        %v6592 = vadd.f32 %v4816, %v6591
        %v6593 = vpop.f32.mrb[0].mxu0
        %6594 = vmatprep.mubr.f32.mxu0 0.0
        %6595 = vmatmul.mubr.f32.gmra.mrb[0].mxu0 %v6425
        %v6596 = vpop.f32.mrb[0].mxu0
        %v6597 = vadd.f32 %v4821, %v6596
        %v6598 = vpop.f32.mrb[0].mxu0
        %6599 = vmatprep.mubr.f32.mxu0 0.0
        %6600 = vmatmul.mubr.f32.gmra.mrb[0].mxu0 %v6428
        %v6601 = vpop.f32.mrb[0].mxu0
        %v6602 = vadd.f32 %v4826, %v6601
        %v6603 = vpop.f32.mrb[0].mxu0
        %6604 = vmatprep.mubr.f32.mxu0 0.0
        %6605 = vmatmul.mubr.f32.gmra.mrb[0].mxu0 %v6431
        %v6606 = vpop.f32.mrb[0].mxu0
        %v6607 = vadd.f32 %v4831, %v6606
        %v6608 = vpop.f32.mrb[0].mxu0
        %6609 = vmatprep.mubr.f32.mxu0 0.0
        %6610 = vmatmul.mubr.f32.gmra.mrb[0].mxu0 %v6434
        %v6611 = vpop.f32.mrb[0].mxu0
        %v6612 = vadd.f32 %v4836, %v6611
        %v6613 = vpop.f32.mrb[0].mxu0
        %6614 = vmatprep.mubr.f32.mxu0 0.0
        %6615 = vmatmul.mubr.f32.gmra.mrb[0].mxu0 %v6437
        %v6616 = vpop.f32.mrb[0].mxu0
        %v6617 = vadd.f32 %v4841, %v6616
        %v6618 = vpop.f32.mrb[0].mxu0
        %6619 = vmatprep.mubr.f32.mxu0 0.0
        %6620 = vmatmul.mubr.f32.gmra.mrb[0].mxu0 %v6440
        %v6621 = vpop.f32.mrb[0].mxu0
        %v6622 = vadd.f32 %v4846, %v6621
        %v6623 = vpop.f32.mrb[0].mxu0
        %6624 = vmatprep.mubr.f32.mxu0 0.0
        %6625 = vmatmul.mubr.f32.gmra.mrb[0].mxu0 %v6443
        %v6626 = vpop.f32.mrb[0].mxu0
        %v6627 = vadd.f32 %v4851, %v6626
        %v6628 = vpop.f32.mrb[0].mxu0
        %6629 = vmatprep.mubr.f32.mxu0 0.0
        %6630 = vmatmul.mubr.f32.gmra.mrb[0].mxu0 %v6446
        %v6631 = vpop.f32.mrb[0].mxu0
        %v6632 = vadd.f32 %v4856, %v6631
        %v6633 = vpop.f32.mrb[0].mxu0
        %6634 = vmatprep.mubr.f32.mxu0 0.0
        %6635 = vmatmul.mubr.f32.gmra.mrb[0].mxu0 %v6449
        %v6636 = vpop.f32.mrb[0].mxu0
        %v6637 = vadd.f32 %v4861, %v6636
        %v6638 = vpop.f32.mrb[0].mxu0
        %6639 = vmatprep.mubr.f32.mxu0 0.0
        %6640 = vmatmul.mubr.f32.gmra.mrb[0].mxu0 %v6452
        %v6641 = vpop.f32.mrb[0].mxu0
        %v6642 = vadd.f32 %v4866, %v6641
        %v6643 = vpop.f32.mrb[0].mxu0
        %6644 = vmatprep.mubr.f32.mxu0 0.0
        %6645 = vmatmul.mubr.f32.gmra.mrb[0].mxu0 %v6455
        %v6646 = vpop.f32.mrb[0].mxu0
        %v6647 = vadd.f32 %v4871, %v6646
        %v6648 = vpop.f32.mrb[0].mxu0
        %6649 = vmatprep.mubr.f32.mxu0 0.0
        %6650 = vmatmul.mubr.f32.gmra.mrb[0].mxu0 %v6458
        %v6651 = vpop.f32.mrb[0].mxu0
        %v6652 = vadd.f32 %v4876, %v6651
        %v6653 = vpop.f32.mrb[0].mxu0
        %6654 = vmatprep.mubr.f32.mxu0 0.0
        %6655 = vmatmul.mubr.f32.gmra.mrb[0].mxu0 %v6461
        %v6656 = vpop.f32.mrb[0].mxu0
        %v6657 = vadd.f32 %v4881, %v6656
        %v6658 = vpop.f32.mrb[0].mxu0
        %6659 = vmatprep.mubr.f32.mxu0 0.0
        %6660 = vmatmul.mubr.f32.gmra.mrb[0].mxu0 %v6464
        %v6661 = vpop.f32.mrb[0].mxu0
        %v6662 = vadd.f32 %v4886, %v6661
        %v6663 = vpop.f32.mrb[0].mxu0
        %6664 = vmatprep.mubr.f32.mxu0 0.0
        %6665 = vmatmul.mubr.f32.gmra.mrb[0].mxu0 %v6467
        %v6666 = vpop.f32.mrb[0].mxu0
        %v6667 = vadd.f32 %v4891, %v6666
        %v6668 = vpop.f32.mrb[0].mxu0
        %6669 = vmatprep.mubr.f32.mxu0 0.0
        %6670 = vmatmul.mubr.f32.gmra.mrb[0].mxu0 %v6470
        %v6671 = vpop.f32.mrb[0].mxu0
        %v6672 = vadd.f32 %v4896, %v6671
        %v6673 = vpop.f32.mrb[0].mxu0
        %6674 = vmatprep.mubr.f32.mxu0 0.0
        %6675 = vmatmul.mubr.f32.gmra.mrb[0].mxu0 %v6473
        %v6676 = vpop.f32.mrb[0].mxu0
        %v6677 = vadd.f32 %v4901, %v6676
        %v6678 = vpop.f32.mrb[0].mxu0
        %6679 = vmatprep.mubr.f32.mxu0 0.0
        %6680 = vmatmul.mubr.f32.gmra.mrb[0].mxu0 %v6476
        %v6681 = vpop.f32.mrb[0].mxu0
        %v6682 = vadd.f32 %v4906, %v6681
        %v6683 = vpop.f32.mrb[0].mxu0
        %6684 = vmatprep.mubr.f32.mxu0 0.0
        %6685 = vmatmul.mubr.f32.gmra.mrb[0].mxu0 %v6479
        %v6686 = vpop.f32.mrb[0].mxu0
        %v6687 = vadd.f32 %v4911, %v6686
        %v6688 = vpop.f32.mrb[0].mxu0
        %6689 = vmatprep.mubr.f32.mxu0 0.0
        %6690 = vmatmul.mubr.f32.gmra.mrb[0].mxu0 %v6482
        %v6691 = vpop.f32.mrb[0].mxu0
        %v6692 = vadd.f32 %v4916, %v6691
        %v6693 = vpop.f32.mrb[0].mxu0
        %6694 = vmatprep.mubr.f32.mxu0 0.0
        %6695 = vmatmul.mubr.f32.gmra.mrb[0].mxu0 %v6485
        %v6696 = vpop.f32.mrb[0].mxu0
        %v6697 = vadd.f32 %v4921, %v6696
        %v6698 = vpop.f32.mrb[0].mxu0
        %6699 = vmatprep.mubr.f32.mxu0 0.0
        %6700 = vmatmul.mubr.f32.gmra.mrb[0].mxu0 %v6488
        %v6701 = vpop.f32.mrb[0].mxu0
        %v6702 = vadd.f32 %v4926, %v6701
        %v6703 = vpop.f32.mrb[0].mxu0
        %6704 = vmatprep.mubr.f32.mxu0 0.0
        %6705 = vmatmul.mubr.f32.gmra.mrb[0].mxu0 %v6491
        %v6706 = vpop.f32.mrb[0].mxu0
        %v6707 = vadd.f32 %v4931, %v6706
        %v6708 = vpop.f32.mrb[0].mxu0
        %6709 = vmatprep.mubr.f32.mxu0 0.0
        %6710 = vmatmul.mubr.f32.gmra.mrb[0].mxu0 %v6494
        %v6711 = vpop.f32.mrb[0].mxu0
        %v6712 = vadd.f32 %v4936, %v6711
        %v6713 = vpop.f32.mrb[0].mxu0
        %6714 = vmatprep.mubr.f32.mxu0 0.0
        %6715 = vmatmul.mubr.f32.gmra.mrb[0].mxu0 %v6497
        %v6716 = vpop.f32.mrb[0].mxu0
        %v6717 = vadd.f32 %v4941, %v6716
        %v6718 = vpop.f32.mrb[0].mxu0
        %6719 = vmatprep.mubr.f32.mxu0 0.0
        %6720 = vmatmul.mubr.f32.gmra.mrb[0].mxu0 %v6500
        %v6721 = vpop.f32.mrb[0].mxu0
        %v6722 = vadd.f32 %v4946, %v6721
        %v6723 = vpop.f32.mrb[0].mxu0
        %6724 = vmatprep.mubr.f32.mxu0 0.0
        %6725 = vmatmul.mubr.f32.gmra.mrb[0].mxu0 %v6503
        %v6726 = vpop.f32.mrb[0].mxu0
        %v6727 = vadd.f32 %v4951, %v6726
        %v6728 = vpop.f32.mrb[0].mxu0
        %6729 = vdwg.mxu0
        %v6731 = vsel %vm501, %v4954, 0
        %v6734 = vsel %vm501, %v4955, 0
        %v6737 = vsel %vm501, %v4956, 0
        %v6740 = vsel %vm501, %v4957, 0
        %v6743 = vsel %vm501, %v4958, 0
        %v6746 = vsel %vm501, %v4959, 0
        %v6749 = vsel %vm501, %v4960, 0
        %v6752 = vsel %vm501, %v4961, 0
        %v6755 = vsel %vm501, %v4962, 0
        %v6758 = vsel %vm501, %v4963, 0
        %v6761 = vsel %vm501, %v4964, 0
        %v6764 = vsel %vm501, %v4965, 0
        %v6767 = vsel %vm501, %v4966, 0
        %v6770 = vsel %vm501, %v4967, 0
        %v6773 = vsel %vm501, %v4968, 0
        %v6776 = vsel %vm501, %v4969, 0
        %v6779 = vsel %vm501, %v4970, 0
        %v6782 = vsel %vm501, %v4971, 0
        %v6785 = vsel %vm501, %v4972, 0
        %v6788 = vsel %vm501, %v4973, 0
        %v6791 = vsel %vm501, %v4974, 0
        %v6794 = vsel %vm501, %v4975, 0
        %v6797 = vsel %vm501, %v4976, 0
        %v6800 = vsel %vm501, %v4977, 0
        %v6803 = vsel %vm501, %v4978, 0
        %v6806 = vsel %vm501, %v4979, 0
        %v6809 = vsel %vm501, %v4980, 0
        %v6812 = vsel %vm501, %v4981, 0
        %v6815 = vsel %vm501, %v4982, 0
        %v6818 = vsel %vm501, %v4983, 0
        %v6821 = vsel %vm501, %v4984, 0
        %v6824 = vsel %vm501, %v4985, 0
        %6826 = vmatprep.subr.mxu0 0.0
        %6827 = vmatpush1.msra.mxu0 %v4987
        %6828 = vmatprep.subr.mxu0 0.0
        %6829 = vmatpush1.msra.mxu0 0.0
        %6830 = vmatprep.subr.mxu0 0.0
        %6831 = vmatpush1.msra.mxu0 0.0
        %6832 = vmatprep.subr.mxu0 0.0
        %6833 = vmatpush1.msra.mxu0 0.0
        %6834 = vmatprep.subr.mxu0 0.0
        %6835 = vmatpush1.msra.mxu0 0.0
        %6836 = vmatprep.subr.mxu0 0.0
        %6837 = vmatpush1.msra.mxu0 0.0
        %6838 = vmatprep.subr.mxu0 0.0
        %6839 = vmatpush1.msra.mxu0 0.0
        %6840 = vmatprep.subr.mxu0 0.0
        %6841 = vmatpush1.msra.mxu0 0.0
        %6842 = vmatprep.subr.mxu0 0.0
        %6843 = vmatpush1.msra.mxu0 0.0
        %6844 = vmatprep.subr.mxu0 0.0
        %6845 = vmatpush1.msra.mxu0 0.0
        %6846 = vmatprep.subr.mxu0 0.0
        %6847 = vmatpush1.msra.mxu0 0.0
        %6848 = vmatprep.subr.mxu0 0.0
        %6849 = vmatpush1.msra.mxu0 0.0
        %6850 = vmatprep.subr.mxu0 0.0
        %6851 = vmatpush1.msra.mxu0 0.0
        %6852 = vmatprep.subr.mxu0 0.0
        %6853 = vmatpush1.msra.mxu0 0.0
        %6854 = vmatprep.subr.mxu0 0.0
        %6855 = vmatpush1.msra.mxu0 0.0
        %6856 = vmatprep.subr.mxu0 0.0
        %6857 = vmatpush1.msra.mxu0 0.0
        %6858 = vmatprep.subr.mxu0 0.0
        %6859 = vmatpush1.msra.mxu0 0.0
        %6860 = vmatprep.subr.mxu0 0.0
        %6861 = vmatpush1.msra.mxu0 0.0
        %6862 = vmatprep.subr.mxu0 0.0
        %6863 = vmatpush1.msra.mxu0 0.0
        %6864 = vmatprep.subr.mxu0 0.0
        %6865 = vmatpush1.msra.mxu0 0.0
        %6866 = vmatprep.subr.mxu0 0.0
        %6867 = vmatpush1.msra.mxu0 0.0
        %6868 = vmatprep.subr.mxu0 0.0
        %6869 = vmatpush1.msra.mxu0 0.0
        %6870 = vmatprep.subr.mxu0 0.0
        %6871 = vmatpush1.msra.mxu0 0.0
        %6872 = vmatprep.subr.mxu0 0.0
        %6873 = vmatpush1.msra.mxu0 0.0
        %6874 = vmatprep.subr.mxu0 0.0
        %6875 = vmatpush1.msra.mxu0 0.0
        %6876 = vmatprep.subr.mxu0 0.0
        %6877 = vmatpush1.msra.mxu0 0.0
        %6878 = vmatprep.subr.mxu0 0.0
        %6879 = vmatpush1.msra.mxu0 0.0
        %6880 = vmatprep.subr.mxu0 0.0
        %6881 = vmatpush1.msra.mxu0 0.0
        %6882 = vmatprep.subr.mxu0 0.0
        %6883 = vmatpush1.msra.mxu0 0.0
        %6884 = vmatprep.subr.mxu0 0.0
        %6885 = vmatpush1.msra.mxu0 0.0
        %6886 = vmatprep.subr.mxu0 0.0
        %6887 = vmatpush1.msra.mxu0 0.0
        %6888 = vmatprep.subr.mxu0 0.0
        %6889 = vmatpush1.msra.mxu0 0.0
        %6890 = vmatprep.mubr.f32.mxu0 0.0
        %6891 = vmatmul.mubr.f32.gmra.mrb[0].mxu0 %v6731
        %v6892 = vpop.f32.mrb[0].mxu0
        %v6893 = vadd.f32 %v5185, %v6892
        %v6894 = vpop.f32.mrb[0].mxu0
        %6895 = vmatprep.mubr.f32.mxu0 0.0
        %6896 = vmatmul.mubr.f32.gmra.mrb[0].mxu0 %v6734
        %v6897 = vpop.f32.mrb[0].mxu0
        %v6898 = vadd.f32 %v5190, %v6897
        %v6899 = vpop.f32.mrb[0].mxu0
        %6900 = vmatprep.mubr.f32.mxu0 0.0
        %6901 = vmatmul.mubr.f32.gmra.mrb[0].mxu0 %v6737
        %v6902 = vpop.f32.mrb[0].mxu0
        %v6903 = vadd.f32 %v5195, %v6902
        %v6904 = vpop.f32.mrb[0].mxu0
        %6905 = vmatprep.mubr.f32.mxu0 0.0
        %6906 = vmatmul.mubr.f32.gmra.mrb[0].mxu0 %v6740
        %v6907 = vpop.f32.mrb[0].mxu0
        %v6908 = vadd.f32 %v5200, %v6907
        %v6909 = vpop.f32.mrb[0].mxu0
        %6910 = vmatprep.mubr.f32.mxu0 0.0
        %6911 = vmatmul.mubr.f32.gmra.mrb[0].mxu0 %v6743
        %v6912 = vpop.f32.mrb[0].mxu0
        %v6913 = vadd.f32 %v5205, %v6912
        %v6914 = vpop.f32.mrb[0].mxu0
        %6915 = vmatprep.mubr.f32.mxu0 0.0
        %6916 = vmatmul.mubr.f32.gmra.mrb[0].mxu0 %v6746
        %v6917 = vpop.f32.mrb[0].mxu0
        %v6918 = vadd.f32 %v5210, %v6917
        %v6919 = vpop.f32.mrb[0].mxu0
        %6920 = vmatprep.mubr.f32.mxu0 0.0
        %6921 = vmatmul.mubr.f32.gmra.mrb[0].mxu0 %v6749
        %v6922 = vpop.f32.mrb[0].mxu0
        %v6923 = vadd.f32 %v5215, %v6922
        %v6924 = vpop.f32.mrb[0].mxu0
        %6925 = vmatprep.mubr.f32.mxu0 0.0
        %6926 = vmatmul.mubr.f32.gmra.mrb[0].mxu0 %v6752
        %v6927 = vpop.f32.mrb[0].mxu0
        %v6928 = vadd.f32 %v5220, %v6927
        %v6929 = vpop.f32.mrb[0].mxu0
        %6930 = vmatprep.mubr.f32.mxu0 0.0
        %6931 = vmatmul.mubr.f32.gmra.mrb[0].mxu0 %v6755
        %v6932 = vpop.f32.mrb[0].mxu0
        %v6933 = vadd.f32 %v5225, %v6932
        %v6934 = vpop.f32.mrb[0].mxu0
        %6935 = vmatprep.mubr.f32.mxu0 0.0
        %6936 = vmatmul.mubr.f32.gmra.mrb[0].mxu0 %v6758
        %v6937 = vpop.f32.mrb[0].mxu0
        %v6938 = vadd.f32 %v5230, %v6937
        %v6939 = vpop.f32.mrb[0].mxu0
        %6940 = vmatprep.mubr.f32.mxu0 0.0
        %6941 = vmatmul.mubr.f32.gmra.mrb[0].mxu0 %v6761
        %v6942 = vpop.f32.mrb[0].mxu0
        %v6943 = vadd.f32 %v5235, %v6942
        %v6944 = vpop.f32.mrb[0].mxu0
        %6945 = vmatprep.mubr.f32.mxu0 0.0
        %6946 = vmatmul.mubr.f32.gmra.mrb[0].mxu0 %v6764
        %v6947 = vpop.f32.mrb[0].mxu0
        %v6948 = vadd.f32 %v5240, %v6947
        %v6949 = vpop.f32.mrb[0].mxu0
        %6950 = vmatprep.mubr.f32.mxu0 0.0
        %6951 = vmatmul.mubr.f32.gmra.mrb[0].mxu0 %v6767
        %v6952 = vpop.f32.mrb[0].mxu0
        %v6953 = vadd.f32 %v5245, %v6952
        %v6954 = vpop.f32.mrb[0].mxu0
        %6955 = vmatprep.mubr.f32.mxu0 0.0
        %6956 = vmatmul.mubr.f32.gmra.mrb[0].mxu0 %v6770
        %v6957 = vpop.f32.mrb[0].mxu0
        %v6958 = vadd.f32 %v5250, %v6957
        %v6959 = vpop.f32.mrb[0].mxu0
        %6960 = vmatprep.mubr.f32.mxu0 0.0
        %6961 = vmatmul.mubr.f32.gmra.mrb[0].mxu0 %v6773
        %v6962 = vpop.f32.mrb[0].mxu0
        %v6963 = vadd.f32 %v5255, %v6962
        %v6964 = vpop.f32.mrb[0].mxu0
        %6965 = vmatprep.mubr.f32.mxu0 0.0
        %6966 = vmatmul.mubr.f32.gmra.mrb[0].mxu0 %v6776
        %v6967 = vpop.f32.mrb[0].mxu0
        %v6968 = vadd.f32 %v5260, %v6967
        %v6969 = vpop.f32.mrb[0].mxu0
        %6970 = vmatprep.mubr.f32.mxu0 0.0
        %6971 = vmatmul.mubr.f32.gmra.mrb[0].mxu0 %v6779
        %v6972 = vpop.f32.mrb[0].mxu0
        %v6973 = vadd.f32 %v5265, %v6972
        %v6974 = vpop.f32.mrb[0].mxu0
        %6975 = vmatprep.mubr.f32.mxu0 0.0
        %6976 = vmatmul.mubr.f32.gmra.mrb[0].mxu0 %v6782
        %v6977 = vpop.f32.mrb[0].mxu0
        %v6978 = vadd.f32 %v5270, %v6977
        %v6979 = vpop.f32.mrb[0].mxu0
        %6980 = vmatprep.mubr.f32.mxu0 0.0
        %6981 = vmatmul.mubr.f32.gmra.mrb[0].mxu0 %v6785
        %v6982 = vpop.f32.mrb[0].mxu0
        %v6983 = vadd.f32 %v5275, %v6982
        %v6984 = vpop.f32.mrb[0].mxu0
        %6985 = vmatprep.mubr.f32.mxu0 0.0
        %6986 = vmatmul.mubr.f32.gmra.mrb[0].mxu0 %v6788
        %v6987 = vpop.f32.mrb[0].mxu0
        %v6988 = vadd.f32 %v5280, %v6987
        %v6989 = vpop.f32.mrb[0].mxu0
        %6990 = vmatprep.mubr.f32.mxu0 0.0
        %6991 = vmatmul.mubr.f32.gmra.mrb[0].mxu0 %v6791
        %v6992 = vpop.f32.mrb[0].mxu0
        %v6993 = vadd.f32 %v5285, %v6992
        %v6994 = vpop.f32.mrb[0].mxu0
        %6995 = vmatprep.mubr.f32.mxu0 0.0
        %6996 = vmatmul.mubr.f32.gmra.mrb[0].mxu0 %v6794
        %v6997 = vpop.f32.mrb[0].mxu0
        %v6998 = vadd.f32 %v5290, %v6997
        %v6999 = vpop.f32.mrb[0].mxu0
        %7000 = vmatprep.mubr.f32.mxu0 0.0
        %7001 = vmatmul.mubr.f32.gmra.mrb[0].mxu0 %v6797
        %v7002 = vpop.f32.mrb[0].mxu0
        %v7003 = vadd.f32 %v5295, %v7002
        %v7004 = vpop.f32.mrb[0].mxu0
        %7005 = vmatprep.mubr.f32.mxu0 0.0
        %7006 = vmatmul.mubr.f32.gmra.mrb[0].mxu0 %v6800
        %v7007 = vpop.f32.mrb[0].mxu0
        %v7008 = vadd.f32 %v5300, %v7007
        %v7009 = vpop.f32.mrb[0].mxu0
        %7010 = vmatprep.mubr.f32.mxu0 0.0
        %7011 = vmatmul.mubr.f32.gmra.mrb[0].mxu0 %v6803
        %v7012 = vpop.f32.mrb[0].mxu0
        %v7013 = vadd.f32 %v5305, %v7012
        %v7014 = vpop.f32.mrb[0].mxu0
        %7015 = vmatprep.mubr.f32.mxu0 0.0
        %7016 = vmatmul.mubr.f32.gmra.mrb[0].mxu0 %v6806
        %v7017 = vpop.f32.mrb[0].mxu0
        %v7018 = vadd.f32 %v5310, %v7017
        %v7019 = vpop.f32.mrb[0].mxu0
        %7020 = vmatprep.mubr.f32.mxu0 0.0
        %7021 = vmatmul.mubr.f32.gmra.mrb[0].mxu0 %v6809
        %v7022 = vpop.f32.mrb[0].mxu0
        %v7023 = vadd.f32 %v5315, %v7022
        %v7024 = vpop.f32.mrb[0].mxu0
        %7025 = vmatprep.mubr.f32.mxu0 0.0
        %7026 = vmatmul.mubr.f32.gmra.mrb[0].mxu0 %v6812
        %v7027 = vpop.f32.mrb[0].mxu0
        %v7028 = vadd.f32 %v5320, %v7027
        %v7029 = vpop.f32.mrb[0].mxu0
        %7030 = vmatprep.mubr.f32.mxu0 0.0
        %7031 = vmatmul.mubr.f32.gmra.mrb[0].mxu0 %v6815
        %v7032 = vpop.f32.mrb[0].mxu0
        %v7033 = vadd.f32 %v5325, %v7032
        %v7034 = vpop.f32.mrb[0].mxu0
        %7035 = vmatprep.mubr.f32.mxu0 0.0
        %7036 = vmatmul.mubr.f32.gmra.mrb[0].mxu0 %v6818
        %v7037 = vpop.f32.mrb[0].mxu0
        %v7038 = vadd.f32 %v5330, %v7037
        %v7039 = vpop.f32.mrb[0].mxu0
        %7040 = vmatprep.mubr.f32.mxu0 0.0
        %7041 = vmatmul.mubr.f32.gmra.mrb[0].mxu0 %v6821
        %v7042 = vpop.f32.mrb[0].mxu0
        %v7043 = vadd.f32 %v5335, %v7042
        %v7044 = vpop.f32.mrb[0].mxu0
        %7045 = vmatprep.mubr.f32.mxu0 0.0
        %7046 = vmatmul.mubr.f32.gmra.mrb[0].mxu0 %v6824
        %v7047 = vpop.f32.mrb[0].mxu0
        %v7048 = vadd.f32 %v5340, %v7047
        %v7049 = vpop.f32.mrb[0].mxu0
        %7050 = vdwg.mxu0
        %v7052 = vsel %vm501, %v5344, 0
        %v7055 = vsel %vm501, %v5345, 0
        %v7058 = vsel %vm501, %v5346, 0
        %v7061 = vsel %vm501, %v5347, 0
        %v7064 = vsel %vm501, %v5348, 0
        %v7067 = vsel %vm501, %v5349, 0
        %v7070 = vsel %vm501, %v5350, 0
        %v7073 = vsel %vm501, %v5351, 0
        %v7076 = vsel %vm501, %v5352, 0
        %v7079 = vsel %vm501, %v5353, 0
        %v7082 = vsel %vm501, %v5354, 0
        %v7085 = vsel %vm501, %v5355, 0
        %v7088 = vsel %vm501, %v5356, 0
        %v7091 = vsel %vm501, %v5357, 0
        %v7094 = vsel %vm501, %v5358, 0
        %v7097 = vsel %vm501, %v5359, 0
        %v7100 = vsel %vm501, %v5360, 0
        %v7103 = vsel %vm501, %v5361, 0
        %v7106 = vsel %vm501, %v5362, 0
        %v7109 = vsel %vm501, %v5363, 0
        %v7112 = vsel %vm501, %v5364, 0
        %v7115 = vsel %vm501, %v5365, 0
        %v7118 = vsel %vm501, %v5366, 0
        %v7121 = vsel %vm501, %v5367, 0
        %v7124 = vsel %vm501, %v5368, 0
        %v7127 = vsel %vm501, %v5369, 0
        %v7130 = vsel %vm501, %v5370, 0
        %v7133 = vsel %vm501, %v5371, 0
        %v7136 = vsel %vm501, %v5372, 0
        %v7139 = vsel %vm501, %v5373, 0
        %v7142 = vsel %vm501, %v5374, 0
        %v7145 = vsel %vm501, %v5375, 0
        %7147 = vmatprep.subr.mxu0 0.0
        %7148 = vmatpush1.msra.mxu0 %v5377
        %7149 = vmatprep.subr.mxu0 0.0
        %7150 = vmatpush1.msra.mxu0 0.0
        %7151 = vmatprep.subr.mxu0 0.0
        %7152 = vmatpush1.msra.mxu0 0.0
        %7153 = vmatprep.subr.mxu0 0.0
        %7154 = vmatpush1.msra.mxu0 0.0
        %7155 = vmatprep.subr.mxu0 0.0
        %7156 = vmatpush1.msra.mxu0 0.0
        %7157 = vmatprep.subr.mxu0 0.0
        %7158 = vmatpush1.msra.mxu0 0.0
        %7159 = vmatprep.subr.mxu0 0.0
        %7160 = vmatpush1.msra.mxu0 0.0
        %7161 = vmatprep.subr.mxu0 0.0
        %7162 = vmatpush1.msra.mxu0 0.0
        %7163 = vmatprep.subr.mxu0 0.0
        %7164 = vmatpush1.msra.mxu0 0.0
        %7165 = vmatprep.subr.mxu0 0.0
        %7166 = vmatpush1.msra.mxu0 0.0
        %7167 = vmatprep.subr.mxu0 0.0
        %7168 = vmatpush1.msra.mxu0 0.0
        %7169 = vmatprep.subr.mxu0 0.0
        %7170 = vmatpush1.msra.mxu0 0.0
        %7171 = vmatprep.subr.mxu0 0.0
        %7172 = vmatpush1.msra.mxu0 0.0
        %7173 = vmatprep.subr.mxu0 0.0
        %7174 = vmatpush1.msra.mxu0 0.0
        %7175 = vmatprep.subr.mxu0 0.0
        %7176 = vmatpush1.msra.mxu0 0.0
        %7177 = vmatprep.subr.mxu0 0.0
        %7178 = vmatpush1.msra.mxu0 0.0
        %7179 = vmatprep.subr.mxu0 0.0
        %7180 = vmatpush1.msra.mxu0 0.0
        %7181 = vmatprep.subr.mxu0 0.0
        %7182 = vmatpush1.msra.mxu0 0.0
        %7183 = vmatprep.subr.mxu0 0.0
        %7184 = vmatpush1.msra.mxu0 0.0
        %7185 = vmatprep.subr.mxu0 0.0
        %7186 = vmatpush1.msra.mxu0 0.0
        %7187 = vmatprep.subr.mxu0 0.0
        %7188 = vmatpush1.msra.mxu0 0.0
        %7189 = vmatprep.subr.mxu0 0.0
        %7190 = vmatpush1.msra.mxu0 0.0
        %7191 = vmatprep.subr.mxu0 0.0
        %7192 = vmatpush1.msra.mxu0 0.0
        %7193 = vmatprep.subr.mxu0 0.0
        %7194 = vmatpush1.msra.mxu0 0.0
        %7195 = vmatprep.subr.mxu0 0.0
        %7196 = vmatpush1.msra.mxu0 0.0
        %7197 = vmatprep.subr.mxu0 0.0
        %7198 = vmatpush1.msra.mxu0 0.0
        %7199 = vmatprep.subr.mxu0 0.0
        %7200 = vmatpush1.msra.mxu0 0.0
        %7201 = vmatprep.subr.mxu0 0.0
        %7202 = vmatpush1.msra.mxu0 0.0
        %7203 = vmatprep.subr.mxu0 0.0
        %7204 = vmatpush1.msra.mxu0 0.0
        %7205 = vmatprep.subr.mxu0 0.0
        %7206 = vmatpush1.msra.mxu0 0.0
        %7207 = vmatprep.subr.mxu0 0.0
        %7208 = vmatpush1.msra.mxu0 0.0
        %7209 = vmatprep.subr.mxu0 0.0
        %7210 = vmatpush1.msra.mxu0 0.0
        %7211 = vmatprep.mubr.f32.mxu0 0.0
        %7212 = vmatmul.mubr.f32.gmra.mrb[0].mxu0 %v7052
        %v7213 = vpop.f32.mrb[0].mxu0
        %v7214 = vadd.f32 %v5575, %v7213
        %v7215 = vpop.f32.mrb[0].mxu0
        %7216 = vmatprep.mubr.f32.mxu0 0.0
        %7217 = vmatmul.mubr.f32.gmra.mrb[0].mxu0 %v7055
        %v7218 = vpop.f32.mrb[0].mxu0
        %v7219 = vadd.f32 %v5580, %v7218
        %v7220 = vpop.f32.mrb[0].mxu0
        %7221 = vmatprep.mubr.f32.mxu0 0.0
        %7222 = vmatmul.mubr.f32.gmra.mrb[0].mxu0 %v7058
        %v7223 = vpop.f32.mrb[0].mxu0
        %v7224 = vadd.f32 %v5585, %v7223
        %v7225 = vpop.f32.mrb[0].mxu0
        %7226 = vmatprep.mubr.f32.mxu0 0.0
        %7227 = vmatmul.mubr.f32.gmra.mrb[0].mxu0 %v7061
        %v7228 = vpop.f32.mrb[0].mxu0
        %v7229 = vadd.f32 %v5590, %v7228
        %v7230 = vpop.f32.mrb[0].mxu0
        %7231 = vmatprep.mubr.f32.mxu0 0.0
        %7232 = vmatmul.mubr.f32.gmra.mrb[0].mxu0 %v7064
        %v7233 = vpop.f32.mrb[0].mxu0
        %v7234 = vadd.f32 %v5595, %v7233
        %v7235 = vpop.f32.mrb[0].mxu0
        %7236 = vmatprep.mubr.f32.mxu0 0.0
        %7237 = vmatmul.mubr.f32.gmra.mrb[0].mxu0 %v7067
        %v7238 = vpop.f32.mrb[0].mxu0
        %v7239 = vadd.f32 %v5600, %v7238
        %v7240 = vpop.f32.mrb[0].mxu0
        %7241 = vmatprep.mubr.f32.mxu0 0.0
        %7242 = vmatmul.mubr.f32.gmra.mrb[0].mxu0 %v7070
        %v7243 = vpop.f32.mrb[0].mxu0
        %v7244 = vadd.f32 %v5605, %v7243
        %v7245 = vpop.f32.mrb[0].mxu0
        %7246 = vmatprep.mubr.f32.mxu0 0.0
        %7247 = vmatmul.mubr.f32.gmra.mrb[0].mxu0 %v7073
        %v7248 = vpop.f32.mrb[0].mxu0
        %v7249 = vadd.f32 %v5610, %v7248
        %v7250 = vpop.f32.mrb[0].mxu0
        %7251 = vmatprep.mubr.f32.mxu0 0.0
        %7252 = vmatmul.mubr.f32.gmra.mrb[0].mxu0 %v7076
        %v7253 = vpop.f32.mrb[0].mxu0
        %v7254 = vadd.f32 %v5615, %v7253
        %v7255 = vpop.f32.mrb[0].mxu0
        %7256 = vmatprep.mubr.f32.mxu0 0.0
        %7257 = vmatmul.mubr.f32.gmra.mrb[0].mxu0 %v7079
        %v7258 = vpop.f32.mrb[0].mxu0
        %v7259 = vadd.f32 %v5620, %v7258
        %v7260 = vpop.f32.mrb[0].mxu0
        %7261 = vmatprep.mubr.f32.mxu0 0.0
        %7262 = vmatmul.mubr.f32.gmra.mrb[0].mxu0 %v7082
        %v7263 = vpop.f32.mrb[0].mxu0
        %v7264 = vadd.f32 %v5625, %v7263
        %v7265 = vpop.f32.mrb[0].mxu0
        %7266 = vmatprep.mubr.f32.mxu0 0.0
        %7267 = vmatmul.mubr.f32.gmra.mrb[0].mxu0 %v7085
        %v7268 = vpop.f32.mrb[0].mxu0
        %v7269 = vadd.f32 %v5630, %v7268
        %v7270 = vpop.f32.mrb[0].mxu0
        %7271 = vmatprep.mubr.f32.mxu0 0.0
        %7272 = vmatmul.mubr.f32.gmra.mrb[0].mxu0 %v7088
        %v7273 = vpop.f32.mrb[0].mxu0
        %v7274 = vadd.f32 %v5635, %v7273
        %v7275 = vpop.f32.mrb[0].mxu0
        %7276 = vmatprep.mubr.f32.mxu0 0.0
        %7277 = vmatmul.mubr.f32.gmra.mrb[0].mxu0 %v7091
        %v7278 = vpop.f32.mrb[0].mxu0
        %v7279 = vadd.f32 %v5640, %v7278
        %v7280 = vpop.f32.mrb[0].mxu0
        %7281 = vmatprep.mubr.f32.mxu0 0.0
        %7282 = vmatmul.mubr.f32.gmra.mrb[0].mxu0 %v7094
        %v7283 = vpop.f32.mrb[0].mxu0
        %v7284 = vadd.f32 %v5645, %v7283
        %v7285 = vpop.f32.mrb[0].mxu0
        %7286 = vmatprep.mubr.f32.mxu0 0.0
        %7287 = vmatmul.mubr.f32.gmra.mrb[0].mxu0 %v7097
        %v7288 = vpop.f32.mrb[0].mxu0
        %v7289 = vadd.f32 %v5650, %v7288
        %v7290 = vpop.f32.mrb[0].mxu0
        %7291 = vmatprep.mubr.f32.mxu0 0.0
        %7292 = vmatmul.mubr.f32.gmra.mrb[0].mxu0 %v7100
        %v7293 = vpop.f32.mrb[0].mxu0
        %v7294 = vadd.f32 %v5655, %v7293
        %v7295 = vpop.f32.mrb[0].mxu0
        %7296 = vmatprep.mubr.f32.mxu0 0.0
        %7297 = vmatmul.mubr.f32.gmra.mrb[0].mxu0 %v7103
        %v7298 = vpop.f32.mrb[0].mxu0
        %v7299 = vadd.f32 %v5660, %v7298
        %v7300 = vpop.f32.mrb[0].mxu0
        %7301 = vmatprep.mubr.f32.mxu0 0.0
        %7302 = vmatmul.mubr.f32.gmra.mrb[0].mxu0 %v7106
        %v7303 = vpop.f32.mrb[0].mxu0
        %v7304 = vadd.f32 %v5665, %v7303
        %v7305 = vpop.f32.mrb[0].mxu0
        %7306 = vmatprep.mubr.f32.mxu0 0.0
        %7307 = vmatmul.mubr.f32.gmra.mrb[0].mxu0 %v7109
        %v7308 = vpop.f32.mrb[0].mxu0
        %v7309 = vadd.f32 %v5670, %v7308
        %v7310 = vpop.f32.mrb[0].mxu0
        %7311 = vmatprep.mubr.f32.mxu0 0.0
        %7312 = vmatmul.mubr.f32.gmra.mrb[0].mxu0 %v7112
        %v7313 = vpop.f32.mrb[0].mxu0
        %v7314 = vadd.f32 %v5675, %v7313
        %v7315 = vpop.f32.mrb[0].mxu0
        %7316 = vmatprep.mubr.f32.mxu0 0.0
        %7317 = vmatmul.mubr.f32.gmra.mrb[0].mxu0 %v7115
        %v7318 = vpop.f32.mrb[0].mxu0
        %v7319 = vadd.f32 %v5680, %v7318
        %v7320 = vpop.f32.mrb[0].mxu0
        %7321 = vmatprep.mubr.f32.mxu0 0.0
        %7322 = vmatmul.mubr.f32.gmra.mrb[0].mxu0 %v7118
        %v7323 = vpop.f32.mrb[0].mxu0
        %v7324 = vadd.f32 %v5685, %v7323
        %v7325 = vpop.f32.mrb[0].mxu0
        %7326 = vmatprep.mubr.f32.mxu0 0.0
        %7327 = vmatmul.mubr.f32.gmra.mrb[0].mxu0 %v7121
        %v7328 = vpop.f32.mrb[0].mxu0
        %v7329 = vadd.f32 %v5690, %v7328
        %v7330 = vpop.f32.mrb[0].mxu0
        %7331 = vmatprep.mubr.f32.mxu0 0.0
        %7332 = vmatmul.mubr.f32.gmra.mrb[0].mxu0 %v7124
        %v7333 = vpop.f32.mrb[0].mxu0
        %v7334 = vadd.f32 %v5695, %v7333
        %v7335 = vpop.f32.mrb[0].mxu0
        %7336 = vmatprep.mubr.f32.mxu0 0.0
        %7337 = vmatmul.mubr.f32.gmra.mrb[0].mxu0 %v7127
        %v7338 = vpop.f32.mrb[0].mxu0
        %v7339 = vadd.f32 %v5700, %v7338
        %v7340 = vpop.f32.mrb[0].mxu0
        %7341 = vmatprep.mubr.f32.mxu0 0.0
        %7342 = vmatmul.mubr.f32.gmra.mrb[0].mxu0 %v7130
        %v7343 = vpop.f32.mrb[0].mxu0
        %v7344 = vadd.f32 %v5705, %v7343
        %v7345 = vpop.f32.mrb[0].mxu0
        %7346 = vmatprep.mubr.f32.mxu0 0.0
        %7347 = vmatmul.mubr.f32.gmra.mrb[0].mxu0 %v7133
        %v7348 = vpop.f32.mrb[0].mxu0
        %v7349 = vadd.f32 %v5710, %v7348
        %v7350 = vpop.f32.mrb[0].mxu0
        %7351 = vmatprep.mubr.f32.mxu0 0.0
        %7352 = vmatmul.mubr.f32.gmra.mrb[0].mxu0 %v7136
        %v7353 = vpop.f32.mrb[0].mxu0
        %v7354 = vadd.f32 %v5715, %v7353
        %v7355 = vpop.f32.mrb[0].mxu0
        %7356 = vmatprep.mubr.f32.mxu0 0.0
        %7357 = vmatmul.mubr.f32.gmra.mrb[0].mxu0 %v7139
        %v7358 = vpop.f32.mrb[0].mxu0
        %v7359 = vadd.f32 %v5720, %v7358
        %v7360 = vpop.f32.mrb[0].mxu0
        %7361 = vmatprep.mubr.f32.mxu0 0.0
        %7362 = vmatmul.mubr.f32.gmra.mrb[0].mxu0 %v7142
        %v7363 = vpop.f32.mrb[0].mxu0
        %v7364 = vadd.f32 %v5725, %v7363
        %v7365 = vpop.f32.mrb[0].mxu0
        %7366 = vmatprep.mubr.f32.mxu0 0.0
        %7367 = vmatmul.mubr.f32.gmra.mrb[0].mxu0 %v7145
        %v7368 = vpop.f32.mrb[0].mxu0
        %v7369 = vadd.f32 %v5730, %v7368
        %v7370 = vpop.f32.mrb[0].mxu0
        %7371 = vdwg.mxu0
        %v7372 = vadd.f32 %v6251, %v6572
        %v7373 = vadd.f32 %v6256, %v6577
        %v7374 = vadd.f32 %v6261, %v6582
        %v7375 = vadd.f32 %v6266, %v6587
        %v7376 = vadd.f32 %v6271, %v6592
        %v7377 = vadd.f32 %v6276, %v6597
        %v7378 = vadd.f32 %v6281, %v6602
        %v7379 = vadd.f32 %v6286, %v6607
        %v7380 = vadd.f32 %v6291, %v6612
        %v7381 = vadd.f32 %v6296, %v6617
        %v7382 = vadd.f32 %v6301, %v6622
        %v7383 = vadd.f32 %v6306, %v6627
        %v7384 = vadd.f32 %v6311, %v6632
        %v7385 = vadd.f32 %v6316, %v6637
        %v7386 = vadd.f32 %v6321, %v6642
        %v7387 = vadd.f32 %v6326, %v6647
        %v7388 = vadd.f32 %v6331, %v6652
        %v7389 = vadd.f32 %v6336, %v6657
        %v7390 = vadd.f32 %v6341, %v6662
        %v7391 = vadd.f32 %v6346, %v6667
        %v7392 = vadd.f32 %v6351, %v6672
        %v7393 = vadd.f32 %v6356, %v6677
        %v7394 = vadd.f32 %v6361, %v6682
        %v7395 = vadd.f32 %v6366, %v6687
        %v7396 = vadd.f32 %v6371, %v6692
        %v7397 = vadd.f32 %v6376, %v6697
        %v7398 = vadd.f32 %v6381, %v6702
        %v7399 = vadd.f32 %v6386, %v6707
        %v7400 = vadd.f32 %v6391, %v6712
        %v7401 = vadd.f32 %v6396, %v6717
        %v7402 = vadd.f32 %v6401, %v6722
        %v7403 = vadd.f32 %v6406, %v6727
        %v7404 = vadd.f32 %v6893, %v7214
        %v7405 = vadd.f32 %v6898, %v7219
        %v7406 = vadd.f32 %v6903, %v7224
        %v7407 = vadd.f32 %v6908, %v7229
        %v7408 = vadd.f32 %v6913, %v7234
        %v7409 = vadd.f32 %v6918, %v7239
        %v7410 = vadd.f32 %v6923, %v7244
        %v7411 = vadd.f32 %v6928, %v7249
        %v7412 = vadd.f32 %v6933, %v7254
        %v7413 = vadd.f32 %v6938, %v7259
        %v7414 = vadd.f32 %v6943, %v7264
        %v7415 = vadd.f32 %v6948, %v7269
        %v7416 = vadd.f32 %v6953, %v7274
        %v7417 = vadd.f32 %v6958, %v7279
        %v7418 = vadd.f32 %v6963, %v7284
        %v7419 = vadd.f32 %v6968, %v7289
        %v7420 = vadd.f32 %v6973, %v7294
        %v7421 = vadd.f32 %v6978, %v7299
        %v7422 = vadd.f32 %v6983, %v7304
        %v7423 = vadd.f32 %v6988, %v7309
        %v7424 = vadd.f32 %v6993, %v7314
        %v7425 = vadd.f32 %v6998, %v7319
        %v7426 = vadd.f32 %v7003, %v7324
        %v7427 = vadd.f32 %v7008, %v7329
        %v7428 = vadd.f32 %v7013, %v7334
        %v7429 = vadd.f32 %v7018, %v7339
        %v7430 = vadd.f32 %v7023, %v7344
        %v7431 = vadd.f32 %v7028, %v7349
        %v7432 = vadd.f32 %v7033, %v7354
        %v7433 = vadd.f32 %v7038, %v7359
        %v7434 = vadd.f32 %v7043, %v7364
        %v7435 = vadd.f32 %v7048, %v7369
        %v7436 = vadd.f32 %v7372, %v7404
        %v7437 = vadd.f32 %v7373, %v7405
        %v7438 = vadd.f32 %v7374, %v7406
        %v7439 = vadd.f32 %v7375, %v7407
        %v7440 = vadd.f32 %v7376, %v7408
        %v7441 = vadd.f32 %v7377, %v7409
        %v7442 = vadd.f32 %v7378, %v7410
        %v7443 = vadd.f32 %v7379, %v7411
        %v7444 = vadd.f32 %v7380, %v7412
        %v7445 = vadd.f32 %v7381, %v7413
        %v7446 = vadd.f32 %v7382, %v7414
        %v7447 = vadd.f32 %v7383, %v7415
        %v7448 = vadd.f32 %v7384, %v7416
        %v7449 = vadd.f32 %v7385, %v7417
        %v7450 = vadd.f32 %v7386, %v7418
        %v7451 = vadd.f32 %v7387, %v7419
        %v7452 = vadd.f32 %v7388, %v7420
        %v7453 = vadd.f32 %v7389, %v7421
        %v7454 = vadd.f32 %v7390, %v7422
        %v7455 = vadd.f32 %v7391, %v7423
        %v7456 = vadd.f32 %v7392, %v7424
        %v7457 = vadd.f32 %v7393, %v7425
        %v7458 = vadd.f32 %v7394, %v7426
        %v7459 = vadd.f32 %v7395, %v7427
        %v7460 = vadd.f32 %v7396, %v7428
        %v7461 = vadd.f32 %v7397, %v7429
        %v7462 = vadd.f32 %v7398, %v7430
        %v7463 = vadd.f32 %v7399, %v7431
        %v7464 = vadd.f32 %v7400, %v7432
        %v7465 = vadd.f32 %v7401, %v7433
        %v7466 = vadd.f32 %v7402, %v7434
        %v7467 = vadd.f32 %v7403, %v7435
        %v7468 = vadd.f32 %v7436, %v5930
        %v7469 = vadd.f32 %v7437, %v5935
        %v7470 = vadd.f32 %v7438, %v5940
        %v7471 = vadd.f32 %v7439, %v5945
        %v7472 = vadd.f32 %v7440, %v5950
        %v7473 = vadd.f32 %v7441, %v5955
        %v7474 = vadd.f32 %v7442, %v5960
        %v7475 = vadd.f32 %v7443, %v5965
        %v7476 = vadd.f32 %v7444, %v5970
        %v7477 = vadd.f32 %v7445, %v5975
        %v7478 = vadd.f32 %v7446, %v5980
        %v7479 = vadd.f32 %v7447, %v5985
        %v7480 = vadd.f32 %v7448, %v5990
        %v7481 = vadd.f32 %v7449, %v5995
        %v7482 = vadd.f32 %v7450, %v6000
        %v7483 = vadd.f32 %v7451, %v6005
        %v7484 = vadd.f32 %v7452, %v6010
        %v7485 = vadd.f32 %v7453, %v6015
        %v7486 = vadd.f32 %v7454, %v6020
        %v7487 = vadd.f32 %v7455, %v6025
        %v7488 = vadd.f32 %v7456, %v6030
        %v7489 = vadd.f32 %v7457, %v6035
        %v7490 = vadd.f32 %v7458, %v6040
        %v7491 = vadd.f32 %v7459, %v6045
        %v7492 = vadd.f32 %v7460, %v6050
        %v7493 = vadd.f32 %v7461, %v6055
        %v7494 = vadd.f32 %v7462, %v6060
        %v7495 = vadd.f32 %v7463, %v6065
        %v7496 = vadd.f32 %v7464, %v6070
        %v7497 = vadd.f32 %v7465, %v6075
        %v7498 = vadd.f32 %v7466, %v6080
        %v7499 = vadd.f32 %v7467, %v6085
        %v7500 = vld [vmem:[#allocation15] sm:$0x1]
        %v7502 = vlaneseq
        %v7503 = vshrl.u32 %v7502, 7
        %v7504 = vsub.s32 0, %v7503
        %v7505 = vrot.slane %v7500, %v7504
        %v7507 = vadd.f32 %v7468, %v7505
        %v7508 = vadd.f32 %v7469, %v7505
        %v7509 = vadd.f32 %v7470, %v7505
        %v7510 = vadd.f32 %v7471, %v7505
        %v7511 = vadd.f32 %v7472, %v7505
        %v7512 = vadd.f32 %v7473, %v7505
        %v7513 = vadd.f32 %v7474, %v7505
        %v7514 = vadd.f32 %v7475, %v7505
        %v7515 = vadd.f32 %v7476, %v7505
        %v7516 = vadd.f32 %v7477, %v7505
        %v7517 = vadd.f32 %v7478, %v7505
        %v7518 = vadd.f32 %v7479, %v7505
        %v7519 = vadd.f32 %v7480, %v7505
        %v7520 = vadd.f32 %v7481, %v7505
        %v7521 = vadd.f32 %v7482, %v7505
        %v7522 = vadd.f32 %v7483, %v7505
        %v7523 = vadd.f32 %v7484, %v7505
        %v7524 = vadd.f32 %v7485, %v7505
        %v7525 = vadd.f32 %v7486, %v7505
        %v7526 = vadd.f32 %v7487, %v7505
        %v7527 = vadd.f32 %v7488, %v7505
        %v7528 = vadd.f32 %v7489, %v7505
        %v7529 = vadd.f32 %v7490, %v7505
        %v7530 = vadd.f32 %v7491, %v7505
        %v7531 = vadd.f32 %v7492, %v7505
        %v7532 = vadd.f32 %v7493, %v7505
        %v7533 = vadd.f32 %v7494, %v7505
        %v7534 = vadd.f32 %v7495, %v7505
        %v7535 = vadd.f32 %v7496, %v7505
        %v7536 = vadd.f32 %v7497, %v7505
        %v7537 = vadd.f32 %v7498, %v7505
        %v7538 = vadd.f32 %v7499, %v7505
        %v7539 = vld [vmem:[#allocation16] sm:$0xf]
        %v7540 = vld [vmem:[#allocation18] sm:$0x1]
        %v7542 = vlaneseq
        %v7543 = vshrl.u32 %v7542, 7
        %v7544 = vsub.s32 0, %v7543
        %v7545 = vrot.slane %v7540, %v7544
        %v7548 = vsel %vm455, %v547, 0
        %v7551 = vsel %vm455, %v548, 0
        %v7554 = vsel %vm455, %v549, 0
        %v7557 = vsel %vm455, %v550, 0
        %v7560 = vsel %vm455, %v551, 0
        %v7563 = vsel %vm455, %v552, 0
        %v7566 = vsel %vm455, %v553, 0
        %v7569 = vsel %vm455, %v554, 0
        %v7572 = vsel %vm455, %v555, 0
        %v7575 = vsel %vm455, %v556, 0
        %v7578 = vsel %vm455, %v557, 0
        %v7581 = vsel %vm455, %v558, 0
        %v7584 = vsel %vm455, %v559, 0
        %v7587 = vsel %vm455, %v560, 0
        %v7590 = vsel %vm455, %v561, 0
        %v7593 = vsel %vm455, %v562, 0
        %v7596 = vsel %vm455, %v563, 0
        %v7599 = vsel %vm455, %v564, 0
        %v7602 = vsel %vm455, %v565, 0
        %v7605 = vsel %vm455, %v566, 0
        %v7608 = vsel %vm455, %v567, 0
        %v7611 = vsel %vm455, %v568, 0
        %v7614 = vsel %vm455, %v569, 0
        %v7617 = vsel %vm455, %v570, 0
        %v7620 = vsel %vm455, %v571, 0
        %v7623 = vsel %vm455, %v572, 0
        %v7626 = vsel %vm455, %v573, 0
        %v7629 = vsel %vm455, %v574, 0
        %v7632 = vsel %vm455, %v575, 0
        %v7635 = vsel %vm455, %v576, 0
        %v7638 = vsel %vm455, %v577, 0
        %v7641 = vsel %vm455, %v578, 0
        %v7644 = vsel %vm853, %v7539, 0
        %7646 = vmatprep.subr.mxu0 0.0
        %7647 = vmatpush1.msra.mxu0 %v7644
        %7648 = vmatprep.subr.mxu0 0.0
        %7649 = vmatpush1.msra.mxu0 0.0
        %7650 = vmatprep.subr.mxu0 0.0
        %7651 = vmatpush1.msra.mxu0 0.0
        %7652 = vmatprep.subr.mxu0 0.0
        %7653 = vmatpush1.msra.mxu0 0.0
        %7654 = vmatprep.subr.mxu0 0.0
        %7655 = vmatpush1.msra.mxu0 0.0
        %7656 = vmatprep.subr.mxu0 0.0
        %7657 = vmatpush1.msra.mxu0 0.0
        %7658 = vmatprep.subr.mxu0 0.0
        %7659 = vmatpush1.msra.mxu0 0.0
        %7660 = vmatprep.subr.mxu0 0.0
        %7661 = vmatpush1.msra.mxu0 0.0
        %7662 = vmatprep.subr.mxu0 0.0
        %7663 = vmatpush1.msra.mxu0 0.0
        %7664 = vmatprep.subr.mxu0 0.0
        %7665 = vmatpush1.msra.mxu0 0.0
        %7666 = vmatprep.subr.mxu0 0.0
        %7667 = vmatpush1.msra.mxu0 0.0
        %7668 = vmatprep.subr.mxu0 0.0
        %7669 = vmatpush1.msra.mxu0 0.0
        %7670 = vmatprep.subr.mxu0 0.0
        %7671 = vmatpush1.msra.mxu0 0.0
        %7672 = vmatprep.subr.mxu0 0.0
        %7673 = vmatpush1.msra.mxu0 0.0
        %7674 = vmatprep.subr.mxu0 0.0
        %7675 = vmatpush1.msra.mxu0 0.0
        %7676 = vmatprep.subr.mxu0 0.0
        %7677 = vmatpush1.msra.mxu0 0.0
        %7678 = vmatprep.subr.mxu0 0.0
        %7679 = vmatpush1.msra.mxu0 0.0
        %7680 = vmatprep.subr.mxu0 0.0
        %7681 = vmatpush1.msra.mxu0 0.0
        %7682 = vmatprep.subr.mxu0 0.0
        %7683 = vmatpush1.msra.mxu0 0.0
        %7684 = vmatprep.subr.mxu0 0.0
        %7685 = vmatpush1.msra.mxu0 0.0
        %7686 = vmatprep.subr.mxu0 0.0
        %7687 = vmatpush1.msra.mxu0 0.0
        %7688 = vmatprep.subr.mxu0 0.0
        %7689 = vmatpush1.msra.mxu0 0.0
        %7690 = vmatprep.subr.mxu0 0.0
        %7691 = vmatpush1.msra.mxu0 0.0
        %7692 = vmatprep.subr.mxu0 0.0
        %7693 = vmatpush1.msra.mxu0 0.0
        %7694 = vmatprep.subr.mxu0 0.0
        %7695 = vmatpush1.msra.mxu0 0.0
        %7696 = vmatprep.subr.mxu0 0.0
        %7697 = vmatpush1.msra.mxu0 0.0
        %7698 = vmatprep.subr.mxu0 0.0
        %7699 = vmatpush1.msra.mxu0 0.0
        %7700 = vmatprep.subr.mxu0 0.0
        %7701 = vmatpush1.msra.mxu0 0.0
        %7702 = vmatprep.subr.mxu0 0.0
        %7703 = vmatpush1.msra.mxu0 0.0
        %7704 = vmatprep.subr.mxu0 0.0
        %7705 = vmatpush1.msra.mxu0 0.0
        %7706 = vmatprep.subr.mxu0 0.0
        %7707 = vmatpush1.msra.mxu0 0.0
        %7708 = vmatprep.subr.mxu0 0.0
        %7709 = vmatpush1.msra.mxu0 0.0
        %7710 = vmatprep.mubr.f32.mxu0 0.0
        %7711 = vmatmul.mubr.f32.gmra.mrb[0].mxu0 %v7548
        %v7712 = vpop.f32.mrb[0].mxu0
        %v7713 = vadd.f32 %v7545, %v7712
        %v7714 = vpop.f32.mrb[0].mxu0
        %7715 = vmatprep.mubr.f32.mxu0 0.0
        %7716 = vmatmul.mubr.f32.gmra.mrb[0].mxu0 %v7551
        %v7717 = vpop.f32.mrb[0].mxu0
        %v7718 = vadd.f32 %v7545, %v7717
        %v7719 = vpop.f32.mrb[0].mxu0
        %7720 = vmatprep.mubr.f32.mxu0 0.0
        %7721 = vmatmul.mubr.f32.gmra.mrb[0].mxu0 %v7554
        %v7722 = vpop.f32.mrb[0].mxu0
        %v7723 = vadd.f32 %v7545, %v7722
        %v7724 = vpop.f32.mrb[0].mxu0
        %7725 = vmatprep.mubr.f32.mxu0 0.0
        %7726 = vmatmul.mubr.f32.gmra.mrb[0].mxu0 %v7557
        %v7727 = vpop.f32.mrb[0].mxu0
        %v7728 = vadd.f32 %v7545, %v7727
        %v7729 = vpop.f32.mrb[0].mxu0
        %7730 = vmatprep.mubr.f32.mxu0 0.0
        %7731 = vmatmul.mubr.f32.gmra.mrb[0].mxu0 %v7560
        %v7732 = vpop.f32.mrb[0].mxu0
        %v7733 = vadd.f32 %v7545, %v7732
        %v7734 = vpop.f32.mrb[0].mxu0
        %7735 = vmatprep.mubr.f32.mxu0 0.0
        %7736 = vmatmul.mubr.f32.gmra.mrb[0].mxu0 %v7563
        %v7737 = vpop.f32.mrb[0].mxu0
        %v7738 = vadd.f32 %v7545, %v7737
        %v7739 = vpop.f32.mrb[0].mxu0
        %7740 = vmatprep.mubr.f32.mxu0 0.0
        %7741 = vmatmul.mubr.f32.gmra.mrb[0].mxu0 %v7566
        %v7742 = vpop.f32.mrb[0].mxu0
        %v7743 = vadd.f32 %v7545, %v7742
        %v7744 = vpop.f32.mrb[0].mxu0
        %7745 = vmatprep.mubr.f32.mxu0 0.0
        %7746 = vmatmul.mubr.f32.gmra.mrb[0].mxu0 %v7569
        %v7747 = vpop.f32.mrb[0].mxu0
        %v7748 = vadd.f32 %v7545, %v7747
        %v7749 = vpop.f32.mrb[0].mxu0
        %7750 = vmatprep.mubr.f32.mxu0 0.0
        %7751 = vmatmul.mubr.f32.gmra.mrb[0].mxu0 %v7572
        %v7752 = vpop.f32.mrb[0].mxu0
        %v7753 = vadd.f32 %v7545, %v7752
        %v7754 = vpop.f32.mrb[0].mxu0
        %7755 = vmatprep.mubr.f32.mxu0 0.0
        %7756 = vmatmul.mubr.f32.gmra.mrb[0].mxu0 %v7575
        %v7757 = vpop.f32.mrb[0].mxu0
        %v7758 = vadd.f32 %v7545, %v7757
        %v7759 = vpop.f32.mrb[0].mxu0
        %7760 = vmatprep.mubr.f32.mxu0 0.0
        %7761 = vmatmul.mubr.f32.gmra.mrb[0].mxu0 %v7578
        %v7762 = vpop.f32.mrb[0].mxu0
        %v7763 = vadd.f32 %v7545, %v7762
        %v7764 = vpop.f32.mrb[0].mxu0
        %7765 = vmatprep.mubr.f32.mxu0 0.0
        %7766 = vmatmul.mubr.f32.gmra.mrb[0].mxu0 %v7581
        %v7767 = vpop.f32.mrb[0].mxu0
        %v7768 = vadd.f32 %v7545, %v7767
        %v7769 = vpop.f32.mrb[0].mxu0
        %7770 = vmatprep.mubr.f32.mxu0 0.0
        %7771 = vmatmul.mubr.f32.gmra.mrb[0].mxu0 %v7584
        %v7772 = vpop.f32.mrb[0].mxu0
        %v7773 = vadd.f32 %v7545, %v7772
        %v7774 = vpop.f32.mrb[0].mxu0
        %7775 = vmatprep.mubr.f32.mxu0 0.0
        %7776 = vmatmul.mubr.f32.gmra.mrb[0].mxu0 %v7587
        %v7777 = vpop.f32.mrb[0].mxu0
        %v7778 = vadd.f32 %v7545, %v7777
        %v7779 = vpop.f32.mrb[0].mxu0
        %7780 = vmatprep.mubr.f32.mxu0 0.0
        %7781 = vmatmul.mubr.f32.gmra.mrb[0].mxu0 %v7590
        %v7782 = vpop.f32.mrb[0].mxu0
        %v7783 = vadd.f32 %v7545, %v7782
        %v7784 = vpop.f32.mrb[0].mxu0
        %7785 = vmatprep.mubr.f32.mxu0 0.0
        %7786 = vmatmul.mubr.f32.gmra.mrb[0].mxu0 %v7593
        %v7787 = vpop.f32.mrb[0].mxu0
        %v7788 = vadd.f32 %v7545, %v7787
        %v7789 = vpop.f32.mrb[0].mxu0
        %7790 = vmatprep.mubr.f32.mxu0 0.0
        %7791 = vmatmul.mubr.f32.gmra.mrb[0].mxu0 %v7596
        %v7792 = vpop.f32.mrb[0].mxu0
        %v7793 = vadd.f32 %v7545, %v7792
        %v7794 = vpop.f32.mrb[0].mxu0
        %7795 = vmatprep.mubr.f32.mxu0 0.0
        %7796 = vmatmul.mubr.f32.gmra.mrb[0].mxu0 %v7599
        %v7797 = vpop.f32.mrb[0].mxu0
        %v7798 = vadd.f32 %v7545, %v7797
        %v7799 = vpop.f32.mrb[0].mxu0
        %7800 = vmatprep.mubr.f32.mxu0 0.0
        %7801 = vmatmul.mubr.f32.gmra.mrb[0].mxu0 %v7602
        %v7802 = vpop.f32.mrb[0].mxu0
        %v7803 = vadd.f32 %v7545, %v7802
        %v7804 = vpop.f32.mrb[0].mxu0
        %7805 = vmatprep.mubr.f32.mxu0 0.0
        %7806 = vmatmul.mubr.f32.gmra.mrb[0].mxu0 %v7605
        %v7807 = vpop.f32.mrb[0].mxu0
        %v7808 = vadd.f32 %v7545, %v7807
        %v7809 = vpop.f32.mrb[0].mxu0
        %7810 = vmatprep.mubr.f32.mxu0 0.0
        %7811 = vmatmul.mubr.f32.gmra.mrb[0].mxu0 %v7608
        %v7812 = vpop.f32.mrb[0].mxu0
        %v7813 = vadd.f32 %v7545, %v7812
        %v7814 = vpop.f32.mrb[0].mxu0
        %7815 = vmatprep.mubr.f32.mxu0 0.0
        %7816 = vmatmul.mubr.f32.gmra.mrb[0].mxu0 %v7611
        %v7817 = vpop.f32.mrb[0].mxu0
        %v7818 = vadd.f32 %v7545, %v7817
        %v7819 = vpop.f32.mrb[0].mxu0
        %7820 = vmatprep.mubr.f32.mxu0 0.0
        %7821 = vmatmul.mubr.f32.gmra.mrb[0].mxu0 %v7614
        %v7822 = vpop.f32.mrb[0].mxu0
        %v7823 = vadd.f32 %v7545, %v7822
        %v7824 = vpop.f32.mrb[0].mxu0
        %7825 = vmatprep.mubr.f32.mxu0 0.0
        %7826 = vmatmul.mubr.f32.gmra.mrb[0].mxu0 %v7617
        %v7827 = vpop.f32.mrb[0].mxu0
        %v7828 = vadd.f32 %v7545, %v7827
        %v7829 = vpop.f32.mrb[0].mxu0
        %7830 = vmatprep.mubr.f32.mxu0 0.0
        %7831 = vmatmul.mubr.f32.gmra.mrb[0].mxu0 %v7620
        %v7832 = vpop.f32.mrb[0].mxu0
        %v7833 = vadd.f32 %v7545, %v7832
        %v7834 = vpop.f32.mrb[0].mxu0
        %7835 = vmatprep.mubr.f32.mxu0 0.0
        %7836 = vmatmul.mubr.f32.gmra.mrb[0].mxu0 %v7623
        %v7837 = vpop.f32.mrb[0].mxu0
        %v7838 = vadd.f32 %v7545, %v7837
        %v7839 = vpop.f32.mrb[0].mxu0
        %7840 = vmatprep.mubr.f32.mxu0 0.0
        %7841 = vmatmul.mubr.f32.gmra.mrb[0].mxu0 %v7626
        %v7842 = vpop.f32.mrb[0].mxu0
        %v7843 = vadd.f32 %v7545, %v7842
        %v7844 = vpop.f32.mrb[0].mxu0
        %7845 = vmatprep.mubr.f32.mxu0 0.0
        %7846 = vmatmul.mubr.f32.gmra.mrb[0].mxu0 %v7629
        %v7847 = vpop.f32.mrb[0].mxu0
        %v7848 = vadd.f32 %v7545, %v7847
        %v7849 = vpop.f32.mrb[0].mxu0
        %7850 = vmatprep.mubr.f32.mxu0 0.0
        %7851 = vmatmul.mubr.f32.gmra.mrb[0].mxu0 %v7632
        %v7852 = vpop.f32.mrb[0].mxu0
        %v7853 = vadd.f32 %v7545, %v7852
        %v7854 = vpop.f32.mrb[0].mxu0
        %7855 = vmatprep.mubr.f32.mxu0 0.0
        %7856 = vmatmul.mubr.f32.gmra.mrb[0].mxu0 %v7635
        %v7857 = vpop.f32.mrb[0].mxu0
        %v7858 = vadd.f32 %v7545, %v7857
        %v7859 = vpop.f32.mrb[0].mxu0
        %7860 = vmatprep.mubr.f32.mxu0 0.0
        %7861 = vmatmul.mubr.f32.gmra.mrb[0].mxu0 %v7638
        %v7862 = vpop.f32.mrb[0].mxu0
        %v7863 = vadd.f32 %v7545, %v7862
        %v7864 = vpop.f32.mrb[0].mxu0
        %7865 = vmatprep.mubr.f32.mxu0 0.0
        %7866 = vmatmul.mubr.f32.gmra.mrb[0].mxu0 %v7641
        %v7867 = vpop.f32.mrb[0].mxu0
        %v7868 = vadd.f32 %v7545, %v7867
        %v7869 = vpop.f32.mrb[0].mxu0
        %7870 = vdwg.mxu0
        %v7871 = vadd.f32 %v7507, %v7713
        %v7872 = vadd.f32 %v7508, %v7718
        %v7873 = vadd.f32 %v7509, %v7723
        %v7874 = vadd.f32 %v7510, %v7728
        %v7875 = vadd.f32 %v7511, %v7733
        %v7876 = vadd.f32 %v7512, %v7738
        %v7877 = vadd.f32 %v7513, %v7743
        %v7878 = vadd.f32 %v7514, %v7748
        %v7879 = vadd.f32 %v7515, %v7753
        %v7880 = vadd.f32 %v7516, %v7758
        %v7881 = vadd.f32 %v7517, %v7763
        %v7882 = vadd.f32 %v7518, %v7768
        %v7883 = vadd.f32 %v7519, %v7773
        %v7884 = vadd.f32 %v7520, %v7778
        %v7885 = vadd.f32 %v7521, %v7783
        %v7886 = vadd.f32 %v7522, %v7788
        %v7887 = vadd.f32 %v7523, %v7793
        %v7888 = vadd.f32 %v7524, %v7798
        %v7889 = vadd.f32 %v7525, %v7803
        %v7890 = vadd.f32 %v7526, %v7808
        %v7891 = vadd.f32 %v7527, %v7813
        %v7892 = vadd.f32 %v7528, %v7818
        %v7893 = vadd.f32 %v7529, %v7823
        %v7894 = vadd.f32 %v7530, %v7828
        %v7895 = vadd.f32 %v7531, %v7833
        %v7896 = vadd.f32 %v7532, %v7838
        %v7897 = vadd.f32 %v7533, %v7843
        %v7898 = vadd.f32 %v7534, %v7848
        %v7899 = vadd.f32 %v7535, %v7853
        %v7900 = vadd.f32 %v7536, %v7858
        %v7901 = vadd.f32 %v7537, %v7863
        %v7902 = vadd.f32 %v7538, %v7868
        %7903 = vst.msk [vmem:[%s454] sm:$0xff] %vm501, %v7871
        %7904 = vst.msk [vmem:[%s454 + $0x8] sm:$0xff] %vm501, %v7872
        %7905 = vst.msk [vmem:[%s454 + $0x10] sm:$0xff] %vm501, %v7873
        %7906 = vst.msk [vmem:[%s454 + $0x18] sm:$0xff] %vm501, %v7874
        %7907 = vst.msk [vmem:[%s454 + $0x20] sm:$0xff] %vm501, %v7875
        %7908 = vst.msk [vmem:[%s454 + $0x28] sm:$0xff] %vm501, %v7876
        %7909 = vst.msk [vmem:[%s454 + $0x30] sm:$0xff] %vm501, %v7877
        %7910 = vst.msk [vmem:[%s454 + $0x38] sm:$0xff] %vm501, %v7878
        %7911 = vst.msk [vmem:[%s454 + $0x40] sm:$0xff] %vm501, %v7879
        %7912 = vst.msk [vmem:[%s454 + $0x48] sm:$0xff] %vm501, %v7880
        %7913 = vst.msk [vmem:[%s454 + $0x50] sm:$0xff] %vm501, %v7881
        %7914 = vst.msk [vmem:[%s454 + $0x58] sm:$0xff] %vm501, %v7882
        %7915 = vst.msk [vmem:[%s454 + $0x60] sm:$0xff] %vm501, %v7883
        %7916 = vst.msk [vmem:[%s454 + $0x68] sm:$0xff] %vm501, %v7884
        %7917 = vst.msk [vmem:[%s454 + $0x70] sm:$0xff] %vm501, %v7885
        %7918 = vst.msk [vmem:[%s454 + $0x78] sm:$0xff] %vm501, %v7886
        %7919 = vst.msk [vmem:[%s454 + $0x80] sm:$0xff] %vm501, %v7887
        %7920 = vst.msk [vmem:[%s454 + $0x88] sm:$0xff] %vm501, %v7888
        %7921 = vst.msk [vmem:[%s454 + $0x90] sm:$0xff] %vm501, %v7889
        %7922 = vst.msk [vmem:[%s454 + $0x98] sm:$0xff] %vm501, %v7890
        %7923 = vst.msk [vmem:[%s454 + $0xa0] sm:$0xff] %vm501, %v7891
        %7924 = vst.msk [vmem:[%s454 + $0xa8] sm:$0xff] %vm501, %v7892
        %7925 = vst.msk [vmem:[%s454 + $0xb0] sm:$0xff] %vm501, %v7893
        %7926 = vst.msk [vmem:[%s454 + $0xb8] sm:$0xff] %vm501, %v7894
        %7927 = vst.msk [vmem:[%s454 + $0xc0] sm:$0xff] %vm501, %v7895
        %7928 = vst.msk [vmem:[%s454 + $0xc8] sm:$0xff] %vm501, %v7896
        %7929 = vst.msk [vmem:[%s454 + $0xd0] sm:$0xff] %vm501, %v7897
        %7930 = vst.msk [vmem:[%s454 + $0xd8] sm:$0xff] %vm501, %v7898
        %7931 = vst.msk [vmem:[%s454 + $0xe0] sm:$0xff] %vm501, %v7899
        %7932 = vst.msk [vmem:[%s454 + $0xe8] sm:$0xff] %vm501, %v7900
        %7933 = vst.msk [vmem:[%s454 + $0xf0] sm:$0xff] %vm501, %v7901
        %7934 = vst.msk [vmem:[%s454 + $0xf8] sm:$0xff] %vm501, %v7902
        %s7935 = sand.u32 %s232, 1
        %s7936 = scalar_lea.sflag [#allocation6], %s7935
        %s7937 = sand.u32 %s232, 1
        %s7938 = smul.addr %s7937, 256
        %s7939 = scalar_lea.vmem [#allocation19], %s7938
        // Predicated region
        $region93: #{bottleneck_ir_forward.1} parent=55 // pred_check
          %p7940 = pneg %p242
        $region94: #{bottleneck_ir_forward.1} parent=55 // pred_check_branch
          %7942 = sbr.rel (%p7940) target = $region96
        $region95: #{bottleneck_ir_forward.1} parent=55 // pred_region
          %s7944 = ssub.s32 4096, 4096
          %7945 = vsyncadd %s7936, %s7944
          %s7946 = smul.addr %s30, 32
          %s7947 = smul.addr %s7946, 128
          %s7948 = scalar_lea.hbm %s9, %s7947
          %s7949 = sshll.u32 %s7939, 4
          %s7950 = int_to_ptr.vmem [resolvable:$true] %s7949
          %7955 = dma.vmem_to_hbm [thread:$0]  %s7950, 4096, %s7948, %s7936, 128, 128, 8
        $region96: #{bottleneck_ir_forward.1} parent=55 // pred_fallthru
          _
      $region56: #{bottleneck_ir_forward.1} parent=5 // pred_fallthru
        _
      %p7956 = scmp.le.s32.totalorder 2, %s25
      // Predicated region
      $region97: #{bottleneck_ir_forward.1} parent=5 // pred_check
        %p7957 = pneg %p7956
      $region98: #{bottleneck_ir_forward.1} parent=5 // pred_check_branch
        %7959 = sbr.rel (%p7957) target = $region100
      $region99: #{bottleneck_ir_forward.1} parent=5 // pred_region
        %s7960 = ssub.s32 %s25, 2
        // Predicated region
        $region101: #{bottleneck_ir_forward.1} parent=99 // pred_check
          %p7961 = pneg %p248
        $region102: #{bottleneck_ir_forward.1} parent=99 // pred_check_branch
          %7963 = sbr.rel (%p7961) target = $region104
        $region103: #{bottleneck_ir_forward.1} parent=99 // pred_region
          %s7964 = sand.u32 %s233, 1
          %s7965 = scalar_lea.sflag [#allocation6], %s7964
          %s7966 = sand.u32 %s233, 1
          %s7967 = smul.addr %s7966, 256
          %s7968 = scalar_lea.vmem [#allocation19], %s7967
          %7969 = dma.done %s7965, 4096
        $region104: #{bottleneck_ir_forward.1} parent=99 // pred_fallthru
          _
      $region100: #{bottleneck_ir_forward.1} parent=5 // pred_fallthru
        _
    $region6: #{bottleneck_ir_forward.1} parent=1 // loop_footer
      %s29 = sadd.s32 1, %s25
    $region7: #{bottleneck_ir_forward.1} parent=1 // loop_footer_branch
      %24 = sbr.rel target = $region3
    $region8: #{bottleneck_ir_forward.1} parent=1 // loop_exit
      _
    %7970 = vsyncpa [#allocation5], 1
    %s7971 = scalar_lea.sflag [#allocation5], 1
    %7972 = vsyncpa %s7971, 1
    %7973 = vsyncpa [#allocation8], 1
    %7974 = vsyncpa [#allocation11], 1
    %7975 = vsyncpa [#allocation14], 1
    %7976 = vsyncpa [#allocation17], 1
    %7977 = vsyncpa [#allocation6], 1
    %s7978 = scalar_lea.sflag [#allocation6], 1
    %7979 = vsyncpa %s7978, 1

</llo_original>
